<compile_context>
chip_gen: v5e
topology: v5e:2x2
jax: 0.10.0
libtpu: 0.0.40
codegen_flags: <defaults>
</compile_context>

<pallas_src>
import functools

import jax
import jax.numpy as jnp
import numpy as np
from jax import lax
from jax.experimental import pallas as pl
from jax.experimental.pallas import tpu as pltpu


def _round_up(n, m):
    return -(-n // m) * m


# ---------------------------------------------------------------------------
# The fused kernel: conv1 -> pool1 -> conv2 -> pool2 -> flatten -> FC tail
# ---------------------------------------------------------------------------
def _qnet_kernel(xg_ref, ex_ref,
                 a1_ref, b1_ref, a2_ref, b2_ref,
                 wc1_ref, bc1_ref, wc2_ref, bc2_ref,
                 wf1a_ref, wf1b_ref, bf1_ref, wf2_ref, bf2_ref,
                 o_ref, *, n1, n2):
    f32 = jnp.float32
    bf16 = jnp.bfloat16

    # conv1 (+bias, ReLU): one structured matmul.
    # output lanes ordered (ph, pw, h2, w2, c) -> width 4*n1
    c1 = jnp.dot(xg_ref[...].astype(bf16), a1_ref[...],
                 preferred_element_type=f32)
    c1 = jnp.maximum(c1 + b1_ref[...], 0.0)

    # pool1: two lane-block maxima (over ph, then pw) -> lanes (h2, w2, c)
    t1 = jnp.maximum(c1[:, :2 * n1], c1[:, 2 * n1:])
    p1 = jnp.maximum(t1[:, :n1], t1[:, n1:])                   # (BB, n1)

    # conv2 (+bias, ReLU): one structured matmul.
    # output lanes ordered (ph, pw, h4, w4, c) -> width 4*n2
    c2 = jnp.dot(p1.astype(bf16), a2_ref[...], preferred_element_type=f32)
    c2 = jnp.maximum(c2 + b2_ref[...], 0.0)

    # pool2 -> lanes (h4, w4, c)  == the flattened CNN features
    t2 = jnp.maximum(c2[:, :2 * n2], c2[:, 2 * n2:])
    p2 = jnp.maximum(t2[:, :n2], t2[:, n2:])                   # (BB, n2)

    # FC tail (all weights resident in VMEM, bf16 with f32 accumulation)
    f = jnp.dot(p2.astype(bf16), wc1_ref[...], preferred_element_type=f32)
    f = jnp.maximum(f + bc1_ref[...], 0.0)                     # (BB, 512)
    f = jnp.dot(f.astype(bf16), wc2_ref[...], preferred_element_type=f32)
    f = jnp.maximum(f + bc2_ref[...], 0.0)                     # (BB, 64)
    # concat([f, extra]) @ ffc1_w == f @ ffc1_w[:64] + extra @ ffc1_w[64:]
    g = (jnp.dot(f.astype(bf16), wf1a_ref[...], preferred_element_type=f32)
         + jnp.dot(ex_ref[...].astype(bf16), wf1b_ref[...],
                   preferred_element_type=f32))
    g = jnp.maximum(g + bf1_ref[...], 0.0)                     # (BB, 256)
    y = jnp.dot(g.astype(bf16), wf2_ref[...], preferred_element_type=f32)
    o_ref[...] = (y + bf2_ref[...]).astype(o_ref.dtype)


def cnn_qnet_forward(x, pp, *, grid_shape, additional_features,
                     block_batch=None):
    """x: (B, H*W + additional_features) f32 -> (B, output_size) f32."""
    H, W = grid_shape
    assert H % 4 == 0 and W % 4 == 0, "grid_shape must be divisible by 4"
    gs = H * W
    E = additional_features
    B = x.shape[0]
    assert x.shape[1] == gs + E
    O = pp["wf2"].shape[1]
    n1 = (H // 2) * (W // 2) * 16
    n2 = (H // 4) * (W // 4) * 32

    xg = x[:, :gs]                                   # raw flat grid, no reshape
    ex = x[:, gs:]

    # batch block: multiple of 8 sublanes; pad batch up to a multiple of it
    bb = block_batch or min(64, _round_up(B, 8))
    bb = max(8, bb - bb % 8)
    Bp = _round_up(B, bb)
    if Bp != B:
        xg = jnp.pad(xg, ((0, Bp - B), (0, 0)))
        ex = jnp.pad(ex, ((0, Bp - B), (0, 0)))

    w_names = ("a1", "b1", "a2", "b2", "wc1", "bc1", "wc2", "bc2",
               "wf1a", "wf1b", "bf1", "wf2", "bf2")
    w_specs = [pl.BlockSpec(pp[k].shape, lambda b: (0, 0)) for k in w_names]

    kernel = functools.partial(_qnet_kernel, n1=n1, n2=n2)
    out = pl.pallas_call(
        kernel,
        out_shape=jax.ShapeDtypeStruct((Bp, O), jnp.float32),
        grid=(Bp // bb,),
        in_specs=[pl.BlockSpec((bb, gs), lambda b: (b, 0)),
                  pl.BlockSpec((bb, E), lambda b: (b, 0))] + w_specs,
        out_specs=pl.BlockSpec((bb, O), lambda b: (b, 0)),
        compiler_params=pltpu.CompilerParams(
            dimension_semantics=("parallel",),
            vmem_limit_bytes=32 * 1024 * 1024),
    )(xg, ex, *(pp[k] for k in w_names))
    return out[:B]


# ---------------------------------------------------------------------------
# Parameters
# ---------------------------------------------------------------------------
def init_params(key, grid_shape, additional_features, output_size):
    """Torch-equivalent params: conv HWIO, linear (in_features, out_features)."""
    H, W = grid_shape
    flattened = 32 * (H // 4) * (W // 4)
    shapes = {
        "conv1_w": (3, 3, 1, 16), "conv1_b": (16,),
        "conv2_w": (3, 3, 16, 32), "conv2_b": (32,),
        "cnnfc1_w": (flattened, 512), "cnnfc1_b": (512,),
        "cnnfc2_w": (512, 64), "cnnfc2_b": (64,),
        "ffc1_w": (64 + additional_features, 256), "ffc1_b": (256,),
        "ffc2_w": (256, output_size), "ffc2_b": (output_size,),
    }
    params = {}
    names = sorted(shapes)
    keys = jax.random.split(key, len(names))
    for name, k in zip(names, keys):
        shp = shapes[name]
        fan_in = int(np.prod(shp[:-1])) if len(shp) > 1 else int(shp[0])
        scale = 1.0 / np.sqrt(max(fan_in, 1))
        params[name] = jax.random.normal(k, shp, jnp.float32) * scale
    return params


def prepare_pallas_params(params, grid_shape, weight_dtype=jnp.bfloat16):
    """One-time re-layout: fold convs into structured matmul weights whose
    column order is (pool_parity_h, pool_parity_w, h_out, w_out, c_out)."""
    H, W = grid_shape
    H2, W2, H4, W4 = H // 2, W // 2, H // 4, W // 4
    w1 = np.asarray(params["conv1_w"], np.float32)      # (3,3,1,16)
    w2 = np.asarray(params["conv2_w"], np.float32)      # (3,3,16,32)

    # conv1 as (H*W) x (4*H2*W2*16) structured matrix (zero padding folded in)
    A1 = np.zeros((H, W, H, W, 16), np.float32)         # (hi, wi, ho, wo, c)
    for ho in range(H):
        for wo in range(W):
            for kh in range(3):
                for kw in range(3):
                    hi, wi = ho + kh - 1, wo + kw - 1
                    if 0 <= hi < H and 0 <= wi < W:
                        A1[hi, wi, ho, wo, :] = w1[kh, kw, 0, :]
    A1 = (A1.reshape(H, W, H2, 2, W2, 2, 16)
            .transpose(0, 1, 3, 5, 2, 4, 6)              # (hi,wi,ph,pw,h2,w2,c)
            .reshape(H * W, 4 * H2 * W2 * 16))
    b1 = np.broadcast_to(np.asarray(params["conv1_b"], np.float32),
                         (2, 2, H2, W2, 16)).reshape(1, -1)

    # conv2 as (H2*W2*16) x (4*H4*W4*32) structured matrix
    A2 = np.zeros((H2, W2, 16, H2, W2, 32), np.float32)  # (h2i,w2i,ci,h2o,w2o,co)
    for ho in range(H2):
        for wo in range(W2):
            for kh in range(3):
                for kw in range(3):
                    hi, wi = ho + kh - 1, wo + kw - 1
                    if 0 <= hi < H2 and 0 <= wi < W2:
                        A2[hi, wi, :, ho, wo, :] = w2[kh, kw, :, :]
    A2 = (A2.reshape(H2, W2, 16, H4, 2, W4, 2, 32)
            .transpose(0, 1, 2, 4, 6, 3, 5, 7)           # (...,ph,pw,h4,w4,c)
            .reshape(H2 * W2 * 16, 4 * H4 * W4 * 32))
    b2 = np.broadcast_to(np.asarray(params["conv2_b"], np.float32),
                         (2, 2, H4, W4, 32)).reshape(1, -1)

    # Fold PyTorch's NCHW flatten order into CNNfc1's rows (kernel produces
    # features in (h4, w4, c) order).
    j = np.arange(H4 * W4 * 32)
    perm = (j % 32) * (H4 * W4) + (j // 32)

    wd = weight_dtype
    return {
        "a1": jnp.asarray(A1, wd), "b1": jnp.asarray(b1, jnp.float32),
        "a2": jnp.asarray(A2, wd), "b2": jnp.asarray(b2, jnp.float32),
        "wc1": jnp.asarray(params["cnnfc1_w"])[perm, :].astype(wd),
        "bc1": jnp.asarray(params["cnnfc1_b"], jnp.float32).reshape(1, -1),
        "wc2": jnp.asarray(params["cnnfc2_w"], wd),
        "bc2": jnp.asarray(params["cnnfc2_b"], jnp.float32).reshape(1, -1),
        "wf1a": jnp.asarray(params["ffc1_w"])[:64, :].astype(wd),
        "wf1b": jnp.asarray(params["ffc1_w"])[64:, :].astype(wd),
        "bf1": jnp.asarray(params["ffc1_b"], jnp.float32).reshape(1, -1),
        "wf2": jnp.asarray(params["ffc2_w"], wd),
        "bf2": jnp.asarray(params["ffc2_b"], jnp.float32).reshape(1, -1),
    }


# ---------------------------------------------------------------------------
# Pure-JAX f32 reference (torch semantics; correctness check only)
# ---------------------------------------------------------------------------
def ref_forward(x, params, grid_shape, additional_features):
    B = x.shape[0]
    H, W = grid_shape
    gs = H * W
    g = x[:, :gs].reshape(B, H, W, 1)
    extra = x[:, gs:]

    def conv(z, w, b):
        y = lax.conv_general_dilated(
            z, w, window_strides=(1, 1), padding="SAME",
            dimension_numbers=("NHWC", "HWIO", "NHWC"))
        return jax.nn.relu(y + b)

    def pool(z):
        b_, h_, w_, c_ = z.shape
        return jnp.max(z.reshape(b_, h_ // 2, 2, w_ // 2, 2, c_), axis=(2, 4))

    h = pool(conv(g, params["conv1_w"], params["conv1_b"]))
    h = pool(conv(h, params["conv2_w"], params["conv2_b"]))
    flat = jnp.transpose(h, (0, 3, 1, 2)).reshape(B, -1)       # NCHW flatten
    f = jax.nn.relu(flat @ params["cnnfc1_w"] + params["cnnfc1_b"])
    f = jax.nn.relu(f @ params["cnnfc2_w"] + params["cnnfc2_b"])
    y = jnp.concatenate([f, extra], axis=1)
    y = jax.nn.relu(y @ params["ffc1_w"] + params["ffc1_b"])
    return y @ params["ffc2_w"] + params["ffc2_b"]


# ---------------------------------------------------------------------------
if __name__ == "__main__":
    grid_shape = (16, 16)          # small, divisible by 4
    additional_features = 11
    output_size = 3
    batch = 2

    key = jax.random.PRNGKey(0)
    k_x, k_p = jax.random.split(key)
    total_features = grid_shape[0] * grid_shape[1] + additional_features
    x = jax.random.normal(k_x, (batch, total_features), dtype=jnp.float32)
    params = init_params(k_p, grid_shape, additional_features, output_size)
    pparams = prepare_pallas_params(params, grid_shape)

    fwd = jax.jit(functools.partial(cnn_qnet_forward,
                                    grid_shape=grid_shape,
                                    additional_features=additional_features))
    out = jax.block_until_ready(fwd(x, pparams))

    ref = jax.block_until_ready(
        ref_forward(x, params, grid_shape, additional_features))
    # bf16 weights (f32 accumulation) cause ~1% deviation vs the f32 reference.
    np.testing.assert_allclose(np.asarray(out), np.asarray(ref),
                               rtol=5e-2, atol=5e-2)
    assert out.shape == (batch, output_size)
    print("KERNEL_OK")
</pallas_src>

<mosaic_0001>
module attributes {stable_mosaic.version = 11 : i64} {
  func.func @_qnet_kernel(%arg0: i32, %arg1: memref<8x256xf32, #tpu.memory_space<vmem>>, %arg2: memref<8x11xf32, #tpu.memory_space<vmem>>, %arg3: memref<256x4096xbf16, #tpu.memory_space<vmem>>, %arg4: memref<1x4096xf32, #tpu.memory_space<vmem>>, %arg5: memref<1024x2048xbf16, #tpu.memory_space<vmem>>, %arg6: memref<1x2048xf32, #tpu.memory_space<vmem>>, %arg7: memref<512x512xbf16, #tpu.memory_space<vmem>>, %arg8: memref<1x512xf32, #tpu.memory_space<vmem>>, %arg9: memref<512x64xbf16, #tpu.memory_space<vmem>>, %arg10: memref<1x64xf32, #tpu.memory_space<vmem>>, %arg11: memref<64x256xbf16, #tpu.memory_space<vmem>>, %arg12: memref<11x256xbf16, #tpu.memory_space<vmem>>, %arg13: memref<1x256xf32, #tpu.memory_space<vmem>>, %arg14: memref<256x3xbf16, #tpu.memory_space<vmem>>, %arg15: memref<1x3xf32, #tpu.memory_space<vmem>>, %arg16: memref<8x3xf32, #tpu.memory_space<vmem>>) attributes {dimension_semantics = [#tpu.dimension_semantics<parallel>], iteration_bounds = array<i64: 1>, scalar_prefetch = 0 : i64, scratch_operands = 0 : i64, tpu.core_type = #tpu.core_type<tc>, window_params = [{transform_indices = @transform_0, window_bounds = array<i64: 8, 256>}, {transform_indices = @transform_1, window_bounds = array<i64: 8, 11>}, {pipeline_mode = #tpu.pipeline_mode<synchronous>, transform_indices = @transform_2, window_bounds = array<i64: 256, 4096>}, {pipeline_mode = #tpu.pipeline_mode<synchronous>, transform_indices = @transform_3, window_bounds = array<i64: 1, 4096>}, {pipeline_mode = #tpu.pipeline_mode<synchronous>, transform_indices = @transform_4, window_bounds = array<i64: 1024, 2048>}, {pipeline_mode = #tpu.pipeline_mode<synchronous>, transform_indices = @transform_5, window_bounds = array<i64: 1, 2048>}, {pipeline_mode = #tpu.pipeline_mode<synchronous>, transform_indices = @transform_6, window_bounds = array<i64: 512, 512>}, {pipeline_mode = #tpu.pipeline_mode<synchronous>, transform_indices = @transform_7, window_bounds = array<i64: 1, 512>}, {pipeline_mode = #tpu.pipeline_mode<synchronous>, transform_indices = @transform_8, window_bounds = array<i64: 512, 64>}, {pipeline_mode = #tpu.pipeline_mode<synchronous>, transform_indices = @transform_9, window_bounds = array<i64: 1, 64>}, {pipeline_mode = #tpu.pipeline_mode<synchronous>, transform_indices = @transform_10, window_bounds = array<i64: 64, 256>}, {pipeline_mode = #tpu.pipeline_mode<synchronous>, transform_indices = @transform_11, window_bounds = array<i64: 11, 256>}, {pipeline_mode = #tpu.pipeline_mode<synchronous>, transform_indices = @transform_12, window_bounds = array<i64: 1, 256>}, {pipeline_mode = #tpu.pipeline_mode<synchronous>, transform_indices = @transform_13, window_bounds = array<i64: 256, 3>}, {pipeline_mode = #tpu.pipeline_mode<synchronous>, transform_indices = @transform_14, window_bounds = array<i64: 1, 3>}, {transform_indices = @transform_15, window_bounds = array<i64: 8, 3>}]} {
    %c0 = arith.constant 0 : index
    %c0_0 = arith.constant 0 : index
    %0 = vector.load %arg1[%c0, %c0_0] : memref<8x256xf32, #tpu.memory_space<vmem>>, vector<8x256xf32>
    %1 = arith.truncf %0 : vector<8x256xf32> to vector<8x256xbf16>
    %c0_1 = arith.constant 0 : index
    %c0_2 = arith.constant 0 : index
    %2 = vector.load %arg3[%c0_1, %c0_2] : memref<256x4096xbf16, #tpu.memory_space<vmem>>, vector<256x4096xbf16>
    %cst = arith.constant dense<0.000000e+00> : vector<8x4096xf32>
    %3 = tpu.matmul %1, %2, %cst {dimension_numbers = #tpu.dot_dimension_numbers<[1], [0], [0], [1], [0, 0, 1, 1], [], []>} : vector<8x256xbf16>, vector<256x4096xbf16>, vector<8x4096xf32> -> vector<8x4096xf32>
    %c0_3 = arith.constant 0 : index
    %c0_4 = arith.constant 0 : index
    %4 = vector.load %arg4[%c0_3, %c0_4] : memref<1x4096xf32, #tpu.memory_space<vmem>>, vector<1x4096xf32>
    %5 = vector.broadcast %4 : vector<1x4096xf32> to vector<8x4096xf32>
    %6 = arith.addf %3, %5 : vector<8x4096xf32>
    %cst_5 = arith.constant 0.000000e+00 : f32
    %7 = vector.broadcast %cst_5 : f32 to vector<8x4096xf32>
    %8 = arith.maximumf %6, %7 : vector<8x4096xf32>
    %9 = vector.extract_strided_slice %8 {offsets = [0, 0], sizes = [8, 2048], strides = [1, 1]} : vector<8x4096xf32> to vector<8x2048xf32>
    %10 = vector.extract_strided_slice %8 {offsets = [0, 2048], sizes = [8, 2048], strides = [1, 1]} : vector<8x4096xf32> to vector<8x2048xf32>
    %11 = arith.maximumf %9, %10 : vector<8x2048xf32>
    %12 = vector.extract_strided_slice %11 {offsets = [0, 0], sizes = [8, 1024], strides = [1, 1]} : vector<8x2048xf32> to vector<8x1024xf32>
    %13 = vector.extract_strided_slice %11 {offsets = [0, 1024], sizes = [8, 1024], strides = [1, 1]} : vector<8x2048xf32> to vector<8x1024xf32>
    %14 = arith.maximumf %12, %13 : vector<8x1024xf32>
    %15 = arith.truncf %14 : vector<8x1024xf32> to vector<8x1024xbf16>
    %c0_6 = arith.constant 0 : index
    %c0_7 = arith.constant 0 : index
    %16 = vector.load %arg5[%c0_6, %c0_7] : memref<1024x2048xbf16, #tpu.memory_space<vmem>>, vector<1024x2048xbf16>
    %cst_8 = arith.constant dense<0.000000e+00> : vector<8x2048xf32>
    %17 = tpu.matmul %15, %16, %cst_8 {dimension_numbers = #tpu.dot_dimension_numbers<[1], [0], [0], [1], [0, 0, 1, 1], [], []>} : vector<8x1024xbf16>, vector<1024x2048xbf16>, vector<8x2048xf32> -> vector<8x2048xf32>
    %c0_9 = arith.constant 0 : index
    %c0_10 = arith.constant 0 : index
    %18 = vector.load %arg6[%c0_9, %c0_10] : memref<1x2048xf32, #tpu.memory_space<vmem>>, vector<1x2048xf32>
    %19 = vector.broadcast %18 : vector<1x2048xf32> to vector<8x2048xf32>
    %20 = arith.addf %17, %19 : vector<8x2048xf32>
    %cst_11 = arith.constant 0.000000e+00 : f32
    %21 = vector.broadcast %cst_11 : f32 to vector<8x2048xf32>
    %22 = arith.maximumf %20, %21 : vector<8x2048xf32>
    %23 = vector.extract_strided_slice %22 {offsets = [0, 0], sizes = [8, 1024], strides = [1, 1]} : vector<8x2048xf32> to vector<8x1024xf32>
    %24 = vector.extract_strided_slice %22 {offsets = [0, 1024], sizes = [8, 1024], strides = [1, 1]} : vector<8x2048xf32> to vector<8x1024xf32>
    %25 = arith.maximumf %23, %24 : vector<8x1024xf32>
    %26 = vector.extract_strided_slice %25 {offsets = [0, 0], sizes = [8, 512], strides = [1, 1]} : vector<8x1024xf32> to vector<8x512xf32>
    %27 = vector.extract_strided_slice %25 {offsets = [0, 512], sizes = [8, 512], strides = [1, 1]} : vector<8x1024xf32> to vector<8x512xf32>
    %28 = arith.maximumf %26, %27 : vector<8x512xf32>
    %29 = arith.truncf %28 : vector<8x512xf32> to vector<8x512xbf16>
    %c0_12 = arith.constant 0 : index
    %c0_13 = arith.constant 0 : index
    %30 = vector.load %arg7[%c0_12, %c0_13] : memref<512x512xbf16, #tpu.memory_space<vmem>>, vector<512x512xbf16>
    %cst_14 = arith.constant dense<0.000000e+00> : vector<8x512xf32>
    %31 = tpu.matmul %29, %30, %cst_14 {dimension_numbers = #tpu.dot_dimension_numbers<[1], [0], [0], [1], [0, 0, 1, 1], [], []>} : vector<8x512xbf16>, vector<512x512xbf16>, vector<8x512xf32> -> vector<8x512xf32>
    %c0_15 = arith.constant 0 : index
    %c0_16 = arith.constant 0 : index
    %32 = vector.load %arg8[%c0_15, %c0_16] : memref<1x512xf32, #tpu.memory_space<vmem>>, vector<1x512xf32>
    %33 = vector.broadcast %32 : vector<1x512xf32> to vector<8x512xf32>
    %34 = arith.addf %31, %33 : vector<8x512xf32>
    %cst_17 = arith.constant 0.000000e+00 : f32
    %35 = vector.broadcast %cst_17 : f32 to vector<8x512xf32>
    %36 = arith.maximumf %34, %35 : vector<8x512xf32>
    %37 = arith.truncf %36 : vector<8x512xf32> to vector<8x512xbf16>
    %c0_18 = arith.constant 0 : index
    %c0_19 = arith.constant 0 : index
    %38 = vector.load %arg9[%c0_18, %c0_19] : memref<512x64xbf16, #tpu.memory_space<vmem>>, vector<512x64xbf16>
    %cst_20 = arith.constant dense<0.000000e+00> : vector<8x64xf32>
    %39 = tpu.matmul %37, %38, %cst_20 {dimension_numbers = #tpu.dot_dimension_numbers<[1], [0], [0], [1], [0, 0, 1, 1], [], []>} : vector<8x512xbf16>, vector<512x64xbf16>, vector<8x64xf32> -> vector<8x64xf32>
    %c0_21 = arith.constant 0 : index
    %c0_22 = arith.constant 0 : index
    %40 = vector.load %arg10[%c0_21, %c0_22] : memref<1x64xf32, #tpu.memory_space<vmem>>, vector<1x64xf32>
    %41 = vector.broadcast %40 : vector<1x64xf32> to vector<8x64xf32>
    %42 = arith.addf %39, %41 : vector<8x64xf32>
    %cst_23 = arith.constant 0.000000e+00 : f32
    %43 = vector.broadcast %cst_23 : f32 to vector<8x64xf32>
    %44 = arith.maximumf %42, %43 : vector<8x64xf32>
    %45 = arith.truncf %44 : vector<8x64xf32> to vector<8x64xbf16>
    %c0_24 = arith.constant 0 : index
    %c0_25 = arith.constant 0 : index
    %46 = vector.load %arg11[%c0_24, %c0_25] : memref<64x256xbf16, #tpu.memory_space<vmem>>, vector<64x256xbf16>
    %cst_26 = arith.constant dense<0.000000e+00> : vector<8x256xf32>
    %47 = tpu.matmul %45, %46, %cst_26 {dimension_numbers = #tpu.dot_dimension_numbers<[1], [0], [0], [1], [0, 0, 1, 1], [], []>} : vector<8x64xbf16>, vector<64x256xbf16>, vector<8x256xf32> -> vector<8x256xf32>
    %c0_27 = arith.constant 0 : index
    %c0_28 = arith.constant 0 : index
    %48 = vector.load %arg2[%c0_27, %c0_28] : memref<8x11xf32, #tpu.memory_space<vmem>>, vector<8x11xf32>
    %49 = arith.truncf %48 : vector<8x11xf32> to vector<8x11xbf16>
    %c0_29 = arith.constant 0 : index
    %c0_30 = arith.constant 0 : index
    %50 = vector.load %arg12[%c0_29, %c0_30] : memref<11x256xbf16, #tpu.memory_space<vmem>>, vector<11x256xbf16>
    %cst_31 = arith.constant dense<0.000000e+00> : vector<8x256xf32>
    %51 = tpu.matmul %49, %50, %cst_31 {dimension_numbers = #tpu.dot_dimension_numbers<[1], [0], [0], [1], [0, 0, 1, 1], [], []>} : vector<8x11xbf16>, vector<11x256xbf16>, vector<8x256xf32> -> vector<8x256xf32>
    %52 = arith.addf %47, %51 : vector<8x256xf32>
    %c0_32 = arith.constant 0 : index
    %c0_33 = arith.constant 0 : index
    %53 = vector.load %arg13[%c0_32, %c0_33] : memref<1x256xf32, #tpu.memory_space<vmem>>, vector<1x256xf32>
    %54 = vector.broadcast %53 : vector<1x256xf32> to vector<8x256xf32>
    %55 = arith.addf %52, %54 : vector<8x256xf32>
    %cst_34 = arith.constant 0.000000e+00 : f32
    %56 = vector.broadcast %cst_34 : f32 to vector<8x256xf32>
    %57 = arith.maximumf %55, %56 : vector<8x256xf32>
    %58 = arith.truncf %57 : vector<8x256xf32> to vector<8x256xbf16>
    %c0_35 = arith.constant 0 : index
    %c0_36 = arith.constant 0 : index
    %59 = vector.load %arg14[%c0_35, %c0_36] : memref<256x3xbf16, #tpu.memory_space<vmem>>, vector<256x3xbf16>
    %cst_37 = arith.constant dense<0.000000e+00> : vector<8x3xf32>
    %60 = tpu.matmul %58, %59, %cst_37 {dimension_numbers = #tpu.dot_dimension_numbers<[1], [0], [0], [1], [0, 0, 1, 1], [], []>} : vector<8x256xbf16>, vector<256x3xbf16>, vector<8x3xf32> -> vector<8x3xf32>
    %c0_38 = arith.constant 0 : index
    %c0_39 = arith.constant 0 : index
    %61 = vector.load %arg15[%c0_38, %c0_39] : memref<1x3xf32, #tpu.memory_space<vmem>>, vector<1x3xf32>
    %62 = vector.broadcast %61 : vector<1x3xf32> to vector<8x3xf32>
    %63 = arith.addf %60, %62 : vector<8x3xf32>
    %c0_40 = arith.constant 0 : index
    %c0_41 = arith.constant 0 : index
    %64 = vector.load %arg16[%c0_40, %c0_41] : memref<8x3xf32, #tpu.memory_space<vmem>>, vector<8x3xf32>
    tpu.vector_store %arg16[%c0_40, %c0_41], %63 {strides = array<i32>} : memref<8x3xf32, #tpu.memory_space<vmem>>, vector<8x3xf32>,
    return
  }
  func.func @transform_0(%arg0: i32) -> (i32, i32) {
    %c0_i32 = arith.constant 0 : i32
    %c0_i32_0 = arith.constant 0 : i32
    return %arg0, %c0_i32 : i32, i32
  }
  func.func @transform_1(%arg0: i32) -> (i32, i32) {
    %c0_i32 = arith.constant 0 : i32
    %c0_i32_0 = arith.constant 0 : i32
    return %arg0, %c0_i32 : i32, i32
  }
  func.func @transform_2(%arg0: i32) -> (i32, i32) {
    %c0_i32 = arith.constant 0 : i32
    %c0_i32_0 = arith.constant 0 : i32
    %c0_i32_1 = arith.constant 0 : i32
    return %c0_i32, %c0_i32_0 : i32, i32
  }
  func.func @transform_3(%arg0: i32) -> (i32, i32) {
    %c0_i32 = arith.constant 0 : i32
    %c0_i32_0 = arith.constant 0 : i32
    %c0_i32_1 = arith.constant 0 : i32
    return %c0_i32, %c0_i32_0 : i32, i32
  }
  func.func @transform_4(%arg0: i32) -> (i32, i32) {
    %c0_i32 = arith.constant 0 : i32
    %c0_i32_0 = arith.constant 0 : i32
    %c0_i32_1 = arith.constant 0 : i32
    return %c0_i32, %c0_i32_0 : i32, i32
  }
  func.func @transform_5(%arg0: i32) -> (i32, i32) {
    %c0_i32 = arith.constant 0 : i32
    %c0_i32_0 = arith.constant 0 : i32
    %c0_i32_1 = arith.constant 0 : i32
    return %c0_i32, %c0_i32_0 : i32, i32
  }
  func.func @transform_6(%arg0: i32) -> (i32, i32) {
    %c0_i32 = arith.constant 0 : i32
    %c0_i32_0 = arith.constant 0 : i32
    %c0_i32_1 = arith.constant 0 : i32
    return %c0_i32, %c0_i32_0 : i32, i32
  }
  func.func @transform_7(%arg0: i32) -> (i32, i32) {
    %c0_i32 = arith.constant 0 : i32
    %c0_i32_0 = arith.constant 0 : i32
    %c0_i32_1 = arith.constant 0 : i32
    return %c0_i32, %c0_i32_0 : i32, i32
  }
  func.func @transform_8(%arg0: i32) -> (i32, i32) {
    %c0_i32 = arith.constant 0 : i32
    %c0_i32_0 = arith.constant 0 : i32
    %c0_i32_1 = arith.constant 0 : i32
    return %c0_i32, %c0_i32_0 : i32, i32
  }
  func.func @transform_9(%arg0: i32) -> (i32, i32) {
    %c0_i32 = arith.constant 0 : i32
    %c0_i32_0 = arith.constant 0 : i32
    %c0_i32_1 = arith.constant 0 : i32
    return %c0_i32, %c0_i32_0 : i32, i32
  }
  func.func @transform_10(%arg0: i32) -> (i32, i32) {
    %c0_i32 = arith.constant 0 : i32
    %c0_i32_0 = arith.constant 0 : i32
    %c0_i32_1 = arith.constant 0 : i32
    return %c0_i32, %c0_i32_0 : i32, i32
  }
  func.func @transform_11(%arg0: i32) -> (i32, i32) {
    %c0_i32 = arith.constant 0 : i32
    %c0_i32_0 = arith.constant 0 : i32
    %c0_i32_1 = arith.constant 0 : i32
    return %c0_i32, %c0_i32_0 : i32, i32
  }
  func.func @transform_12(%arg0: i32) -> (i32, i32) {
    %c0_i32 = arith.constant 0 : i32
    %c0_i32_0 = arith.constant 0 : i32
    %c0_i32_1 = arith.constant 0 : i32
    return %c0_i32, %c0_i32_0 : i32, i32
  }
  func.func @transform_13(%arg0: i32) -> (i32, i32) {
    %c0_i32 = arith.constant 0 : i32
    %c0_i32_0 = arith.constant 0 : i32
    %c0_i32_1 = arith.constant 0 : i32
    return %c0_i32, %c0_i32_0 : i32, i32
  }
  func.func @transform_14(%arg0: i32) -> (i32, i32) {
    %c0_i32 = arith.constant 0 : i32
    %c0_i32_0 = arith.constant 0 : i32
    %c0_i32_1 = arith.constant 0 : i32
    return %c0_i32, %c0_i32_0 : i32, i32
  }
  func.func @transform_15(%arg0: i32) -> (i32, i32) {
    %c0_i32 = arith.constant 0 : i32
    %c0_i32_0 = arith.constant 0 : i32
    return %arg0, %c0_i32 : i32, i32
  }
}

</mosaic_0001>

<llo_original>
// kernel: cnn_qnet_forward.1
$region0: #{cnn_qnet_forward.1}
  #allocation0 [shape = 'u32[]', space=smem, size = 0x4, offset = 0x4, fixed_abs, tag = 'smem constant byte address 0x4 - core index']
  #allocation1 [shape = 'u32[72,128]{1,0:T(1,128)}', space=vmem, size = 0x9000, scoped, tag = 'internal scratch']
  %s0 = inlined_call_operand.vmem [shape: f32[8,256], index: 0, kind: input, shape index: {}]
  %s1 = inlined_call_operand.vmem [shape: f32[8,11], index: 1, kind: input, shape index: {}]
  %s2 = inlined_call_operand.hbm [shape: bf16[256,4096], index: 2, kind: input, shape index: {}]
  %s3 = inlined_call_operand.hbm [shape: f32[1,4096], index: 3, kind: input, shape index: {}]
  %s4 = inlined_call_operand.hbm [shape: bf16[1024,2048], index: 4, kind: input, shape index: {}]
  %s5 = inlined_call_operand.hbm [shape: f32[1,2048], index: 5, kind: input, shape index: {}]
  %s6 = inlined_call_operand.hbm [shape: bf16[512,512], index: 6, kind: input, shape index: {}]
  %s7 = inlined_call_operand.hbm [shape: f32[1,512], index: 7, kind: input, shape index: {}]
  %s8 = inlined_call_operand.vmem [shape: bf16[512,64], index: 8, kind: input, shape index: {}]
  %s9 = inlined_call_operand.hbm [shape: f32[1,64], index: 9, kind: input, shape index: {}]
  %s10 = inlined_call_operand.hbm [shape: bf16[64,256], index: 10, kind: input, shape index: {}]
  %s11 = inlined_call_operand.hbm [shape: bf16[11,256], index: 11, kind: input, shape index: {}]
  %s12 = inlined_call_operand.hbm [shape: f32[1,256], index: 12, kind: input, shape index: {}]
  %s13 = inlined_call_operand.vmem [shape: bf16[256,3], index: 13, kind: input, shape index: {}]
  %s14 = inlined_call_operand.hbm [shape: f32[1,3], index: 14, kind: input, shape index: {}]
  %s15 = inlined_call_operand.vmem [shape: f32[8,3], index: 15, kind: output, shape index: {}]
  %s16 = sld [smem:[#allocation0]]
  $region114: #{cnn_qnet_forward.1} parent=0
    _
  %s18 = ssub.s32 1, %s16
  %s19 = scalar_select 0, %s18, %s16
  $region1: #{cnn_qnet_forward.1} parent=0
    #allocation2 [shape = 'u8[2097152]{0}', space=vmem, size = 0x200000, scoped, tag = 'input window, operand 2, single buffered']
    #allocation3 [shape = 's32[1]{0}', space=sflag, size = 0x4, scoped, tag = 'scoped memory for cnn_qnet_forward.1']
    #allocation4 [shape = 'u8[16384]{0}', space=vmem, size = 0x4000, scoped, tag = 'input window, operand 3, single buffered']
    #allocation5 [shape = 's32[1]{0}', space=sflag, size = 0x4, scoped, tag = 'scoped memory for cnn_qnet_forward.1']
    #allocation6 [shape = 'u8[4194304]{0}', space=vmem, size = 0x400000, scoped, tag = 'input window, operand 4, single buffered']
    #allocation7 [shape = 'u8[8192]{0}', space=vmem, size = 0x2000, scoped, tag = 'input window, operand 5, single buffered']
    #allocation8 [shape = 's32[1]{0}', space=sflag, size = 0x4, scoped, tag = 'scoped memory for cnn_qnet_forward.1']
    #allocation9 [shape = 'u8[524288]{0}', space=vmem, size = 0x80000, scoped, tag = 'input window, operand 6, single buffered']
    #allocation10 [shape = 'u8[2048]{0}', space=vmem, size = 0x800, scoped, tag = 'input window, operand 7, single buffered']
    #allocation11 [shape = 's32[1]{0}', space=sflag, size = 0x4, scoped, tag = 'scoped memory for cnn_qnet_forward.1']
    #allocation12 [shape = 'u8[512]{0}', space=vmem, size = 0x400, scoped, tag = 'input window, operand 9, single buffered']
    #allocation13 [shape = 'u8[32768]{0}', space=vmem, size = 0x8000, scoped, tag = 'input window, operand 10, single buffered']
    #allocation14 [shape = 's32[1]{0}', space=sflag, size = 0x4, scoped, tag = 'scoped memory for cnn_qnet_forward.1']
    #allocation15 [shape = 'u8[8192]{0}', space=vmem, size = 0x2000, scoped, tag = 'input window, operand 11, single buffered']
    #allocation16 [shape = 'u8[1024]{0}', space=vmem, size = 0x400, scoped, tag = 'input window, operand 12, single buffered']
    #allocation17 [shape = 's32[1]{0}', space=sflag, size = 0x4, scoped, tag = 'scoped memory for cnn_qnet_forward.1']
    #allocation18 [shape = 'u8[512]{0}', space=vmem, size = 0x400, scoped, tag = 'input window, operand 14, single buffered']
    %20 = vsyncpa [#allocation3], 0
    %21 = vsyncpa [#allocation5], 0
    %22 = vsyncpa [#allocation8], 0
    %23 = vsyncpa [#allocation11], 0
    %24 = vsyncpa [#allocation14], 0
    %25 = vsyncpa [#allocation17], 0
    // Predicated region
    $region2: #{cnn_qnet_forward.1} parent=1 // pred_check
      _
    $region3: #{cnn_qnet_forward.1} parent=1 // pred_check_branch
      %27 = sbr.rel (0) target = $region5
    $region4: #{cnn_qnet_forward.1} parent=1 // pred_region
      _
    $region5: #{cnn_qnet_forward.1} parent=1 // pred_fallthru
      _
    // Predicated region
    $region6: #{cnn_qnet_forward.1} parent=1 // pred_check
      _
    $region7: #{cnn_qnet_forward.1} parent=1 // pred_check_branch
      %29 = sbr.rel (0) target = $region9
    $region8: #{cnn_qnet_forward.1} parent=1 // pred_region
      _
    $region9: #{cnn_qnet_forward.1} parent=1 // pred_fallthru
      _
    // Predicated region
    $region10: #{cnn_qnet_forward.1} parent=1 // pred_check
      _
    $region11: #{cnn_qnet_forward.1} parent=1 // pred_check_branch
      %31 = sbr.rel (0) target = $region13
    $region12: #{cnn_qnet_forward.1} parent=1 // pred_region
      %33 = vsyncadd [#allocation3], 0
      %s34 = sshll.u32 %s2, 4
      %s35 = int_to_ptr.hbm [resolvable:$true] %s34
      %s36 = sshll.u32 [#allocation2], 4
      %s37 = int_to_ptr.vmem [resolvable:$true] %s36
      %42 = dma.hbm_to_vmem [thread:$0]  %s35, 65536, %s37, [#allocation3], 2048, 2048, 128
    $region13: #{cnn_qnet_forward.1} parent=1 // pred_fallthru
      _
    // Predicated region
    $region14: #{cnn_qnet_forward.1} parent=1 // pred_check
      _
    $region15: #{cnn_qnet_forward.1} parent=1 // pred_check_branch
      %44 = sbr.rel (0) target = $region17
    $region16: #{cnn_qnet_forward.1} parent=1 // pred_region
      %46 = vsyncadd [#allocation5], 0
      %s48 = sshll.u32 %s3, 4
      %s49 = int_to_ptr.hbm [resolvable:$true] %s48
      %s50 = sshll.u32 [#allocation4], 4
      %s51 = int_to_ptr.vmem [resolvable:$true] %s50
      %53 = dma.hbm_to_vmem [thread:$0]  %s49, 512, %s51, [#allocation5]
    $region17: #{cnn_qnet_forward.1} parent=1 // pred_fallthru
      _
    // Predicated region
    $region18: #{cnn_qnet_forward.1} parent=1 // pred_check
      _
    $region19: #{cnn_qnet_forward.1} parent=1 // pred_check_branch
      %55 = sbr.rel (0) target = $region21
    $region20: #{cnn_qnet_forward.1} parent=1 // pred_region
      %57 = vsyncadd [#allocation5], 0
      %s58 = sshll.u32 %s4, 4
      %s59 = int_to_ptr.hbm [resolvable:$true] %s58
      %s60 = sshll.u32 [#allocation6], 4
      %s61 = int_to_ptr.vmem [resolvable:$true] %s60
      %66 = dma.hbm_to_vmem [thread:$0]  %s59, 131072, %s61, [#allocation5], 1024, 1024, 64
    $region21: #{cnn_qnet_forward.1} parent=1 // pred_fallthru
      _
    // Predicated region
    $region22: #{cnn_qnet_forward.1} parent=1 // pred_check
      _
    $region23: #{cnn_qnet_forward.1} parent=1 // pred_check_branch
      %68 = sbr.rel (0) target = $region25
    $region24: #{cnn_qnet_forward.1} parent=1 // pred_region
      %70 = vsyncadd [#allocation8], 0
      %s72 = sshll.u32 %s5, 4
      %s73 = int_to_ptr.hbm [resolvable:$true] %s72
      %s74 = sshll.u32 [#allocation7], 4
      %s75 = int_to_ptr.vmem [resolvable:$true] %s74
      %77 = dma.hbm_to_vmem [thread:$0]  %s73, 256, %s75, [#allocation8]
    $region25: #{cnn_qnet_forward.1} parent=1 // pred_fallthru
      _
    // Predicated region
    $region26: #{cnn_qnet_forward.1} parent=1 // pred_check
      _
    $region27: #{cnn_qnet_forward.1} parent=1 // pred_check_branch
      %79 = sbr.rel (0) target = $region29
    $region28: #{cnn_qnet_forward.1} parent=1 // pred_region
      %81 = vsyncadd [#allocation8], 0
      %s82 = sshll.u32 %s6, 4
      %s83 = int_to_ptr.hbm [resolvable:$true] %s82
      %s84 = sshll.u32 [#allocation9], 4
      %s85 = int_to_ptr.vmem [resolvable:$true] %s84
      %90 = dma.hbm_to_vmem [thread:$0]  %s83, 16384, %s85, [#allocation8], 256, 256, 16
    $region29: #{cnn_qnet_forward.1} parent=1 // pred_fallthru
      _
    // Predicated region
    $region30: #{cnn_qnet_forward.1} parent=1 // pred_check
      _
    $region31: #{cnn_qnet_forward.1} parent=1 // pred_check_branch
      %92 = sbr.rel (0) target = $region33
    $region32: #{cnn_qnet_forward.1} parent=1 // pred_region
      %94 = vsyncadd [#allocation11], 0
      %s96 = sshll.u32 %s7, 4
      %s97 = int_to_ptr.hbm [resolvable:$true] %s96
      %s98 = sshll.u32 [#allocation10], 4
      %s99 = int_to_ptr.vmem [resolvable:$true] %s98
      %101 = dma.hbm_to_vmem [thread:$0]  %s97, 64, %s99, [#allocation11]
    $region33: #{cnn_qnet_forward.1} parent=1 // pred_fallthru
      _
    // Predicated region
    $region34: #{cnn_qnet_forward.1} parent=1 // pred_check
      _
    $region35: #{cnn_qnet_forward.1} parent=1 // pred_check_branch
      %103 = sbr.rel (0) target = $region37
    $region36: #{cnn_qnet_forward.1} parent=1 // pred_region
      _
    $region37: #{cnn_qnet_forward.1} parent=1 // pred_fallthru
      _
    // Predicated region
    $region38: #{cnn_qnet_forward.1} parent=1 // pred_check
      _
    $region39: #{cnn_qnet_forward.1} parent=1 // pred_check_branch
      %105 = sbr.rel (0) target = $region41
    $region40: #{cnn_qnet_forward.1} parent=1 // pred_region
      %107 = vsyncadd [#allocation11], 0
      %s109 = sshll.u32 %s9, 4
      %s110 = int_to_ptr.hbm [resolvable:$true] %s109
      %s111 = sshll.u32 [#allocation12], 4
      %s112 = int_to_ptr.vmem [resolvable:$true] %s111
      %114 = dma.hbm_to_vmem [thread:$0]  %s110, 16, %s112, [#allocation11]
    $region41: #{cnn_qnet_forward.1} parent=1 // pred_fallthru
      _
    // Predicated region
    $region42: #{cnn_qnet_forward.1} parent=1 // pred_check
      _
    $region43: #{cnn_qnet_forward.1} parent=1 // pred_check_branch
      %116 = sbr.rel (0) target = $region45
    $region44: #{cnn_qnet_forward.1} parent=1 // pred_region
      %118 = vsyncadd [#allocation14], 0
      %s119 = sshll.u32 %s10, 4
      %s120 = int_to_ptr.hbm [resolvable:$true] %s119
      %s121 = sshll.u32 [#allocation13], 4
      %s122 = int_to_ptr.vmem [resolvable:$true] %s121
      %127 = dma.hbm_to_vmem [thread:$0]  %s120, 1024, %s122, [#allocation14], 128, 128, 8
    $region45: #{cnn_qnet_forward.1} parent=1 // pred_fallthru
      _
    // Predicated region
    $region46: #{cnn_qnet_forward.1} parent=1 // pred_check
      _
    $region47: #{cnn_qnet_forward.1} parent=1 // pred_check_branch
      %129 = sbr.rel (0) target = $region49
    $region48: #{cnn_qnet_forward.1} parent=1 // pred_region
      %131 = vsyncadd [#allocation14], 0
      %s132 = sshll.u32 %s11, 4
      %s133 = int_to_ptr.hbm [resolvable:$true] %s132
      %s134 = sshll.u32 [#allocation15], 4
      %s135 = int_to_ptr.vmem [resolvable:$true] %s134
      %140 = dma.hbm_to_vmem [thread:$0]  %s133, 256, %s135, [#allocation14], 128, 128, 8
    $region49: #{cnn_qnet_forward.1} parent=1 // pred_fallthru
      _
    // Predicated region
    $region50: #{cnn_qnet_forward.1} parent=1 // pred_check
      _
    $region51: #{cnn_qnet_forward.1} parent=1 // pred_check_branch
      %142 = sbr.rel (0) target = $region53
    $region52: #{cnn_qnet_forward.1} parent=1 // pred_region
      %144 = vsyncadd [#allocation17], 0
      %s146 = sshll.u32 %s12, 4
      %s147 = int_to_ptr.hbm [resolvable:$true] %s146
      %s148 = sshll.u32 [#allocation16], 4
      %s149 = int_to_ptr.vmem [resolvable:$true] %s148
      %151 = dma.hbm_to_vmem [thread:$0]  %s147, 32, %s149, [#allocation17]
    $region53: #{cnn_qnet_forward.1} parent=1 // pred_fallthru
      _
    // Predicated region
    $region54: #{cnn_qnet_forward.1} parent=1 // pred_check
      _
    $region55: #{cnn_qnet_forward.1} parent=1 // pred_check_branch
      %153 = sbr.rel (0) target = $region57
    $region56: #{cnn_qnet_forward.1} parent=1 // pred_region
      _
    $region57: #{cnn_qnet_forward.1} parent=1 // pred_fallthru
      _
    // Predicated region
    $region58: #{cnn_qnet_forward.1} parent=1 // pred_check
      _
    $region59: #{cnn_qnet_forward.1} parent=1 // pred_check_branch
      %155 = sbr.rel (0) target = $region61
    $region60: #{cnn_qnet_forward.1} parent=1 // pred_region
      %157 = vsyncadd [#allocation17], 0
      %s159 = sshll.u32 %s14, 4
      %s160 = int_to_ptr.hbm [resolvable:$true] %s159
      %s161 = sshll.u32 [#allocation18], 4
      %s162 = int_to_ptr.vmem [resolvable:$true] %s161
      %164 = dma.hbm_to_vmem [thread:$0]  %s160, 16, %s162, [#allocation17]
    $region61: #{cnn_qnet_forward.1} parent=1 // pred_fallthru
      _
    // Predicated region
    $region62: #{cnn_qnet_forward.1} parent=1 // pred_check
      _
    $region63: #{cnn_qnet_forward.1} parent=1 // pred_check_branch
      %166 = sbr.rel (0) target = $region65
    $region64: #{cnn_qnet_forward.1} parent=1 // pred_region
      %168 = dma.done [#allocation3], 65536
    $region65: #{cnn_qnet_forward.1} parent=1 // pred_fallthru
      _
    // Predicated region
    $region66: #{cnn_qnet_forward.1} parent=1 // pred_check
      _
    $region67: #{cnn_qnet_forward.1} parent=1 // pred_check_branch
      %170 = sbr.rel (0) target = $region69
    $region68: #{cnn_qnet_forward.1} parent=1 // pred_region
      %172 = dma.done [#allocation5], 512
    $region69: #{cnn_qnet_forward.1} parent=1 // pred_fallthru
      _
    // Predicated region
    $region70: #{cnn_qnet_forward.1} parent=1 // pred_check
      _
    $region71: #{cnn_qnet_forward.1} parent=1 // pred_check_branch
      %174 = sbr.rel (0) target = $region73
    $region72: #{cnn_qnet_forward.1} parent=1 // pred_region
      %176 = dma.done [#allocation5], 131072
    $region73: #{cnn_qnet_forward.1} parent=1 // pred_fallthru
      _
    // Predicated region
    $region74: #{cnn_qnet_forward.1} parent=1 // pred_check
      _
    $region75: #{cnn_qnet_forward.1} parent=1 // pred_check_branch
      %178 = sbr.rel (0) target = $region77
    $region76: #{cnn_qnet_forward.1} parent=1 // pred_region
      %180 = dma.done [#allocation8], 256
    $region77: #{cnn_qnet_forward.1} parent=1 // pred_fallthru
      _
    // Predicated region
    $region78: #{cnn_qnet_forward.1} parent=1 // pred_check
      _
    $region79: #{cnn_qnet_forward.1} parent=1 // pred_check_branch
      %182 = sbr.rel (0) target = $region81
    $region80: #{cnn_qnet_forward.1} parent=1 // pred_region
      %184 = dma.done [#allocation8], 16384
    $region81: #{cnn_qnet_forward.1} parent=1 // pred_fallthru
      _
    // Predicated region
    $region82: #{cnn_qnet_forward.1} parent=1 // pred_check
      _
    $region83: #{cnn_qnet_forward.1} parent=1 // pred_check_branch
      %186 = sbr.rel (0) target = $region85
    $region84: #{cnn_qnet_forward.1} parent=1 // pred_region
      %188 = dma.done [#allocation11], 64
    $region85: #{cnn_qnet_forward.1} parent=1 // pred_fallthru
      _
    // Predicated region
    $region86: #{cnn_qnet_forward.1} parent=1 // pred_check
      _
    $region87: #{cnn_qnet_forward.1} parent=1 // pred_check_branch
      %190 = sbr.rel (0) target = $region89
    $region88: #{cnn_qnet_forward.1} parent=1 // pred_region
      %192 = dma.done [#allocation11], 16
    $region89: #{cnn_qnet_forward.1} parent=1 // pred_fallthru
      _
    // Predicated region
    $region90: #{cnn_qnet_forward.1} parent=1 // pred_check
      _
    $region91: #{cnn_qnet_forward.1} parent=1 // pred_check_branch
      %194 = sbr.rel (0) target = $region93
    $region92: #{cnn_qnet_forward.1} parent=1 // pred_region
      %196 = dma.done [#allocation14], 1024
    $region93: #{cnn_qnet_forward.1} parent=1 // pred_fallthru
      _
    // Predicated region
    $region94: #{cnn_qnet_forward.1} parent=1 // pred_check
      _
    $region95: #{cnn_qnet_forward.1} parent=1 // pred_check_branch
      %198 = sbr.rel (0) target = $region97
    $region96: #{cnn_qnet_forward.1} parent=1 // pred_region
      %200 = dma.done [#allocation14], 256
    $region97: #{cnn_qnet_forward.1} parent=1 // pred_fallthru
      _
    // Predicated region
    $region98: #{cnn_qnet_forward.1} parent=1 // pred_check
      _
    $region99: #{cnn_qnet_forward.1} parent=1 // pred_check_branch
      %202 = sbr.rel (0) target = $region101
    $region100: #{cnn_qnet_forward.1} parent=1 // pred_region
      %204 = dma.done [#allocation17], 32
    $region101: #{cnn_qnet_forward.1} parent=1 // pred_fallthru
      _
    // Predicated region
    $region102: #{cnn_qnet_forward.1} parent=1 // pred_check
      _
    $region103: #{cnn_qnet_forward.1} parent=1 // pred_check_branch
      %206 = sbr.rel (0) target = $region105
    $region104: #{cnn_qnet_forward.1} parent=1 // pred_region
      %208 = dma.done [#allocation17], 16
    $region105: #{cnn_qnet_forward.1} parent=1 // pred_fallthru
      _
    %v210 = vld [vmem:[%s0] sm:$0xff]
    %v211 = vld [vmem:[%s0 + $0x8] sm:$0xff]
    %v212 = vpack.c.bf16 %v210, %v210
    %v213 = vpack.c.bf16 %v211, %v211
    %v214 = vld [vmem:[#allocation2] sm:$0xff]
    %v215 = vld [vmem:[#allocation2 + $0x8] sm:$0xff]
    %v216 = vld [vmem:[#allocation2 + $0x10] sm:$0xff]
    %v217 = vld [vmem:[#allocation2 + $0x18] sm:$0xff]
    %v218 = vld [vmem:[#allocation2 + $0x20] sm:$0xff]
    %v219 = vld [vmem:[#allocation2 + $0x28] sm:$0xff]
    %v220 = vld [vmem:[#allocation2 + $0x30] sm:$0xff]
    %v221 = vld [vmem:[#allocation2 + $0x38] sm:$0xff]
    %v222 = vld [vmem:[#allocation2 + $0x40] sm:$0xff]
    %v223 = vld [vmem:[#allocation2 + $0x48] sm:$0xff]
    %v224 = vld [vmem:[#allocation2 + $0x50] sm:$0xff]
    %v225 = vld [vmem:[#allocation2 + $0x58] sm:$0xff]
    %v226 = vld [vmem:[#allocation2 + $0x60] sm:$0xff]
    %v227 = vld [vmem:[#allocation2 + $0x68] sm:$0xff]
    %v228 = vld [vmem:[#allocation2 + $0x70] sm:$0xff]
    %v229 = vld [vmem:[#allocation2 + $0x78] sm:$0xff]
    %v230 = vld [vmem:[#allocation2 + $0x80] sm:$0xff]
    %v231 = vld [vmem:[#allocation2 + $0x88] sm:$0xff]
    %v232 = vld [vmem:[#allocation2 + $0x90] sm:$0xff]
    %v233 = vld [vmem:[#allocation2 + $0x98] sm:$0xff]
    %v234 = vld [vmem:[#allocation2 + $0xa0] sm:$0xff]
    %v235 = vld [vmem:[#allocation2 + $0xa8] sm:$0xff]
    %v236 = vld [vmem:[#allocation2 + $0xb0] sm:$0xff]
    %v237 = vld [vmem:[#allocation2 + $0xb8] sm:$0xff]
    %v238 = vld [vmem:[#allocation2 + $0xc0] sm:$0xff]
    %v239 = vld [vmem:[#allocation2 + $0xc8] sm:$0xff]
    %v240 = vld [vmem:[#allocation2 + $0xd0] sm:$0xff]
    %v241 = vld [vmem:[#allocation2 + $0xd8] sm:$0xff]
    %v242 = vld [vmem:[#allocation2 + $0xe0] sm:$0xff]
    %v243 = vld [vmem:[#allocation2 + $0xe8] sm:$0xff]
    %v244 = vld [vmem:[#allocation2 + $0xf0] sm:$0xff]
    %v245 = vld [vmem:[#allocation2 + $0xf8] sm:$0xff]
    %v246 = vld [vmem:[#allocation2 + $0x100] sm:$0xff]
    %v247 = vld [vmem:[#allocation2 + $0x108] sm:$0xff]
    %v248 = vld [vmem:[#allocation2 + $0x110] sm:$0xff]
    %v249 = vld [vmem:[#allocation2 + $0x118] sm:$0xff]
    %v250 = vld [vmem:[#allocation2 + $0x120] sm:$0xff]
    %v251 = vld [vmem:[#allocation2 + $0x128] sm:$0xff]
    %v252 = vld [vmem:[#allocation2 + $0x130] sm:$0xff]
    %v253 = vld [vmem:[#allocation2 + $0x138] sm:$0xff]
    %v254 = vld [vmem:[#allocation2 + $0x140] sm:$0xff]
    %v255 = vld [vmem:[#allocation2 + $0x148] sm:$0xff]
    %v256 = vld [vmem:[#allocation2 + $0x150] sm:$0xff]
    %v257 = vld [vmem:[#allocation2 + $0x158] sm:$0xff]
    %v258 = vld [vmem:[#allocation2 + $0x160] sm:$0xff]
    %v259 = vld [vmem:[#allocation2 + $0x168] sm:$0xff]
    %v260 = vld [vmem:[#allocation2 + $0x170] sm:$0xff]
    %v261 = vld [vmem:[#allocation2 + $0x178] sm:$0xff]
    %v262 = vld [vmem:[#allocation2 + $0x180] sm:$0xff]
    %v263 = vld [vmem:[#allocation2 + $0x188] sm:$0xff]
    %v264 = vld [vmem:[#allocation2 + $0x190] sm:$0xff]
    %v265 = vld [vmem:[#allocation2 + $0x198] sm:$0xff]
    %v266 = vld [vmem:[#allocation2 + $0x1a0] sm:$0xff]
    %v267 = vld [vmem:[#allocation2 + $0x1a8] sm:$0xff]
    %v268 = vld [vmem:[#allocation2 + $0x1b0] sm:$0xff]
    %v269 = vld [vmem:[#allocation2 + $0x1b8] sm:$0xff]
    %v270 = vld [vmem:[#allocation2 + $0x1c0] sm:$0xff]
    %v271 = vld [vmem:[#allocation2 + $0x1c8] sm:$0xff]
    %v272 = vld [vmem:[#allocation2 + $0x1d0] sm:$0xff]
    %v273 = vld [vmem:[#allocation2 + $0x1d8] sm:$0xff]
    %v274 = vld [vmem:[#allocation2 + $0x1e0] sm:$0xff]
    %v275 = vld [vmem:[#allocation2 + $0x1e8] sm:$0xff]
    %v276 = vld [vmem:[#allocation2 + $0x1f0] sm:$0xff]
    %v277 = vld [vmem:[#allocation2 + $0x1f8] sm:$0xff]
    %v278 = vld [vmem:[#allocation2 + $0x200] sm:$0xff]
    %v279 = vld [vmem:[#allocation2 + $0x208] sm:$0xff]
    %v280 = vld [vmem:[#allocation2 + $0x210] sm:$0xff]
    %v281 = vld [vmem:[#allocation2 + $0x218] sm:$0xff]
    %v282 = vld [vmem:[#allocation2 + $0x220] sm:$0xff]
    %v283 = vld [vmem:[#allocation2 + $0x228] sm:$0xff]
    %v284 = vld [vmem:[#allocation2 + $0x230] sm:$0xff]
    %v285 = vld [vmem:[#allocation2 + $0x238] sm:$0xff]
    %v286 = vld [vmem:[#allocation2 + $0x240] sm:$0xff]
    %v287 = vld [vmem:[#allocation2 + $0x248] sm:$0xff]
    %v288 = vld [vmem:[#allocation2 + $0x250] sm:$0xff]
    %v289 = vld [vmem:[#allocation2 + $0x258] sm:$0xff]
    %v290 = vld [vmem:[#allocation2 + $0x260] sm:$0xff]
    %v291 = vld [vmem:[#allocation2 + $0x268] sm:$0xff]
    %v292 = vld [vmem:[#allocation2 + $0x270] sm:$0xff]
    %v293 = vld [vmem:[#allocation2 + $0x278] sm:$0xff]
    %v294 = vld [vmem:[#allocation2 + $0x280] sm:$0xff]
    %v295 = vld [vmem:[#allocation2 + $0x288] sm:$0xff]
    %v296 = vld [vmem:[#allocation2 + $0x290] sm:$0xff]
    %v297 = vld [vmem:[#allocation2 + $0x298] sm:$0xff]
    %v298 = vld [vmem:[#allocation2 + $0x2a0] sm:$0xff]
    %v299 = vld [vmem:[#allocation2 + $0x2a8] sm:$0xff]
    %v300 = vld [vmem:[#allocation2 + $0x2b0] sm:$0xff]
    %v301 = vld [vmem:[#allocation2 + $0x2b8] sm:$0xff]
    %v302 = vld [vmem:[#allocation2 + $0x2c0] sm:$0xff]
    %v303 = vld [vmem:[#allocation2 + $0x2c8] sm:$0xff]
    %v304 = vld [vmem:[#allocation2 + $0x2d0] sm:$0xff]
    %v305 = vld [vmem:[#allocation2 + $0x2d8] sm:$0xff]
    %v306 = vld [vmem:[#allocation2 + $0x2e0] sm:$0xff]
    %v307 = vld [vmem:[#allocation2 + $0x2e8] sm:$0xff]
    %v308 = vld [vmem:[#allocation2 + $0x2f0] sm:$0xff]
    %v309 = vld [vmem:[#allocation2 + $0x2f8] sm:$0xff]
    %v310 = vld [vmem:[#allocation2 + $0x300] sm:$0xff]
    %v311 = vld [vmem:[#allocation2 + $0x308] sm:$0xff]
    %v312 = vld [vmem:[#allocation2 + $0x310] sm:$0xff]
    %v313 = vld [vmem:[#allocation2 + $0x318] sm:$0xff]
    %v314 = vld [vmem:[#allocation2 + $0x320] sm:$0xff]
    %v315 = vld [vmem:[#allocation2 + $0x328] sm:$0xff]
    %v316 = vld [vmem:[#allocation2 + $0x330] sm:$0xff]
    %v317 = vld [vmem:[#allocation2 + $0x338] sm:$0xff]
    %v318 = vld [vmem:[#allocation2 + $0x340] sm:$0xff]
    %v319 = vld [vmem:[#allocation2 + $0x348] sm:$0xff]
    %v320 = vld [vmem:[#allocation2 + $0x350] sm:$0xff]
    %v321 = vld [vmem:[#allocation2 + $0x358] sm:$0xff]
    %v322 = vld [vmem:[#allocation2 + $0x360] sm:$0xff]
    %v323 = vld [vmem:[#allocation2 + $0x368] sm:$0xff]
    %v324 = vld [vmem:[#allocation2 + $0x370] sm:$0xff]
    %v325 = vld [vmem:[#allocation2 + $0x378] sm:$0xff]
    %v326 = vld [vmem:[#allocation2 + $0x380] sm:$0xff]
    %v327 = vld [vmem:[#allocation2 + $0x388] sm:$0xff]
    %v328 = vld [vmem:[#allocation2 + $0x390] sm:$0xff]
    %v329 = vld [vmem:[#allocation2 + $0x398] sm:$0xff]
    %v330 = vld [vmem:[#allocation2 + $0x3a0] sm:$0xff]
    %v331 = vld [vmem:[#allocation2 + $0x3a8] sm:$0xff]
    %v332 = vld [vmem:[#allocation2 + $0x3b0] sm:$0xff]
    %v333 = vld [vmem:[#allocation2 + $0x3b8] sm:$0xff]
    %v334 = vld [vmem:[#allocation2 + $0x3c0] sm:$0xff]
    %v335 = vld [vmem:[#allocation2 + $0x3c8] sm:$0xff]
    %v336 = vld [vmem:[#allocation2 + $0x3d0] sm:$0xff]
    %v337 = vld [vmem:[#allocation2 + $0x3d8] sm:$0xff]
    %v338 = vld [vmem:[#allocation2 + $0x3e0] sm:$0xff]
    %v339 = vld [vmem:[#allocation2 + $0x3e8] sm:$0xff]
    %v340 = vld [vmem:[#allocation2 + $0x3f0] sm:$0xff]
    %v341 = vld [vmem:[#allocation2 + $0x3f8] sm:$0xff]
    %v342 = vld [vmem:[#allocation2 + $0x400] sm:$0xff]
    %v343 = vld [vmem:[#allocation2 + $0x408] sm:$0xff]
    %v344 = vld [vmem:[#allocation2 + $0x410] sm:$0xff]
    %v345 = vld [vmem:[#allocation2 + $0x418] sm:$0xff]
    %v346 = vld [vmem:[#allocation2 + $0x420] sm:$0xff]
    %v347 = vld [vmem:[#allocation2 + $0x428] sm:$0xff]
    %v348 = vld [vmem:[#allocation2 + $0x430] sm:$0xff]
    %v349 = vld [vmem:[#allocation2 + $0x438] sm:$0xff]
    %v350 = vld [vmem:[#allocation2 + $0x440] sm:$0xff]
    %v351 = vld [vmem:[#allocation2 + $0x448] sm:$0xff]
    %v352 = vld [vmem:[#allocation2 + $0x450] sm:$0xff]
    %v353 = vld [vmem:[#allocation2 + $0x458] sm:$0xff]
    %v354 = vld [vmem:[#allocation2 + $0x460] sm:$0xff]
    %v355 = vld [vmem:[#allocation2 + $0x468] sm:$0xff]
    %v356 = vld [vmem:[#allocation2 + $0x470] sm:$0xff]
    %v357 = vld [vmem:[#allocation2 + $0x478] sm:$0xff]
    %v358 = vld [vmem:[#allocation2 + $0x480] sm:$0xff]
    %v359 = vld [vmem:[#allocation2 + $0x488] sm:$0xff]
    %v360 = vld [vmem:[#allocation2 + $0x490] sm:$0xff]
    %v361 = vld [vmem:[#allocation2 + $0x498] sm:$0xff]
    %v362 = vld [vmem:[#allocation2 + $0x4a0] sm:$0xff]
    %v363 = vld [vmem:[#allocation2 + $0x4a8] sm:$0xff]
    %v364 = vld [vmem:[#allocation2 + $0x4b0] sm:$0xff]
    %v365 = vld [vmem:[#allocation2 + $0x4b8] sm:$0xff]
    %v366 = vld [vmem:[#allocation2 + $0x4c0] sm:$0xff]
    %v367 = vld [vmem:[#allocation2 + $0x4c8] sm:$0xff]
    %v368 = vld [vmem:[#allocation2 + $0x4d0] sm:$0xff]
    %v369 = vld [vmem:[#allocation2 + $0x4d8] sm:$0xff]
    %v370 = vld [vmem:[#allocation2 + $0x4e0] sm:$0xff]
    %v371 = vld [vmem:[#allocation2 + $0x4e8] sm:$0xff]
    %v372 = vld [vmem:[#allocation2 + $0x4f0] sm:$0xff]
    %v373 = vld [vmem:[#allocation2 + $0x4f8] sm:$0xff]
    %v374 = vld [vmem:[#allocation2 + $0x500] sm:$0xff]
    %v375 = vld [vmem:[#allocation2 + $0x508] sm:$0xff]
    %v376 = vld [vmem:[#allocation2 + $0x510] sm:$0xff]
    %v377 = vld [vmem:[#allocation2 + $0x518] sm:$0xff]
    %v378 = vld [vmem:[#allocation2 + $0x520] sm:$0xff]
    %v379 = vld [vmem:[#allocation2 + $0x528] sm:$0xff]
    %v380 = vld [vmem:[#allocation2 + $0x530] sm:$0xff]
    %v381 = vld [vmem:[#allocation2 + $0x538] sm:$0xff]
    %v382 = vld [vmem:[#allocation2 + $0x540] sm:$0xff]
    %v383 = vld [vmem:[#allocation2 + $0x548] sm:$0xff]
    %v384 = vld [vmem:[#allocation2 + $0x550] sm:$0xff]
    %v385 = vld [vmem:[#allocation2 + $0x558] sm:$0xff]
    %v386 = vld [vmem:[#allocation2 + $0x560] sm:$0xff]
    %v387 = vld [vmem:[#allocation2 + $0x568] sm:$0xff]
    %v388 = vld [vmem:[#allocation2 + $0x570] sm:$0xff]
    %v389 = vld [vmem:[#allocation2 + $0x578] sm:$0xff]
    %v390 = vld [vmem:[#allocation2 + $0x580] sm:$0xff]
    %v391 = vld [vmem:[#allocation2 + $0x588] sm:$0xff]
    %v392 = vld [vmem:[#allocation2 + $0x590] sm:$0xff]
    %v393 = vld [vmem:[#allocation2 + $0x598] sm:$0xff]
    %v394 = vld [vmem:[#allocation2 + $0x5a0] sm:$0xff]
    %v395 = vld [vmem:[#allocation2 + $0x5a8] sm:$0xff]
    %v396 = vld [vmem:[#allocation2 + $0x5b0] sm:$0xff]
    %v397 = vld [vmem:[#allocation2 + $0x5b8] sm:$0xff]
    %v398 = vld [vmem:[#allocation2 + $0x5c0] sm:$0xff]
    %v399 = vld [vmem:[#allocation2 + $0x5c8] sm:$0xff]
    %v400 = vld [vmem:[#allocation2 + $0x5d0] sm:$0xff]
    %v401 = vld [vmem:[#allocation2 + $0x5d8] sm:$0xff]
    %v402 = vld [vmem:[#allocation2 + $0x5e0] sm:$0xff]
    %v403 = vld [vmem:[#allocation2 + $0x5e8] sm:$0xff]
    %v404 = vld [vmem:[#allocation2 + $0x5f0] sm:$0xff]
    %v405 = vld [vmem:[#allocation2 + $0x5f8] sm:$0xff]
    %v406 = vld [vmem:[#allocation2 + $0x600] sm:$0xff]
    %v407 = vld [vmem:[#allocation2 + $0x608] sm:$0xff]
    %v408 = vld [vmem:[#allocation2 + $0x610] sm:$0xff]
    %v409 = vld [vmem:[#allocation2 + $0x618] sm:$0xff]
    %v410 = vld [vmem:[#allocation2 + $0x620] sm:$0xff]
    %v411 = vld [vmem:[#allocation2 + $0x628] sm:$0xff]
    %v412 = vld [vmem:[#allocation2 + $0x630] sm:$0xff]
    %v413 = vld [vmem:[#allocation2 + $0x638] sm:$0xff]
    %v414 = vld [vmem:[#allocation2 + $0x640] sm:$0xff]
    %v415 = vld [vmem:[#allocation2 + $0x648] sm:$0xff]
    %v416 = vld [vmem:[#allocation2 + $0x650] sm:$0xff]
    %v417 = vld [vmem:[#allocation2 + $0x658] sm:$0xff]
    %v418 = vld [vmem:[#allocation2 + $0x660] sm:$0xff]
    %v419 = vld [vmem:[#allocation2 + $0x668] sm:$0xff]
    %v420 = vld [vmem:[#allocation2 + $0x670] sm:$0xff]
    %v421 = vld [vmem:[#allocation2 + $0x678] sm:$0xff]
    %v422 = vld [vmem:[#allocation2 + $0x680] sm:$0xff]
    %v423 = vld [vmem:[#allocation2 + $0x688] sm:$0xff]
    %v424 = vld [vmem:[#allocation2 + $0x690] sm:$0xff]
    %v425 = vld [vmem:[#allocation2 + $0x698] sm:$0xff]
    %v426 = vld [vmem:[#allocation2 + $0x6a0] sm:$0xff]
    %v427 = vld [vmem:[#allocation2 + $0x6a8] sm:$0xff]
    %v428 = vld [vmem:[#allocation2 + $0x6b0] sm:$0xff]
    %v429 = vld [vmem:[#allocation2 + $0x6b8] sm:$0xff]
    %v430 = vld [vmem:[#allocation2 + $0x6c0] sm:$0xff]
    %v431 = vld [vmem:[#allocation2 + $0x6c8] sm:$0xff]
    %v432 = vld [vmem:[#allocation2 + $0x6d0] sm:$0xff]
    %v433 = vld [vmem:[#allocation2 + $0x6d8] sm:$0xff]
    %v434 = vld [vmem:[#allocation2 + $0x6e0] sm:$0xff]
    %v435 = vld [vmem:[#allocation2 + $0x6e8] sm:$0xff]
    %v436 = vld [vmem:[#allocation2 + $0x6f0] sm:$0xff]
    %v437 = vld [vmem:[#allocation2 + $0x6f8] sm:$0xff]
    %v438 = vld [vmem:[#allocation2 + $0x700] sm:$0xff]
    %v439 = vld [vmem:[#allocation2 + $0x708] sm:$0xff]
    %v440 = vld [vmem:[#allocation2 + $0x710] sm:$0xff]
    %v441 = vld [vmem:[#allocation2 + $0x718] sm:$0xff]
    %v442 = vld [vmem:[#allocation2 + $0x720] sm:$0xff]
    %v443 = vld [vmem:[#allocation2 + $0x728] sm:$0xff]
    %v444 = vld [vmem:[#allocation2 + $0x730] sm:$0xff]
    %v445 = vld [vmem:[#allocation2 + $0x738] sm:$0xff]
    %v446 = vld [vmem:[#allocation2 + $0x740] sm:$0xff]
    %v447 = vld [vmem:[#allocation2 + $0x748] sm:$0xff]
    %v448 = vld [vmem:[#allocation2 + $0x750] sm:$0xff]
    %v449 = vld [vmem:[#allocation2 + $0x758] sm:$0xff]
    %v450 = vld [vmem:[#allocation2 + $0x760] sm:$0xff]
    %v451 = vld [vmem:[#allocation2 + $0x768] sm:$0xff]
    %v452 = vld [vmem:[#allocation2 + $0x770] sm:$0xff]
    %v453 = vld [vmem:[#allocation2 + $0x778] sm:$0xff]
    %v454 = vld [vmem:[#allocation2 + $0x780] sm:$0xff]
    %v455 = vld [vmem:[#allocation2 + $0x788] sm:$0xff]
    %v456 = vld [vmem:[#allocation2 + $0x790] sm:$0xff]
    %v457 = vld [vmem:[#allocation2 + $0x798] sm:$0xff]
    %v458 = vld [vmem:[#allocation2 + $0x7a0] sm:$0xff]
    %v459 = vld [vmem:[#allocation2 + $0x7a8] sm:$0xff]
    %v460 = vld [vmem:[#allocation2 + $0x7b0] sm:$0xff]
    %v461 = vld [vmem:[#allocation2 + $0x7b8] sm:$0xff]
    %v462 = vld [vmem:[#allocation2 + $0x7c0] sm:$0xff]
    %v463 = vld [vmem:[#allocation2 + $0x7c8] sm:$0xff]
    %v464 = vld [vmem:[#allocation2 + $0x7d0] sm:$0xff]
    %v465 = vld [vmem:[#allocation2 + $0x7d8] sm:$0xff]
    %v466 = vld [vmem:[#allocation2 + $0x7e0] sm:$0xff]
    %v467 = vld [vmem:[#allocation2 + $0x7e8] sm:$0xff]
    %v468 = vld [vmem:[#allocation2 + $0x7f0] sm:$0xff]
    %v469 = vld [vmem:[#allocation2 + $0x7f8] sm:$0xff]
    %v470 = vld [vmem:[#allocation2 + $0x800] sm:$0xff]
    %v471 = vld [vmem:[#allocation2 + $0x808] sm:$0xff]
    %v472 = vld [vmem:[#allocation2 + $0x810] sm:$0xff]
    %v473 = vld [vmem:[#allocation2 + $0x818] sm:$0xff]
    %v474 = vld [vmem:[#allocation2 + $0x820] sm:$0xff]
    %v475 = vld [vmem:[#allocation2 + $0x828] sm:$0xff]
    %v476 = vld [vmem:[#allocation2 + $0x830] sm:$0xff]
    %v477 = vld [vmem:[#allocation2 + $0x838] sm:$0xff]
    %v478 = vld [vmem:[#allocation2 + $0x840] sm:$0xff]
    %v479 = vld [vmem:[#allocation2 + $0x848] sm:$0xff]
    %v480 = vld [vmem:[#allocation2 + $0x850] sm:$0xff]
    %v481 = vld [vmem:[#allocation2 + $0x858] sm:$0xff]
    %v482 = vld [vmem:[#allocation2 + $0x860] sm:$0xff]
    %v483 = vld [vmem:[#allocation2 + $0x868] sm:$0xff]
    %v484 = vld [vmem:[#allocation2 + $0x870] sm:$0xff]
    %v485 = vld [vmem:[#allocation2 + $0x878] sm:$0xff]
    %v486 = vld [vmem:[#allocation2 + $0x880] sm:$0xff]
    %v487 = vld [vmem:[#allocation2 + $0x888] sm:$0xff]
    %v488 = vld [vmem:[#allocation2 + $0x890] sm:$0xff]
    %v489 = vld [vmem:[#allocation2 + $0x898] sm:$0xff]
    %v490 = vld [vmem:[#allocation2 + $0x8a0] sm:$0xff]
    %v491 = vld [vmem:[#allocation2 + $0x8a8] sm:$0xff]
    %v492 = vld [vmem:[#allocation2 + $0x8b0] sm:$0xff]
    %v493 = vld [vmem:[#allocation2 + $0x8b8] sm:$0xff]
    %v494 = vld [vmem:[#allocation2 + $0x8c0] sm:$0xff]
    %v495 = vld [vmem:[#allocation2 + $0x8c8] sm:$0xff]
    %v496 = vld [vmem:[#allocation2 + $0x8d0] sm:$0xff]
    %v497 = vld [vmem:[#allocation2 + $0x8d8] sm:$0xff]
    %v498 = vld [vmem:[#allocation2 + $0x8e0] sm:$0xff]
    %v499 = vld [vmem:[#allocation2 + $0x8e8] sm:$0xff]
    %v500 = vld [vmem:[#allocation2 + $0x8f0] sm:$0xff]
    %v501 = vld [vmem:[#allocation2 + $0x8f8] sm:$0xff]
    %v502 = vld [vmem:[#allocation2 + $0x900] sm:$0xff]
    %v503 = vld [vmem:[#allocation2 + $0x908] sm:$0xff]
    %v504 = vld [vmem:[#allocation2 + $0x910] sm:$0xff]
    %v505 = vld [vmem:[#allocation2 + $0x918] sm:$0xff]
    %v506 = vld [vmem:[#allocation2 + $0x920] sm:$0xff]
    %v507 = vld [vmem:[#allocation2 + $0x928] sm:$0xff]
    %v508 = vld [vmem:[#allocation2 + $0x930] sm:$0xff]
    %v509 = vld [vmem:[#allocation2 + $0x938] sm:$0xff]
    %v510 = vld [vmem:[#allocation2 + $0x940] sm:$0xff]
    %v511 = vld [vmem:[#allocation2 + $0x948] sm:$0xff]
    %v512 = vld [vmem:[#allocation2 + $0x950] sm:$0xff]
    %v513 = vld [vmem:[#allocation2 + $0x958] sm:$0xff]
    %v514 = vld [vmem:[#allocation2 + $0x960] sm:$0xff]
    %v515 = vld [vmem:[#allocation2 + $0x968] sm:$0xff]
    %v516 = vld [vmem:[#allocation2 + $0x970] sm:$0xff]
    %v517 = vld [vmem:[#allocation2 + $0x978] sm:$0xff]
    %v518 = vld [vmem:[#allocation2 + $0x980] sm:$0xff]
    %v519 = vld [vmem:[#allocation2 + $0x988] sm:$0xff]
    %v520 = vld [vmem:[#allocation2 + $0x990] sm:$0xff]
    %v521 = vld [vmem:[#allocation2 + $0x998] sm:$0xff]
    %v522 = vld [vmem:[#allocation2 + $0x9a0] sm:$0xff]
    %v523 = vld [vmem:[#allocation2 + $0x9a8] sm:$0xff]
    %v524 = vld [vmem:[#allocation2 + $0x9b0] sm:$0xff]
    %v525 = vld [vmem:[#allocation2 + $0x9b8] sm:$0xff]
    %v526 = vld [vmem:[#allocation2 + $0x9c0] sm:$0xff]
    %v527 = vld [vmem:[#allocation2 + $0x9c8] sm:$0xff]
    %v528 = vld [vmem:[#allocation2 + $0x9d0] sm:$0xff]
    %v529 = vld [vmem:[#allocation2 + $0x9d8] sm:$0xff]
    %v530 = vld [vmem:[#allocation2 + $0x9e0] sm:$0xff]
    %v531 = vld [vmem:[#allocation2 + $0x9e8] sm:$0xff]
    %v532 = vld [vmem:[#allocation2 + $0x9f0] sm:$0xff]
    %v533 = vld [vmem:[#allocation2 + $0x9f8] sm:$0xff]
    %v534 = vld [vmem:[#allocation2 + $0xa00] sm:$0xff]
    %v535 = vld [vmem:[#allocation2 + $0xa08] sm:$0xff]
    %v536 = vld [vmem:[#allocation2 + $0xa10] sm:$0xff]
    %v537 = vld [vmem:[#allocation2 + $0xa18] sm:$0xff]
    %v538 = vld [vmem:[#allocation2 + $0xa20] sm:$0xff]
    %v539 = vld [vmem:[#allocation2 + $0xa28] sm:$0xff]
    %v540 = vld [vmem:[#allocation2 + $0xa30] sm:$0xff]
    %v541 = vld [vmem:[#allocation2 + $0xa38] sm:$0xff]
    %v542 = vld [vmem:[#allocation2 + $0xa40] sm:$0xff]
    %v543 = vld [vmem:[#allocation2 + $0xa48] sm:$0xff]
    %v544 = vld [vmem:[#allocation2 + $0xa50] sm:$0xff]
    %v545 = vld [vmem:[#allocation2 + $0xa58] sm:$0xff]
    %v546 = vld [vmem:[#allocation2 + $0xa60] sm:$0xff]
    %v547 = vld [vmem:[#allocation2 + $0xa68] sm:$0xff]
    %v548 = vld [vmem:[#allocation2 + $0xa70] sm:$0xff]
    %v549 = vld [vmem:[#allocation2 + $0xa78] sm:$0xff]
    %v550 = vld [vmem:[#allocation2 + $0xa80] sm:$0xff]
    %v551 = vld [vmem:[#allocation2 + $0xa88] sm:$0xff]
    %v552 = vld [vmem:[#allocation2 + $0xa90] sm:$0xff]
    %v553 = vld [vmem:[#allocation2 + $0xa98] sm:$0xff]
    %v554 = vld [vmem:[#allocation2 + $0xaa0] sm:$0xff]
    %v555 = vld [vmem:[#allocation2 + $0xaa8] sm:$0xff]
    %v556 = vld [vmem:[#allocation2 + $0xab0] sm:$0xff]
    %v557 = vld [vmem:[#allocation2 + $0xab8] sm:$0xff]
    %v558 = vld [vmem:[#allocation2 + $0xac0] sm:$0xff]
    %v559 = vld [vmem:[#allocation2 + $0xac8] sm:$0xff]
    %v560 = vld [vmem:[#allocation2 + $0xad0] sm:$0xff]
    %v561 = vld [vmem:[#allocation2 + $0xad8] sm:$0xff]
    %v562 = vld [vmem:[#allocation2 + $0xae0] sm:$0xff]
    %v563 = vld [vmem:[#allocation2 + $0xae8] sm:$0xff]
    %v564 = vld [vmem:[#allocation2 + $0xaf0] sm:$0xff]
    %v565 = vld [vmem:[#allocation2 + $0xaf8] sm:$0xff]
    %v566 = vld [vmem:[#allocation2 + $0xb00] sm:$0xff]
    %v567 = vld [vmem:[#allocation2 + $0xb08] sm:$0xff]
    %v568 = vld [vmem:[#allocation2 + $0xb10] sm:$0xff]
    %v569 = vld [vmem:[#allocation2 + $0xb18] sm:$0xff]
    %v570 = vld [vmem:[#allocation2 + $0xb20] sm:$0xff]
    %v571 = vld [vmem:[#allocation2 + $0xb28] sm:$0xff]
    %v572 = vld [vmem:[#allocation2 + $0xb30] sm:$0xff]
    %v573 = vld [vmem:[#allocation2 + $0xb38] sm:$0xff]
    %v574 = vld [vmem:[#allocation2 + $0xb40] sm:$0xff]
    %v575 = vld [vmem:[#allocation2 + $0xb48] sm:$0xff]
    %v576 = vld [vmem:[#allocation2 + $0xb50] sm:$0xff]
    %v577 = vld [vmem:[#allocation2 + $0xb58] sm:$0xff]
    %v578 = vld [vmem:[#allocation2 + $0xb60] sm:$0xff]
    %v579 = vld [vmem:[#allocation2 + $0xb68] sm:$0xff]
    %v580 = vld [vmem:[#allocation2 + $0xb70] sm:$0xff]
    %v581 = vld [vmem:[#allocation2 + $0xb78] sm:$0xff]
    %v582 = vld [vmem:[#allocation2 + $0xb80] sm:$0xff]
    %v583 = vld [vmem:[#allocation2 + $0xb88] sm:$0xff]
    %v584 = vld [vmem:[#allocation2 + $0xb90] sm:$0xff]
    %v585 = vld [vmem:[#allocation2 + $0xb98] sm:$0xff]
    %v586 = vld [vmem:[#allocation2 + $0xba0] sm:$0xff]
    %v587 = vld [vmem:[#allocation2 + $0xba8] sm:$0xff]
    %v588 = vld [vmem:[#allocation2 + $0xbb0] sm:$0xff]
    %v589 = vld [vmem:[#allocation2 + $0xbb8] sm:$0xff]
    %v590 = vld [vmem:[#allocation2 + $0xbc0] sm:$0xff]
    %v591 = vld [vmem:[#allocation2 + $0xbc8] sm:$0xff]
    %v592 = vld [vmem:[#allocation2 + $0xbd0] sm:$0xff]
    %v593 = vld [vmem:[#allocation2 + $0xbd8] sm:$0xff]
    %v594 = vld [vmem:[#allocation2 + $0xbe0] sm:$0xff]
    %v595 = vld [vmem:[#allocation2 + $0xbe8] sm:$0xff]
    %v596 = vld [vmem:[#allocation2 + $0xbf0] sm:$0xff]
    %v597 = vld [vmem:[#allocation2 + $0xbf8] sm:$0xff]
    %v598 = vld [vmem:[#allocation2 + $0xc00] sm:$0xff]
    %v599 = vld [vmem:[#allocation2 + $0xc08] sm:$0xff]
    %v600 = vld [vmem:[#allocation2 + $0xc10] sm:$0xff]
    %v601 = vld [vmem:[#allocation2 + $0xc18] sm:$0xff]
    %v602 = vld [vmem:[#allocation2 + $0xc20] sm:$0xff]
    %v603 = vld [vmem:[#allocation2 + $0xc28] sm:$0xff]
    %v604 = vld [vmem:[#allocation2 + $0xc30] sm:$0xff]
    %v605 = vld [vmem:[#allocation2 + $0xc38] sm:$0xff]
    %v606 = vld [vmem:[#allocation2 + $0xc40] sm:$0xff]
    %v607 = vld [vmem:[#allocation2 + $0xc48] sm:$0xff]
    %v608 = vld [vmem:[#allocation2 + $0xc50] sm:$0xff]
    %v609 = vld [vmem:[#allocation2 + $0xc58] sm:$0xff]
    %v610 = vld [vmem:[#allocation2 + $0xc60] sm:$0xff]
    %v611 = vld [vmem:[#allocation2 + $0xc68] sm:$0xff]
    %v612 = vld [vmem:[#allocation2 + $0xc70] sm:$0xff]
    %v613 = vld [vmem:[#allocation2 + $0xc78] sm:$0xff]
    %v614 = vld [vmem:[#allocation2 + $0xc80] sm:$0xff]
    %v615 = vld [vmem:[#allocation2 + $0xc88] sm:$0xff]
    %v616 = vld [vmem:[#allocation2 + $0xc90] sm:$0xff]
    %v617 = vld [vmem:[#allocation2 + $0xc98] sm:$0xff]
    %v618 = vld [vmem:[#allocation2 + $0xca0] sm:$0xff]
    %v619 = vld [vmem:[#allocation2 + $0xca8] sm:$0xff]
    %v620 = vld [vmem:[#allocation2 + $0xcb0] sm:$0xff]
    %v621 = vld [vmem:[#allocation2 + $0xcb8] sm:$0xff]
    %v622 = vld [vmem:[#allocation2 + $0xcc0] sm:$0xff]
    %v623 = vld [vmem:[#allocation2 + $0xcc8] sm:$0xff]
    %v624 = vld [vmem:[#allocation2 + $0xcd0] sm:$0xff]
    %v625 = vld [vmem:[#allocation2 + $0xcd8] sm:$0xff]
    %v626 = vld [vmem:[#allocation2 + $0xce0] sm:$0xff]
    %v627 = vld [vmem:[#allocation2 + $0xce8] sm:$0xff]
    %v628 = vld [vmem:[#allocation2 + $0xcf0] sm:$0xff]
    %v629 = vld [vmem:[#allocation2 + $0xcf8] sm:$0xff]
    %v630 = vld [vmem:[#allocation2 + $0xd00] sm:$0xff]
    %v631 = vld [vmem:[#allocation2 + $0xd08] sm:$0xff]
    %v632 = vld [vmem:[#allocation2 + $0xd10] sm:$0xff]
    %v633 = vld [vmem:[#allocation2 + $0xd18] sm:$0xff]
    %v634 = vld [vmem:[#allocation2 + $0xd20] sm:$0xff]
    %v635 = vld [vmem:[#allocation2 + $0xd28] sm:$0xff]
    %v636 = vld [vmem:[#allocation2 + $0xd30] sm:$0xff]
    %v637 = vld [vmem:[#allocation2 + $0xd38] sm:$0xff]
    %v638 = vld [vmem:[#allocation2 + $0xd40] sm:$0xff]
    %v639 = vld [vmem:[#allocation2 + $0xd48] sm:$0xff]
    %v640 = vld [vmem:[#allocation2 + $0xd50] sm:$0xff]
    %v641 = vld [vmem:[#allocation2 + $0xd58] sm:$0xff]
    %v642 = vld [vmem:[#allocation2 + $0xd60] sm:$0xff]
    %v643 = vld [vmem:[#allocation2 + $0xd68] sm:$0xff]
    %v644 = vld [vmem:[#allocation2 + $0xd70] sm:$0xff]
    %v645 = vld [vmem:[#allocation2 + $0xd78] sm:$0xff]
    %v646 = vld [vmem:[#allocation2 + $0xd80] sm:$0xff]
    %v647 = vld [vmem:[#allocation2 + $0xd88] sm:$0xff]
    %v648 = vld [vmem:[#allocation2 + $0xd90] sm:$0xff]
    %v649 = vld [vmem:[#allocation2 + $0xd98] sm:$0xff]
    %v650 = vld [vmem:[#allocation2 + $0xda0] sm:$0xff]
    %v651 = vld [vmem:[#allocation2 + $0xda8] sm:$0xff]
    %v652 = vld [vmem:[#allocation2 + $0xdb0] sm:$0xff]
    %v653 = vld [vmem:[#allocation2 + $0xdb8] sm:$0xff]
    %v654 = vld [vmem:[#allocation2 + $0xdc0] sm:$0xff]
    %v655 = vld [vmem:[#allocation2 + $0xdc8] sm:$0xff]
    %v656 = vld [vmem:[#allocation2 + $0xdd0] sm:$0xff]
    %v657 = vld [vmem:[#allocation2 + $0xdd8] sm:$0xff]
    %v658 = vld [vmem:[#allocation2 + $0xde0] sm:$0xff]
    %v659 = vld [vmem:[#allocation2 + $0xde8] sm:$0xff]
    %v660 = vld [vmem:[#allocation2 + $0xdf0] sm:$0xff]
    %v661 = vld [vmem:[#allocation2 + $0xdf8] sm:$0xff]
    %v662 = vld [vmem:[#allocation2 + $0xe00] sm:$0xff]
    %v663 = vld [vmem:[#allocation2 + $0xe08] sm:$0xff]
    %v664 = vld [vmem:[#allocation2 + $0xe10] sm:$0xff]
    %v665 = vld [vmem:[#allocation2 + $0xe18] sm:$0xff]
    %v666 = vld [vmem:[#allocation2 + $0xe20] sm:$0xff]
    %v667 = vld [vmem:[#allocation2 + $0xe28] sm:$0xff]
    %v668 = vld [vmem:[#allocation2 + $0xe30] sm:$0xff]
    %v669 = vld [vmem:[#allocation2 + $0xe38] sm:$0xff]
    %v670 = vld [vmem:[#allocation2 + $0xe40] sm:$0xff]
    %v671 = vld [vmem:[#allocation2 + $0xe48] sm:$0xff]
    %v672 = vld [vmem:[#allocation2 + $0xe50] sm:$0xff]
    %v673 = vld [vmem:[#allocation2 + $0xe58] sm:$0xff]
    %v674 = vld [vmem:[#allocation2 + $0xe60] sm:$0xff]
    %v675 = vld [vmem:[#allocation2 + $0xe68] sm:$0xff]
    %v676 = vld [vmem:[#allocation2 + $0xe70] sm:$0xff]
    %v677 = vld [vmem:[#allocation2 + $0xe78] sm:$0xff]
    %v678 = vld [vmem:[#allocation2 + $0xe80] sm:$0xff]
    %v679 = vld [vmem:[#allocation2 + $0xe88] sm:$0xff]
    %v680 = vld [vmem:[#allocation2 + $0xe90] sm:$0xff]
    %v681 = vld [vmem:[#allocation2 + $0xe98] sm:$0xff]
    %v682 = vld [vmem:[#allocation2 + $0xea0] sm:$0xff]
    %v683 = vld [vmem:[#allocation2 + $0xea8] sm:$0xff]
    %v684 = vld [vmem:[#allocation2 + $0xeb0] sm:$0xff]
    %v685 = vld [vmem:[#allocation2 + $0xeb8] sm:$0xff]
    %v686 = vld [vmem:[#allocation2 + $0xec0] sm:$0xff]
    %v687 = vld [vmem:[#allocation2 + $0xec8] sm:$0xff]
    %v688 = vld [vmem:[#allocation2 + $0xed0] sm:$0xff]
    %v689 = vld [vmem:[#allocation2 + $0xed8] sm:$0xff]
    %v690 = vld [vmem:[#allocation2 + $0xee0] sm:$0xff]
    %v691 = vld [vmem:[#allocation2 + $0xee8] sm:$0xff]
    %v692 = vld [vmem:[#allocation2 + $0xef0] sm:$0xff]
    %v693 = vld [vmem:[#allocation2 + $0xef8] sm:$0xff]
    %v694 = vld [vmem:[#allocation2 + $0xf00] sm:$0xff]
    %v695 = vld [vmem:[#allocation2 + $0xf08] sm:$0xff]
    %v696 = vld [vmem:[#allocation2 + $0xf10] sm:$0xff]
    %v697 = vld [vmem:[#allocation2 + $0xf18] sm:$0xff]
    %v698 = vld [vmem:[#allocation2 + $0xf20] sm:$0xff]
    %v699 = vld [vmem:[#allocation2 + $0xf28] sm:$0xff]
    %v700 = vld [vmem:[#allocation2 + $0xf30] sm:$0xff]
    %v701 = vld [vmem:[#allocation2 + $0xf38] sm:$0xff]
    %v702 = vld [vmem:[#allocation2 + $0xf40] sm:$0xff]
    %v703 = vld [vmem:[#allocation2 + $0xf48] sm:$0xff]
    %v704 = vld [vmem:[#allocation2 + $0xf50] sm:$0xff]
    %v705 = vld [vmem:[#allocation2 + $0xf58] sm:$0xff]
    %v706 = vld [vmem:[#allocation2 + $0xf60] sm:$0xff]
    %v707 = vld [vmem:[#allocation2 + $0xf68] sm:$0xff]
    %v708 = vld [vmem:[#allocation2 + $0xf70] sm:$0xff]
    %v709 = vld [vmem:[#allocation2 + $0xf78] sm:$0xff]
    %v710 = vld [vmem:[#allocation2 + $0xf80] sm:$0xff]
    %v711 = vld [vmem:[#allocation2 + $0xf88] sm:$0xff]
    %v712 = vld [vmem:[#allocation2 + $0xf90] sm:$0xff]
    %v713 = vld [vmem:[#allocation2 + $0xf98] sm:$0xff]
    %v714 = vld [vmem:[#allocation2 + $0xfa0] sm:$0xff]
    %v715 = vld [vmem:[#allocation2 + $0xfa8] sm:$0xff]
    %v716 = vld [vmem:[#allocation2 + $0xfb0] sm:$0xff]
    %v717 = vld [vmem:[#allocation2 + $0xfb8] sm:$0xff]
    %v718 = vld [vmem:[#allocation2 + $0xfc0] sm:$0xff]
    %v719 = vld [vmem:[#allocation2 + $0xfc8] sm:$0xff]
    %v720 = vld [vmem:[#allocation2 + $0xfd0] sm:$0xff]
    %v721 = vld [vmem:[#allocation2 + $0xfd8] sm:$0xff]
    %v722 = vld [vmem:[#allocation2 + $0xfe0] sm:$0xff]
    %v723 = vld [vmem:[#allocation2 + $0xfe8] sm:$0xff]
    %v724 = vld [vmem:[#allocation2 + $0xff0] sm:$0xff]
    %v725 = vld [vmem:[#allocation2 + $0xff8] sm:$0xff]
    %v726 = vld [vmem:[#allocation4] sm:$0xff]
    %v727 = vld [vmem:[#allocation4 + $0x8] sm:$0xff]
    %v728 = vld [vmem:[#allocation4 + $0x10] sm:$0xff]
    %v729 = vld [vmem:[#allocation4 + $0x18] sm:$0xff]
    %v734 = vperm.slane %v726, 0
    %v735 = vperm.slane %v726, 1
    %v736 = vperm.slane %v726, 2
    %v737 = vperm.slane %v726, 3
    %v738 = vperm.slane %v726, 4
    %v739 = vperm.slane %v726, 5
    %v740 = vperm.slane %v726, 6
    %v741 = vperm.slane %v726, 7
    %v742 = vperm.slane %v727, 0
    %v743 = vperm.slane %v727, 1
    %v744 = vperm.slane %v727, 2
    %v745 = vperm.slane %v727, 3
    %v746 = vperm.slane %v727, 4
    %v747 = vperm.slane %v727, 5
    %v748 = vperm.slane %v727, 6
    %v749 = vperm.slane %v727, 7
    %v750 = vperm.slane %v728, 0
    %v751 = vperm.slane %v728, 1
    %v752 = vperm.slane %v728, 2
    %v753 = vperm.slane %v728, 3
    %v754 = vperm.slane %v728, 4
    %v755 = vperm.slane %v728, 5
    %v756 = vperm.slane %v728, 6
    %v757 = vperm.slane %v728, 7
    %v758 = vperm.slane %v729, 0
    %v759 = vperm.slane %v729, 1
    %v760 = vperm.slane %v729, 2
    %v761 = vperm.slane %v729, 3
    %v762 = vperm.slane %v729, 4
    %v763 = vperm.slane %v729, 5
    %v764 = vperm.slane %v729, 6
    %v765 = vperm.slane %v729, 7
    %v1310 = vunpack.c.l.b16 %v214
    %v1311 = vunpack.c.h.b16 %v214
    %v1312 = vunpack.c.l.b16 %v215
    %v1313 = vunpack.c.h.b16 %v215
    %v1314 = vunpack.c.l.b16 %v216
    %v1315 = vunpack.c.h.b16 %v216
    %v1316 = vunpack.c.l.b16 %v217
    %v1317 = vunpack.c.h.b16 %v217
    %v1318 = vunpack.c.l.b16 %v218
    %v1319 = vunpack.c.h.b16 %v218
    %v1320 = vunpack.c.l.b16 %v219
    %v1321 = vunpack.c.h.b16 %v219
    %v1322 = vunpack.c.l.b16 %v220
    %v1323 = vunpack.c.h.b16 %v220
    %v1324 = vunpack.c.l.b16 %v221
    %v1325 = vunpack.c.h.b16 %v221
    %v1326 = vunpack.c.l.b16 %v222
    %v1327 = vunpack.c.h.b16 %v222
    %v1328 = vunpack.c.l.b16 %v223
    %v1329 = vunpack.c.h.b16 %v223
    %v1330 = vunpack.c.l.b16 %v224
    %v1331 = vunpack.c.h.b16 %v224
    %v1332 = vunpack.c.l.b16 %v225
    %v1333 = vunpack.c.h.b16 %v225
    %v1334 = vunpack.c.l.b16 %v226
    %v1335 = vunpack.c.h.b16 %v226
    %v1336 = vunpack.c.l.b16 %v227
    %v1337 = vunpack.c.h.b16 %v227
    %v1338 = vunpack.c.l.b16 %v228
    %v1339 = vunpack.c.h.b16 %v228
    %v1340 = vunpack.c.l.b16 %v229
    %v1341 = vunpack.c.h.b16 %v229
    %v1342 = vunpack.c.l.b16 %v230
    %v1343 = vunpack.c.h.b16 %v230
    %v1344 = vunpack.c.l.b16 %v231
    %v1345 = vunpack.c.h.b16 %v231
    %v1346 = vunpack.c.l.b16 %v232
    %v1347 = vunpack.c.h.b16 %v232
    %v1348 = vunpack.c.l.b16 %v233
    %v1349 = vunpack.c.h.b16 %v233
    %v1350 = vunpack.c.l.b16 %v234
    %v1351 = vunpack.c.h.b16 %v234
    %v1352 = vunpack.c.l.b16 %v235
    %v1353 = vunpack.c.h.b16 %v235
    %v1354 = vunpack.c.l.b16 %v236
    %v1355 = vunpack.c.h.b16 %v236
    %v1356 = vunpack.c.l.b16 %v237
    %v1357 = vunpack.c.h.b16 %v237
    %v1358 = vunpack.c.l.b16 %v238
    %v1359 = vunpack.c.h.b16 %v238
    %v1360 = vunpack.c.l.b16 %v239
    %v1361 = vunpack.c.h.b16 %v239
    %v1362 = vunpack.c.l.b16 %v240
    %v1363 = vunpack.c.h.b16 %v240
    %v1364 = vunpack.c.l.b16 %v241
    %v1365 = vunpack.c.h.b16 %v241
    %v1366 = vunpack.c.l.b16 %v242
    %v1367 = vunpack.c.h.b16 %v242
    %v1368 = vunpack.c.l.b16 %v243
    %v1369 = vunpack.c.h.b16 %v243
    %v1370 = vunpack.c.l.b16 %v244
    %v1371 = vunpack.c.h.b16 %v244
    %v1372 = vunpack.c.l.b16 %v245
    %v1373 = vunpack.c.h.b16 %v245
    %v1374 = vunpack.c.l.b16 %v246
    %v1375 = vunpack.c.h.b16 %v246
    %v1376 = vunpack.c.l.b16 %v247
    %v1377 = vunpack.c.h.b16 %v247
    %v1378 = vunpack.c.l.b16 %v248
    %v1379 = vunpack.c.h.b16 %v248
    %v1380 = vunpack.c.l.b16 %v249
    %v1381 = vunpack.c.h.b16 %v249
    %v1382 = vunpack.c.l.b16 %v250
    %v1383 = vunpack.c.h.b16 %v250
    %v1384 = vunpack.c.l.b16 %v251
    %v1385 = vunpack.c.h.b16 %v251
    %v1386 = vunpack.c.l.b16 %v252
    %v1387 = vunpack.c.h.b16 %v252
    %v1388 = vunpack.c.l.b16 %v253
    %v1389 = vunpack.c.h.b16 %v253
    %v1390 = vunpack.c.l.b16 %v254
    %v1391 = vunpack.c.h.b16 %v254
    %v1392 = vunpack.c.l.b16 %v255
    %v1393 = vunpack.c.h.b16 %v255
    %v1394 = vunpack.c.l.b16 %v256
    %v1395 = vunpack.c.h.b16 %v256
    %v1396 = vunpack.c.l.b16 %v257
    %v1397 = vunpack.c.h.b16 %v257
    %v1398 = vunpack.c.l.b16 %v258
    %v1399 = vunpack.c.h.b16 %v258
    %v1400 = vunpack.c.l.b16 %v259
    %v1401 = vunpack.c.h.b16 %v259
    %v1402 = vunpack.c.l.b16 %v260
    %v1403 = vunpack.c.h.b16 %v260
    %v1404 = vunpack.c.l.b16 %v261
    %v1405 = vunpack.c.h.b16 %v261
    %v1406 = vunpack.c.l.b16 %v262
    %v1407 = vunpack.c.h.b16 %v262
    %v1408 = vunpack.c.l.b16 %v263
    %v1409 = vunpack.c.h.b16 %v263
    %v1410 = vunpack.c.l.b16 %v264
    %v1411 = vunpack.c.h.b16 %v264
    %v1412 = vunpack.c.l.b16 %v265
    %v1413 = vunpack.c.h.b16 %v265
    %v1414 = vunpack.c.l.b16 %v266
    %v1415 = vunpack.c.h.b16 %v266
    %v1416 = vunpack.c.l.b16 %v267
    %v1417 = vunpack.c.h.b16 %v267
    %v1418 = vunpack.c.l.b16 %v268
    %v1419 = vunpack.c.h.b16 %v268
    %v1420 = vunpack.c.l.b16 %v269
    %v1421 = vunpack.c.h.b16 %v269
    %v1422 = vunpack.c.l.b16 %v270
    %v1423 = vunpack.c.h.b16 %v270
    %v1424 = vunpack.c.l.b16 %v271
    %v1425 = vunpack.c.h.b16 %v271
    %v1426 = vunpack.c.l.b16 %v272
    %v1427 = vunpack.c.h.b16 %v272
    %v1428 = vunpack.c.l.b16 %v273
    %v1429 = vunpack.c.h.b16 %v273
    %v1430 = vunpack.c.l.b16 %v274
    %v1431 = vunpack.c.h.b16 %v274
    %v1432 = vunpack.c.l.b16 %v275
    %v1433 = vunpack.c.h.b16 %v275
    %v1434 = vunpack.c.l.b16 %v276
    %v1435 = vunpack.c.h.b16 %v276
    %v1436 = vunpack.c.l.b16 %v277
    %v1437 = vunpack.c.h.b16 %v277
    %v1438 = vunpack.c.l.b16 %v278
    %v1439 = vunpack.c.h.b16 %v278
    %v1440 = vunpack.c.l.b16 %v279
    %v1441 = vunpack.c.h.b16 %v279
    %v1442 = vunpack.c.l.b16 %v280
    %v1443 = vunpack.c.h.b16 %v280
    %v1444 = vunpack.c.l.b16 %v281
    %v1445 = vunpack.c.h.b16 %v281
    %v1446 = vunpack.c.l.b16 %v282
    %v1447 = vunpack.c.h.b16 %v282
    %v1448 = vunpack.c.l.b16 %v283
    %v1449 = vunpack.c.h.b16 %v283
    %v1450 = vunpack.c.l.b16 %v284
    %v1451 = vunpack.c.h.b16 %v284
    %v1452 = vunpack.c.l.b16 %v285
    %v1453 = vunpack.c.h.b16 %v285
    %v1454 = vunpack.c.l.b16 %v286
    %v1455 = vunpack.c.h.b16 %v286
    %v1456 = vunpack.c.l.b16 %v287
    %v1457 = vunpack.c.h.b16 %v287
    %v1458 = vunpack.c.l.b16 %v288
    %v1459 = vunpack.c.h.b16 %v288
    %v1460 = vunpack.c.l.b16 %v289
    %v1461 = vunpack.c.h.b16 %v289
    %v1462 = vunpack.c.l.b16 %v290
    %v1463 = vunpack.c.h.b16 %v290
    %v1464 = vunpack.c.l.b16 %v291
    %v1465 = vunpack.c.h.b16 %v291
    %v1466 = vunpack.c.l.b16 %v292
    %v1467 = vunpack.c.h.b16 %v292
    %v1468 = vunpack.c.l.b16 %v293
    %v1469 = vunpack.c.h.b16 %v293
    %v1470 = vunpack.c.l.b16 %v294
    %v1471 = vunpack.c.h.b16 %v294
    %v1472 = vunpack.c.l.b16 %v295
    %v1473 = vunpack.c.h.b16 %v295
    %v1474 = vunpack.c.l.b16 %v296
    %v1475 = vunpack.c.h.b16 %v296
    %v1476 = vunpack.c.l.b16 %v297
    %v1477 = vunpack.c.h.b16 %v297
    %v1478 = vunpack.c.l.b16 %v298
    %v1479 = vunpack.c.h.b16 %v298
    %v1480 = vunpack.c.l.b16 %v299
    %v1481 = vunpack.c.h.b16 %v299
    %v1482 = vunpack.c.l.b16 %v300
    %v1483 = vunpack.c.h.b16 %v300
    %v1484 = vunpack.c.l.b16 %v301
    %v1485 = vunpack.c.h.b16 %v301
    %v1486 = vunpack.c.l.b16 %v302
    %v1487 = vunpack.c.h.b16 %v302
    %v1488 = vunpack.c.l.b16 %v303
    %v1489 = vunpack.c.h.b16 %v303
    %v1490 = vunpack.c.l.b16 %v304
    %v1491 = vunpack.c.h.b16 %v304
    %v1492 = vunpack.c.l.b16 %v305
    %v1493 = vunpack.c.h.b16 %v305
    %v1494 = vunpack.c.l.b16 %v306
    %v1495 = vunpack.c.h.b16 %v306
    %v1496 = vunpack.c.l.b16 %v307
    %v1497 = vunpack.c.h.b16 %v307
    %v1498 = vunpack.c.l.b16 %v308
    %v1499 = vunpack.c.h.b16 %v308
    %v1500 = vunpack.c.l.b16 %v309
    %v1501 = vunpack.c.h.b16 %v309
    %v1502 = vunpack.c.l.b16 %v310
    %v1503 = vunpack.c.h.b16 %v310
    %v1504 = vunpack.c.l.b16 %v311
    %v1505 = vunpack.c.h.b16 %v311
    %v1506 = vunpack.c.l.b16 %v312
    %v1507 = vunpack.c.h.b16 %v312
    %v1508 = vunpack.c.l.b16 %v313
    %v1509 = vunpack.c.h.b16 %v313
    %v1510 = vunpack.c.l.b16 %v314
    %v1511 = vunpack.c.h.b16 %v314
    %v1512 = vunpack.c.l.b16 %v315
    %v1513 = vunpack.c.h.b16 %v315
    %v1514 = vunpack.c.l.b16 %v316
    %v1515 = vunpack.c.h.b16 %v316
    %v1516 = vunpack.c.l.b16 %v317
    %v1517 = vunpack.c.h.b16 %v317
    %v1518 = vunpack.c.l.b16 %v318
    %v1519 = vunpack.c.h.b16 %v318
    %v1520 = vunpack.c.l.b16 %v319
    %v1521 = vunpack.c.h.b16 %v319
    %v1522 = vunpack.c.l.b16 %v320
    %v1523 = vunpack.c.h.b16 %v320
    %v1524 = vunpack.c.l.b16 %v321
    %v1525 = vunpack.c.h.b16 %v321
    %v1526 = vunpack.c.l.b16 %v322
    %v1527 = vunpack.c.h.b16 %v322
    %v1528 = vunpack.c.l.b16 %v323
    %v1529 = vunpack.c.h.b16 %v323
    %v1530 = vunpack.c.l.b16 %v324
    %v1531 = vunpack.c.h.b16 %v324
    %v1532 = vunpack.c.l.b16 %v325
    %v1533 = vunpack.c.h.b16 %v325
    %v1534 = vunpack.c.l.b16 %v326
    %v1535 = vunpack.c.h.b16 %v326
    %v1536 = vunpack.c.l.b16 %v327
    %v1537 = vunpack.c.h.b16 %v327
    %v1538 = vunpack.c.l.b16 %v328
    %v1539 = vunpack.c.h.b16 %v328
    %v1540 = vunpack.c.l.b16 %v329
    %v1541 = vunpack.c.h.b16 %v329
    %v1542 = vunpack.c.l.b16 %v330
    %v1543 = vunpack.c.h.b16 %v330
    %v1544 = vunpack.c.l.b16 %v331
    %v1545 = vunpack.c.h.b16 %v331
    %v1546 = vunpack.c.l.b16 %v332
    %v1547 = vunpack.c.h.b16 %v332
    %v1548 = vunpack.c.l.b16 %v333
    %v1549 = vunpack.c.h.b16 %v333
    %v1550 = vunpack.c.l.b16 %v334
    %v1551 = vunpack.c.h.b16 %v334
    %v1552 = vunpack.c.l.b16 %v335
    %v1553 = vunpack.c.h.b16 %v335
    %v1554 = vunpack.c.l.b16 %v336
    %v1555 = vunpack.c.h.b16 %v336
    %v1556 = vunpack.c.l.b16 %v337
    %v1557 = vunpack.c.h.b16 %v337
    %v1558 = vunpack.c.l.b16 %v338
    %v1559 = vunpack.c.h.b16 %v338
    %v1560 = vunpack.c.l.b16 %v339
    %v1561 = vunpack.c.h.b16 %v339
    %v1562 = vunpack.c.l.b16 %v340
    %v1563 = vunpack.c.h.b16 %v340
    %v1564 = vunpack.c.l.b16 %v341
    %v1565 = vunpack.c.h.b16 %v341
    %v1566 = vunpack.c.l.b16 %v342
    %v1567 = vunpack.c.h.b16 %v342
    %v1568 = vunpack.c.l.b16 %v343
    %v1569 = vunpack.c.h.b16 %v343
    %v1570 = vunpack.c.l.b16 %v344
    %v1571 = vunpack.c.h.b16 %v344
    %v1572 = vunpack.c.l.b16 %v345
    %v1573 = vunpack.c.h.b16 %v345
    %v1574 = vunpack.c.l.b16 %v346
    %v1575 = vunpack.c.h.b16 %v346
    %v1576 = vunpack.c.l.b16 %v347
    %v1577 = vunpack.c.h.b16 %v347
    %v1578 = vunpack.c.l.b16 %v348
    %v1579 = vunpack.c.h.b16 %v348
    %v1580 = vunpack.c.l.b16 %v349
    %v1581 = vunpack.c.h.b16 %v349
    %v1582 = vunpack.c.l.b16 %v350
    %v1583 = vunpack.c.h.b16 %v350
    %v1584 = vunpack.c.l.b16 %v351
    %v1585 = vunpack.c.h.b16 %v351
    %v1586 = vunpack.c.l.b16 %v352
    %v1587 = vunpack.c.h.b16 %v352
    %v1588 = vunpack.c.l.b16 %v353
    %v1589 = vunpack.c.h.b16 %v353
    %v1590 = vunpack.c.l.b16 %v354
    %v1591 = vunpack.c.h.b16 %v354
    %v1592 = vunpack.c.l.b16 %v355
    %v1593 = vunpack.c.h.b16 %v355
    %v1594 = vunpack.c.l.b16 %v356
    %v1595 = vunpack.c.h.b16 %v356
    %v1596 = vunpack.c.l.b16 %v357
    %v1597 = vunpack.c.h.b16 %v357
    %v1598 = vunpack.c.l.b16 %v358
    %v1599 = vunpack.c.h.b16 %v358
    %v1600 = vunpack.c.l.b16 %v359
    %v1601 = vunpack.c.h.b16 %v359
    %v1602 = vunpack.c.l.b16 %v360
    %v1603 = vunpack.c.h.b16 %v360
    %v1604 = vunpack.c.l.b16 %v361
    %v1605 = vunpack.c.h.b16 %v361
    %v1606 = vunpack.c.l.b16 %v362
    %v1607 = vunpack.c.h.b16 %v362
    %v1608 = vunpack.c.l.b16 %v363
    %v1609 = vunpack.c.h.b16 %v363
    %v1610 = vunpack.c.l.b16 %v364
    %v1611 = vunpack.c.h.b16 %v364
    %v1612 = vunpack.c.l.b16 %v365
    %v1613 = vunpack.c.h.b16 %v365
    %v1614 = vunpack.c.l.b16 %v366
    %v1615 = vunpack.c.h.b16 %v366
    %v1616 = vunpack.c.l.b16 %v367
    %v1617 = vunpack.c.h.b16 %v367
    %v1618 = vunpack.c.l.b16 %v368
    %v1619 = vunpack.c.h.b16 %v368
    %v1620 = vunpack.c.l.b16 %v369
    %v1621 = vunpack.c.h.b16 %v369
    %v1622 = vunpack.c.l.b16 %v370
    %v1623 = vunpack.c.h.b16 %v370
    %v1624 = vunpack.c.l.b16 %v371
    %v1625 = vunpack.c.h.b16 %v371
    %v1626 = vunpack.c.l.b16 %v372
    %v1627 = vunpack.c.h.b16 %v372
    %v1628 = vunpack.c.l.b16 %v373
    %v1629 = vunpack.c.h.b16 %v373
    %v1630 = vunpack.c.l.b16 %v374
    %v1631 = vunpack.c.h.b16 %v374
    %v1632 = vunpack.c.l.b16 %v375
    %v1633 = vunpack.c.h.b16 %v375
    %v1634 = vunpack.c.l.b16 %v376
    %v1635 = vunpack.c.h.b16 %v376
    %v1636 = vunpack.c.l.b16 %v377
    %v1637 = vunpack.c.h.b16 %v377
    %v1638 = vunpack.c.l.b16 %v378
    %v1639 = vunpack.c.h.b16 %v378
    %v1640 = vunpack.c.l.b16 %v379
    %v1641 = vunpack.c.h.b16 %v379
    %v1642 = vunpack.c.l.b16 %v380
    %v1643 = vunpack.c.h.b16 %v380
    %v1644 = vunpack.c.l.b16 %v381
    %v1645 = vunpack.c.h.b16 %v381
    %v1646 = vunpack.c.l.b16 %v382
    %v1647 = vunpack.c.h.b16 %v382
    %v1648 = vunpack.c.l.b16 %v383
    %v1649 = vunpack.c.h.b16 %v383
    %v1650 = vunpack.c.l.b16 %v384
    %v1651 = vunpack.c.h.b16 %v384
    %v1652 = vunpack.c.l.b16 %v385
    %v1653 = vunpack.c.h.b16 %v385
    %v1654 = vunpack.c.l.b16 %v386
    %v1655 = vunpack.c.h.b16 %v386
    %v1656 = vunpack.c.l.b16 %v387
    %v1657 = vunpack.c.h.b16 %v387
    %v1658 = vunpack.c.l.b16 %v388
    %v1659 = vunpack.c.h.b16 %v388
    %v1660 = vunpack.c.l.b16 %v389
    %v1661 = vunpack.c.h.b16 %v389
    %v1662 = vunpack.c.l.b16 %v390
    %v1663 = vunpack.c.h.b16 %v390
    %v1664 = vunpack.c.l.b16 %v391
    %v1665 = vunpack.c.h.b16 %v391
    %v1666 = vunpack.c.l.b16 %v392
    %v1667 = vunpack.c.h.b16 %v392
    %v1668 = vunpack.c.l.b16 %v393
    %v1669 = vunpack.c.h.b16 %v393
    %v1670 = vunpack.c.l.b16 %v394
    %v1671 = vunpack.c.h.b16 %v394
    %v1672 = vunpack.c.l.b16 %v395
    %v1673 = vunpack.c.h.b16 %v395
    %v1674 = vunpack.c.l.b16 %v396
    %v1675 = vunpack.c.h.b16 %v396
    %v1676 = vunpack.c.l.b16 %v397
    %v1677 = vunpack.c.h.b16 %v397
    %v1678 = vunpack.c.l.b16 %v398
    %v1679 = vunpack.c.h.b16 %v398
    %v1680 = vunpack.c.l.b16 %v399
    %v1681 = vunpack.c.h.b16 %v399
    %v1682 = vunpack.c.l.b16 %v400
    %v1683 = vunpack.c.h.b16 %v400
    %v1684 = vunpack.c.l.b16 %v401
    %v1685 = vunpack.c.h.b16 %v401
    %v1686 = vunpack.c.l.b16 %v402
    %v1687 = vunpack.c.h.b16 %v402
    %v1688 = vunpack.c.l.b16 %v403
    %v1689 = vunpack.c.h.b16 %v403
    %v1690 = vunpack.c.l.b16 %v404
    %v1691 = vunpack.c.h.b16 %v404
    %v1692 = vunpack.c.l.b16 %v405
    %v1693 = vunpack.c.h.b16 %v405
    %v1694 = vunpack.c.l.b16 %v406
    %v1695 = vunpack.c.h.b16 %v406
    %v1696 = vunpack.c.l.b16 %v407
    %v1697 = vunpack.c.h.b16 %v407
    %v1698 = vunpack.c.l.b16 %v408
    %v1699 = vunpack.c.h.b16 %v408
    %v1700 = vunpack.c.l.b16 %v409
    %v1701 = vunpack.c.h.b16 %v409
    %v1702 = vunpack.c.l.b16 %v410
    %v1703 = vunpack.c.h.b16 %v410
    %v1704 = vunpack.c.l.b16 %v411
    %v1705 = vunpack.c.h.b16 %v411
    %v1706 = vunpack.c.l.b16 %v412
    %v1707 = vunpack.c.h.b16 %v412
    %v1708 = vunpack.c.l.b16 %v413
    %v1709 = vunpack.c.h.b16 %v413
    %v1710 = vunpack.c.l.b16 %v414
    %v1711 = vunpack.c.h.b16 %v414
    %v1712 = vunpack.c.l.b16 %v415
    %v1713 = vunpack.c.h.b16 %v415
    %v1714 = vunpack.c.l.b16 %v416
    %v1715 = vunpack.c.h.b16 %v416
    %v1716 = vunpack.c.l.b16 %v417
    %v1717 = vunpack.c.h.b16 %v417
    %v1718 = vunpack.c.l.b16 %v418
    %v1719 = vunpack.c.h.b16 %v418
    %v1720 = vunpack.c.l.b16 %v419
    %v1721 = vunpack.c.h.b16 %v419
    %v1722 = vunpack.c.l.b16 %v420
    %v1723 = vunpack.c.h.b16 %v420
    %v1724 = vunpack.c.l.b16 %v421
    %v1725 = vunpack.c.h.b16 %v421
    %v1726 = vunpack.c.l.b16 %v422
    %v1727 = vunpack.c.h.b16 %v422
    %v1728 = vunpack.c.l.b16 %v423
    %v1729 = vunpack.c.h.b16 %v423
    %v1730 = vunpack.c.l.b16 %v424
    %v1731 = vunpack.c.h.b16 %v424
    %v1732 = vunpack.c.l.b16 %v425
    %v1733 = vunpack.c.h.b16 %v425
    %v1734 = vunpack.c.l.b16 %v426
    %v1735 = vunpack.c.h.b16 %v426
    %v1736 = vunpack.c.l.b16 %v427
    %v1737 = vunpack.c.h.b16 %v427
    %v1738 = vunpack.c.l.b16 %v428
    %v1739 = vunpack.c.h.b16 %v428
    %v1740 = vunpack.c.l.b16 %v429
    %v1741 = vunpack.c.h.b16 %v429
    %v1742 = vunpack.c.l.b16 %v430
    %v1743 = vunpack.c.h.b16 %v430
    %v1744 = vunpack.c.l.b16 %v431
    %v1745 = vunpack.c.h.b16 %v431
    %v1746 = vunpack.c.l.b16 %v432
    %v1747 = vunpack.c.h.b16 %v432
    %v1748 = vunpack.c.l.b16 %v433
    %v1749 = vunpack.c.h.b16 %v433
    %v1750 = vunpack.c.l.b16 %v434
    %v1751 = vunpack.c.h.b16 %v434
    %v1752 = vunpack.c.l.b16 %v435
    %v1753 = vunpack.c.h.b16 %v435
    %v1754 = vunpack.c.l.b16 %v436
    %v1755 = vunpack.c.h.b16 %v436
    %v1756 = vunpack.c.l.b16 %v437
    %v1757 = vunpack.c.h.b16 %v437
    %v1758 = vunpack.c.l.b16 %v438
    %v1759 = vunpack.c.h.b16 %v438
    %v1760 = vunpack.c.l.b16 %v439
    %v1761 = vunpack.c.h.b16 %v439
    %v1762 = vunpack.c.l.b16 %v440
    %v1763 = vunpack.c.h.b16 %v440
    %v1764 = vunpack.c.l.b16 %v441
    %v1765 = vunpack.c.h.b16 %v441
    %v1766 = vunpack.c.l.b16 %v442
    %v1767 = vunpack.c.h.b16 %v442
    %v1768 = vunpack.c.l.b16 %v443
    %v1769 = vunpack.c.h.b16 %v443
    %v1770 = vunpack.c.l.b16 %v444
    %v1771 = vunpack.c.h.b16 %v444
    %v1772 = vunpack.c.l.b16 %v445
    %v1773 = vunpack.c.h.b16 %v445
    %v1774 = vunpack.c.l.b16 %v446
    %v1775 = vunpack.c.h.b16 %v446
    %v1776 = vunpack.c.l.b16 %v447
    %v1777 = vunpack.c.h.b16 %v447
    %v1778 = vunpack.c.l.b16 %v448
    %v1779 = vunpack.c.h.b16 %v448
    %v1780 = vunpack.c.l.b16 %v449
    %v1781 = vunpack.c.h.b16 %v449
    %v1782 = vunpack.c.l.b16 %v450
    %v1783 = vunpack.c.h.b16 %v450
    %v1784 = vunpack.c.l.b16 %v451
    %v1785 = vunpack.c.h.b16 %v451
    %v1786 = vunpack.c.l.b16 %v452
    %v1787 = vunpack.c.h.b16 %v452
    %v1788 = vunpack.c.l.b16 %v453
    %v1789 = vunpack.c.h.b16 %v453
    %v1790 = vunpack.c.l.b16 %v454
    %v1791 = vunpack.c.h.b16 %v454
    %v1792 = vunpack.c.l.b16 %v455
    %v1793 = vunpack.c.h.b16 %v455
    %v1794 = vunpack.c.l.b16 %v456
    %v1795 = vunpack.c.h.b16 %v456
    %v1796 = vunpack.c.l.b16 %v457
    %v1797 = vunpack.c.h.b16 %v457
    %v1798 = vunpack.c.l.b16 %v458
    %v1799 = vunpack.c.h.b16 %v458
    %v1800 = vunpack.c.l.b16 %v459
    %v1801 = vunpack.c.h.b16 %v459
    %v1802 = vunpack.c.l.b16 %v460
    %v1803 = vunpack.c.h.b16 %v460
    %v1804 = vunpack.c.l.b16 %v461
    %v1805 = vunpack.c.h.b16 %v461
    %v1806 = vunpack.c.l.b16 %v462
    %v1807 = vunpack.c.h.b16 %v462
    %v1808 = vunpack.c.l.b16 %v463
    %v1809 = vunpack.c.h.b16 %v463
    %v1810 = vunpack.c.l.b16 %v464
    %v1811 = vunpack.c.h.b16 %v464
    %v1812 = vunpack.c.l.b16 %v465
    %v1813 = vunpack.c.h.b16 %v465
    %v1814 = vunpack.c.l.b16 %v466
    %v1815 = vunpack.c.h.b16 %v466
    %v1816 = vunpack.c.l.b16 %v467
    %v1817 = vunpack.c.h.b16 %v467
    %v1818 = vunpack.c.l.b16 %v468
    %v1819 = vunpack.c.h.b16 %v468
    %v1820 = vunpack.c.l.b16 %v469
    %v1821 = vunpack.c.h.b16 %v469
    %v1822 = vunpack.c.l.b16 %v470
    %v1823 = vunpack.c.h.b16 %v470
    %v1824 = vunpack.c.l.b16 %v471
    %v1825 = vunpack.c.h.b16 %v471
    %v1826 = vunpack.c.l.b16 %v472
    %v1827 = vunpack.c.h.b16 %v472
    %v1828 = vunpack.c.l.b16 %v473
    %v1829 = vunpack.c.h.b16 %v473
    %v1830 = vunpack.c.l.b16 %v474
    %v1831 = vunpack.c.h.b16 %v474
    %v1832 = vunpack.c.l.b16 %v475
    %v1833 = vunpack.c.h.b16 %v475
    %v1834 = vunpack.c.l.b16 %v476
    %v1835 = vunpack.c.h.b16 %v476
    %v1836 = vunpack.c.l.b16 %v477
    %v1837 = vunpack.c.h.b16 %v477
    %v1838 = vunpack.c.l.b16 %v478
    %v1839 = vunpack.c.h.b16 %v478
    %v1840 = vunpack.c.l.b16 %v479
    %v1841 = vunpack.c.h.b16 %v479
    %v1842 = vunpack.c.l.b16 %v480
    %v1843 = vunpack.c.h.b16 %v480
    %v1844 = vunpack.c.l.b16 %v481
    %v1845 = vunpack.c.h.b16 %v481
    %v1846 = vunpack.c.l.b16 %v482
    %v1847 = vunpack.c.h.b16 %v482
    %v1848 = vunpack.c.l.b16 %v483
    %v1849 = vunpack.c.h.b16 %v483
    %v1850 = vunpack.c.l.b16 %v484
    %v1851 = vunpack.c.h.b16 %v484
    %v1852 = vunpack.c.l.b16 %v485
    %v1853 = vunpack.c.h.b16 %v485
    %v1854 = vunpack.c.l.b16 %v486
    %v1855 = vunpack.c.h.b16 %v486
    %v1856 = vunpack.c.l.b16 %v487
    %v1857 = vunpack.c.h.b16 %v487
    %v1858 = vunpack.c.l.b16 %v488
    %v1859 = vunpack.c.h.b16 %v488
    %v1860 = vunpack.c.l.b16 %v489
    %v1861 = vunpack.c.h.b16 %v489
    %v1862 = vunpack.c.l.b16 %v490
    %v1863 = vunpack.c.h.b16 %v490
    %v1864 = vunpack.c.l.b16 %v491
    %v1865 = vunpack.c.h.b16 %v491
    %v1866 = vunpack.c.l.b16 %v492
    %v1867 = vunpack.c.h.b16 %v492
    %v1868 = vunpack.c.l.b16 %v493
    %v1869 = vunpack.c.h.b16 %v493
    %v1870 = vunpack.c.l.b16 %v494
    %v1871 = vunpack.c.h.b16 %v494
    %v1872 = vunpack.c.l.b16 %v495
    %v1873 = vunpack.c.h.b16 %v495
    %v1874 = vunpack.c.l.b16 %v496
    %v1875 = vunpack.c.h.b16 %v496
    %v1876 = vunpack.c.l.b16 %v497
    %v1877 = vunpack.c.h.b16 %v497
    %v1878 = vunpack.c.l.b16 %v498
    %v1879 = vunpack.c.h.b16 %v498
    %v1880 = vunpack.c.l.b16 %v499
    %v1881 = vunpack.c.h.b16 %v499
    %v1882 = vunpack.c.l.b16 %v500
    %v1883 = vunpack.c.h.b16 %v500
    %v1884 = vunpack.c.l.b16 %v501
    %v1885 = vunpack.c.h.b16 %v501
    %v1886 = vunpack.c.l.b16 %v502
    %v1887 = vunpack.c.h.b16 %v502
    %v1888 = vunpack.c.l.b16 %v503
    %v1889 = vunpack.c.h.b16 %v503
    %v1890 = vunpack.c.l.b16 %v504
    %v1891 = vunpack.c.h.b16 %v504
    %v1892 = vunpack.c.l.b16 %v505
    %v1893 = vunpack.c.h.b16 %v505
    %v1894 = vunpack.c.l.b16 %v506
    %v1895 = vunpack.c.h.b16 %v506
    %v1896 = vunpack.c.l.b16 %v507
    %v1897 = vunpack.c.h.b16 %v507
    %v1898 = vunpack.c.l.b16 %v508
    %v1899 = vunpack.c.h.b16 %v508
    %v1900 = vunpack.c.l.b16 %v509
    %v1901 = vunpack.c.h.b16 %v509
    %v1902 = vunpack.c.l.b16 %v510
    %v1903 = vunpack.c.h.b16 %v510
    %v1904 = vunpack.c.l.b16 %v511
    %v1905 = vunpack.c.h.b16 %v511
    %v1906 = vunpack.c.l.b16 %v512
    %v1907 = vunpack.c.h.b16 %v512
    %v1908 = vunpack.c.l.b16 %v513
    %v1909 = vunpack.c.h.b16 %v513
    %v1910 = vunpack.c.l.b16 %v514
    %v1911 = vunpack.c.h.b16 %v514
    %v1912 = vunpack.c.l.b16 %v515
    %v1913 = vunpack.c.h.b16 %v515
    %v1914 = vunpack.c.l.b16 %v516
    %v1915 = vunpack.c.h.b16 %v516
    %v1916 = vunpack.c.l.b16 %v517
    %v1917 = vunpack.c.h.b16 %v517
    %v1918 = vunpack.c.l.b16 %v518
    %v1919 = vunpack.c.h.b16 %v518
    %v1920 = vunpack.c.l.b16 %v519
    %v1921 = vunpack.c.h.b16 %v519
    %v1922 = vunpack.c.l.b16 %v520
    %v1923 = vunpack.c.h.b16 %v520
    %v1924 = vunpack.c.l.b16 %v521
    %v1925 = vunpack.c.h.b16 %v521
    %v1926 = vunpack.c.l.b16 %v522
    %v1927 = vunpack.c.h.b16 %v522
    %v1928 = vunpack.c.l.b16 %v523
    %v1929 = vunpack.c.h.b16 %v523
    %v1930 = vunpack.c.l.b16 %v524
    %v1931 = vunpack.c.h.b16 %v524
    %v1932 = vunpack.c.l.b16 %v525
    %v1933 = vunpack.c.h.b16 %v525
    %v1934 = vunpack.c.l.b16 %v526
    %v1935 = vunpack.c.h.b16 %v526
    %v1936 = vunpack.c.l.b16 %v527
    %v1937 = vunpack.c.h.b16 %v527
    %v1938 = vunpack.c.l.b16 %v528
    %v1939 = vunpack.c.h.b16 %v528
    %v1940 = vunpack.c.l.b16 %v529
    %v1941 = vunpack.c.h.b16 %v529
    %v1942 = vunpack.c.l.b16 %v530
    %v1943 = vunpack.c.h.b16 %v530
    %v1944 = vunpack.c.l.b16 %v531
    %v1945 = vunpack.c.h.b16 %v531
    %v1946 = vunpack.c.l.b16 %v532
    %v1947 = vunpack.c.h.b16 %v532
    %v1948 = vunpack.c.l.b16 %v533
    %v1949 = vunpack.c.h.b16 %v533
    %v1950 = vunpack.c.l.b16 %v534
    %v1951 = vunpack.c.h.b16 %v534
    %v1952 = vunpack.c.l.b16 %v535
    %v1953 = vunpack.c.h.b16 %v535
    %v1954 = vunpack.c.l.b16 %v536
    %v1955 = vunpack.c.h.b16 %v536
    %v1956 = vunpack.c.l.b16 %v537
    %v1957 = vunpack.c.h.b16 %v537
    %v1958 = vunpack.c.l.b16 %v538
    %v1959 = vunpack.c.h.b16 %v538
    %v1960 = vunpack.c.l.b16 %v539
    %v1961 = vunpack.c.h.b16 %v539
    %v1962 = vunpack.c.l.b16 %v540
    %v1963 = vunpack.c.h.b16 %v540
    %v1964 = vunpack.c.l.b16 %v541
    %v1965 = vunpack.c.h.b16 %v541
    %v1966 = vunpack.c.l.b16 %v542
    %v1967 = vunpack.c.h.b16 %v542
    %v1968 = vunpack.c.l.b16 %v543
    %v1969 = vunpack.c.h.b16 %v543
    %v1970 = vunpack.c.l.b16 %v544
    %v1971 = vunpack.c.h.b16 %v544
    %v1972 = vunpack.c.l.b16 %v545
    %v1973 = vunpack.c.h.b16 %v545
    %v1974 = vunpack.c.l.b16 %v546
    %v1975 = vunpack.c.h.b16 %v546
    %v1976 = vunpack.c.l.b16 %v547
    %v1977 = vunpack.c.h.b16 %v547
    %v1978 = vunpack.c.l.b16 %v548
    %v1979 = vunpack.c.h.b16 %v548
    %v1980 = vunpack.c.l.b16 %v549
    %v1981 = vunpack.c.h.b16 %v549
    %v1982 = vunpack.c.l.b16 %v550
    %v1983 = vunpack.c.h.b16 %v550
    %v1984 = vunpack.c.l.b16 %v551
    %v1985 = vunpack.c.h.b16 %v551
    %v1986 = vunpack.c.l.b16 %v552
    %v1987 = vunpack.c.h.b16 %v552
    %v1988 = vunpack.c.l.b16 %v553
    %v1989 = vunpack.c.h.b16 %v553
    %v1990 = vunpack.c.l.b16 %v554
    %v1991 = vunpack.c.h.b16 %v554
    %v1992 = vunpack.c.l.b16 %v555
    %v1993 = vunpack.c.h.b16 %v555
    %v1994 = vunpack.c.l.b16 %v556
    %v1995 = vunpack.c.h.b16 %v556
    %v1996 = vunpack.c.l.b16 %v557
    %v1997 = vunpack.c.h.b16 %v557
    %v1998 = vunpack.c.l.b16 %v558
    %v1999 = vunpack.c.h.b16 %v558
    %v2000 = vunpack.c.l.b16 %v559
    %v2001 = vunpack.c.h.b16 %v559
    %v2002 = vunpack.c.l.b16 %v560
    %v2003 = vunpack.c.h.b16 %v560
    %v2004 = vunpack.c.l.b16 %v561
    %v2005 = vunpack.c.h.b16 %v561
    %v2006 = vunpack.c.l.b16 %v562
    %v2007 = vunpack.c.h.b16 %v562
    %v2008 = vunpack.c.l.b16 %v563
    %v2009 = vunpack.c.h.b16 %v563
    %v2010 = vunpack.c.l.b16 %v564
    %v2011 = vunpack.c.h.b16 %v564
    %v2012 = vunpack.c.l.b16 %v565
    %v2013 = vunpack.c.h.b16 %v565
    %v2014 = vunpack.c.l.b16 %v566
    %v2015 = vunpack.c.h.b16 %v566
    %v2016 = vunpack.c.l.b16 %v567
    %v2017 = vunpack.c.h.b16 %v567
    %v2018 = vunpack.c.l.b16 %v568
    %v2019 = vunpack.c.h.b16 %v568
    %v2020 = vunpack.c.l.b16 %v569
    %v2021 = vunpack.c.h.b16 %v569
    %v2022 = vunpack.c.l.b16 %v570
    %v2023 = vunpack.c.h.b16 %v570
    %v2024 = vunpack.c.l.b16 %v571
    %v2025 = vunpack.c.h.b16 %v571
    %v2026 = vunpack.c.l.b16 %v572
    %v2027 = vunpack.c.h.b16 %v572
    %v2028 = vunpack.c.l.b16 %v573
    %v2029 = vunpack.c.h.b16 %v573
    %v2030 = vunpack.c.l.b16 %v574
    %v2031 = vunpack.c.h.b16 %v574
    %v2032 = vunpack.c.l.b16 %v575
    %v2033 = vunpack.c.h.b16 %v575
    %v2034 = vunpack.c.l.b16 %v576
    %v2035 = vunpack.c.h.b16 %v576
    %v2036 = vunpack.c.l.b16 %v577
    %v2037 = vunpack.c.h.b16 %v577
    %v2038 = vunpack.c.l.b16 %v578
    %v2039 = vunpack.c.h.b16 %v578
    %v2040 = vunpack.c.l.b16 %v579
    %v2041 = vunpack.c.h.b16 %v579
    %v2042 = vunpack.c.l.b16 %v580
    %v2043 = vunpack.c.h.b16 %v580
    %v2044 = vunpack.c.l.b16 %v581
    %v2045 = vunpack.c.h.b16 %v581
    %v2046 = vunpack.c.l.b16 %v582
    %v2047 = vunpack.c.h.b16 %v582
    %v2048 = vunpack.c.l.b16 %v583
    %v2049 = vunpack.c.h.b16 %v583
    %v2050 = vunpack.c.l.b16 %v584
    %v2051 = vunpack.c.h.b16 %v584
    %v2052 = vunpack.c.l.b16 %v585
    %v2053 = vunpack.c.h.b16 %v585
    %v2054 = vunpack.c.l.b16 %v586
    %v2055 = vunpack.c.h.b16 %v586
    %v2056 = vunpack.c.l.b16 %v587
    %v2057 = vunpack.c.h.b16 %v587
    %v2058 = vunpack.c.l.b16 %v588
    %v2059 = vunpack.c.h.b16 %v588
    %v2060 = vunpack.c.l.b16 %v589
    %v2061 = vunpack.c.h.b16 %v589
    %v2062 = vunpack.c.l.b16 %v590
    %v2063 = vunpack.c.h.b16 %v590
    %v2064 = vunpack.c.l.b16 %v591
    %v2065 = vunpack.c.h.b16 %v591
    %v2066 = vunpack.c.l.b16 %v592
    %v2067 = vunpack.c.h.b16 %v592
    %v2068 = vunpack.c.l.b16 %v593
    %v2069 = vunpack.c.h.b16 %v593
    %v2070 = vunpack.c.l.b16 %v594
    %v2071 = vunpack.c.h.b16 %v594
    %v2072 = vunpack.c.l.b16 %v595
    %v2073 = vunpack.c.h.b16 %v595
    %v2074 = vunpack.c.l.b16 %v596
    %v2075 = vunpack.c.h.b16 %v596
    %v2076 = vunpack.c.l.b16 %v597
    %v2077 = vunpack.c.h.b16 %v597
    %v2078 = vunpack.c.l.b16 %v598
    %v2079 = vunpack.c.h.b16 %v598
    %v2080 = vunpack.c.l.b16 %v599
    %v2081 = vunpack.c.h.b16 %v599
    %v2082 = vunpack.c.l.b16 %v600
    %v2083 = vunpack.c.h.b16 %v600
    %v2084 = vunpack.c.l.b16 %v601
    %v2085 = vunpack.c.h.b16 %v601
    %v2086 = vunpack.c.l.b16 %v602
    %v2087 = vunpack.c.h.b16 %v602
    %v2088 = vunpack.c.l.b16 %v603
    %v2089 = vunpack.c.h.b16 %v603
    %v2090 = vunpack.c.l.b16 %v604
    %v2091 = vunpack.c.h.b16 %v604
    %v2092 = vunpack.c.l.b16 %v605
    %v2093 = vunpack.c.h.b16 %v605
    %v2094 = vunpack.c.l.b16 %v606
    %v2095 = vunpack.c.h.b16 %v606
    %v2096 = vunpack.c.l.b16 %v607
    %v2097 = vunpack.c.h.b16 %v607
    %v2098 = vunpack.c.l.b16 %v608
    %v2099 = vunpack.c.h.b16 %v608
    %v2100 = vunpack.c.l.b16 %v609
    %v2101 = vunpack.c.h.b16 %v609
    %v2102 = vunpack.c.l.b16 %v610
    %v2103 = vunpack.c.h.b16 %v610
    %v2104 = vunpack.c.l.b16 %v611
    %v2105 = vunpack.c.h.b16 %v611
    %v2106 = vunpack.c.l.b16 %v612
    %v2107 = vunpack.c.h.b16 %v612
    %v2108 = vunpack.c.l.b16 %v613
    %v2109 = vunpack.c.h.b16 %v613
    %v2110 = vunpack.c.l.b16 %v614
    %v2111 = vunpack.c.h.b16 %v614
    %v2112 = vunpack.c.l.b16 %v615
    %v2113 = vunpack.c.h.b16 %v615
    %v2114 = vunpack.c.l.b16 %v616
    %v2115 = vunpack.c.h.b16 %v616
    %v2116 = vunpack.c.l.b16 %v617
    %v2117 = vunpack.c.h.b16 %v617
    %v2118 = vunpack.c.l.b16 %v618
    %v2119 = vunpack.c.h.b16 %v618
    %v2120 = vunpack.c.l.b16 %v619
    %v2121 = vunpack.c.h.b16 %v619
    %v2122 = vunpack.c.l.b16 %v620
    %v2123 = vunpack.c.h.b16 %v620
    %v2124 = vunpack.c.l.b16 %v621
    %v2125 = vunpack.c.h.b16 %v621
    %v2126 = vunpack.c.l.b16 %v622
    %v2127 = vunpack.c.h.b16 %v622
    %v2128 = vunpack.c.l.b16 %v623
    %v2129 = vunpack.c.h.b16 %v623
    %v2130 = vunpack.c.l.b16 %v624
    %v2131 = vunpack.c.h.b16 %v624
    %v2132 = vunpack.c.l.b16 %v625
    %v2133 = vunpack.c.h.b16 %v625
    %v2134 = vunpack.c.l.b16 %v626
    %v2135 = vunpack.c.h.b16 %v626
    %v2136 = vunpack.c.l.b16 %v627
    %v2137 = vunpack.c.h.b16 %v627
    %v2138 = vunpack.c.l.b16 %v628
    %v2139 = vunpack.c.h.b16 %v628
    %v2140 = vunpack.c.l.b16 %v629
    %v2141 = vunpack.c.h.b16 %v629
    %v2142 = vunpack.c.l.b16 %v630
    %v2143 = vunpack.c.h.b16 %v630
    %v2144 = vunpack.c.l.b16 %v631
    %v2145 = vunpack.c.h.b16 %v631
    %v2146 = vunpack.c.l.b16 %v632
    %v2147 = vunpack.c.h.b16 %v632
    %v2148 = vunpack.c.l.b16 %v633
    %v2149 = vunpack.c.h.b16 %v633
    %v2150 = vunpack.c.l.b16 %v634
    %v2151 = vunpack.c.h.b16 %v634
    %v2152 = vunpack.c.l.b16 %v635
    %v2153 = vunpack.c.h.b16 %v635
    %v2154 = vunpack.c.l.b16 %v636
    %v2155 = vunpack.c.h.b16 %v636
    %v2156 = vunpack.c.l.b16 %v637
    %v2157 = vunpack.c.h.b16 %v637
    %v2158 = vunpack.c.l.b16 %v638
    %v2159 = vunpack.c.h.b16 %v638
    %v2160 = vunpack.c.l.b16 %v639
    %v2161 = vunpack.c.h.b16 %v639
    %v2162 = vunpack.c.l.b16 %v640
    %v2163 = vunpack.c.h.b16 %v640
    %v2164 = vunpack.c.l.b16 %v641
    %v2165 = vunpack.c.h.b16 %v641
    %v2166 = vunpack.c.l.b16 %v642
    %v2167 = vunpack.c.h.b16 %v642
    %v2168 = vunpack.c.l.b16 %v643
    %v2169 = vunpack.c.h.b16 %v643
    %v2170 = vunpack.c.l.b16 %v644
    %v2171 = vunpack.c.h.b16 %v644
    %v2172 = vunpack.c.l.b16 %v645
    %v2173 = vunpack.c.h.b16 %v645
    %v2174 = vunpack.c.l.b16 %v646
    %v2175 = vunpack.c.h.b16 %v646
    %v2176 = vunpack.c.l.b16 %v647
    %v2177 = vunpack.c.h.b16 %v647
    %v2178 = vunpack.c.l.b16 %v648
    %v2179 = vunpack.c.h.b16 %v648
    %v2180 = vunpack.c.l.b16 %v649
    %v2181 = vunpack.c.h.b16 %v649
    %v2182 = vunpack.c.l.b16 %v650
    %v2183 = vunpack.c.h.b16 %v650
    %v2184 = vunpack.c.l.b16 %v651
    %v2185 = vunpack.c.h.b16 %v651
    %v2186 = vunpack.c.l.b16 %v652
    %v2187 = vunpack.c.h.b16 %v652
    %v2188 = vunpack.c.l.b16 %v653
    %v2189 = vunpack.c.h.b16 %v653
    %v2190 = vunpack.c.l.b16 %v654
    %v2191 = vunpack.c.h.b16 %v654
    %v2192 = vunpack.c.l.b16 %v655
    %v2193 = vunpack.c.h.b16 %v655
    %v2194 = vunpack.c.l.b16 %v656
    %v2195 = vunpack.c.h.b16 %v656
    %v2196 = vunpack.c.l.b16 %v657
    %v2197 = vunpack.c.h.b16 %v657
    %v2198 = vunpack.c.l.b16 %v658
    %v2199 = vunpack.c.h.b16 %v658
    %v2200 = vunpack.c.l.b16 %v659
    %v2201 = vunpack.c.h.b16 %v659
    %v2202 = vunpack.c.l.b16 %v660
    %v2203 = vunpack.c.h.b16 %v660
    %v2204 = vunpack.c.l.b16 %v661
    %v2205 = vunpack.c.h.b16 %v661
    %v2206 = vunpack.c.l.b16 %v662
    %v2207 = vunpack.c.h.b16 %v662
    %v2208 = vunpack.c.l.b16 %v663
    %v2209 = vunpack.c.h.b16 %v663
    %v2210 = vunpack.c.l.b16 %v664
    %v2211 = vunpack.c.h.b16 %v664
    %v2212 = vunpack.c.l.b16 %v665
    %v2213 = vunpack.c.h.b16 %v665
    %v2214 = vunpack.c.l.b16 %v666
    %v2215 = vunpack.c.h.b16 %v666
    %v2216 = vunpack.c.l.b16 %v667
    %v2217 = vunpack.c.h.b16 %v667
    %v2218 = vunpack.c.l.b16 %v668
    %v2219 = vunpack.c.h.b16 %v668
    %v2220 = vunpack.c.l.b16 %v669
    %v2221 = vunpack.c.h.b16 %v669
    %v2222 = vunpack.c.l.b16 %v670
    %v2223 = vunpack.c.h.b16 %v670
    %v2224 = vunpack.c.l.b16 %v671
    %v2225 = vunpack.c.h.b16 %v671
    %v2226 = vunpack.c.l.b16 %v672
    %v2227 = vunpack.c.h.b16 %v672
    %v2228 = vunpack.c.l.b16 %v673
    %v2229 = vunpack.c.h.b16 %v673
    %v2230 = vunpack.c.l.b16 %v674
    %v2231 = vunpack.c.h.b16 %v674
    %v2232 = vunpack.c.l.b16 %v675
    %v2233 = vunpack.c.h.b16 %v675
    %v2234 = vunpack.c.l.b16 %v676
    %v2235 = vunpack.c.h.b16 %v676
    %v2236 = vunpack.c.l.b16 %v677
    %v2237 = vunpack.c.h.b16 %v677
    %v2238 = vunpack.c.l.b16 %v678
    %v2239 = vunpack.c.h.b16 %v678
    %v2240 = vunpack.c.l.b16 %v679
    %v2241 = vunpack.c.h.b16 %v679
    %v2242 = vunpack.c.l.b16 %v680
    %v2243 = vunpack.c.h.b16 %v680
    %v2244 = vunpack.c.l.b16 %v681
    %v2245 = vunpack.c.h.b16 %v681
    %v2246 = vunpack.c.l.b16 %v682
    %v2247 = vunpack.c.h.b16 %v682
    %v2248 = vunpack.c.l.b16 %v683
    %v2249 = vunpack.c.h.b16 %v683
    %v2250 = vunpack.c.l.b16 %v684
    %v2251 = vunpack.c.h.b16 %v684
    %v2252 = vunpack.c.l.b16 %v685
    %v2253 = vunpack.c.h.b16 %v685
    %v2254 = vunpack.c.l.b16 %v686
    %v2255 = vunpack.c.h.b16 %v686
    %v2256 = vunpack.c.l.b16 %v687
    %v2257 = vunpack.c.h.b16 %v687
    %v2258 = vunpack.c.l.b16 %v688
    %v2259 = vunpack.c.h.b16 %v688
    %v2260 = vunpack.c.l.b16 %v689
    %v2261 = vunpack.c.h.b16 %v689
    %v2262 = vunpack.c.l.b16 %v690
    %v2263 = vunpack.c.h.b16 %v690
    %v2264 = vunpack.c.l.b16 %v691
    %v2265 = vunpack.c.h.b16 %v691
    %v2266 = vunpack.c.l.b16 %v692
    %v2267 = vunpack.c.h.b16 %v692
    %v2268 = vunpack.c.l.b16 %v693
    %v2269 = vunpack.c.h.b16 %v693
    %v2270 = vunpack.c.l.b16 %v694
    %v2271 = vunpack.c.h.b16 %v694
    %v2272 = vunpack.c.l.b16 %v695
    %v2273 = vunpack.c.h.b16 %v695
    %v2274 = vunpack.c.l.b16 %v696
    %v2275 = vunpack.c.h.b16 %v696
    %v2276 = vunpack.c.l.b16 %v697
    %v2277 = vunpack.c.h.b16 %v697
    %v2278 = vunpack.c.l.b16 %v698
    %v2279 = vunpack.c.h.b16 %v698
    %v2280 = vunpack.c.l.b16 %v699
    %v2281 = vunpack.c.h.b16 %v699
    %v2282 = vunpack.c.l.b16 %v700
    %v2283 = vunpack.c.h.b16 %v700
    %v2284 = vunpack.c.l.b16 %v701
    %v2285 = vunpack.c.h.b16 %v701
    %v2286 = vunpack.c.l.b16 %v702
    %v2287 = vunpack.c.h.b16 %v702
    %v2288 = vunpack.c.l.b16 %v703
    %v2289 = vunpack.c.h.b16 %v703
    %v2290 = vunpack.c.l.b16 %v704
    %v2291 = vunpack.c.h.b16 %v704
    %v2292 = vunpack.c.l.b16 %v705
    %v2293 = vunpack.c.h.b16 %v705
    %v2294 = vunpack.c.l.b16 %v706
    %v2295 = vunpack.c.h.b16 %v706
    %v2296 = vunpack.c.l.b16 %v707
    %v2297 = vunpack.c.h.b16 %v707
    %v2298 = vunpack.c.l.b16 %v708
    %v2299 = vunpack.c.h.b16 %v708
    %v2300 = vunpack.c.l.b16 %v709
    %v2301 = vunpack.c.h.b16 %v709
    %v2302 = vunpack.c.l.b16 %v710
    %v2303 = vunpack.c.h.b16 %v710
    %v2304 = vunpack.c.l.b16 %v711
    %v2305 = vunpack.c.h.b16 %v711
    %v2306 = vunpack.c.l.b16 %v712
    %v2307 = vunpack.c.h.b16 %v712
    %v2308 = vunpack.c.l.b16 %v713
    %v2309 = vunpack.c.h.b16 %v713
    %v2310 = vunpack.c.l.b16 %v714
    %v2311 = vunpack.c.h.b16 %v714
    %v2312 = vunpack.c.l.b16 %v715
    %v2313 = vunpack.c.h.b16 %v715
    %v2314 = vunpack.c.l.b16 %v716
    %v2315 = vunpack.c.h.b16 %v716
    %v2316 = vunpack.c.l.b16 %v717
    %v2317 = vunpack.c.h.b16 %v717
    %v2318 = vunpack.c.l.b16 %v718
    %v2319 = vunpack.c.h.b16 %v718
    %v2320 = vunpack.c.l.b16 %v719
    %v2321 = vunpack.c.h.b16 %v719
    %v2322 = vunpack.c.l.b16 %v720
    %v2323 = vunpack.c.h.b16 %v720
    %v2324 = vunpack.c.l.b16 %v721
    %v2325 = vunpack.c.h.b16 %v721
    %v2326 = vunpack.c.l.b16 %v722
    %v2327 = vunpack.c.h.b16 %v722
    %v2328 = vunpack.c.l.b16 %v723
    %v2329 = vunpack.c.h.b16 %v723
    %v2330 = vunpack.c.l.b16 %v724
    %v2331 = vunpack.c.h.b16 %v724
    %v2332 = vunpack.c.l.b16 %v725
    %v2333 = vunpack.c.h.b16 %v725
    %v2334 = vpack.c.b16 %v1342, %v1310
    %v2335 = vpack.c.b16 %v1343, %v1311
    %v2336 = vpack.c.b16 %v1344, %v1312
    %v2337 = vpack.c.b16 %v1345, %v1313
    %v2338 = vpack.c.b16 %v1346, %v1314
    %v2339 = vpack.c.b16 %v1347, %v1315
    %v2340 = vpack.c.b16 %v1348, %v1316
    %v2341 = vpack.c.b16 %v1349, %v1317
    %v2342 = vpack.c.b16 %v1350, %v1318
    %v2343 = vpack.c.b16 %v1351, %v1319
    %v2344 = vpack.c.b16 %v1352, %v1320
    %v2345 = vpack.c.b16 %v1353, %v1321
    %v2346 = vpack.c.b16 %v1354, %v1322
    %v2347 = vpack.c.b16 %v1355, %v1323
    %v2348 = vpack.c.b16 %v1356, %v1324
    %v2349 = vpack.c.b16 %v1357, %v1325
    %v2350 = vpack.c.b16 %v1358, %v1326
    %v2351 = vpack.c.b16 %v1359, %v1327
    %v2352 = vpack.c.b16 %v1360, %v1328
    %v2353 = vpack.c.b16 %v1361, %v1329
    %v2354 = vpack.c.b16 %v1362, %v1330
    %v2355 = vpack.c.b16 %v1363, %v1331
    %v2356 = vpack.c.b16 %v1364, %v1332
    %v2357 = vpack.c.b16 %v1365, %v1333
    %v2358 = vpack.c.b16 %v1366, %v1334
    %v2359 = vpack.c.b16 %v1367, %v1335
    %v2360 = vpack.c.b16 %v1368, %v1336
    %v2361 = vpack.c.b16 %v1369, %v1337
    %v2362 = vpack.c.b16 %v1370, %v1338
    %v2363 = vpack.c.b16 %v1371, %v1339
    %v2364 = vpack.c.b16 %v1372, %v1340
    %v2365 = vpack.c.b16 %v1373, %v1341
    %v2366 = vpack.c.b16 %v1406, %v1374
    %v2367 = vpack.c.b16 %v1407, %v1375
    %v2368 = vpack.c.b16 %v1408, %v1376
    %v2369 = vpack.c.b16 %v1409, %v1377
    %v2370 = vpack.c.b16 %v1410, %v1378
    %v2371 = vpack.c.b16 %v1411, %v1379
    %v2372 = vpack.c.b16 %v1412, %v1380
    %v2373 = vpack.c.b16 %v1413, %v1381
    %v2374 = vpack.c.b16 %v1414, %v1382
    %v2375 = vpack.c.b16 %v1415, %v1383
    %v2376 = vpack.c.b16 %v1416, %v1384
    %v2377 = vpack.c.b16 %v1417, %v1385
    %v2378 = vpack.c.b16 %v1418, %v1386
    %v2379 = vpack.c.b16 %v1419, %v1387
    %v2380 = vpack.c.b16 %v1420, %v1388
    %v2381 = vpack.c.b16 %v1421, %v1389
    %v2382 = vpack.c.b16 %v1422, %v1390
    %v2383 = vpack.c.b16 %v1423, %v1391
    %v2384 = vpack.c.b16 %v1424, %v1392
    %v2385 = vpack.c.b16 %v1425, %v1393
    %v2386 = vpack.c.b16 %v1426, %v1394
    %v2387 = vpack.c.b16 %v1427, %v1395
    %v2388 = vpack.c.b16 %v1428, %v1396
    %v2389 = vpack.c.b16 %v1429, %v1397
    %v2390 = vpack.c.b16 %v1430, %v1398
    %v2391 = vpack.c.b16 %v1431, %v1399
    %v2392 = vpack.c.b16 %v1432, %v1400
    %v2393 = vpack.c.b16 %v1433, %v1401
    %v2394 = vpack.c.b16 %v1434, %v1402
    %v2395 = vpack.c.b16 %v1435, %v1403
    %v2396 = vpack.c.b16 %v1436, %v1404
    %v2397 = vpack.c.b16 %v1437, %v1405
    %v2398 = vpack.c.b16 %v1470, %v1438
    %v2399 = vpack.c.b16 %v1471, %v1439
    %v2400 = vpack.c.b16 %v1472, %v1440
    %v2401 = vpack.c.b16 %v1473, %v1441
    %v2402 = vpack.c.b16 %v1474, %v1442
    %v2403 = vpack.c.b16 %v1475, %v1443
    %v2404 = vpack.c.b16 %v1476, %v1444
    %v2405 = vpack.c.b16 %v1477, %v1445
    %v2406 = vpack.c.b16 %v1478, %v1446
    %v2407 = vpack.c.b16 %v1479, %v1447
    %v2408 = vpack.c.b16 %v1480, %v1448
    %v2409 = vpack.c.b16 %v1481, %v1449
    %v2410 = vpack.c.b16 %v1482, %v1450
    %v2411 = vpack.c.b16 %v1483, %v1451
    %v2412 = vpack.c.b16 %v1484, %v1452
    %v2413 = vpack.c.b16 %v1485, %v1453
    %v2414 = vpack.c.b16 %v1486, %v1454
    %v2415 = vpack.c.b16 %v1487, %v1455
    %v2416 = vpack.c.b16 %v1488, %v1456
    %v2417 = vpack.c.b16 %v1489, %v1457
    %v2418 = vpack.c.b16 %v1490, %v1458
    %v2419 = vpack.c.b16 %v1491, %v1459
    %v2420 = vpack.c.b16 %v1492, %v1460
    %v2421 = vpack.c.b16 %v1493, %v1461
    %v2422 = vpack.c.b16 %v1494, %v1462
    %v2423 = vpack.c.b16 %v1495, %v1463
    %v2424 = vpack.c.b16 %v1496, %v1464
    %v2425 = vpack.c.b16 %v1497, %v1465
    %v2426 = vpack.c.b16 %v1498, %v1466
    %v2427 = vpack.c.b16 %v1499, %v1467
    %v2428 = vpack.c.b16 %v1500, %v1468
    %v2429 = vpack.c.b16 %v1501, %v1469
    %v2430 = vpack.c.b16 %v1534, %v1502
    %v2431 = vpack.c.b16 %v1535, %v1503
    %v2432 = vpack.c.b16 %v1536, %v1504
    %v2433 = vpack.c.b16 %v1537, %v1505
    %v2434 = vpack.c.b16 %v1538, %v1506
    %v2435 = vpack.c.b16 %v1539, %v1507
    %v2436 = vpack.c.b16 %v1540, %v1508
    %v2437 = vpack.c.b16 %v1541, %v1509
    %v2438 = vpack.c.b16 %v1542, %v1510
    %v2439 = vpack.c.b16 %v1543, %v1511
    %v2440 = vpack.c.b16 %v1544, %v1512
    %v2441 = vpack.c.b16 %v1545, %v1513
    %v2442 = vpack.c.b16 %v1546, %v1514
    %v2443 = vpack.c.b16 %v1547, %v1515
    %v2444 = vpack.c.b16 %v1548, %v1516
    %v2445 = vpack.c.b16 %v1549, %v1517
    %v2446 = vpack.c.b16 %v1550, %v1518
    %v2447 = vpack.c.b16 %v1551, %v1519
    %v2448 = vpack.c.b16 %v1552, %v1520
    %v2449 = vpack.c.b16 %v1553, %v1521
    %v2450 = vpack.c.b16 %v1554, %v1522
    %v2451 = vpack.c.b16 %v1555, %v1523
    %v2452 = vpack.c.b16 %v1556, %v1524
    %v2453 = vpack.c.b16 %v1557, %v1525
    %v2454 = vpack.c.b16 %v1558, %v1526
    %v2455 = vpack.c.b16 %v1559, %v1527
    %v2456 = vpack.c.b16 %v1560, %v1528
    %v2457 = vpack.c.b16 %v1561, %v1529
    %v2458 = vpack.c.b16 %v1562, %v1530
    %v2459 = vpack.c.b16 %v1563, %v1531
    %v2460 = vpack.c.b16 %v1564, %v1532
    %v2461 = vpack.c.b16 %v1565, %v1533
    %v2462 = vpack.c.b16 %v1598, %v1566
    %v2463 = vpack.c.b16 %v1599, %v1567
    %v2464 = vpack.c.b16 %v1600, %v1568
    %v2465 = vpack.c.b16 %v1601, %v1569
    %v2466 = vpack.c.b16 %v1602, %v1570
    %v2467 = vpack.c.b16 %v1603, %v1571
    %v2468 = vpack.c.b16 %v1604, %v1572
    %v2469 = vpack.c.b16 %v1605, %v1573
    %v2470 = vpack.c.b16 %v1606, %v1574
    %v2471 = vpack.c.b16 %v1607, %v1575
    %v2472 = vpack.c.b16 %v1608, %v1576
    %v2473 = vpack.c.b16 %v1609, %v1577
    %v2474 = vpack.c.b16 %v1610, %v1578
    %v2475 = vpack.c.b16 %v1611, %v1579
    %v2476 = vpack.c.b16 %v1612, %v1580
    %v2477 = vpack.c.b16 %v1613, %v1581
    %v2478 = vpack.c.b16 %v1614, %v1582
    %v2479 = vpack.c.b16 %v1615, %v1583
    %v2480 = vpack.c.b16 %v1616, %v1584
    %v2481 = vpack.c.b16 %v1617, %v1585
    %v2482 = vpack.c.b16 %v1618, %v1586
    %v2483 = vpack.c.b16 %v1619, %v1587
    %v2484 = vpack.c.b16 %v1620, %v1588
    %v2485 = vpack.c.b16 %v1621, %v1589
    %v2486 = vpack.c.b16 %v1622, %v1590
    %v2487 = vpack.c.b16 %v1623, %v1591
    %v2488 = vpack.c.b16 %v1624, %v1592
    %v2489 = vpack.c.b16 %v1625, %v1593
    %v2490 = vpack.c.b16 %v1626, %v1594
    %v2491 = vpack.c.b16 %v1627, %v1595
    %v2492 = vpack.c.b16 %v1628, %v1596
    %v2493 = vpack.c.b16 %v1629, %v1597
    %v2494 = vpack.c.b16 %v1662, %v1630
    %v2495 = vpack.c.b16 %v1663, %v1631
    %v2496 = vpack.c.b16 %v1664, %v1632
    %v2497 = vpack.c.b16 %v1665, %v1633
    %v2498 = vpack.c.b16 %v1666, %v1634
    %v2499 = vpack.c.b16 %v1667, %v1635
    %v2500 = vpack.c.b16 %v1668, %v1636
    %v2501 = vpack.c.b16 %v1669, %v1637
    %v2502 = vpack.c.b16 %v1670, %v1638
    %v2503 = vpack.c.b16 %v1671, %v1639
    %v2504 = vpack.c.b16 %v1672, %v1640
    %v2505 = vpack.c.b16 %v1673, %v1641
    %v2506 = vpack.c.b16 %v1674, %v1642
    %v2507 = vpack.c.b16 %v1675, %v1643
    %v2508 = vpack.c.b16 %v1676, %v1644
    %v2509 = vpack.c.b16 %v1677, %v1645
    %v2510 = vpack.c.b16 %v1678, %v1646
    %v2511 = vpack.c.b16 %v1679, %v1647
    %v2512 = vpack.c.b16 %v1680, %v1648
    %v2513 = vpack.c.b16 %v1681, %v1649
    %v2514 = vpack.c.b16 %v1682, %v1650
    %v2515 = vpack.c.b16 %v1683, %v1651
    %v2516 = vpack.c.b16 %v1684, %v1652
    %v2517 = vpack.c.b16 %v1685, %v1653
    %v2518 = vpack.c.b16 %v1686, %v1654
    %v2519 = vpack.c.b16 %v1687, %v1655
    %v2520 = vpack.c.b16 %v1688, %v1656
    %v2521 = vpack.c.b16 %v1689, %v1657
    %v2522 = vpack.c.b16 %v1690, %v1658
    %v2523 = vpack.c.b16 %v1691, %v1659
    %v2524 = vpack.c.b16 %v1692, %v1660
    %v2525 = vpack.c.b16 %v1693, %v1661
    %v2526 = vpack.c.b16 %v1726, %v1694
    %v2527 = vpack.c.b16 %v1727, %v1695
    %v2528 = vpack.c.b16 %v1728, %v1696
    %v2529 = vpack.c.b16 %v1729, %v1697
    %v2530 = vpack.c.b16 %v1730, %v1698
    %v2531 = vpack.c.b16 %v1731, %v1699
    %v2532 = vpack.c.b16 %v1732, %v1700
    %v2533 = vpack.c.b16 %v1733, %v1701
    %v2534 = vpack.c.b16 %v1734, %v1702
    %v2535 = vpack.c.b16 %v1735, %v1703
    %v2536 = vpack.c.b16 %v1736, %v1704
    %v2537 = vpack.c.b16 %v1737, %v1705
    %v2538 = vpack.c.b16 %v1738, %v1706
    %v2539 = vpack.c.b16 %v1739, %v1707
    %v2540 = vpack.c.b16 %v1740, %v1708
    %v2541 = vpack.c.b16 %v1741, %v1709
    %v2542 = vpack.c.b16 %v1742, %v1710
    %v2543 = vpack.c.b16 %v1743, %v1711
    %v2544 = vpack.c.b16 %v1744, %v1712
    %v2545 = vpack.c.b16 %v1745, %v1713
    %v2546 = vpack.c.b16 %v1746, %v1714
    %v2547 = vpack.c.b16 %v1747, %v1715
    %v2548 = vpack.c.b16 %v1748, %v1716
    %v2549 = vpack.c.b16 %v1749, %v1717
    %v2550 = vpack.c.b16 %v1750, %v1718
    %v2551 = vpack.c.b16 %v1751, %v1719
    %v2552 = vpack.c.b16 %v1752, %v1720
    %v2553 = vpack.c.b16 %v1753, %v1721
    %v2554 = vpack.c.b16 %v1754, %v1722
    %v2555 = vpack.c.b16 %v1755, %v1723
    %v2556 = vpack.c.b16 %v1756, %v1724
    %v2557 = vpack.c.b16 %v1757, %v1725
    %v2558 = vpack.c.b16 %v1790, %v1758
    %v2559 = vpack.c.b16 %v1791, %v1759
    %v2560 = vpack.c.b16 %v1792, %v1760
    %v2561 = vpack.c.b16 %v1793, %v1761
    %v2562 = vpack.c.b16 %v1794, %v1762
    %v2563 = vpack.c.b16 %v1795, %v1763
    %v2564 = vpack.c.b16 %v1796, %v1764
    %v2565 = vpack.c.b16 %v1797, %v1765
    %v2566 = vpack.c.b16 %v1798, %v1766
    %v2567 = vpack.c.b16 %v1799, %v1767
    %v2568 = vpack.c.b16 %v1800, %v1768
    %v2569 = vpack.c.b16 %v1801, %v1769
    %v2570 = vpack.c.b16 %v1802, %v1770
    %v2571 = vpack.c.b16 %v1803, %v1771
    %v2572 = vpack.c.b16 %v1804, %v1772
    %v2573 = vpack.c.b16 %v1805, %v1773
    %v2574 = vpack.c.b16 %v1806, %v1774
    %v2575 = vpack.c.b16 %v1807, %v1775
    %v2576 = vpack.c.b16 %v1808, %v1776
    %v2577 = vpack.c.b16 %v1809, %v1777
    %v2578 = vpack.c.b16 %v1810, %v1778
    %v2579 = vpack.c.b16 %v1811, %v1779
    %v2580 = vpack.c.b16 %v1812, %v1780
    %v2581 = vpack.c.b16 %v1813, %v1781
    %v2582 = vpack.c.b16 %v1814, %v1782
    %v2583 = vpack.c.b16 %v1815, %v1783
    %v2584 = vpack.c.b16 %v1816, %v1784
    %v2585 = vpack.c.b16 %v1817, %v1785
    %v2586 = vpack.c.b16 %v1818, %v1786
    %v2587 = vpack.c.b16 %v1819, %v1787
    %v2588 = vpack.c.b16 %v1820, %v1788
    %v2589 = vpack.c.b16 %v1821, %v1789
    %v2590 = vpack.c.b16 %v1854, %v1822
    %v2591 = vpack.c.b16 %v1855, %v1823
    %v2592 = vpack.c.b16 %v1856, %v1824
    %v2593 = vpack.c.b16 %v1857, %v1825
    %v2594 = vpack.c.b16 %v1858, %v1826
    %v2595 = vpack.c.b16 %v1859, %v1827
    %v2596 = vpack.c.b16 %v1860, %v1828
    %v2597 = vpack.c.b16 %v1861, %v1829
    %v2598 = vpack.c.b16 %v1862, %v1830
    %v2599 = vpack.c.b16 %v1863, %v1831
    %v2600 = vpack.c.b16 %v1864, %v1832
    %v2601 = vpack.c.b16 %v1865, %v1833
    %v2602 = vpack.c.b16 %v1866, %v1834
    %v2603 = vpack.c.b16 %v1867, %v1835
    %v2604 = vpack.c.b16 %v1868, %v1836
    %v2605 = vpack.c.b16 %v1869, %v1837
    %v2606 = vpack.c.b16 %v1870, %v1838
    %v2607 = vpack.c.b16 %v1871, %v1839
    %v2608 = vpack.c.b16 %v1872, %v1840
    %v2609 = vpack.c.b16 %v1873, %v1841
    %v2610 = vpack.c.b16 %v1874, %v1842
    %v2611 = vpack.c.b16 %v1875, %v1843
    %v2612 = vpack.c.b16 %v1876, %v1844
    %v2613 = vpack.c.b16 %v1877, %v1845
    %v2614 = vpack.c.b16 %v1878, %v1846
    %v2615 = vpack.c.b16 %v1879, %v1847
    %v2616 = vpack.c.b16 %v1880, %v1848
    %v2617 = vpack.c.b16 %v1881, %v1849
    %v2618 = vpack.c.b16 %v1882, %v1850
    %v2619 = vpack.c.b16 %v1883, %v1851
    %v2620 = vpack.c.b16 %v1884, %v1852
    %v2621 = vpack.c.b16 %v1885, %v1853
    %v2622 = vpack.c.b16 %v1918, %v1886
    %v2623 = vpack.c.b16 %v1919, %v1887
    %v2624 = vpack.c.b16 %v1920, %v1888
    %v2625 = vpack.c.b16 %v1921, %v1889
    %v2626 = vpack.c.b16 %v1922, %v1890
    %v2627 = vpack.c.b16 %v1923, %v1891
    %v2628 = vpack.c.b16 %v1924, %v1892
    %v2629 = vpack.c.b16 %v1925, %v1893
    %v2630 = vpack.c.b16 %v1926, %v1894
    %v2631 = vpack.c.b16 %v1927, %v1895
    %v2632 = vpack.c.b16 %v1928, %v1896
    %v2633 = vpack.c.b16 %v1929, %v1897
    %v2634 = vpack.c.b16 %v1930, %v1898
    %v2635 = vpack.c.b16 %v1931, %v1899
    %v2636 = vpack.c.b16 %v1932, %v1900
    %v2637 = vpack.c.b16 %v1933, %v1901
    %v2638 = vpack.c.b16 %v1934, %v1902
    %v2639 = vpack.c.b16 %v1935, %v1903
    %v2640 = vpack.c.b16 %v1936, %v1904
    %v2641 = vpack.c.b16 %v1937, %v1905
    %v2642 = vpack.c.b16 %v1938, %v1906
    %v2643 = vpack.c.b16 %v1939, %v1907
    %v2644 = vpack.c.b16 %v1940, %v1908
    %v2645 = vpack.c.b16 %v1941, %v1909
    %v2646 = vpack.c.b16 %v1942, %v1910
    %v2647 = vpack.c.b16 %v1943, %v1911
    %v2648 = vpack.c.b16 %v1944, %v1912
    %v2649 = vpack.c.b16 %v1945, %v1913
    %v2650 = vpack.c.b16 %v1946, %v1914
    %v2651 = vpack.c.b16 %v1947, %v1915
    %v2652 = vpack.c.b16 %v1948, %v1916
    %v2653 = vpack.c.b16 %v1949, %v1917
    %v2654 = vpack.c.b16 %v1982, %v1950
    %v2655 = vpack.c.b16 %v1983, %v1951
    %v2656 = vpack.c.b16 %v1984, %v1952
    %v2657 = vpack.c.b16 %v1985, %v1953
    %v2658 = vpack.c.b16 %v1986, %v1954
    %v2659 = vpack.c.b16 %v1987, %v1955
    %v2660 = vpack.c.b16 %v1988, %v1956
    %v2661 = vpack.c.b16 %v1989, %v1957
    %v2662 = vpack.c.b16 %v1990, %v1958
    %v2663 = vpack.c.b16 %v1991, %v1959
    %v2664 = vpack.c.b16 %v1992, %v1960
    %v2665 = vpack.c.b16 %v1993, %v1961
    %v2666 = vpack.c.b16 %v1994, %v1962
    %v2667 = vpack.c.b16 %v1995, %v1963
    %v2668 = vpack.c.b16 %v1996, %v1964
    %v2669 = vpack.c.b16 %v1997, %v1965
    %v2670 = vpack.c.b16 %v1998, %v1966
    %v2671 = vpack.c.b16 %v1999, %v1967
    %v2672 = vpack.c.b16 %v2000, %v1968
    %v2673 = vpack.c.b16 %v2001, %v1969
    %v2674 = vpack.c.b16 %v2002, %v1970
    %v2675 = vpack.c.b16 %v2003, %v1971
    %v2676 = vpack.c.b16 %v2004, %v1972
    %v2677 = vpack.c.b16 %v2005, %v1973
    %v2678 = vpack.c.b16 %v2006, %v1974
    %v2679 = vpack.c.b16 %v2007, %v1975
    %v2680 = vpack.c.b16 %v2008, %v1976
    %v2681 = vpack.c.b16 %v2009, %v1977
    %v2682 = vpack.c.b16 %v2010, %v1978
    %v2683 = vpack.c.b16 %v2011, %v1979
    %v2684 = vpack.c.b16 %v2012, %v1980
    %v2685 = vpack.c.b16 %v2013, %v1981
    %v2686 = vpack.c.b16 %v2046, %v2014
    %v2687 = vpack.c.b16 %v2047, %v2015
    %v2688 = vpack.c.b16 %v2048, %v2016
    %v2689 = vpack.c.b16 %v2049, %v2017
    %v2690 = vpack.c.b16 %v2050, %v2018
    %v2691 = vpack.c.b16 %v2051, %v2019
    %v2692 = vpack.c.b16 %v2052, %v2020
    %v2693 = vpack.c.b16 %v2053, %v2021
    %v2694 = vpack.c.b16 %v2054, %v2022
    %v2695 = vpack.c.b16 %v2055, %v2023
    %v2696 = vpack.c.b16 %v2056, %v2024
    %v2697 = vpack.c.b16 %v2057, %v2025
    %v2698 = vpack.c.b16 %v2058, %v2026
    %v2699 = vpack.c.b16 %v2059, %v2027
    %v2700 = vpack.c.b16 %v2060, %v2028
    %v2701 = vpack.c.b16 %v2061, %v2029
    %v2702 = vpack.c.b16 %v2062, %v2030
    %v2703 = vpack.c.b16 %v2063, %v2031
    %v2704 = vpack.c.b16 %v2064, %v2032
    %v2705 = vpack.c.b16 %v2065, %v2033
    %v2706 = vpack.c.b16 %v2066, %v2034
    %v2707 = vpack.c.b16 %v2067, %v2035
    %v2708 = vpack.c.b16 %v2068, %v2036
    %v2709 = vpack.c.b16 %v2069, %v2037
    %v2710 = vpack.c.b16 %v2070, %v2038
    %v2711 = vpack.c.b16 %v2071, %v2039
    %v2712 = vpack.c.b16 %v2072, %v2040
    %v2713 = vpack.c.b16 %v2073, %v2041
    %v2714 = vpack.c.b16 %v2074, %v2042
    %v2715 = vpack.c.b16 %v2075, %v2043
    %v2716 = vpack.c.b16 %v2076, %v2044
    %v2717 = vpack.c.b16 %v2077, %v2045
    %v2718 = vpack.c.b16 %v2110, %v2078
    %v2719 = vpack.c.b16 %v2111, %v2079
    %v2720 = vpack.c.b16 %v2112, %v2080
    %v2721 = vpack.c.b16 %v2113, %v2081
    %v2722 = vpack.c.b16 %v2114, %v2082
    %v2723 = vpack.c.b16 %v2115, %v2083
    %v2724 = vpack.c.b16 %v2116, %v2084
    %v2725 = vpack.c.b16 %v2117, %v2085
    %v2726 = vpack.c.b16 %v2118, %v2086
    %v2727 = vpack.c.b16 %v2119, %v2087
    %v2728 = vpack.c.b16 %v2120, %v2088
    %v2729 = vpack.c.b16 %v2121, %v2089
    %v2730 = vpack.c.b16 %v2122, %v2090
    %v2731 = vpack.c.b16 %v2123, %v2091
    %v2732 = vpack.c.b16 %v2124, %v2092
    %v2733 = vpack.c.b16 %v2125, %v2093
    %v2734 = vpack.c.b16 %v2126, %v2094
    %v2735 = vpack.c.b16 %v2127, %v2095
    %v2736 = vpack.c.b16 %v2128, %v2096
    %v2737 = vpack.c.b16 %v2129, %v2097
    %v2738 = vpack.c.b16 %v2130, %v2098
    %v2739 = vpack.c.b16 %v2131, %v2099
    %v2740 = vpack.c.b16 %v2132, %v2100
    %v2741 = vpack.c.b16 %v2133, %v2101
    %v2742 = vpack.c.b16 %v2134, %v2102
    %v2743 = vpack.c.b16 %v2135, %v2103
    %v2744 = vpack.c.b16 %v2136, %v2104
    %v2745 = vpack.c.b16 %v2137, %v2105
    %v2746 = vpack.c.b16 %v2138, %v2106
    %v2747 = vpack.c.b16 %v2139, %v2107
    %v2748 = vpack.c.b16 %v2140, %v2108
    %v2749 = vpack.c.b16 %v2141, %v2109
    %v2750 = vpack.c.b16 %v2174, %v2142
    %v2751 = vpack.c.b16 %v2175, %v2143
    %v2752 = vpack.c.b16 %v2176, %v2144
    %v2753 = vpack.c.b16 %v2177, %v2145
    %v2754 = vpack.c.b16 %v2178, %v2146
    %v2755 = vpack.c.b16 %v2179, %v2147
    %v2756 = vpack.c.b16 %v2180, %v2148
    %v2757 = vpack.c.b16 %v2181, %v2149
    %v2758 = vpack.c.b16 %v2182, %v2150
    %v2759 = vpack.c.b16 %v2183, %v2151
    %v2760 = vpack.c.b16 %v2184, %v2152
    %v2761 = vpack.c.b16 %v2185, %v2153
    %v2762 = vpack.c.b16 %v2186, %v2154
    %v2763 = vpack.c.b16 %v2187, %v2155
    %v2764 = vpack.c.b16 %v2188, %v2156
    %v2765 = vpack.c.b16 %v2189, %v2157
    %v2766 = vpack.c.b16 %v2190, %v2158
    %v2767 = vpack.c.b16 %v2191, %v2159
    %v2768 = vpack.c.b16 %v2192, %v2160
    %v2769 = vpack.c.b16 %v2193, %v2161
    %v2770 = vpack.c.b16 %v2194, %v2162
    %v2771 = vpack.c.b16 %v2195, %v2163
    %v2772 = vpack.c.b16 %v2196, %v2164
    %v2773 = vpack.c.b16 %v2197, %v2165
    %v2774 = vpack.c.b16 %v2198, %v2166
    %v2775 = vpack.c.b16 %v2199, %v2167
    %v2776 = vpack.c.b16 %v2200, %v2168
    %v2777 = vpack.c.b16 %v2201, %v2169
    %v2778 = vpack.c.b16 %v2202, %v2170
    %v2779 = vpack.c.b16 %v2203, %v2171
    %v2780 = vpack.c.b16 %v2204, %v2172
    %v2781 = vpack.c.b16 %v2205, %v2173
    %v2782 = vpack.c.b16 %v2238, %v2206
    %v2783 = vpack.c.b16 %v2239, %v2207
    %v2784 = vpack.c.b16 %v2240, %v2208
    %v2785 = vpack.c.b16 %v2241, %v2209
    %v2786 = vpack.c.b16 %v2242, %v2210
    %v2787 = vpack.c.b16 %v2243, %v2211
    %v2788 = vpack.c.b16 %v2244, %v2212
    %v2789 = vpack.c.b16 %v2245, %v2213
    %v2790 = vpack.c.b16 %v2246, %v2214
    %v2791 = vpack.c.b16 %v2247, %v2215
    %v2792 = vpack.c.b16 %v2248, %v2216
    %v2793 = vpack.c.b16 %v2249, %v2217
    %v2794 = vpack.c.b16 %v2250, %v2218
    %v2795 = vpack.c.b16 %v2251, %v2219
    %v2796 = vpack.c.b16 %v2252, %v2220
    %v2797 = vpack.c.b16 %v2253, %v2221
    %v2798 = vpack.c.b16 %v2254, %v2222
    %v2799 = vpack.c.b16 %v2255, %v2223
    %v2800 = vpack.c.b16 %v2256, %v2224
    %v2801 = vpack.c.b16 %v2257, %v2225
    %v2802 = vpack.c.b16 %v2258, %v2226
    %v2803 = vpack.c.b16 %v2259, %v2227
    %v2804 = vpack.c.b16 %v2260, %v2228
    %v2805 = vpack.c.b16 %v2261, %v2229
    %v2806 = vpack.c.b16 %v2262, %v2230
    %v2807 = vpack.c.b16 %v2263, %v2231
    %v2808 = vpack.c.b16 %v2264, %v2232
    %v2809 = vpack.c.b16 %v2265, %v2233
    %v2810 = vpack.c.b16 %v2266, %v2234
    %v2811 = vpack.c.b16 %v2267, %v2235
    %v2812 = vpack.c.b16 %v2268, %v2236
    %v2813 = vpack.c.b16 %v2269, %v2237
    %v2814 = vpack.c.b16 %v2302, %v2270
    %v2815 = vpack.c.b16 %v2303, %v2271
    %v2816 = vpack.c.b16 %v2304, %v2272
    %v2817 = vpack.c.b16 %v2305, %v2273
    %v2818 = vpack.c.b16 %v2306, %v2274
    %v2819 = vpack.c.b16 %v2307, %v2275
    %v2820 = vpack.c.b16 %v2308, %v2276
    %v2821 = vpack.c.b16 %v2309, %v2277
    %v2822 = vpack.c.b16 %v2310, %v2278
    %v2823 = vpack.c.b16 %v2311, %v2279
    %v2824 = vpack.c.b16 %v2312, %v2280
    %v2825 = vpack.c.b16 %v2313, %v2281
    %v2826 = vpack.c.b16 %v2314, %v2282
    %v2827 = vpack.c.b16 %v2315, %v2283
    %v2828 = vpack.c.b16 %v2316, %v2284
    %v2829 = vpack.c.b16 %v2317, %v2285
    %v2830 = vpack.c.b16 %v2318, %v2286
    %v2831 = vpack.c.b16 %v2319, %v2287
    %v2832 = vpack.c.b16 %v2320, %v2288
    %v2833 = vpack.c.b16 %v2321, %v2289
    %v2834 = vpack.c.b16 %v2322, %v2290
    %v2835 = vpack.c.b16 %v2323, %v2291
    %v2836 = vpack.c.b16 %v2324, %v2292
    %v2837 = vpack.c.b16 %v2325, %v2293
    %v2838 = vpack.c.b16 %v2326, %v2294
    %v2839 = vpack.c.b16 %v2327, %v2295
    %v2840 = vpack.c.b16 %v2328, %v2296
    %v2841 = vpack.c.b16 %v2329, %v2297
    %v2842 = vpack.c.b16 %v2330, %v2298
    %v2843 = vpack.c.b16 %v2331, %v2299
    %v2844 = vpack.c.b16 %v2332, %v2300
    %v2845 = vpack.c.b16 %v2333, %v2301
    %3358 = vmatpush.bf16.msra.mxu0 %v2558
    %3359 = vmatpush.bf16.msra.mxu0 %v2526
    %3360 = vmatpush.bf16.msra.mxu0 %v2494
    %3361 = vmatpush.bf16.msra.mxu0 %v2462
    %3362 = vmatpush.bf16.msra.mxu0 %v2430
    %3363 = vmatpush.bf16.msra.mxu0 %v2398
    %3364 = vmatpush.bf16.msra.mxu0 %v2366
    %3365 = vmatpush.bf16.msra.mxu0 %v2334
    %3366 = vmatmul.bf16.gmra.mxu0 %v212
    %v3367 = vpop.f32.mrf.mxu0
    %v3368 = vadd.f32 %v734, %v3367
    %v3369 = vpop.f32.mrf.mxu0
    %3370 = vdwg.mxu0
    %3371 = vmatpush.bf16.msra.mxu0 %v2814
    %3372 = vmatpush.bf16.msra.mxu0 %v2782
    %3373 = vmatpush.bf16.msra.mxu0 %v2750
    %3374 = vmatpush.bf16.msra.mxu0 %v2718
    %3375 = vmatpush.bf16.msra.mxu0 %v2686
    %3376 = vmatpush.bf16.msra.mxu0 %v2654
    %3377 = vmatpush.bf16.msra.mxu0 %v2622
    %3378 = vmatpush.bf16.msra.mxu0 %v2590
    %3379 = vmatmul.bf16.gmra.mxu0 %v213
    %v3380 = vpop.f32.mrf.mxu0
    %v3381 = vadd.f32 %v3368, %v3380
    %v3382 = vpop.f32.mrf.mxu0
    %3383 = vdwg.mxu0
    %3384 = vmatpush.bf16.msra.mxu0 %v2559
    %3385 = vmatpush.bf16.msra.mxu0 %v2527
    %3386 = vmatpush.bf16.msra.mxu0 %v2495
    %3387 = vmatpush.bf16.msra.mxu0 %v2463
    %3388 = vmatpush.bf16.msra.mxu0 %v2431
    %3389 = vmatpush.bf16.msra.mxu0 %v2399
    %3390 = vmatpush.bf16.msra.mxu0 %v2367
    %3391 = vmatpush.bf16.msra.mxu0 %v2335
    %3392 = vmatmul.bf16.gmra.mxu0 %v212
    %v3393 = vpop.f32.mrf.mxu0
    %v3394 = vadd.f32 %v735, %v3393
    %v3395 = vpop.f32.mrf.mxu0
    %3396 = vdwg.mxu0
    %3397 = vmatpush.bf16.msra.mxu0 %v2815
    %3398 = vmatpush.bf16.msra.mxu0 %v2783
    %3399 = vmatpush.bf16.msra.mxu0 %v2751
    %3400 = vmatpush.bf16.msra.mxu0 %v2719
    %3401 = vmatpush.bf16.msra.mxu0 %v2687
    %3402 = vmatpush.bf16.msra.mxu0 %v2655
    %3403 = vmatpush.bf16.msra.mxu0 %v2623
    %3404 = vmatpush.bf16.msra.mxu0 %v2591
    %3405 = vmatmul.bf16.gmra.mxu0 %v213
    %v3406 = vpop.f32.mrf.mxu0
    %v3407 = vadd.f32 %v3394, %v3406
    %v3408 = vpop.f32.mrf.mxu0
    %3409 = vdwg.mxu0
    %3410 = vmatpush.bf16.msra.mxu0 %v2560
    %3411 = vmatpush.bf16.msra.mxu0 %v2528
    %3412 = vmatpush.bf16.msra.mxu0 %v2496
    %3413 = vmatpush.bf16.msra.mxu0 %v2464
    %3414 = vmatpush.bf16.msra.mxu0 %v2432
    %3415 = vmatpush.bf16.msra.mxu0 %v2400
    %3416 = vmatpush.bf16.msra.mxu0 %v2368
    %3417 = vmatpush.bf16.msra.mxu0 %v2336
    %3418 = vmatmul.bf16.gmra.mxu0 %v212
    %v3419 = vpop.f32.mrf.mxu0
    %v3420 = vadd.f32 %v736, %v3419
    %v3421 = vpop.f32.mrf.mxu0
    %3422 = vdwg.mxu0
    %3423 = vmatpush.bf16.msra.mxu0 %v2816
    %3424 = vmatpush.bf16.msra.mxu0 %v2784
    %3425 = vmatpush.bf16.msra.mxu0 %v2752
    %3426 = vmatpush.bf16.msra.mxu0 %v2720
    %3427 = vmatpush.bf16.msra.mxu0 %v2688
    %3428 = vmatpush.bf16.msra.mxu0 %v2656
    %3429 = vmatpush.bf16.msra.mxu0 %v2624
    %3430 = vmatpush.bf16.msra.mxu0 %v2592
    %3431 = vmatmul.bf16.gmra.mxu0 %v213
    %v3432 = vpop.f32.mrf.mxu0
    %v3433 = vadd.f32 %v3420, %v3432
    %v3434 = vpop.f32.mrf.mxu0
    %3435 = vdwg.mxu0
    %3436 = vmatpush.bf16.msra.mxu0 %v2561
    %3437 = vmatpush.bf16.msra.mxu0 %v2529
    %3438 = vmatpush.bf16.msra.mxu0 %v2497
    %3439 = vmatpush.bf16.msra.mxu0 %v2465
    %3440 = vmatpush.bf16.msra.mxu0 %v2433
    %3441 = vmatpush.bf16.msra.mxu0 %v2401
    %3442 = vmatpush.bf16.msra.mxu0 %v2369
    %3443 = vmatpush.bf16.msra.mxu0 %v2337
    %3444 = vmatmul.bf16.gmra.mxu0 %v212
    %v3445 = vpop.f32.mrf.mxu0
    %v3446 = vadd.f32 %v737, %v3445
    %v3447 = vpop.f32.mrf.mxu0
    %3448 = vdwg.mxu0
    %3449 = vmatpush.bf16.msra.mxu0 %v2817
    %3450 = vmatpush.bf16.msra.mxu0 %v2785
    %3451 = vmatpush.bf16.msra.mxu0 %v2753
    %3452 = vmatpush.bf16.msra.mxu0 %v2721
    %3453 = vmatpush.bf16.msra.mxu0 %v2689
    %3454 = vmatpush.bf16.msra.mxu0 %v2657
    %3455 = vmatpush.bf16.msra.mxu0 %v2625
    %3456 = vmatpush.bf16.msra.mxu0 %v2593
    %3457 = vmatmul.bf16.gmra.mxu0 %v213
    %v3458 = vpop.f32.mrf.mxu0
    %v3459 = vadd.f32 %v3446, %v3458
    %v3460 = vpop.f32.mrf.mxu0
    %3461 = vdwg.mxu0
    %3462 = vmatpush.bf16.msra.mxu0 %v2562
    %3463 = vmatpush.bf16.msra.mxu0 %v2530
    %3464 = vmatpush.bf16.msra.mxu0 %v2498
    %3465 = vmatpush.bf16.msra.mxu0 %v2466
    %3466 = vmatpush.bf16.msra.mxu0 %v2434
    %3467 = vmatpush.bf16.msra.mxu0 %v2402
    %3468 = vmatpush.bf16.msra.mxu0 %v2370
    %3469 = vmatpush.bf16.msra.mxu0 %v2338
    %3470 = vmatmul.bf16.gmra.mxu0 %v212
    %v3471 = vpop.f32.mrf.mxu0
    %v3472 = vadd.f32 %v738, %v3471
    %v3473 = vpop.f32.mrf.mxu0
    %3474 = vdwg.mxu0
    %3475 = vmatpush.bf16.msra.mxu0 %v2818
    %3476 = vmatpush.bf16.msra.mxu0 %v2786
    %3477 = vmatpush.bf16.msra.mxu0 %v2754
    %3478 = vmatpush.bf16.msra.mxu0 %v2722
    %3479 = vmatpush.bf16.msra.mxu0 %v2690
    %3480 = vmatpush.bf16.msra.mxu0 %v2658
    %3481 = vmatpush.bf16.msra.mxu0 %v2626
    %3482 = vmatpush.bf16.msra.mxu0 %v2594
    %3483 = vmatmul.bf16.gmra.mxu0 %v213
    %v3484 = vpop.f32.mrf.mxu0
    %v3485 = vadd.f32 %v3472, %v3484
    %v3486 = vpop.f32.mrf.mxu0
    %3487 = vdwg.mxu0
    %3488 = vmatpush.bf16.msra.mxu0 %v2563
    %3489 = vmatpush.bf16.msra.mxu0 %v2531
    %3490 = vmatpush.bf16.msra.mxu0 %v2499
    %3491 = vmatpush.bf16.msra.mxu0 %v2467
    %3492 = vmatpush.bf16.msra.mxu0 %v2435
    %3493 = vmatpush.bf16.msra.mxu0 %v2403
    %3494 = vmatpush.bf16.msra.mxu0 %v2371
    %3495 = vmatpush.bf16.msra.mxu0 %v2339
    %3496 = vmatmul.bf16.gmra.mxu0 %v212
    %v3497 = vpop.f32.mrf.mxu0
    %v3498 = vadd.f32 %v739, %v3497
    %v3499 = vpop.f32.mrf.mxu0
    %3500 = vdwg.mxu0
    %3501 = vmatpush.bf16.msra.mxu0 %v2819
    %3502 = vmatpush.bf16.msra.mxu0 %v2787
    %3503 = vmatpush.bf16.msra.mxu0 %v2755
    %3504 = vmatpush.bf16.msra.mxu0 %v2723
    %3505 = vmatpush.bf16.msra.mxu0 %v2691
    %3506 = vmatpush.bf16.msra.mxu0 %v2659
    %3507 = vmatpush.bf16.msra.mxu0 %v2627
    %3508 = vmatpush.bf16.msra.mxu0 %v2595
    %3509 = vmatmul.bf16.gmra.mxu0 %v213
    %v3510 = vpop.f32.mrf.mxu0
    %v3511 = vadd.f32 %v3498, %v3510
    %v3512 = vpop.f32.mrf.mxu0
    %3513 = vdwg.mxu0
    %3514 = vmatpush.bf16.msra.mxu0 %v2564
    %3515 = vmatpush.bf16.msra.mxu0 %v2532
    %3516 = vmatpush.bf16.msra.mxu0 %v2500
    %3517 = vmatpush.bf16.msra.mxu0 %v2468
    %3518 = vmatpush.bf16.msra.mxu0 %v2436
    %3519 = vmatpush.bf16.msra.mxu0 %v2404
    %3520 = vmatpush.bf16.msra.mxu0 %v2372
    %3521 = vmatpush.bf16.msra.mxu0 %v2340
    %3522 = vmatmul.bf16.gmra.mxu0 %v212
    %v3523 = vpop.f32.mrf.mxu0
    %v3524 = vadd.f32 %v740, %v3523
    %v3525 = vpop.f32.mrf.mxu0
    %3526 = vdwg.mxu0
    %3527 = vmatpush.bf16.msra.mxu0 %v2820
    %3528 = vmatpush.bf16.msra.mxu0 %v2788
    %3529 = vmatpush.bf16.msra.mxu0 %v2756
    %3530 = vmatpush.bf16.msra.mxu0 %v2724
    %3531 = vmatpush.bf16.msra.mxu0 %v2692
    %3532 = vmatpush.bf16.msra.mxu0 %v2660
    %3533 = vmatpush.bf16.msra.mxu0 %v2628
    %3534 = vmatpush.bf16.msra.mxu0 %v2596
    %3535 = vmatmul.bf16.gmra.mxu0 %v213
    %v3536 = vpop.f32.mrf.mxu0
    %v3537 = vadd.f32 %v3524, %v3536
    %v3538 = vpop.f32.mrf.mxu0
    %3539 = vdwg.mxu0
    %3540 = vmatpush.bf16.msra.mxu0 %v2565
    %3541 = vmatpush.bf16.msra.mxu0 %v2533
    %3542 = vmatpush.bf16.msra.mxu0 %v2501
    %3543 = vmatpush.bf16.msra.mxu0 %v2469
    %3544 = vmatpush.bf16.msra.mxu0 %v2437
    %3545 = vmatpush.bf16.msra.mxu0 %v2405
    %3546 = vmatpush.bf16.msra.mxu0 %v2373
    %3547 = vmatpush.bf16.msra.mxu0 %v2341
    %3548 = vmatmul.bf16.gmra.mxu0 %v212
    %v3549 = vpop.f32.mrf.mxu0
    %v3550 = vadd.f32 %v741, %v3549
    %v3551 = vpop.f32.mrf.mxu0
    %3552 = vdwg.mxu0
    %3553 = vmatpush.bf16.msra.mxu0 %v2821
    %3554 = vmatpush.bf16.msra.mxu0 %v2789
    %3555 = vmatpush.bf16.msra.mxu0 %v2757
    %3556 = vmatpush.bf16.msra.mxu0 %v2725
    %3557 = vmatpush.bf16.msra.mxu0 %v2693
    %3558 = vmatpush.bf16.msra.mxu0 %v2661
    %3559 = vmatpush.bf16.msra.mxu0 %v2629
    %3560 = vmatpush.bf16.msra.mxu0 %v2597
    %3561 = vmatmul.bf16.gmra.mxu0 %v213
    %v3562 = vpop.f32.mrf.mxu0
    %v3563 = vadd.f32 %v3550, %v3562
    %v3564 = vpop.f32.mrf.mxu0
    %3565 = vdwg.mxu0
    %3566 = vmatpush.bf16.msra.mxu0 %v2566
    %3567 = vmatpush.bf16.msra.mxu0 %v2534
    %3568 = vmatpush.bf16.msra.mxu0 %v2502
    %3569 = vmatpush.bf16.msra.mxu0 %v2470
    %3570 = vmatpush.bf16.msra.mxu0 %v2438
    %3571 = vmatpush.bf16.msra.mxu0 %v2406
    %3572 = vmatpush.bf16.msra.mxu0 %v2374
    %3573 = vmatpush.bf16.msra.mxu0 %v2342
    %3574 = vmatmul.bf16.gmra.mxu0 %v212
    %v3575 = vpop.f32.mrf.mxu0
    %v3576 = vadd.f32 %v742, %v3575
    %v3577 = vpop.f32.mrf.mxu0
    %3578 = vdwg.mxu0
    %3579 = vmatpush.bf16.msra.mxu0 %v2822
    %3580 = vmatpush.bf16.msra.mxu0 %v2790
    %3581 = vmatpush.bf16.msra.mxu0 %v2758
    %3582 = vmatpush.bf16.msra.mxu0 %v2726
    %3583 = vmatpush.bf16.msra.mxu0 %v2694
    %3584 = vmatpush.bf16.msra.mxu0 %v2662
    %3585 = vmatpush.bf16.msra.mxu0 %v2630
    %3586 = vmatpush.bf16.msra.mxu0 %v2598
    %3587 = vmatmul.bf16.gmra.mxu0 %v213
    %v3588 = vpop.f32.mrf.mxu0
    %v3589 = vadd.f32 %v3576, %v3588
    %v3590 = vpop.f32.mrf.mxu0
    %3591 = vdwg.mxu0
    %3592 = vmatpush.bf16.msra.mxu0 %v2567
    %3593 = vmatpush.bf16.msra.mxu0 %v2535
    %3594 = vmatpush.bf16.msra.mxu0 %v2503
    %3595 = vmatpush.bf16.msra.mxu0 %v2471
    %3596 = vmatpush.bf16.msra.mxu0 %v2439
    %3597 = vmatpush.bf16.msra.mxu0 %v2407
    %3598 = vmatpush.bf16.msra.mxu0 %v2375
    %3599 = vmatpush.bf16.msra.mxu0 %v2343
    %3600 = vmatmul.bf16.gmra.mxu0 %v212
    %v3601 = vpop.f32.mrf.mxu0
    %v3602 = vadd.f32 %v743, %v3601
    %v3603 = vpop.f32.mrf.mxu0
    %3604 = vdwg.mxu0
    %3605 = vmatpush.bf16.msra.mxu0 %v2823
    %3606 = vmatpush.bf16.msra.mxu0 %v2791
    %3607 = vmatpush.bf16.msra.mxu0 %v2759
    %3608 = vmatpush.bf16.msra.mxu0 %v2727
    %3609 = vmatpush.bf16.msra.mxu0 %v2695
    %3610 = vmatpush.bf16.msra.mxu0 %v2663
    %3611 = vmatpush.bf16.msra.mxu0 %v2631
    %3612 = vmatpush.bf16.msra.mxu0 %v2599
    %3613 = vmatmul.bf16.gmra.mxu0 %v213
    %v3614 = vpop.f32.mrf.mxu0
    %v3615 = vadd.f32 %v3602, %v3614
    %v3616 = vpop.f32.mrf.mxu0
    %3617 = vdwg.mxu0
    %3618 = vmatpush.bf16.msra.mxu0 %v2568
    %3619 = vmatpush.bf16.msra.mxu0 %v2536
    %3620 = vmatpush.bf16.msra.mxu0 %v2504
    %3621 = vmatpush.bf16.msra.mxu0 %v2472
    %3622 = vmatpush.bf16.msra.mxu0 %v2440
    %3623 = vmatpush.bf16.msra.mxu0 %v2408
    %3624 = vmatpush.bf16.msra.mxu0 %v2376
    %3625 = vmatpush.bf16.msra.mxu0 %v2344
    %3626 = vmatmul.bf16.gmra.mxu0 %v212
    %v3627 = vpop.f32.mrf.mxu0
    %v3628 = vadd.f32 %v744, %v3627
    %v3629 = vpop.f32.mrf.mxu0
    %3630 = vdwg.mxu0
    %3631 = vmatpush.bf16.msra.mxu0 %v2824
    %3632 = vmatpush.bf16.msra.mxu0 %v2792
    %3633 = vmatpush.bf16.msra.mxu0 %v2760
    %3634 = vmatpush.bf16.msra.mxu0 %v2728
    %3635 = vmatpush.bf16.msra.mxu0 %v2696
    %3636 = vmatpush.bf16.msra.mxu0 %v2664
    %3637 = vmatpush.bf16.msra.mxu0 %v2632
    %3638 = vmatpush.bf16.msra.mxu0 %v2600
    %3639 = vmatmul.bf16.gmra.mxu0 %v213
    %v3640 = vpop.f32.mrf.mxu0
    %v3641 = vadd.f32 %v3628, %v3640
    %v3642 = vpop.f32.mrf.mxu0
    %3643 = vdwg.mxu0
    %3644 = vmatpush.bf16.msra.mxu0 %v2569
    %3645 = vmatpush.bf16.msra.mxu0 %v2537
    %3646 = vmatpush.bf16.msra.mxu0 %v2505
    %3647 = vmatpush.bf16.msra.mxu0 %v2473
    %3648 = vmatpush.bf16.msra.mxu0 %v2441
    %3649 = vmatpush.bf16.msra.mxu0 %v2409
    %3650 = vmatpush.bf16.msra.mxu0 %v2377
    %3651 = vmatpush.bf16.msra.mxu0 %v2345
    %3652 = vmatmul.bf16.gmra.mxu0 %v212
    %v3653 = vpop.f32.mrf.mxu0
    %v3654 = vadd.f32 %v745, %v3653
    %v3655 = vpop.f32.mrf.mxu0
    %3656 = vdwg.mxu0
    %3657 = vmatpush.bf16.msra.mxu0 %v2825
    %3658 = vmatpush.bf16.msra.mxu0 %v2793
    %3659 = vmatpush.bf16.msra.mxu0 %v2761
    %3660 = vmatpush.bf16.msra.mxu0 %v2729
    %3661 = vmatpush.bf16.msra.mxu0 %v2697
    %3662 = vmatpush.bf16.msra.mxu0 %v2665
    %3663 = vmatpush.bf16.msra.mxu0 %v2633
    %3664 = vmatpush.bf16.msra.mxu0 %v2601
    %3665 = vmatmul.bf16.gmra.mxu0 %v213
    %v3666 = vpop.f32.mrf.mxu0
    %v3667 = vadd.f32 %v3654, %v3666
    %v3668 = vpop.f32.mrf.mxu0
    %3669 = vdwg.mxu0
    %3670 = vmatpush.bf16.msra.mxu0 %v2570
    %3671 = vmatpush.bf16.msra.mxu0 %v2538
    %3672 = vmatpush.bf16.msra.mxu0 %v2506
    %3673 = vmatpush.bf16.msra.mxu0 %v2474
    %3674 = vmatpush.bf16.msra.mxu0 %v2442
    %3675 = vmatpush.bf16.msra.mxu0 %v2410
    %3676 = vmatpush.bf16.msra.mxu0 %v2378
    %3677 = vmatpush.bf16.msra.mxu0 %v2346
    %3678 = vmatmul.bf16.gmra.mxu0 %v212
    %v3679 = vpop.f32.mrf.mxu0
    %v3680 = vadd.f32 %v746, %v3679
    %v3681 = vpop.f32.mrf.mxu0
    %3682 = vdwg.mxu0
    %3683 = vmatpush.bf16.msra.mxu0 %v2826
    %3684 = vmatpush.bf16.msra.mxu0 %v2794
    %3685 = vmatpush.bf16.msra.mxu0 %v2762
    %3686 = vmatpush.bf16.msra.mxu0 %v2730
    %3687 = vmatpush.bf16.msra.mxu0 %v2698
    %3688 = vmatpush.bf16.msra.mxu0 %v2666
    %3689 = vmatpush.bf16.msra.mxu0 %v2634
    %3690 = vmatpush.bf16.msra.mxu0 %v2602
    %3691 = vmatmul.bf16.gmra.mxu0 %v213
    %v3692 = vpop.f32.mrf.mxu0
    %v3693 = vadd.f32 %v3680, %v3692
    %v3694 = vpop.f32.mrf.mxu0
    %3695 = vdwg.mxu0
    %3696 = vmatpush.bf16.msra.mxu0 %v2571
    %3697 = vmatpush.bf16.msra.mxu0 %v2539
    %3698 = vmatpush.bf16.msra.mxu0 %v2507
    %3699 = vmatpush.bf16.msra.mxu0 %v2475
    %3700 = vmatpush.bf16.msra.mxu0 %v2443
    %3701 = vmatpush.bf16.msra.mxu0 %v2411
    %3702 = vmatpush.bf16.msra.mxu0 %v2379
    %3703 = vmatpush.bf16.msra.mxu0 %v2347
    %3704 = vmatmul.bf16.gmra.mxu0 %v212
    %v3705 = vpop.f32.mrf.mxu0
    %v3706 = vadd.f32 %v747, %v3705
    %v3707 = vpop.f32.mrf.mxu0
    %3708 = vdwg.mxu0
    %3709 = vmatpush.bf16.msra.mxu0 %v2827
    %3710 = vmatpush.bf16.msra.mxu0 %v2795
    %3711 = vmatpush.bf16.msra.mxu0 %v2763
    %3712 = vmatpush.bf16.msra.mxu0 %v2731
    %3713 = vmatpush.bf16.msra.mxu0 %v2699
    %3714 = vmatpush.bf16.msra.mxu0 %v2667
    %3715 = vmatpush.bf16.msra.mxu0 %v2635
    %3716 = vmatpush.bf16.msra.mxu0 %v2603
    %3717 = vmatmul.bf16.gmra.mxu0 %v213
    %v3718 = vpop.f32.mrf.mxu0
    %v3719 = vadd.f32 %v3706, %v3718
    %v3720 = vpop.f32.mrf.mxu0
    %3721 = vdwg.mxu0
    %3722 = vmatpush.bf16.msra.mxu0 %v2572
    %3723 = vmatpush.bf16.msra.mxu0 %v2540
    %3724 = vmatpush.bf16.msra.mxu0 %v2508
    %3725 = vmatpush.bf16.msra.mxu0 %v2476
    %3726 = vmatpush.bf16.msra.mxu0 %v2444
    %3727 = vmatpush.bf16.msra.mxu0 %v2412
    %3728 = vmatpush.bf16.msra.mxu0 %v2380
    %3729 = vmatpush.bf16.msra.mxu0 %v2348
    %3730 = vmatmul.bf16.gmra.mxu0 %v212
    %v3731 = vpop.f32.mrf.mxu0
    %v3732 = vadd.f32 %v748, %v3731
    %v3733 = vpop.f32.mrf.mxu0
    %3734 = vdwg.mxu0
    %3735 = vmatpush.bf16.msra.mxu0 %v2828
    %3736 = vmatpush.bf16.msra.mxu0 %v2796
    %3737 = vmatpush.bf16.msra.mxu0 %v2764
    %3738 = vmatpush.bf16.msra.mxu0 %v2732
    %3739 = vmatpush.bf16.msra.mxu0 %v2700
    %3740 = vmatpush.bf16.msra.mxu0 %v2668
    %3741 = vmatpush.bf16.msra.mxu0 %v2636
    %3742 = vmatpush.bf16.msra.mxu0 %v2604
    %3743 = vmatmul.bf16.gmra.mxu0 %v213
    %v3744 = vpop.f32.mrf.mxu0
    %v3745 = vadd.f32 %v3732, %v3744
    %v3746 = vpop.f32.mrf.mxu0
    %3747 = vdwg.mxu0
    %3748 = vmatpush.bf16.msra.mxu0 %v2573
    %3749 = vmatpush.bf16.msra.mxu0 %v2541
    %3750 = vmatpush.bf16.msra.mxu0 %v2509
    %3751 = vmatpush.bf16.msra.mxu0 %v2477
    %3752 = vmatpush.bf16.msra.mxu0 %v2445
    %3753 = vmatpush.bf16.msra.mxu0 %v2413
    %3754 = vmatpush.bf16.msra.mxu0 %v2381
    %3755 = vmatpush.bf16.msra.mxu0 %v2349
    %3756 = vmatmul.bf16.gmra.mxu0 %v212
    %v3757 = vpop.f32.mrf.mxu0
    %v3758 = vadd.f32 %v749, %v3757
    %v3759 = vpop.f32.mrf.mxu0
    %3760 = vdwg.mxu0
    %3761 = vmatpush.bf16.msra.mxu0 %v2829
    %3762 = vmatpush.bf16.msra.mxu0 %v2797
    %3763 = vmatpush.bf16.msra.mxu0 %v2765
    %3764 = vmatpush.bf16.msra.mxu0 %v2733
    %3765 = vmatpush.bf16.msra.mxu0 %v2701
    %3766 = vmatpush.bf16.msra.mxu0 %v2669
    %3767 = vmatpush.bf16.msra.mxu0 %v2637
    %3768 = vmatpush.bf16.msra.mxu0 %v2605
    %3769 = vmatmul.bf16.gmra.mxu0 %v213
    %v3770 = vpop.f32.mrf.mxu0
    %v3771 = vadd.f32 %v3758, %v3770
    %v3772 = vpop.f32.mrf.mxu0
    %3773 = vdwg.mxu0
    %3774 = vmatpush.bf16.msra.mxu0 %v2574
    %3775 = vmatpush.bf16.msra.mxu0 %v2542
    %3776 = vmatpush.bf16.msra.mxu0 %v2510
    %3777 = vmatpush.bf16.msra.mxu0 %v2478
    %3778 = vmatpush.bf16.msra.mxu0 %v2446
    %3779 = vmatpush.bf16.msra.mxu0 %v2414
    %3780 = vmatpush.bf16.msra.mxu0 %v2382
    %3781 = vmatpush.bf16.msra.mxu0 %v2350
    %3782 = vmatmul.bf16.gmra.mxu0 %v212
    %v3783 = vpop.f32.mrf.mxu0
    %v3784 = vadd.f32 %v750, %v3783
    %v3785 = vpop.f32.mrf.mxu0
    %3786 = vdwg.mxu0
    %3787 = vmatpush.bf16.msra.mxu0 %v2830
    %3788 = vmatpush.bf16.msra.mxu0 %v2798
    %3789 = vmatpush.bf16.msra.mxu0 %v2766
    %3790 = vmatpush.bf16.msra.mxu0 %v2734
    %3791 = vmatpush.bf16.msra.mxu0 %v2702
    %3792 = vmatpush.bf16.msra.mxu0 %v2670
    %3793 = vmatpush.bf16.msra.mxu0 %v2638
    %3794 = vmatpush.bf16.msra.mxu0 %v2606
    %3795 = vmatmul.bf16.gmra.mxu0 %v213
    %v3796 = vpop.f32.mrf.mxu0
    %v3797 = vadd.f32 %v3784, %v3796
    %v3798 = vpop.f32.mrf.mxu0
    %3799 = vdwg.mxu0
    %3800 = vmatpush.bf16.msra.mxu0 %v2575
    %3801 = vmatpush.bf16.msra.mxu0 %v2543
    %3802 = vmatpush.bf16.msra.mxu0 %v2511
    %3803 = vmatpush.bf16.msra.mxu0 %v2479
    %3804 = vmatpush.bf16.msra.mxu0 %v2447
    %3805 = vmatpush.bf16.msra.mxu0 %v2415
    %3806 = vmatpush.bf16.msra.mxu0 %v2383
    %3807 = vmatpush.bf16.msra.mxu0 %v2351
    %3808 = vmatmul.bf16.gmra.mxu0 %v212
    %v3809 = vpop.f32.mrf.mxu0
    %v3810 = vadd.f32 %v751, %v3809
    %v3811 = vpop.f32.mrf.mxu0
    %3812 = vdwg.mxu0
    %3813 = vmatpush.bf16.msra.mxu0 %v2831
    %3814 = vmatpush.bf16.msra.mxu0 %v2799
    %3815 = vmatpush.bf16.msra.mxu0 %v2767
    %3816 = vmatpush.bf16.msra.mxu0 %v2735
    %3817 = vmatpush.bf16.msra.mxu0 %v2703
    %3818 = vmatpush.bf16.msra.mxu0 %v2671
    %3819 = vmatpush.bf16.msra.mxu0 %v2639
    %3820 = vmatpush.bf16.msra.mxu0 %v2607
    %3821 = vmatmul.bf16.gmra.mxu0 %v213
    %v3822 = vpop.f32.mrf.mxu0
    %v3823 = vadd.f32 %v3810, %v3822
    %v3824 = vpop.f32.mrf.mxu0
    %3825 = vdwg.mxu0
    %3826 = vmatpush.bf16.msra.mxu0 %v2576
    %3827 = vmatpush.bf16.msra.mxu0 %v2544
    %3828 = vmatpush.bf16.msra.mxu0 %v2512
    %3829 = vmatpush.bf16.msra.mxu0 %v2480
    %3830 = vmatpush.bf16.msra.mxu0 %v2448
    %3831 = vmatpush.bf16.msra.mxu0 %v2416
    %3832 = vmatpush.bf16.msra.mxu0 %v2384
    %3833 = vmatpush.bf16.msra.mxu0 %v2352
    %3834 = vmatmul.bf16.gmra.mxu0 %v212
    %v3835 = vpop.f32.mrf.mxu0
    %v3836 = vadd.f32 %v752, %v3835
    %v3837 = vpop.f32.mrf.mxu0
    %3838 = vdwg.mxu0
    %3839 = vmatpush.bf16.msra.mxu0 %v2832
    %3840 = vmatpush.bf16.msra.mxu0 %v2800
    %3841 = vmatpush.bf16.msra.mxu0 %v2768
    %3842 = vmatpush.bf16.msra.mxu0 %v2736
    %3843 = vmatpush.bf16.msra.mxu0 %v2704
    %3844 = vmatpush.bf16.msra.mxu0 %v2672
    %3845 = vmatpush.bf16.msra.mxu0 %v2640
    %3846 = vmatpush.bf16.msra.mxu0 %v2608
    %3847 = vmatmul.bf16.gmra.mxu0 %v213
    %v3848 = vpop.f32.mrf.mxu0
    %v3849 = vadd.f32 %v3836, %v3848
    %v3850 = vpop.f32.mrf.mxu0
    %3851 = vdwg.mxu0
    %3852 = vmatpush.bf16.msra.mxu0 %v2577
    %3853 = vmatpush.bf16.msra.mxu0 %v2545
    %3854 = vmatpush.bf16.msra.mxu0 %v2513
    %3855 = vmatpush.bf16.msra.mxu0 %v2481
    %3856 = vmatpush.bf16.msra.mxu0 %v2449
    %3857 = vmatpush.bf16.msra.mxu0 %v2417
    %3858 = vmatpush.bf16.msra.mxu0 %v2385
    %3859 = vmatpush.bf16.msra.mxu0 %v2353
    %3860 = vmatmul.bf16.gmra.mxu0 %v212
    %v3861 = vpop.f32.mrf.mxu0
    %v3862 = vadd.f32 %v753, %v3861
    %v3863 = vpop.f32.mrf.mxu0
    %3864 = vdwg.mxu0
    %3865 = vmatpush.bf16.msra.mxu0 %v2833
    %3866 = vmatpush.bf16.msra.mxu0 %v2801
    %3867 = vmatpush.bf16.msra.mxu0 %v2769
    %3868 = vmatpush.bf16.msra.mxu0 %v2737
    %3869 = vmatpush.bf16.msra.mxu0 %v2705
    %3870 = vmatpush.bf16.msra.mxu0 %v2673
    %3871 = vmatpush.bf16.msra.mxu0 %v2641
    %3872 = vmatpush.bf16.msra.mxu0 %v2609
    %3873 = vmatmul.bf16.gmra.mxu0 %v213
    %v3874 = vpop.f32.mrf.mxu0
    %v3875 = vadd.f32 %v3862, %v3874
    %v3876 = vpop.f32.mrf.mxu0
    %3877 = vdwg.mxu0
    %3878 = vmatpush.bf16.msra.mxu0 %v2578
    %3879 = vmatpush.bf16.msra.mxu0 %v2546
    %3880 = vmatpush.bf16.msra.mxu0 %v2514
    %3881 = vmatpush.bf16.msra.mxu0 %v2482
    %3882 = vmatpush.bf16.msra.mxu0 %v2450
    %3883 = vmatpush.bf16.msra.mxu0 %v2418
    %3884 = vmatpush.bf16.msra.mxu0 %v2386
    %3885 = vmatpush.bf16.msra.mxu0 %v2354
    %3886 = vmatmul.bf16.gmra.mxu0 %v212
    %v3887 = vpop.f32.mrf.mxu0
    %v3888 = vadd.f32 %v754, %v3887
    %v3889 = vpop.f32.mrf.mxu0
    %3890 = vdwg.mxu0
    %3891 = vmatpush.bf16.msra.mxu0 %v2834
    %3892 = vmatpush.bf16.msra.mxu0 %v2802
    %3893 = vmatpush.bf16.msra.mxu0 %v2770
    %3894 = vmatpush.bf16.msra.mxu0 %v2738
    %3895 = vmatpush.bf16.msra.mxu0 %v2706
    %3896 = vmatpush.bf16.msra.mxu0 %v2674
    %3897 = vmatpush.bf16.msra.mxu0 %v2642
    %3898 = vmatpush.bf16.msra.mxu0 %v2610
    %3899 = vmatmul.bf16.gmra.mxu0 %v213
    %v3900 = vpop.f32.mrf.mxu0
    %v3901 = vadd.f32 %v3888, %v3900
    %v3902 = vpop.f32.mrf.mxu0
    %3903 = vdwg.mxu0
    %3904 = vmatpush.bf16.msra.mxu0 %v2579
    %3905 = vmatpush.bf16.msra.mxu0 %v2547
    %3906 = vmatpush.bf16.msra.mxu0 %v2515
    %3907 = vmatpush.bf16.msra.mxu0 %v2483
    %3908 = vmatpush.bf16.msra.mxu0 %v2451
    %3909 = vmatpush.bf16.msra.mxu0 %v2419
    %3910 = vmatpush.bf16.msra.mxu0 %v2387
    %3911 = vmatpush.bf16.msra.mxu0 %v2355
    %3912 = vmatmul.bf16.gmra.mxu0 %v212
    %v3913 = vpop.f32.mrf.mxu0
    %v3914 = vadd.f32 %v755, %v3913
    %v3915 = vpop.f32.mrf.mxu0
    %3916 = vdwg.mxu0
    %3917 = vmatpush.bf16.msra.mxu0 %v2835
    %3918 = vmatpush.bf16.msra.mxu0 %v2803
    %3919 = vmatpush.bf16.msra.mxu0 %v2771
    %3920 = vmatpush.bf16.msra.mxu0 %v2739
    %3921 = vmatpush.bf16.msra.mxu0 %v2707
    %3922 = vmatpush.bf16.msra.mxu0 %v2675
    %3923 = vmatpush.bf16.msra.mxu0 %v2643
    %3924 = vmatpush.bf16.msra.mxu0 %v2611
    %3925 = vmatmul.bf16.gmra.mxu0 %v213
    %v3926 = vpop.f32.mrf.mxu0
    %v3927 = vadd.f32 %v3914, %v3926
    %v3928 = vpop.f32.mrf.mxu0
    %3929 = vdwg.mxu0
    %3930 = vmatpush.bf16.msra.mxu0 %v2580
    %3931 = vmatpush.bf16.msra.mxu0 %v2548
    %3932 = vmatpush.bf16.msra.mxu0 %v2516
    %3933 = vmatpush.bf16.msra.mxu0 %v2484
    %3934 = vmatpush.bf16.msra.mxu0 %v2452
    %3935 = vmatpush.bf16.msra.mxu0 %v2420
    %3936 = vmatpush.bf16.msra.mxu0 %v2388
    %3937 = vmatpush.bf16.msra.mxu0 %v2356
    %3938 = vmatmul.bf16.gmra.mxu0 %v212
    %v3939 = vpop.f32.mrf.mxu0
    %v3940 = vadd.f32 %v756, %v3939
    %v3941 = vpop.f32.mrf.mxu0
    %3942 = vdwg.mxu0
    %3943 = vmatpush.bf16.msra.mxu0 %v2836
    %3944 = vmatpush.bf16.msra.mxu0 %v2804
    %3945 = vmatpush.bf16.msra.mxu0 %v2772
    %3946 = vmatpush.bf16.msra.mxu0 %v2740
    %3947 = vmatpush.bf16.msra.mxu0 %v2708
    %3948 = vmatpush.bf16.msra.mxu0 %v2676
    %3949 = vmatpush.bf16.msra.mxu0 %v2644
    %3950 = vmatpush.bf16.msra.mxu0 %v2612
    %3951 = vmatmul.bf16.gmra.mxu0 %v213
    %v3952 = vpop.f32.mrf.mxu0
    %v3953 = vadd.f32 %v3940, %v3952
    %v3954 = vpop.f32.mrf.mxu0
    %3955 = vdwg.mxu0
    %3956 = vmatpush.bf16.msra.mxu0 %v2581
    %3957 = vmatpush.bf16.msra.mxu0 %v2549
    %3958 = vmatpush.bf16.msra.mxu0 %v2517
    %3959 = vmatpush.bf16.msra.mxu0 %v2485
    %3960 = vmatpush.bf16.msra.mxu0 %v2453
    %3961 = vmatpush.bf16.msra.mxu0 %v2421
    %3962 = vmatpush.bf16.msra.mxu0 %v2389
    %3963 = vmatpush.bf16.msra.mxu0 %v2357
    %3964 = vmatmul.bf16.gmra.mxu0 %v212
    %v3965 = vpop.f32.mrf.mxu0
    %v3966 = vadd.f32 %v757, %v3965
    %v3967 = vpop.f32.mrf.mxu0
    %3968 = vdwg.mxu0
    %3969 = vmatpush.bf16.msra.mxu0 %v2837
    %3970 = vmatpush.bf16.msra.mxu0 %v2805
    %3971 = vmatpush.bf16.msra.mxu0 %v2773
    %3972 = vmatpush.bf16.msra.mxu0 %v2741
    %3973 = vmatpush.bf16.msra.mxu0 %v2709
    %3974 = vmatpush.bf16.msra.mxu0 %v2677
    %3975 = vmatpush.bf16.msra.mxu0 %v2645
    %3976 = vmatpush.bf16.msra.mxu0 %v2613
    %3977 = vmatmul.bf16.gmra.mxu0 %v213
    %v3978 = vpop.f32.mrf.mxu0
    %v3979 = vadd.f32 %v3966, %v3978
    %v3980 = vpop.f32.mrf.mxu0
    %3981 = vdwg.mxu0
    %3982 = vmatpush.bf16.msra.mxu0 %v2582
    %3983 = vmatpush.bf16.msra.mxu0 %v2550
    %3984 = vmatpush.bf16.msra.mxu0 %v2518
    %3985 = vmatpush.bf16.msra.mxu0 %v2486
    %3986 = vmatpush.bf16.msra.mxu0 %v2454
    %3987 = vmatpush.bf16.msra.mxu0 %v2422
    %3988 = vmatpush.bf16.msra.mxu0 %v2390
    %3989 = vmatpush.bf16.msra.mxu0 %v2358
    %3990 = vmatmul.bf16.gmra.mxu0 %v212
    %v3991 = vpop.f32.mrf.mxu0
    %v3992 = vadd.f32 %v758, %v3991
    %v3993 = vpop.f32.mrf.mxu0
    %3994 = vdwg.mxu0
    %3995 = vmatpush.bf16.msra.mxu0 %v2838
    %3996 = vmatpush.bf16.msra.mxu0 %v2806
    %3997 = vmatpush.bf16.msra.mxu0 %v2774
    %3998 = vmatpush.bf16.msra.mxu0 %v2742
    %3999 = vmatpush.bf16.msra.mxu0 %v2710
    %4000 = vmatpush.bf16.msra.mxu0 %v2678
    %4001 = vmatpush.bf16.msra.mxu0 %v2646
    %4002 = vmatpush.bf16.msra.mxu0 %v2614
    %4003 = vmatmul.bf16.gmra.mxu0 %v213
    %v4004 = vpop.f32.mrf.mxu0
    %v4005 = vadd.f32 %v3992, %v4004
    %v4006 = vpop.f32.mrf.mxu0
    %4007 = vdwg.mxu0
    %4008 = vmatpush.bf16.msra.mxu0 %v2583
    %4009 = vmatpush.bf16.msra.mxu0 %v2551
    %4010 = vmatpush.bf16.msra.mxu0 %v2519
    %4011 = vmatpush.bf16.msra.mxu0 %v2487
    %4012 = vmatpush.bf16.msra.mxu0 %v2455
    %4013 = vmatpush.bf16.msra.mxu0 %v2423
    %4014 = vmatpush.bf16.msra.mxu0 %v2391
    %4015 = vmatpush.bf16.msra.mxu0 %v2359
    %4016 = vmatmul.bf16.gmra.mxu0 %v212
    %v4017 = vpop.f32.mrf.mxu0
    %v4018 = vadd.f32 %v759, %v4017
    %v4019 = vpop.f32.mrf.mxu0
    %4020 = vdwg.mxu0
    %4021 = vmatpush.bf16.msra.mxu0 %v2839
    %4022 = vmatpush.bf16.msra.mxu0 %v2807
    %4023 = vmatpush.bf16.msra.mxu0 %v2775
    %4024 = vmatpush.bf16.msra.mxu0 %v2743
    %4025 = vmatpush.bf16.msra.mxu0 %v2711
    %4026 = vmatpush.bf16.msra.mxu0 %v2679
    %4027 = vmatpush.bf16.msra.mxu0 %v2647
    %4028 = vmatpush.bf16.msra.mxu0 %v2615
    %4029 = vmatmul.bf16.gmra.mxu0 %v213
    %v4030 = vpop.f32.mrf.mxu0
    %v4031 = vadd.f32 %v4018, %v4030
    %v4032 = vpop.f32.mrf.mxu0
    %4033 = vdwg.mxu0
    %4034 = vmatpush.bf16.msra.mxu0 %v2584
    %4035 = vmatpush.bf16.msra.mxu0 %v2552
    %4036 = vmatpush.bf16.msra.mxu0 %v2520
    %4037 = vmatpush.bf16.msra.mxu0 %v2488
    %4038 = vmatpush.bf16.msra.mxu0 %v2456
    %4039 = vmatpush.bf16.msra.mxu0 %v2424
    %4040 = vmatpush.bf16.msra.mxu0 %v2392
    %4041 = vmatpush.bf16.msra.mxu0 %v2360
    %4042 = vmatmul.bf16.gmra.mxu0 %v212
    %v4043 = vpop.f32.mrf.mxu0
    %v4044 = vadd.f32 %v760, %v4043
    %v4045 = vpop.f32.mrf.mxu0
    %4046 = vdwg.mxu0
    %4047 = vmatpush.bf16.msra.mxu0 %v2840
    %4048 = vmatpush.bf16.msra.mxu0 %v2808
    %4049 = vmatpush.bf16.msra.mxu0 %v2776
    %4050 = vmatpush.bf16.msra.mxu0 %v2744
    %4051 = vmatpush.bf16.msra.mxu0 %v2712
    %4052 = vmatpush.bf16.msra.mxu0 %v2680
    %4053 = vmatpush.bf16.msra.mxu0 %v2648
    %4054 = vmatpush.bf16.msra.mxu0 %v2616
    %4055 = vmatmul.bf16.gmra.mxu0 %v213
    %v4056 = vpop.f32.mrf.mxu0
    %v4057 = vadd.f32 %v4044, %v4056
    %v4058 = vpop.f32.mrf.mxu0
    %4059 = vdwg.mxu0
    %4060 = vmatpush.bf16.msra.mxu0 %v2585
    %4061 = vmatpush.bf16.msra.mxu0 %v2553
    %4062 = vmatpush.bf16.msra.mxu0 %v2521
    %4063 = vmatpush.bf16.msra.mxu0 %v2489
    %4064 = vmatpush.bf16.msra.mxu0 %v2457
    %4065 = vmatpush.bf16.msra.mxu0 %v2425
    %4066 = vmatpush.bf16.msra.mxu0 %v2393
    %4067 = vmatpush.bf16.msra.mxu0 %v2361
    %4068 = vmatmul.bf16.gmra.mxu0 %v212
    %v4069 = vpop.f32.mrf.mxu0
    %v4070 = vadd.f32 %v761, %v4069
    %v4071 = vpop.f32.mrf.mxu0
    %4072 = vdwg.mxu0
    %4073 = vmatpush.bf16.msra.mxu0 %v2841
    %4074 = vmatpush.bf16.msra.mxu0 %v2809
    %4075 = vmatpush.bf16.msra.mxu0 %v2777
    %4076 = vmatpush.bf16.msra.mxu0 %v2745
    %4077 = vmatpush.bf16.msra.mxu0 %v2713
    %4078 = vmatpush.bf16.msra.mxu0 %v2681
    %4079 = vmatpush.bf16.msra.mxu0 %v2649
    %4080 = vmatpush.bf16.msra.mxu0 %v2617
    %4081 = vmatmul.bf16.gmra.mxu0 %v213
    %v4082 = vpop.f32.mrf.mxu0
    %v4083 = vadd.f32 %v4070, %v4082
    %v4084 = vpop.f32.mrf.mxu0
    %4085 = vdwg.mxu0
    %4086 = vmatpush.bf16.msra.mxu0 %v2586
    %4087 = vmatpush.bf16.msra.mxu0 %v2554
    %4088 = vmatpush.bf16.msra.mxu0 %v2522
    %4089 = vmatpush.bf16.msra.mxu0 %v2490
    %4090 = vmatpush.bf16.msra.mxu0 %v2458
    %4091 = vmatpush.bf16.msra.mxu0 %v2426
    %4092 = vmatpush.bf16.msra.mxu0 %v2394
    %4093 = vmatpush.bf16.msra.mxu0 %v2362
    %4094 = vmatmul.bf16.gmra.mxu0 %v212
    %v4095 = vpop.f32.mrf.mxu0
    %v4096 = vadd.f32 %v762, %v4095
    %v4097 = vpop.f32.mrf.mxu0
    %4098 = vdwg.mxu0
    %4099 = vmatpush.bf16.msra.mxu0 %v2842
    %4100 = vmatpush.bf16.msra.mxu0 %v2810
    %4101 = vmatpush.bf16.msra.mxu0 %v2778
    %4102 = vmatpush.bf16.msra.mxu0 %v2746
    %4103 = vmatpush.bf16.msra.mxu0 %v2714
    %4104 = vmatpush.bf16.msra.mxu0 %v2682
    %4105 = vmatpush.bf16.msra.mxu0 %v2650
    %4106 = vmatpush.bf16.msra.mxu0 %v2618
    %4107 = vmatmul.bf16.gmra.mxu0 %v213
    %v4108 = vpop.f32.mrf.mxu0
    %v4109 = vadd.f32 %v4096, %v4108
    %v4110 = vpop.f32.mrf.mxu0
    %4111 = vdwg.mxu0
    %4112 = vmatpush.bf16.msra.mxu0 %v2587
    %4113 = vmatpush.bf16.msra.mxu0 %v2555
    %4114 = vmatpush.bf16.msra.mxu0 %v2523
    %4115 = vmatpush.bf16.msra.mxu0 %v2491
    %4116 = vmatpush.bf16.msra.mxu0 %v2459
    %4117 = vmatpush.bf16.msra.mxu0 %v2427
    %4118 = vmatpush.bf16.msra.mxu0 %v2395
    %4119 = vmatpush.bf16.msra.mxu0 %v2363
    %4120 = vmatmul.bf16.gmra.mxu0 %v212
    %v4121 = vpop.f32.mrf.mxu0
    %v4122 = vadd.f32 %v763, %v4121
    %v4123 = vpop.f32.mrf.mxu0
    %4124 = vdwg.mxu0
    %4125 = vmatpush.bf16.msra.mxu0 %v2843
    %4126 = vmatpush.bf16.msra.mxu0 %v2811
    %4127 = vmatpush.bf16.msra.mxu0 %v2779
    %4128 = vmatpush.bf16.msra.mxu0 %v2747
    %4129 = vmatpush.bf16.msra.mxu0 %v2715
    %4130 = vmatpush.bf16.msra.mxu0 %v2683
    %4131 = vmatpush.bf16.msra.mxu0 %v2651
    %4132 = vmatpush.bf16.msra.mxu0 %v2619
    %4133 = vmatmul.bf16.gmra.mxu0 %v213
    %v4134 = vpop.f32.mrf.mxu0
    %v4135 = vadd.f32 %v4122, %v4134
    %v4136 = vpop.f32.mrf.mxu0
    %4137 = vdwg.mxu0
    %4138 = vmatpush.bf16.msra.mxu0 %v2588
    %4139 = vmatpush.bf16.msra.mxu0 %v2556
    %4140 = vmatpush.bf16.msra.mxu0 %v2524
    %4141 = vmatpush.bf16.msra.mxu0 %v2492
    %4142 = vmatpush.bf16.msra.mxu0 %v2460
    %4143 = vmatpush.bf16.msra.mxu0 %v2428
    %4144 = vmatpush.bf16.msra.mxu0 %v2396
    %4145 = vmatpush.bf16.msra.mxu0 %v2364
    %4146 = vmatmul.bf16.gmra.mxu0 %v212
    %v4147 = vpop.f32.mrf.mxu0
    %v4148 = vadd.f32 %v764, %v4147
    %v4149 = vpop.f32.mrf.mxu0
    %4150 = vdwg.mxu0
    %4151 = vmatpush.bf16.msra.mxu0 %v2844
    %4152 = vmatpush.bf16.msra.mxu0 %v2812
    %4153 = vmatpush.bf16.msra.mxu0 %v2780
    %4154 = vmatpush.bf16.msra.mxu0 %v2748
    %4155 = vmatpush.bf16.msra.mxu0 %v2716
    %4156 = vmatpush.bf16.msra.mxu0 %v2684
    %4157 = vmatpush.bf16.msra.mxu0 %v2652
    %4158 = vmatpush.bf16.msra.mxu0 %v2620
    %4159 = vmatmul.bf16.gmra.mxu0 %v213
    %v4160 = vpop.f32.mrf.mxu0
    %v4161 = vadd.f32 %v4148, %v4160
    %v4162 = vpop.f32.mrf.mxu0
    %4163 = vdwg.mxu0
    %4164 = vmatpush.bf16.msra.mxu0 %v2589
    %4165 = vmatpush.bf16.msra.mxu0 %v2557
    %4166 = vmatpush.bf16.msra.mxu0 %v2525
    %4167 = vmatpush.bf16.msra.mxu0 %v2493
    %4168 = vmatpush.bf16.msra.mxu0 %v2461
    %4169 = vmatpush.bf16.msra.mxu0 %v2429
    %4170 = vmatpush.bf16.msra.mxu0 %v2397
    %4171 = vmatpush.bf16.msra.mxu0 %v2365
    %4172 = vmatmul.bf16.gmra.mxu0 %v212
    %v4173 = vpop.f32.mrf.mxu0
    %v4174 = vadd.f32 %v765, %v4173
    %v4175 = vpop.f32.mrf.mxu0
    %4176 = vdwg.mxu0
    %4177 = vmatpush.bf16.msra.mxu0 %v2845
    %4178 = vmatpush.bf16.msra.mxu0 %v2813
    %4179 = vmatpush.bf16.msra.mxu0 %v2781
    %4180 = vmatpush.bf16.msra.mxu0 %v2749
    %4181 = vmatpush.bf16.msra.mxu0 %v2717
    %4182 = vmatpush.bf16.msra.mxu0 %v2685
    %4183 = vmatpush.bf16.msra.mxu0 %v2653
    %4184 = vmatpush.bf16.msra.mxu0 %v2621
    %4185 = vmatmul.bf16.gmra.mxu0 %v213
    %v4186 = vpop.f32.mrf.mxu0
    %v4187 = vadd.f32 %v4174, %v4186
    %v4188 = vpop.f32.mrf.mxu0
    %4189 = vdwg.mxu0
    %v4190 = vmax.f32 %v3381, 0.0
    %v4191 = vmax.f32 %v3407, 0.0
    %v4192 = vmax.f32 %v3433, 0.0
    %v4193 = vmax.f32 %v3459, 0.0
    %v4194 = vmax.f32 %v3485, 0.0
    %v4195 = vmax.f32 %v3511, 0.0
    %v4196 = vmax.f32 %v3537, 0.0
    %v4197 = vmax.f32 %v3563, 0.0
    %v4198 = vmax.f32 %v3589, 0.0
    %v4199 = vmax.f32 %v3615, 0.0
    %v4200 = vmax.f32 %v3641, 0.0
    %v4201 = vmax.f32 %v3667, 0.0
    %v4202 = vmax.f32 %v3693, 0.0
    %v4203 = vmax.f32 %v3719, 0.0
    %v4204 = vmax.f32 %v3745, 0.0
    %v4205 = vmax.f32 %v3771, 0.0
    %v4206 = vmax.f32 %v3797, 0.0
    %v4207 = vmax.f32 %v3823, 0.0
    %v4208 = vmax.f32 %v3849, 0.0
    %v4209 = vmax.f32 %v3875, 0.0
    %v4210 = vmax.f32 %v3901, 0.0
    %v4211 = vmax.f32 %v3927, 0.0
    %v4212 = vmax.f32 %v3953, 0.0
    %v4213 = vmax.f32 %v3979, 0.0
    %v4214 = vmax.f32 %v4005, 0.0
    %v4215 = vmax.f32 %v4031, 0.0
    %v4216 = vmax.f32 %v4057, 0.0
    %v4217 = vmax.f32 %v4083, 0.0
    %v4218 = vmax.f32 %v4109, 0.0
    %v4219 = vmax.f32 %v4135, 0.0
    %v4220 = vmax.f32 %v4161, 0.0
    %v4221 = vmax.f32 %v4187, 0.0
    %v4222 = vmax.f32 %v4190, %v4206
    %v4223 = vmax.f32 %v4191, %v4207
    %v4224 = vmax.f32 %v4192, %v4208
    %v4225 = vmax.f32 %v4193, %v4209
    %v4226 = vmax.f32 %v4194, %v4210
    %v4227 = vmax.f32 %v4195, %v4211
    %v4228 = vmax.f32 %v4196, %v4212
    %v4229 = vmax.f32 %v4197, %v4213
    %v4230 = vmax.f32 %v4198, %v4214
    %v4231 = vmax.f32 %v4199, %v4215
    %v4232 = vmax.f32 %v4200, %v4216
    %v4233 = vmax.f32 %v4201, %v4217
    %v4234 = vmax.f32 %v4202, %v4218
    %v4235 = vmax.f32 %v4203, %v4219
    %v4236 = vmax.f32 %v4204, %v4220
    %v4237 = vmax.f32 %v4205, %v4221
    %v4238 = vmax.f32 %v4222, %v4230
    %v4239 = vmax.f32 %v4223, %v4231
    %v4240 = vmax.f32 %v4224, %v4232
    %v4241 = vmax.f32 %v4225, %v4233
    %v4242 = vmax.f32 %v4226, %v4234
    %v4243 = vmax.f32 %v4227, %v4235
    %v4244 = vmax.f32 %v4228, %v4236
    %v4245 = vmax.f32 %v4229, %v4237
    %v4246 = vpack.c.bf16 %v4238, %v4238
    %v4247 = vpack.c.bf16 %v4239, %v4239
    %v4248 = vpack.c.bf16 %v4240, %v4240
    %v4249 = vpack.c.bf16 %v4241, %v4241
    %v4250 = vpack.c.bf16 %v4242, %v4242
    %v4251 = vpack.c.bf16 %v4243, %v4243
    %v4252 = vpack.c.bf16 %v4244, %v4244
    %v4253 = vpack.c.bf16 %v4245, %v4245
    %v4254 = vld [vmem:[#allocation6] sm:$0xff]
    %v4255 = vld [vmem:[#allocation6 + $0x8] sm:$0xff]
    %v4256 = vld [vmem:[#allocation6 + $0x10] sm:$0xff]
    %v4257 = vld [vmem:[#allocation6 + $0x18] sm:$0xff]
    %v4258 = vld [vmem:[#allocation6 + $0x20] sm:$0xff]
    %v4259 = vld [vmem:[#allocation6 + $0x28] sm:$0xff]
    %v4260 = vld [vmem:[#allocation6 + $0x30] sm:$0xff]
    %v4261 = vld [vmem:[#allocation6 + $0x38] sm:$0xff]
    %v4262 = vld [vmem:[#allocation6 + $0x40] sm:$0xff]
    %v4263 = vld [vmem:[#allocation6 + $0x48] sm:$0xff]
    %v4264 = vld [vmem:[#allocation6 + $0x50] sm:$0xff]
    %v4265 = vld [vmem:[#allocation6 + $0x58] sm:$0xff]
    %v4266 = vld [vmem:[#allocation6 + $0x60] sm:$0xff]
    %v4267 = vld [vmem:[#allocation6 + $0x68] sm:$0xff]
    %v4268 = vld [vmem:[#allocation6 + $0x70] sm:$0xff]
    %v4269 = vld [vmem:[#allocation6 + $0x78] sm:$0xff]
    %v4270 = vld [vmem:[#allocation6 + $0x80] sm:$0xff]
    %v4271 = vld [vmem:[#allocation6 + $0x88] sm:$0xff]
    %v4272 = vld [vmem:[#allocation6 + $0x90] sm:$0xff]
    %v4273 = vld [vmem:[#allocation6 + $0x98] sm:$0xff]
    %v4274 = vld [vmem:[#allocation6 + $0xa0] sm:$0xff]
    %v4275 = vld [vmem:[#allocation6 + $0xa8] sm:$0xff]
    %v4276 = vld [vmem:[#allocation6 + $0xb0] sm:$0xff]
    %v4277 = vld [vmem:[#allocation6 + $0xb8] sm:$0xff]
    %v4278 = vld [vmem:[#allocation6 + $0xc0] sm:$0xff]
    %v4279 = vld [vmem:[#allocation6 + $0xc8] sm:$0xff]
    %v4280 = vld [vmem:[#allocation6 + $0xd0] sm:$0xff]
    %v4281 = vld [vmem:[#allocation6 + $0xd8] sm:$0xff]
    %v4282 = vld [vmem:[#allocation6 + $0xe0] sm:$0xff]
    %v4283 = vld [vmem:[#allocation6 + $0xe8] sm:$0xff]
    %v4284 = vld [vmem:[#allocation6 + $0xf0] sm:$0xff]
    %v4285 = vld [vmem:[#allocation6 + $0xf8] sm:$0xff]
    %v4286 = vld [vmem:[#allocation6 + $0x100] sm:$0xff]
    %v4287 = vld [vmem:[#allocation6 + $0x108] sm:$0xff]
    %v4288 = vld [vmem:[#allocation6 + $0x110] sm:$0xff]
    %v4289 = vld [vmem:[#allocation6 + $0x118] sm:$0xff]
    %v4290 = vld [vmem:[#allocation6 + $0x120] sm:$0xff]
    %v4291 = vld [vmem:[#allocation6 + $0x128] sm:$0xff]
    %v4292 = vld [vmem:[#allocation6 + $0x130] sm:$0xff]
    %v4293 = vld [vmem:[#allocation6 + $0x138] sm:$0xff]
    %v4294 = vld [vmem:[#allocation6 + $0x140] sm:$0xff]
    %v4295 = vld [vmem:[#allocation6 + $0x148] sm:$0xff]
    %v4296 = vld [vmem:[#allocation6 + $0x150] sm:$0xff]
    %v4297 = vld [vmem:[#allocation6 + $0x158] sm:$0xff]
    %v4298 = vld [vmem:[#allocation6 + $0x160] sm:$0xff]
    %v4299 = vld [vmem:[#allocation6 + $0x168] sm:$0xff]
    %v4300 = vld [vmem:[#allocation6 + $0x170] sm:$0xff]
    %v4301 = vld [vmem:[#allocation6 + $0x178] sm:$0xff]
    %v4302 = vld [vmem:[#allocation6 + $0x180] sm:$0xff]
    %v4303 = vld [vmem:[#allocation6 + $0x188] sm:$0xff]
    %v4304 = vld [vmem:[#allocation6 + $0x190] sm:$0xff]
    %v4305 = vld [vmem:[#allocation6 + $0x198] sm:$0xff]
    %v4306 = vld [vmem:[#allocation6 + $0x1a0] sm:$0xff]
    %v4307 = vld [vmem:[#allocation6 + $0x1a8] sm:$0xff]
    %v4308 = vld [vmem:[#allocation6 + $0x1b0] sm:$0xff]
    %v4309 = vld [vmem:[#allocation6 + $0x1b8] sm:$0xff]
    %v4310 = vld [vmem:[#allocation6 + $0x1c0] sm:$0xff]
    %v4311 = vld [vmem:[#allocation6 + $0x1c8] sm:$0xff]
    %v4312 = vld [vmem:[#allocation6 + $0x1d0] sm:$0xff]
    %v4313 = vld [vmem:[#allocation6 + $0x1d8] sm:$0xff]
    %v4314 = vld [vmem:[#allocation6 + $0x1e0] sm:$0xff]
    %v4315 = vld [vmem:[#allocation6 + $0x1e8] sm:$0xff]
    %v4316 = vld [vmem:[#allocation6 + $0x1f0] sm:$0xff]
    %v4317 = vld [vmem:[#allocation6 + $0x1f8] sm:$0xff]
    %v4318 = vld [vmem:[#allocation6 + $0x200] sm:$0xff]
    %v4319 = vld [vmem:[#allocation6 + $0x208] sm:$0xff]
    %v4320 = vld [vmem:[#allocation6 + $0x210] sm:$0xff]
    %v4321 = vld [vmem:[#allocation6 + $0x218] sm:$0xff]
    %v4322 = vld [vmem:[#allocation6 + $0x220] sm:$0xff]
    %v4323 = vld [vmem:[#allocation6 + $0x228] sm:$0xff]
    %v4324 = vld [vmem:[#allocation6 + $0x230] sm:$0xff]
    %v4325 = vld [vmem:[#allocation6 + $0x238] sm:$0xff]
    %v4326 = vld [vmem:[#allocation6 + $0x240] sm:$0xff]
    %v4327 = vld [vmem:[#allocation6 + $0x248] sm:$0xff]
    %v4328 = vld [vmem:[#allocation6 + $0x250] sm:$0xff]
    %v4329 = vld [vmem:[#allocation6 + $0x258] sm:$0xff]
    %v4330 = vld [vmem:[#allocation6 + $0x260] sm:$0xff]
    %v4331 = vld [vmem:[#allocation6 + $0x268] sm:$0xff]
    %v4332 = vld [vmem:[#allocation6 + $0x270] sm:$0xff]
    %v4333 = vld [vmem:[#allocation6 + $0x278] sm:$0xff]
    %v4334 = vld [vmem:[#allocation6 + $0x280] sm:$0xff]
    %v4335 = vld [vmem:[#allocation6 + $0x288] sm:$0xff]
    %v4336 = vld [vmem:[#allocation6 + $0x290] sm:$0xff]
    %v4337 = vld [vmem:[#allocation6 + $0x298] sm:$0xff]
    %v4338 = vld [vmem:[#allocation6 + $0x2a0] sm:$0xff]
    %v4339 = vld [vmem:[#allocation6 + $0x2a8] sm:$0xff]
    %v4340 = vld [vmem:[#allocation6 + $0x2b0] sm:$0xff]
    %v4341 = vld [vmem:[#allocation6 + $0x2b8] sm:$0xff]
    %v4342 = vld [vmem:[#allocation6 + $0x2c0] sm:$0xff]
    %v4343 = vld [vmem:[#allocation6 + $0x2c8] sm:$0xff]
    %v4344 = vld [vmem:[#allocation6 + $0x2d0] sm:$0xff]
    %v4345 = vld [vmem:[#allocation6 + $0x2d8] sm:$0xff]
    %v4346 = vld [vmem:[#allocation6 + $0x2e0] sm:$0xff]
    %v4347 = vld [vmem:[#allocation6 + $0x2e8] sm:$0xff]
    %v4348 = vld [vmem:[#allocation6 + $0x2f0] sm:$0xff]
    %v4349 = vld [vmem:[#allocation6 + $0x2f8] sm:$0xff]
    %v4350 = vld [vmem:[#allocation6 + $0x300] sm:$0xff]
    %v4351 = vld [vmem:[#allocation6 + $0x308] sm:$0xff]
    %v4352 = vld [vmem:[#allocation6 + $0x310] sm:$0xff]
    %v4353 = vld [vmem:[#allocation6 + $0x318] sm:$0xff]
    %v4354 = vld [vmem:[#allocation6 + $0x320] sm:$0xff]
    %v4355 = vld [vmem:[#allocation6 + $0x328] sm:$0xff]
    %v4356 = vld [vmem:[#allocation6 + $0x330] sm:$0xff]
    %v4357 = vld [vmem:[#allocation6 + $0x338] sm:$0xff]
    %v4358 = vld [vmem:[#allocation6 + $0x340] sm:$0xff]
    %v4359 = vld [vmem:[#allocation6 + $0x348] sm:$0xff]
    %v4360 = vld [vmem:[#allocation6 + $0x350] sm:$0xff]
    %v4361 = vld [vmem:[#allocation6 + $0x358] sm:$0xff]
    %v4362 = vld [vmem:[#allocation6 + $0x360] sm:$0xff]
    %v4363 = vld [vmem:[#allocation6 + $0x368] sm:$0xff]
    %v4364 = vld [vmem:[#allocation6 + $0x370] sm:$0xff]
    %v4365 = vld [vmem:[#allocation6 + $0x378] sm:$0xff]
    %v4366 = vld [vmem:[#allocation6 + $0x380] sm:$0xff]
    %v4367 = vld [vmem:[#allocation6 + $0x388] sm:$0xff]
    %v4368 = vld [vmem:[#allocation6 + $0x390] sm:$0xff]
    %v4369 = vld [vmem:[#allocation6 + $0x398] sm:$0xff]
    %v4370 = vld [vmem:[#allocation6 + $0x3a0] sm:$0xff]
    %v4371 = vld [vmem:[#allocation6 + $0x3a8] sm:$0xff]
    %v4372 = vld [vmem:[#allocation6 + $0x3b0] sm:$0xff]
    %v4373 = vld [vmem:[#allocation6 + $0x3b8] sm:$0xff]
    %v4374 = vld [vmem:[#allocation6 + $0x3c0] sm:$0xff]
    %v4375 = vld [vmem:[#allocation6 + $0x3c8] sm:$0xff]
    %v4376 = vld [vmem:[#allocation6 + $0x3d0] sm:$0xff]
    %v4377 = vld [vmem:[#allocation6 + $0x3d8] sm:$0xff]
    %v4378 = vld [vmem:[#allocation6 + $0x3e0] sm:$0xff]
    %v4379 = vld [vmem:[#allocation6 + $0x3e8] sm:$0xff]
    %v4380 = vld [vmem:[#allocation6 + $0x3f0] sm:$0xff]
    %v4381 = vld [vmem:[#allocation6 + $0x3f8] sm:$0xff]
    %v4382 = vld [vmem:[#allocation6 + $0x400] sm:$0xff]
    %v4383 = vld [vmem:[#allocation6 + $0x408] sm:$0xff]
    %v4384 = vld [vmem:[#allocation6 + $0x410] sm:$0xff]
    %v4385 = vld [vmem:[#allocation6 + $0x418] sm:$0xff]
    %v4386 = vld [vmem:[#allocation6 + $0x420] sm:$0xff]
    %v4387 = vld [vmem:[#allocation6 + $0x428] sm:$0xff]
    %v4388 = vld [vmem:[#allocation6 + $0x430] sm:$0xff]
    %v4389 = vld [vmem:[#allocation6 + $0x438] sm:$0xff]
    %v4390 = vld [vmem:[#allocation6 + $0x440] sm:$0xff]
    %v4391 = vld [vmem:[#allocation6 + $0x448] sm:$0xff]
    %v4392 = vld [vmem:[#allocation6 + $0x450] sm:$0xff]
    %v4393 = vld [vmem:[#allocation6 + $0x458] sm:$0xff]
    %v4394 = vld [vmem:[#allocation6 + $0x460] sm:$0xff]
    %v4395 = vld [vmem:[#allocation6 + $0x468] sm:$0xff]
    %v4396 = vld [vmem:[#allocation6 + $0x470] sm:$0xff]
    %v4397 = vld [vmem:[#allocation6 + $0x478] sm:$0xff]
    %v4398 = vld [vmem:[#allocation6 + $0x480] sm:$0xff]
    %v4399 = vld [vmem:[#allocation6 + $0x488] sm:$0xff]
    %v4400 = vld [vmem:[#allocation6 + $0x490] sm:$0xff]
    %v4401 = vld [vmem:[#allocation6 + $0x498] sm:$0xff]
    %v4402 = vld [vmem:[#allocation6 + $0x4a0] sm:$0xff]
    %v4403 = vld [vmem:[#allocation6 + $0x4a8] sm:$0xff]
    %v4404 = vld [vmem:[#allocation6 + $0x4b0] sm:$0xff]
    %v4405 = vld [vmem:[#allocation6 + $0x4b8] sm:$0xff]
    %v4406 = vld [vmem:[#allocation6 + $0x4c0] sm:$0xff]
    %v4407 = vld [vmem:[#allocation6 + $0x4c8] sm:$0xff]
    %v4408 = vld [vmem:[#allocation6 + $0x4d0] sm:$0xff]
    %v4409 = vld [vmem:[#allocation6 + $0x4d8] sm:$0xff]
    %v4410 = vld [vmem:[#allocation6 + $0x4e0] sm:$0xff]
    %v4411 = vld [vmem:[#allocation6 + $0x4e8] sm:$0xff]
    %v4412 = vld [vmem:[#allocation6 + $0x4f0] sm:$0xff]
    %v4413 = vld [vmem:[#allocation6 + $0x4f8] sm:$0xff]
    %v4414 = vld [vmem:[#allocation6 + $0x500] sm:$0xff]
    %v4415 = vld [vmem:[#allocation6 + $0x508] sm:$0xff]
    %v4416 = vld [vmem:[#allocation6 + $0x510] sm:$0xff]
    %v4417 = vld [vmem:[#allocation6 + $0x518] sm:$0xff]
    %v4418 = vld [vmem:[#allocation6 + $0x520] sm:$0xff]
    %v4419 = vld [vmem:[#allocation6 + $0x528] sm:$0xff]
    %v4420 = vld [vmem:[#allocation6 + $0x530] sm:$0xff]
    %v4421 = vld [vmem:[#allocation6 + $0x538] sm:$0xff]
    %v4422 = vld [vmem:[#allocation6 + $0x540] sm:$0xff]
    %v4423 = vld [vmem:[#allocation6 + $0x548] sm:$0xff]
    %v4424 = vld [vmem:[#allocation6 + $0x550] sm:$0xff]
    %v4425 = vld [vmem:[#allocation6 + $0x558] sm:$0xff]
    %v4426 = vld [vmem:[#allocation6 + $0x560] sm:$0xff]
    %v4427 = vld [vmem:[#allocation6 + $0x568] sm:$0xff]
    %v4428 = vld [vmem:[#allocation6 + $0x570] sm:$0xff]
    %v4429 = vld [vmem:[#allocation6 + $0x578] sm:$0xff]
    %v4430 = vld [vmem:[#allocation6 + $0x580] sm:$0xff]
    %v4431 = vld [vmem:[#allocation6 + $0x588] sm:$0xff]
    %v4432 = vld [vmem:[#allocation6 + $0x590] sm:$0xff]
    %v4433 = vld [vmem:[#allocation6 + $0x598] sm:$0xff]
    %v4434 = vld [vmem:[#allocation6 + $0x5a0] sm:$0xff]
    %v4435 = vld [vmem:[#allocation6 + $0x5a8] sm:$0xff]
    %v4436 = vld [vmem:[#allocation6 + $0x5b0] sm:$0xff]
    %v4437 = vld [vmem:[#allocation6 + $0x5b8] sm:$0xff]
    %v4438 = vld [vmem:[#allocation6 + $0x5c0] sm:$0xff]
    %v4439 = vld [vmem:[#allocation6 + $0x5c8] sm:$0xff]
    %v4440 = vld [vmem:[#allocation6 + $0x5d0] sm:$0xff]
    %v4441 = vld [vmem:[#allocation6 + $0x5d8] sm:$0xff]
    %v4442 = vld [vmem:[#allocation6 + $0x5e0] sm:$0xff]
    %v4443 = vld [vmem:[#allocation6 + $0x5e8] sm:$0xff]
    %v4444 = vld [vmem:[#allocation6 + $0x5f0] sm:$0xff]
    %v4445 = vld [vmem:[#allocation6 + $0x5f8] sm:$0xff]
    %v4446 = vld [vmem:[#allocation6 + $0x600] sm:$0xff]
    %v4447 = vld [vmem:[#allocation6 + $0x608] sm:$0xff]
    %v4448 = vld [vmem:[#allocation6 + $0x610] sm:$0xff]
    %v4449 = vld [vmem:[#allocation6 + $0x618] sm:$0xff]
    %v4450 = vld [vmem:[#allocation6 + $0x620] sm:$0xff]
    %v4451 = vld [vmem:[#allocation6 + $0x628] sm:$0xff]
    %v4452 = vld [vmem:[#allocation6 + $0x630] sm:$0xff]
    %v4453 = vld [vmem:[#allocation6 + $0x638] sm:$0xff]
    %v4454 = vld [vmem:[#allocation6 + $0x640] sm:$0xff]
    %v4455 = vld [vmem:[#allocation6 + $0x648] sm:$0xff]
    %v4456 = vld [vmem:[#allocation6 + $0x650] sm:$0xff]
    %v4457 = vld [vmem:[#allocation6 + $0x658] sm:$0xff]
    %v4458 = vld [vmem:[#allocation6 + $0x660] sm:$0xff]
    %v4459 = vld [vmem:[#allocation6 + $0x668] sm:$0xff]
    %v4460 = vld [vmem:[#allocation6 + $0x670] sm:$0xff]
    %v4461 = vld [vmem:[#allocation6 + $0x678] sm:$0xff]
    %v4462 = vld [vmem:[#allocation6 + $0x680] sm:$0xff]
    %v4463 = vld [vmem:[#allocation6 + $0x688] sm:$0xff]
    %v4464 = vld [vmem:[#allocation6 + $0x690] sm:$0xff]
    %v4465 = vld [vmem:[#allocation6 + $0x698] sm:$0xff]
    %v4466 = vld [vmem:[#allocation6 + $0x6a0] sm:$0xff]
    %v4467 = vld [vmem:[#allocation6 + $0x6a8] sm:$0xff]
    %v4468 = vld [vmem:[#allocation6 + $0x6b0] sm:$0xff]
    %v4469 = vld [vmem:[#allocation6 + $0x6b8] sm:$0xff]
    %v4470 = vld [vmem:[#allocation6 + $0x6c0] sm:$0xff]
    %v4471 = vld [vmem:[#allocation6 + $0x6c8] sm:$0xff]
    %v4472 = vld [vmem:[#allocation6 + $0x6d0] sm:$0xff]
    %v4473 = vld [vmem:[#allocation6 + $0x6d8] sm:$0xff]
    %v4474 = vld [vmem:[#allocation6 + $0x6e0] sm:$0xff]
    %v4475 = vld [vmem:[#allocation6 + $0x6e8] sm:$0xff]
    %v4476 = vld [vmem:[#allocation6 + $0x6f0] sm:$0xff]
    %v4477 = vld [vmem:[#allocation6 + $0x6f8] sm:$0xff]
    %v4478 = vld [vmem:[#allocation6 + $0x700] sm:$0xff]
    %v4479 = vld [vmem:[#allocation6 + $0x708] sm:$0xff]
    %v4480 = vld [vmem:[#allocation6 + $0x710] sm:$0xff]
    %v4481 = vld [vmem:[#allocation6 + $0x718] sm:$0xff]
    %v4482 = vld [vmem:[#allocation6 + $0x720] sm:$0xff]
    %v4483 = vld [vmem:[#allocation6 + $0x728] sm:$0xff]
    %v4484 = vld [vmem:[#allocation6 + $0x730] sm:$0xff]
    %v4485 = vld [vmem:[#allocation6 + $0x738] sm:$0xff]
    %v4486 = vld [vmem:[#allocation6 + $0x740] sm:$0xff]
    %v4487 = vld [vmem:[#allocation6 + $0x748] sm:$0xff]
    %v4488 = vld [vmem:[#allocation6 + $0x750] sm:$0xff]
    %v4489 = vld [vmem:[#allocation6 + $0x758] sm:$0xff]
    %v4490 = vld [vmem:[#allocation6 + $0x760] sm:$0xff]
    %v4491 = vld [vmem:[#allocation6 + $0x768] sm:$0xff]
    %v4492 = vld [vmem:[#allocation6 + $0x770] sm:$0xff]
    %v4493 = vld [vmem:[#allocation6 + $0x778] sm:$0xff]
    %v4494 = vld [vmem:[#allocation6 + $0x780] sm:$0xff]
    %v4495 = vld [vmem:[#allocation6 + $0x788] sm:$0xff]
    %v4496 = vld [vmem:[#allocation6 + $0x790] sm:$0xff]
    %v4497 = vld [vmem:[#allocation6 + $0x798] sm:$0xff]
    %v4498 = vld [vmem:[#allocation6 + $0x7a0] sm:$0xff]
    %v4499 = vld [vmem:[#allocation6 + $0x7a8] sm:$0xff]
    %v4500 = vld [vmem:[#allocation6 + $0x7b0] sm:$0xff]
    %v4501 = vld [vmem:[#allocation6 + $0x7b8] sm:$0xff]
    %v4502 = vld [vmem:[#allocation6 + $0x7c0] sm:$0xff]
    %v4503 = vld [vmem:[#allocation6 + $0x7c8] sm:$0xff]
    %v4504 = vld [vmem:[#allocation6 + $0x7d0] sm:$0xff]
    %v4505 = vld [vmem:[#allocation6 + $0x7d8] sm:$0xff]
    %v4506 = vld [vmem:[#allocation6 + $0x7e0] sm:$0xff]
    %v4507 = vld [vmem:[#allocation6 + $0x7e8] sm:$0xff]
    %v4508 = vld [vmem:[#allocation6 + $0x7f0] sm:$0xff]
    %v4509 = vld [vmem:[#allocation6 + $0x7f8] sm:$0xff]
    %v4510 = vld [vmem:[#allocation6 + $0x800] sm:$0xff]
    %v4511 = vld [vmem:[#allocation6 + $0x808] sm:$0xff]
    %v4512 = vld [vmem:[#allocation6 + $0x810] sm:$0xff]
    %v4513 = vld [vmem:[#allocation6 + $0x818] sm:$0xff]
    %v4514 = vld [vmem:[#allocation6 + $0x820] sm:$0xff]
    %v4515 = vld [vmem:[#allocation6 + $0x828] sm:$0xff]
    %v4516 = vld [vmem:[#allocation6 + $0x830] sm:$0xff]
    %v4517 = vld [vmem:[#allocation6 + $0x838] sm:$0xff]
    %v4518 = vld [vmem:[#allocation6 + $0x840] sm:$0xff]
    %v4519 = vld [vmem:[#allocation6 + $0x848] sm:$0xff]
    %v4520 = vld [vmem:[#allocation6 + $0x850] sm:$0xff]
    %v4521 = vld [vmem:[#allocation6 + $0x858] sm:$0xff]
    %v4522 = vld [vmem:[#allocation6 + $0x860] sm:$0xff]
    %v4523 = vld [vmem:[#allocation6 + $0x868] sm:$0xff]
    %v4524 = vld [vmem:[#allocation6 + $0x870] sm:$0xff]
    %v4525 = vld [vmem:[#allocation6 + $0x878] sm:$0xff]
    %v4526 = vld [vmem:[#allocation6 + $0x880] sm:$0xff]
    %v4527 = vld [vmem:[#allocation6 + $0x888] sm:$0xff]
    %v4528 = vld [vmem:[#allocation6 + $0x890] sm:$0xff]
    %v4529 = vld [vmem:[#allocation6 + $0x898] sm:$0xff]
    %v4530 = vld [vmem:[#allocation6 + $0x8a0] sm:$0xff]
    %v4531 = vld [vmem:[#allocation6 + $0x8a8] sm:$0xff]
    %v4532 = vld [vmem:[#allocation6 + $0x8b0] sm:$0xff]
    %v4533 = vld [vmem:[#allocation6 + $0x8b8] sm:$0xff]
    %v4534 = vld [vmem:[#allocation6 + $0x8c0] sm:$0xff]
    %v4535 = vld [vmem:[#allocation6 + $0x8c8] sm:$0xff]
    %v4536 = vld [vmem:[#allocation6 + $0x8d0] sm:$0xff]
    %v4537 = vld [vmem:[#allocation6 + $0x8d8] sm:$0xff]
    %v4538 = vld [vmem:[#allocation6 + $0x8e0] sm:$0xff]
    %v4539 = vld [vmem:[#allocation6 + $0x8e8] sm:$0xff]
    %v4540 = vld [vmem:[#allocation6 + $0x8f0] sm:$0xff]
    %v4541 = vld [vmem:[#allocation6 + $0x8f8] sm:$0xff]
    %v4542 = vld [vmem:[#allocation6 + $0x900] sm:$0xff]
    %v4543 = vld [vmem:[#allocation6 + $0x908] sm:$0xff]
    %v4544 = vld [vmem:[#allocation6 + $0x910] sm:$0xff]
    %v4545 = vld [vmem:[#allocation6 + $0x918] sm:$0xff]
    %v4546 = vld [vmem:[#allocation6 + $0x920] sm:$0xff]
    %v4547 = vld [vmem:[#allocation6 + $0x928] sm:$0xff]
    %v4548 = vld [vmem:[#allocation6 + $0x930] sm:$0xff]
    %v4549 = vld [vmem:[#allocation6 + $0x938] sm:$0xff]
    %v4550 = vld [vmem:[#allocation6 + $0x940] sm:$0xff]
    %v4551 = vld [vmem:[#allocation6 + $0x948] sm:$0xff]
    %v4552 = vld [vmem:[#allocation6 + $0x950] sm:$0xff]
    %v4553 = vld [vmem:[#allocation6 + $0x958] sm:$0xff]
    %v4554 = vld [vmem:[#allocation6 + $0x960] sm:$0xff]
    %v4555 = vld [vmem:[#allocation6 + $0x968] sm:$0xff]
    %v4556 = vld [vmem:[#allocation6 + $0x970] sm:$0xff]
    %v4557 = vld [vmem:[#allocation6 + $0x978] sm:$0xff]
    %v4558 = vld [vmem:[#allocation6 + $0x980] sm:$0xff]
    %v4559 = vld [vmem:[#allocation6 + $0x988] sm:$0xff]
    %v4560 = vld [vmem:[#allocation6 + $0x990] sm:$0xff]
    %v4561 = vld [vmem:[#allocation6 + $0x998] sm:$0xff]
    %v4562 = vld [vmem:[#allocation6 + $0x9a0] sm:$0xff]
    %v4563 = vld [vmem:[#allocation6 + $0x9a8] sm:$0xff]
    %v4564 = vld [vmem:[#allocation6 + $0x9b0] sm:$0xff]
    %v4565 = vld [vmem:[#allocation6 + $0x9b8] sm:$0xff]
    %v4566 = vld [vmem:[#allocation6 + $0x9c0] sm:$0xff]
    %v4567 = vld [vmem:[#allocation6 + $0x9c8] sm:$0xff]
    %v4568 = vld [vmem:[#allocation6 + $0x9d0] sm:$0xff]
    %v4569 = vld [vmem:[#allocation6 + $0x9d8] sm:$0xff]
    %v4570 = vld [vmem:[#allocation6 + $0x9e0] sm:$0xff]
    %v4571 = vld [vmem:[#allocation6 + $0x9e8] sm:$0xff]
    %v4572 = vld [vmem:[#allocation6 + $0x9f0] sm:$0xff]
    %v4573 = vld [vmem:[#allocation6 + $0x9f8] sm:$0xff]
    %v4574 = vld [vmem:[#allocation6 + $0xa00] sm:$0xff]
    %v4575 = vld [vmem:[#allocation6 + $0xa08] sm:$0xff]
    %v4576 = vld [vmem:[#allocation6 + $0xa10] sm:$0xff]
    %v4577 = vld [vmem:[#allocation6 + $0xa18] sm:$0xff]
    %v4578 = vld [vmem:[#allocation6 + $0xa20] sm:$0xff]
    %v4579 = vld [vmem:[#allocation6 + $0xa28] sm:$0xff]
    %v4580 = vld [vmem:[#allocation6 + $0xa30] sm:$0xff]
    %v4581 = vld [vmem:[#allocation6 + $0xa38] sm:$0xff]
    %v4582 = vld [vmem:[#allocation6 + $0xa40] sm:$0xff]
    %v4583 = vld [vmem:[#allocation6 + $0xa48] sm:$0xff]
    %v4584 = vld [vmem:[#allocation6 + $0xa50] sm:$0xff]
    %v4585 = vld [vmem:[#allocation6 + $0xa58] sm:$0xff]
    %v4586 = vld [vmem:[#allocation6 + $0xa60] sm:$0xff]
    %v4587 = vld [vmem:[#allocation6 + $0xa68] sm:$0xff]
    %v4588 = vld [vmem:[#allocation6 + $0xa70] sm:$0xff]
    %v4589 = vld [vmem:[#allocation6 + $0xa78] sm:$0xff]
    %v4590 = vld [vmem:[#allocation6 + $0xa80] sm:$0xff]
    %v4591 = vld [vmem:[#allocation6 + $0xa88] sm:$0xff]
    %v4592 = vld [vmem:[#allocation6 + $0xa90] sm:$0xff]
    %v4593 = vld [vmem:[#allocation6 + $0xa98] sm:$0xff]
    %v4594 = vld [vmem:[#allocation6 + $0xaa0] sm:$0xff]
    %v4595 = vld [vmem:[#allocation6 + $0xaa8] sm:$0xff]
    %v4596 = vld [vmem:[#allocation6 + $0xab0] sm:$0xff]
    %v4597 = vld [vmem:[#allocation6 + $0xab8] sm:$0xff]
    %v4598 = vld [vmem:[#allocation6 + $0xac0] sm:$0xff]
    %v4599 = vld [vmem:[#allocation6 + $0xac8] sm:$0xff]
    %v4600 = vld [vmem:[#allocation6 + $0xad0] sm:$0xff]
    %v4601 = vld [vmem:[#allocation6 + $0xad8] sm:$0xff]
    %v4602 = vld [vmem:[#allocation6 + $0xae0] sm:$0xff]
    %v4603 = vld [vmem:[#allocation6 + $0xae8] sm:$0xff]
    %v4604 = vld [vmem:[#allocation6 + $0xaf0] sm:$0xff]
    %v4605 = vld [vmem:[#allocation6 + $0xaf8] sm:$0xff]
    %v4606 = vld [vmem:[#allocation6 + $0xb00] sm:$0xff]
    %v4607 = vld [vmem:[#allocation6 + $0xb08] sm:$0xff]
    %v4608 = vld [vmem:[#allocation6 + $0xb10] sm:$0xff]
    %v4609 = vld [vmem:[#allocation6 + $0xb18] sm:$0xff]
    %v4610 = vld [vmem:[#allocation6 + $0xb20] sm:$0xff]
    %v4611 = vld [vmem:[#allocation6 + $0xb28] sm:$0xff]
    %v4612 = vld [vmem:[#allocation6 + $0xb30] sm:$0xff]
    %v4613 = vld [vmem:[#allocation6 + $0xb38] sm:$0xff]
    %v4614 = vld [vmem:[#allocation6 + $0xb40] sm:$0xff]
    %v4615 = vld [vmem:[#allocation6 + $0xb48] sm:$0xff]
    %v4616 = vld [vmem:[#allocation6 + $0xb50] sm:$0xff]
    %v4617 = vld [vmem:[#allocation6 + $0xb58] sm:$0xff]
    %v4618 = vld [vmem:[#allocation6 + $0xb60] sm:$0xff]
    %v4619 = vld [vmem:[#allocation6 + $0xb68] sm:$0xff]
    %v4620 = vld [vmem:[#allocation6 + $0xb70] sm:$0xff]
    %v4621 = vld [vmem:[#allocation6 + $0xb78] sm:$0xff]
    %v4622 = vld [vmem:[#allocation6 + $0xb80] sm:$0xff]
    %v4623 = vld [vmem:[#allocation6 + $0xb88] sm:$0xff]
    %v4624 = vld [vmem:[#allocation6 + $0xb90] sm:$0xff]
    %v4625 = vld [vmem:[#allocation6 + $0xb98] sm:$0xff]
    %v4626 = vld [vmem:[#allocation6 + $0xba0] sm:$0xff]
    %v4627 = vld [vmem:[#allocation6 + $0xba8] sm:$0xff]
    %v4628 = vld [vmem:[#allocation6 + $0xbb0] sm:$0xff]
    %v4629 = vld [vmem:[#allocation6 + $0xbb8] sm:$0xff]
    %v4630 = vld [vmem:[#allocation6 + $0xbc0] sm:$0xff]
    %v4631 = vld [vmem:[#allocation6 + $0xbc8] sm:$0xff]
    %v4632 = vld [vmem:[#allocation6 + $0xbd0] sm:$0xff]
    %v4633 = vld [vmem:[#allocation6 + $0xbd8] sm:$0xff]
    %v4634 = vld [vmem:[#allocation6 + $0xbe0] sm:$0xff]
    %v4635 = vld [vmem:[#allocation6 + $0xbe8] sm:$0xff]
    %v4636 = vld [vmem:[#allocation6 + $0xbf0] sm:$0xff]
    %v4637 = vld [vmem:[#allocation6 + $0xbf8] sm:$0xff]
    %v4638 = vld [vmem:[#allocation6 + $0xc00] sm:$0xff]
    %v4639 = vld [vmem:[#allocation6 + $0xc08] sm:$0xff]
    %v4640 = vld [vmem:[#allocation6 + $0xc10] sm:$0xff]
    %v4641 = vld [vmem:[#allocation6 + $0xc18] sm:$0xff]
    %v4642 = vld [vmem:[#allocation6 + $0xc20] sm:$0xff]
    %v4643 = vld [vmem:[#allocation6 + $0xc28] sm:$0xff]
    %v4644 = vld [vmem:[#allocation6 + $0xc30] sm:$0xff]
    %v4645 = vld [vmem:[#allocation6 + $0xc38] sm:$0xff]
    %v4646 = vld [vmem:[#allocation6 + $0xc40] sm:$0xff]
    %v4647 = vld [vmem:[#allocation6 + $0xc48] sm:$0xff]
    %v4648 = vld [vmem:[#allocation6 + $0xc50] sm:$0xff]
    %v4649 = vld [vmem:[#allocation6 + $0xc58] sm:$0xff]
    %v4650 = vld [vmem:[#allocation6 + $0xc60] sm:$0xff]
    %v4651 = vld [vmem:[#allocation6 + $0xc68] sm:$0xff]
    %v4652 = vld [vmem:[#allocation6 + $0xc70] sm:$0xff]
    %v4653 = vld [vmem:[#allocation6 + $0xc78] sm:$0xff]
    %v4654 = vld [vmem:[#allocation6 + $0xc80] sm:$0xff]
    %v4655 = vld [vmem:[#allocation6 + $0xc88] sm:$0xff]
    %v4656 = vld [vmem:[#allocation6 + $0xc90] sm:$0xff]
    %v4657 = vld [vmem:[#allocation6 + $0xc98] sm:$0xff]
    %v4658 = vld [vmem:[#allocation6 + $0xca0] sm:$0xff]
    %v4659 = vld [vmem:[#allocation6 + $0xca8] sm:$0xff]
    %v4660 = vld [vmem:[#allocation6 + $0xcb0] sm:$0xff]
    %v4661 = vld [vmem:[#allocation6 + $0xcb8] sm:$0xff]
    %v4662 = vld [vmem:[#allocation6 + $0xcc0] sm:$0xff]
    %v4663 = vld [vmem:[#allocation6 + $0xcc8] sm:$0xff]
    %v4664 = vld [vmem:[#allocation6 + $0xcd0] sm:$0xff]
    %v4665 = vld [vmem:[#allocation6 + $0xcd8] sm:$0xff]
    %v4666 = vld [vmem:[#allocation6 + $0xce0] sm:$0xff]
    %v4667 = vld [vmem:[#allocation6 + $0xce8] sm:$0xff]
    %v4668 = vld [vmem:[#allocation6 + $0xcf0] sm:$0xff]
    %v4669 = vld [vmem:[#allocation6 + $0xcf8] sm:$0xff]
    %v4670 = vld [vmem:[#allocation6 + $0xd00] sm:$0xff]
    %v4671 = vld [vmem:[#allocation6 + $0xd08] sm:$0xff]
    %v4672 = vld [vmem:[#allocation6 + $0xd10] sm:$0xff]
    %v4673 = vld [vmem:[#allocation6 + $0xd18] sm:$0xff]
    %v4674 = vld [vmem:[#allocation6 + $0xd20] sm:$0xff]
    %v4675 = vld [vmem:[#allocation6 + $0xd28] sm:$0xff]
    %v4676 = vld [vmem:[#allocation6 + $0xd30] sm:$0xff]
    %v4677 = vld [vmem:[#allocation6 + $0xd38] sm:$0xff]
    %v4678 = vld [vmem:[#allocation6 + $0xd40] sm:$0xff]
    %v4679 = vld [vmem:[#allocation6 + $0xd48] sm:$0xff]
    %v4680 = vld [vmem:[#allocation6 + $0xd50] sm:$0xff]
    %v4681 = vld [vmem:[#allocation6 + $0xd58] sm:$0xff]
    %v4682 = vld [vmem:[#allocation6 + $0xd60] sm:$0xff]
    %v4683 = vld [vmem:[#allocation6 + $0xd68] sm:$0xff]
    %v4684 = vld [vmem:[#allocation6 + $0xd70] sm:$0xff]
    %v4685 = vld [vmem:[#allocation6 + $0xd78] sm:$0xff]
    %v4686 = vld [vmem:[#allocation6 + $0xd80] sm:$0xff]
    %v4687 = vld [vmem:[#allocation6 + $0xd88] sm:$0xff]
    %v4688 = vld [vmem:[#allocation6 + $0xd90] sm:$0xff]
    %v4689 = vld [vmem:[#allocation6 + $0xd98] sm:$0xff]
    %v4690 = vld [vmem:[#allocation6 + $0xda0] sm:$0xff]
    %v4691 = vld [vmem:[#allocation6 + $0xda8] sm:$0xff]
    %v4692 = vld [vmem:[#allocation6 + $0xdb0] sm:$0xff]
    %v4693 = vld [vmem:[#allocation6 + $0xdb8] sm:$0xff]
    %v4694 = vld [vmem:[#allocation6 + $0xdc0] sm:$0xff]
    %v4695 = vld [vmem:[#allocation6 + $0xdc8] sm:$0xff]
    %v4696 = vld [vmem:[#allocation6 + $0xdd0] sm:$0xff]
    %v4697 = vld [vmem:[#allocation6 + $0xdd8] sm:$0xff]
    %v4698 = vld [vmem:[#allocation6 + $0xde0] sm:$0xff]
    %v4699 = vld [vmem:[#allocation6 + $0xde8] sm:$0xff]
    %v4700 = vld [vmem:[#allocation6 + $0xdf0] sm:$0xff]
    %v4701 = vld [vmem:[#allocation6 + $0xdf8] sm:$0xff]
    %v4702 = vld [vmem:[#allocation6 + $0xe00] sm:$0xff]
    %v4703 = vld [vmem:[#allocation6 + $0xe08] sm:$0xff]
    %v4704 = vld [vmem:[#allocation6 + $0xe10] sm:$0xff]
    %v4705 = vld [vmem:[#allocation6 + $0xe18] sm:$0xff]
    %v4706 = vld [vmem:[#allocation6 + $0xe20] sm:$0xff]
    %v4707 = vld [vmem:[#allocation6 + $0xe28] sm:$0xff]
    %v4708 = vld [vmem:[#allocation6 + $0xe30] sm:$0xff]
    %v4709 = vld [vmem:[#allocation6 + $0xe38] sm:$0xff]
    %v4710 = vld [vmem:[#allocation6 + $0xe40] sm:$0xff]
    %v4711 = vld [vmem:[#allocation6 + $0xe48] sm:$0xff]
    %v4712 = vld [vmem:[#allocation6 + $0xe50] sm:$0xff]
    %v4713 = vld [vmem:[#allocation6 + $0xe58] sm:$0xff]
    %v4714 = vld [vmem:[#allocation6 + $0xe60] sm:$0xff]
    %v4715 = vld [vmem:[#allocation6 + $0xe68] sm:$0xff]
    %v4716 = vld [vmem:[#allocation6 + $0xe70] sm:$0xff]
    %v4717 = vld [vmem:[#allocation6 + $0xe78] sm:$0xff]
    %v4718 = vld [vmem:[#allocation6 + $0xe80] sm:$0xff]
    %v4719 = vld [vmem:[#allocation6 + $0xe88] sm:$0xff]
    %v4720 = vld [vmem:[#allocation6 + $0xe90] sm:$0xff]
    %v4721 = vld [vmem:[#allocation6 + $0xe98] sm:$0xff]
    %v4722 = vld [vmem:[#allocation6 + $0xea0] sm:$0xff]
    %v4723 = vld [vmem:[#allocation6 + $0xea8] sm:$0xff]
    %v4724 = vld [vmem:[#allocation6 + $0xeb0] sm:$0xff]
    %v4725 = vld [vmem:[#allocation6 + $0xeb8] sm:$0xff]
    %v4726 = vld [vmem:[#allocation6 + $0xec0] sm:$0xff]
    %v4727 = vld [vmem:[#allocation6 + $0xec8] sm:$0xff]
    %v4728 = vld [vmem:[#allocation6 + $0xed0] sm:$0xff]
    %v4729 = vld [vmem:[#allocation6 + $0xed8] sm:$0xff]
    %v4730 = vld [vmem:[#allocation6 + $0xee0] sm:$0xff]
    %v4731 = vld [vmem:[#allocation6 + $0xee8] sm:$0xff]
    %v4732 = vld [vmem:[#allocation6 + $0xef0] sm:$0xff]
    %v4733 = vld [vmem:[#allocation6 + $0xef8] sm:$0xff]
    %v4734 = vld [vmem:[#allocation6 + $0xf00] sm:$0xff]
    %v4735 = vld [vmem:[#allocation6 + $0xf08] sm:$0xff]
    %v4736 = vld [vmem:[#allocation6 + $0xf10] sm:$0xff]
    %v4737 = vld [vmem:[#allocation6 + $0xf18] sm:$0xff]
    %v4738 = vld [vmem:[#allocation6 + $0xf20] sm:$0xff]
    %v4739 = vld [vmem:[#allocation6 + $0xf28] sm:$0xff]
    %v4740 = vld [vmem:[#allocation6 + $0xf30] sm:$0xff]
    %v4741 = vld [vmem:[#allocation6 + $0xf38] sm:$0xff]
    %v4742 = vld [vmem:[#allocation6 + $0xf40] sm:$0xff]
    %v4743 = vld [vmem:[#allocation6 + $0xf48] sm:$0xff]
    %v4744 = vld [vmem:[#allocation6 + $0xf50] sm:$0xff]
    %v4745 = vld [vmem:[#allocation6 + $0xf58] sm:$0xff]
    %v4746 = vld [vmem:[#allocation6 + $0xf60] sm:$0xff]
    %v4747 = vld [vmem:[#allocation6 + $0xf68] sm:$0xff]
    %v4748 = vld [vmem:[#allocation6 + $0xf70] sm:$0xff]
    %v4749 = vld [vmem:[#allocation6 + $0xf78] sm:$0xff]
    %v4750 = vld [vmem:[#allocation6 + $0xf80] sm:$0xff]
    %v4751 = vld [vmem:[#allocation6 + $0xf88] sm:$0xff]
    %v4752 = vld [vmem:[#allocation6 + $0xf90] sm:$0xff]
    %v4753 = vld [vmem:[#allocation6 + $0xf98] sm:$0xff]
    %v4754 = vld [vmem:[#allocation6 + $0xfa0] sm:$0xff]
    %v4755 = vld [vmem:[#allocation6 + $0xfa8] sm:$0xff]
    %v4756 = vld [vmem:[#allocation6 + $0xfb0] sm:$0xff]
    %v4757 = vld [vmem:[#allocation6 + $0xfb8] sm:$0xff]
    %v4758 = vld [vmem:[#allocation6 + $0xfc0] sm:$0xff]
    %v4759 = vld [vmem:[#allocation6 + $0xfc8] sm:$0xff]
    %v4760 = vld [vmem:[#allocation6 + $0xfd0] sm:$0xff]
    %v4761 = vld [vmem:[#allocation6 + $0xfd8] sm:$0xff]
    %v4762 = vld [vmem:[#allocation6 + $0xfe0] sm:$0xff]
    %v4763 = vld [vmem:[#allocation6 + $0xfe8] sm:$0xff]
    %v4764 = vld [vmem:[#allocation6 + $0xff0] sm:$0xff]
    %v4765 = vld [vmem:[#allocation6 + $0xff8] sm:$0xff]
    %v4766 = vld [vmem:[#allocation6 + $0x1000] sm:$0xff]
    %v4767 = vld [vmem:[#allocation6 + $0x1008] sm:$0xff]
    %v4768 = vld [vmem:[#allocation6 + $0x1010] sm:$0xff]
    %v4769 = vld [vmem:[#allocation6 + $0x1018] sm:$0xff]
    %v4770 = vld [vmem:[#allocation6 + $0x1020] sm:$0xff]
    %v4771 = vld [vmem:[#allocation6 + $0x1028] sm:$0xff]
    %v4772 = vld [vmem:[#allocation6 + $0x1030] sm:$0xff]
    %v4773 = vld [vmem:[#allocation6 + $0x1038] sm:$0xff]
    %v4774 = vld [vmem:[#allocation6 + $0x1040] sm:$0xff]
    %v4775 = vld [vmem:[#allocation6 + $0x1048] sm:$0xff]
    %v4776 = vld [vmem:[#allocation6 + $0x1050] sm:$0xff]
    %v4777 = vld [vmem:[#allocation6 + $0x1058] sm:$0xff]
    %v4778 = vld [vmem:[#allocation6 + $0x1060] sm:$0xff]
    %v4779 = vld [vmem:[#allocation6 + $0x1068] sm:$0xff]
    %v4780 = vld [vmem:[#allocation6 + $0x1070] sm:$0xff]
    %v4781 = vld [vmem:[#allocation6 + $0x1078] sm:$0xff]
    %v4782 = vld [vmem:[#allocation6 + $0x1080] sm:$0xff]
    %v4783 = vld [vmem:[#allocation6 + $0x1088] sm:$0xff]
    %v4784 = vld [vmem:[#allocation6 + $0x1090] sm:$0xff]
    %v4785 = vld [vmem:[#allocation6 + $0x1098] sm:$0xff]
    %v4786 = vld [vmem:[#allocation6 + $0x10a0] sm:$0xff]
    %v4787 = vld [vmem:[#allocation6 + $0x10a8] sm:$0xff]
    %v4788 = vld [vmem:[#allocation6 + $0x10b0] sm:$0xff]
    %v4789 = vld [vmem:[#allocation6 + $0x10b8] sm:$0xff]
    %v4790 = vld [vmem:[#allocation6 + $0x10c0] sm:$0xff]
    %v4791 = vld [vmem:[#allocation6 + $0x10c8] sm:$0xff]
    %v4792 = vld [vmem:[#allocation6 + $0x10d0] sm:$0xff]
    %v4793 = vld [vmem:[#allocation6 + $0x10d8] sm:$0xff]
    %v4794 = vld [vmem:[#allocation6 + $0x10e0] sm:$0xff]
    %v4795 = vld [vmem:[#allocation6 + $0x10e8] sm:$0xff]
    %v4796 = vld [vmem:[#allocation6 + $0x10f0] sm:$0xff]
    %v4797 = vld [vmem:[#allocation6 + $0x10f8] sm:$0xff]
    %v4798 = vld [vmem:[#allocation6 + $0x1100] sm:$0xff]
    %v4799 = vld [vmem:[#allocation6 + $0x1108] sm:$0xff]
    %v4800 = vld [vmem:[#allocation6 + $0x1110] sm:$0xff]
    %v4801 = vld [vmem:[#allocation6 + $0x1118] sm:$0xff]
    %v4802 = vld [vmem:[#allocation6 + $0x1120] sm:$0xff]
    %v4803 = vld [vmem:[#allocation6 + $0x1128] sm:$0xff]
    %v4804 = vld [vmem:[#allocation6 + $0x1130] sm:$0xff]
    %v4805 = vld [vmem:[#allocation6 + $0x1138] sm:$0xff]
    %v4806 = vld [vmem:[#allocation6 + $0x1140] sm:$0xff]
    %v4807 = vld [vmem:[#allocation6 + $0x1148] sm:$0xff]
    %v4808 = vld [vmem:[#allocation6 + $0x1150] sm:$0xff]
    %v4809 = vld [vmem:[#allocation6 + $0x1158] sm:$0xff]
    %v4810 = vld [vmem:[#allocation6 + $0x1160] sm:$0xff]
    %v4811 = vld [vmem:[#allocation6 + $0x1168] sm:$0xff]
    %v4812 = vld [vmem:[#allocation6 + $0x1170] sm:$0xff]
    %v4813 = vld [vmem:[#allocation6 + $0x1178] sm:$0xff]
    %v4814 = vld [vmem:[#allocation6 + $0x1180] sm:$0xff]
    %v4815 = vld [vmem:[#allocation6 + $0x1188] sm:$0xff]
    %v4816 = vld [vmem:[#allocation6 + $0x1190] sm:$0xff]
    %v4817 = vld [vmem:[#allocation6 + $0x1198] sm:$0xff]
    %v4818 = vld [vmem:[#allocation6 + $0x11a0] sm:$0xff]
    %v4819 = vld [vmem:[#allocation6 + $0x11a8] sm:$0xff]
    %v4820 = vld [vmem:[#allocation6 + $0x11b0] sm:$0xff]
    %v4821 = vld [vmem:[#allocation6 + $0x11b8] sm:$0xff]
    %v4822 = vld [vmem:[#allocation6 + $0x11c0] sm:$0xff]
    %v4823 = vld [vmem:[#allocation6 + $0x11c8] sm:$0xff]
    %v4824 = vld [vmem:[#allocation6 + $0x11d0] sm:$0xff]
    %v4825 = vld [vmem:[#allocation6 + $0x11d8] sm:$0xff]
    %v4826 = vld [vmem:[#allocation6 + $0x11e0] sm:$0xff]
    %v4827 = vld [vmem:[#allocation6 + $0x11e8] sm:$0xff]
    %v4828 = vld [vmem:[#allocation6 + $0x11f0] sm:$0xff]
    %v4829 = vld [vmem:[#allocation6 + $0x11f8] sm:$0xff]
    %v4830 = vld [vmem:[#allocation6 + $0x1200] sm:$0xff]
    %v4831 = vld [vmem:[#allocation6 + $0x1208] sm:$0xff]
    %v4832 = vld [vmem:[#allocation6 + $0x1210] sm:$0xff]
    %v4833 = vld [vmem:[#allocation6 + $0x1218] sm:$0xff]
    %v4834 = vld [vmem:[#allocation6 + $0x1220] sm:$0xff]
    %v4835 = vld [vmem:[#allocation6 + $0x1228] sm:$0xff]
    %v4836 = vld [vmem:[#allocation6 + $0x1230] sm:$0xff]
    %v4837 = vld [vmem:[#allocation6 + $0x1238] sm:$0xff]
    %v4838 = vld [vmem:[#allocation6 + $0x1240] sm:$0xff]
    %v4839 = vld [vmem:[#allocation6 + $0x1248] sm:$0xff]
    %v4840 = vld [vmem:[#allocation6 + $0x1250] sm:$0xff]
    %v4841 = vld [vmem:[#allocation6 + $0x1258] sm:$0xff]
    %v4842 = vld [vmem:[#allocation6 + $0x1260] sm:$0xff]
    %v4843 = vld [vmem:[#allocation6 + $0x1268] sm:$0xff]
    %v4844 = vld [vmem:[#allocation6 + $0x1270] sm:$0xff]
    %v4845 = vld [vmem:[#allocation6 + $0x1278] sm:$0xff]
    %v4846 = vld [vmem:[#allocation6 + $0x1280] sm:$0xff]
    %v4847 = vld [vmem:[#allocation6 + $0x1288] sm:$0xff]
    %v4848 = vld [vmem:[#allocation6 + $0x1290] sm:$0xff]
    %v4849 = vld [vmem:[#allocation6 + $0x1298] sm:$0xff]
    %v4850 = vld [vmem:[#allocation6 + $0x12a0] sm:$0xff]
    %v4851 = vld [vmem:[#allocation6 + $0x12a8] sm:$0xff]
    %v4852 = vld [vmem:[#allocation6 + $0x12b0] sm:$0xff]
    %v4853 = vld [vmem:[#allocation6 + $0x12b8] sm:$0xff]
    %v4854 = vld [vmem:[#allocation6 + $0x12c0] sm:$0xff]
    %v4855 = vld [vmem:[#allocation6 + $0x12c8] sm:$0xff]
    %v4856 = vld [vmem:[#allocation6 + $0x12d0] sm:$0xff]
    %v4857 = vld [vmem:[#allocation6 + $0x12d8] sm:$0xff]
    %v4858 = vld [vmem:[#allocation6 + $0x12e0] sm:$0xff]
    %v4859 = vld [vmem:[#allocation6 + $0x12e8] sm:$0xff]
    %v4860 = vld [vmem:[#allocation6 + $0x12f0] sm:$0xff]
    %v4861 = vld [vmem:[#allocation6 + $0x12f8] sm:$0xff]
    %v4862 = vld [vmem:[#allocation6 + $0x1300] sm:$0xff]
    %v4863 = vld [vmem:[#allocation6 + $0x1308] sm:$0xff]
    %v4864 = vld [vmem:[#allocation6 + $0x1310] sm:$0xff]
    %v4865 = vld [vmem:[#allocation6 + $0x1318] sm:$0xff]
    %v4866 = vld [vmem:[#allocation6 + $0x1320] sm:$0xff]
    %v4867 = vld [vmem:[#allocation6 + $0x1328] sm:$0xff]
    %v4868 = vld [vmem:[#allocation6 + $0x1330] sm:$0xff]
    %v4869 = vld [vmem:[#allocation6 + $0x1338] sm:$0xff]
    %v4870 = vld [vmem:[#allocation6 + $0x1340] sm:$0xff]
    %v4871 = vld [vmem:[#allocation6 + $0x1348] sm:$0xff]
    %v4872 = vld [vmem:[#allocation6 + $0x1350] sm:$0xff]
    %v4873 = vld [vmem:[#allocation6 + $0x1358] sm:$0xff]
    %v4874 = vld [vmem:[#allocation6 + $0x1360] sm:$0xff]
    %v4875 = vld [vmem:[#allocation6 + $0x1368] sm:$0xff]
    %v4876 = vld [vmem:[#allocation6 + $0x1370] sm:$0xff]
    %v4877 = vld [vmem:[#allocation6 + $0x1378] sm:$0xff]
    %v4878 = vld [vmem:[#allocation6 + $0x1380] sm:$0xff]
    %v4879 = vld [vmem:[#allocation6 + $0x1388] sm:$0xff]
    %v4880 = vld [vmem:[#allocation6 + $0x1390] sm:$0xff]
    %v4881 = vld [vmem:[#allocation6 + $0x1398] sm:$0xff]
    %v4882 = vld [vmem:[#allocation6 + $0x13a0] sm:$0xff]
    %v4883 = vld [vmem:[#allocation6 + $0x13a8] sm:$0xff]
    %v4884 = vld [vmem:[#allocation6 + $0x13b0] sm:$0xff]
    %v4885 = vld [vmem:[#allocation6 + $0x13b8] sm:$0xff]
    %v4886 = vld [vmem:[#allocation6 + $0x13c0] sm:$0xff]
    %v4887 = vld [vmem:[#allocation6 + $0x13c8] sm:$0xff]
    %v4888 = vld [vmem:[#allocation6 + $0x13d0] sm:$0xff]
    %v4889 = vld [vmem:[#allocation6 + $0x13d8] sm:$0xff]
    %v4890 = vld [vmem:[#allocation6 + $0x13e0] sm:$0xff]
    %v4891 = vld [vmem:[#allocation6 + $0x13e8] sm:$0xff]
    %v4892 = vld [vmem:[#allocation6 + $0x13f0] sm:$0xff]
    %v4893 = vld [vmem:[#allocation6 + $0x13f8] sm:$0xff]
    %v4894 = vld [vmem:[#allocation6 + $0x1400] sm:$0xff]
    %v4895 = vld [vmem:[#allocation6 + $0x1408] sm:$0xff]
    %v4896 = vld [vmem:[#allocation6 + $0x1410] sm:$0xff]
    %v4897 = vld [vmem:[#allocation6 + $0x1418] sm:$0xff]
    %v4898 = vld [vmem:[#allocation6 + $0x1420] sm:$0xff]
    %v4899 = vld [vmem:[#allocation6 + $0x1428] sm:$0xff]
    %v4900 = vld [vmem:[#allocation6 + $0x1430] sm:$0xff]
    %v4901 = vld [vmem:[#allocation6 + $0x1438] sm:$0xff]
    %v4902 = vld [vmem:[#allocation6 + $0x1440] sm:$0xff]
    %v4903 = vld [vmem:[#allocation6 + $0x1448] sm:$0xff]
    %v4904 = vld [vmem:[#allocation6 + $0x1450] sm:$0xff]
    %v4905 = vld [vmem:[#allocation6 + $0x1458] sm:$0xff]
    %v4906 = vld [vmem:[#allocation6 + $0x1460] sm:$0xff]
    %v4907 = vld [vmem:[#allocation6 + $0x1468] sm:$0xff]
    %v4908 = vld [vmem:[#allocation6 + $0x1470] sm:$0xff]
    %v4909 = vld [vmem:[#allocation6 + $0x1478] sm:$0xff]
    %v4910 = vld [vmem:[#allocation6 + $0x1480] sm:$0xff]
    %v4911 = vld [vmem:[#allocation6 + $0x1488] sm:$0xff]
    %v4912 = vld [vmem:[#allocation6 + $0x1490] sm:$0xff]
    %v4913 = vld [vmem:[#allocation6 + $0x1498] sm:$0xff]
    %v4914 = vld [vmem:[#allocation6 + $0x14a0] sm:$0xff]
    %v4915 = vld [vmem:[#allocation6 + $0x14a8] sm:$0xff]
    %v4916 = vld [vmem:[#allocation6 + $0x14b0] sm:$0xff]
    %v4917 = vld [vmem:[#allocation6 + $0x14b8] sm:$0xff]
    %v4918 = vld [vmem:[#allocation6 + $0x14c0] sm:$0xff]
    %v4919 = vld [vmem:[#allocation6 + $0x14c8] sm:$0xff]
    %v4920 = vld [vmem:[#allocation6 + $0x14d0] sm:$0xff]
    %v4921 = vld [vmem:[#allocation6 + $0x14d8] sm:$0xff]
    %v4922 = vld [vmem:[#allocation6 + $0x14e0] sm:$0xff]
    %v4923 = vld [vmem:[#allocation6 + $0x14e8] sm:$0xff]
    %v4924 = vld [vmem:[#allocation6 + $0x14f0] sm:$0xff]
    %v4925 = vld [vmem:[#allocation6 + $0x14f8] sm:$0xff]
    %v4926 = vld [vmem:[#allocation6 + $0x1500] sm:$0xff]
    %v4927 = vld [vmem:[#allocation6 + $0x1508] sm:$0xff]
    %v4928 = vld [vmem:[#allocation6 + $0x1510] sm:$0xff]
    %v4929 = vld [vmem:[#allocation6 + $0x1518] sm:$0xff]
    %v4930 = vld [vmem:[#allocation6 + $0x1520] sm:$0xff]
    %v4931 = vld [vmem:[#allocation6 + $0x1528] sm:$0xff]
    %v4932 = vld [vmem:[#allocation6 + $0x1530] sm:$0xff]
    %v4933 = vld [vmem:[#allocation6 + $0x1538] sm:$0xff]
    %v4934 = vld [vmem:[#allocation6 + $0x1540] sm:$0xff]
    %v4935 = vld [vmem:[#allocation6 + $0x1548] sm:$0xff]
    %v4936 = vld [vmem:[#allocation6 + $0x1550] sm:$0xff]
    %v4937 = vld [vmem:[#allocation6 + $0x1558] sm:$0xff]
    %v4938 = vld [vmem:[#allocation6 + $0x1560] sm:$0xff]
    %v4939 = vld [vmem:[#allocation6 + $0x1568] sm:$0xff]
    %v4940 = vld [vmem:[#allocation6 + $0x1570] sm:$0xff]
    %v4941 = vld [vmem:[#allocation6 + $0x1578] sm:$0xff]
    %v4942 = vld [vmem:[#allocation6 + $0x1580] sm:$0xff]
    %v4943 = vld [vmem:[#allocation6 + $0x1588] sm:$0xff]
    %v4944 = vld [vmem:[#allocation6 + $0x1590] sm:$0xff]
    %v4945 = vld [vmem:[#allocation6 + $0x1598] sm:$0xff]
    %v4946 = vld [vmem:[#allocation6 + $0x15a0] sm:$0xff]
    %v4947 = vld [vmem:[#allocation6 + $0x15a8] sm:$0xff]
    %v4948 = vld [vmem:[#allocation6 + $0x15b0] sm:$0xff]
    %v4949 = vld [vmem:[#allocation6 + $0x15b8] sm:$0xff]
    %v4950 = vld [vmem:[#allocation6 + $0x15c0] sm:$0xff]
    %v4951 = vld [vmem:[#allocation6 + $0x15c8] sm:$0xff]
    %v4952 = vld [vmem:[#allocation6 + $0x15d0] sm:$0xff]
    %v4953 = vld [vmem:[#allocation6 + $0x15d8] sm:$0xff]
    %v4954 = vld [vmem:[#allocation6 + $0x15e0] sm:$0xff]
    %v4955 = vld [vmem:[#allocation6 + $0x15e8] sm:$0xff]
    %v4956 = vld [vmem:[#allocation6 + $0x15f0] sm:$0xff]
    %v4957 = vld [vmem:[#allocation6 + $0x15f8] sm:$0xff]
    %v4958 = vld [vmem:[#allocation6 + $0x1600] sm:$0xff]
    %v4959 = vld [vmem:[#allocation6 + $0x1608] sm:$0xff]
    %v4960 = vld [vmem:[#allocation6 + $0x1610] sm:$0xff]
    %v4961 = vld [vmem:[#allocation6 + $0x1618] sm:$0xff]
    %v4962 = vld [vmem:[#allocation6 + $0x1620] sm:$0xff]
    %v4963 = vld [vmem:[#allocation6 + $0x1628] sm:$0xff]
    %v4964 = vld [vmem:[#allocation6 + $0x1630] sm:$0xff]
    %v4965 = vld [vmem:[#allocation6 + $0x1638] sm:$0xff]
    %v4966 = vld [vmem:[#allocation6 + $0x1640] sm:$0xff]
    %v4967 = vld [vmem:[#allocation6 + $0x1648] sm:$0xff]
    %v4968 = vld [vmem:[#allocation6 + $0x1650] sm:$0xff]
    %v4969 = vld [vmem:[#allocation6 + $0x1658] sm:$0xff]
    %v4970 = vld [vmem:[#allocation6 + $0x1660] sm:$0xff]
    %v4971 = vld [vmem:[#allocation6 + $0x1668] sm:$0xff]
    %v4972 = vld [vmem:[#allocation6 + $0x1670] sm:$0xff]
    %v4973 = vld [vmem:[#allocation6 + $0x1678] sm:$0xff]
    %v4974 = vld [vmem:[#allocation6 + $0x1680] sm:$0xff]
    %v4975 = vld [vmem:[#allocation6 + $0x1688] sm:$0xff]
    %v4976 = vld [vmem:[#allocation6 + $0x1690] sm:$0xff]
    %v4977 = vld [vmem:[#allocation6 + $0x1698] sm:$0xff]
    %v4978 = vld [vmem:[#allocation6 + $0x16a0] sm:$0xff]
    %v4979 = vld [vmem:[#allocation6 + $0x16a8] sm:$0xff]
    %v4980 = vld [vmem:[#allocation6 + $0x16b0] sm:$0xff]
    %v4981 = vld [vmem:[#allocation6 + $0x16b8] sm:$0xff]
    %v4982 = vld [vmem:[#allocation6 + $0x16c0] sm:$0xff]
    %v4983 = vld [vmem:[#allocation6 + $0x16c8] sm:$0xff]
    %v4984 = vld [vmem:[#allocation6 + $0x16d0] sm:$0xff]
    %v4985 = vld [vmem:[#allocation6 + $0x16d8] sm:$0xff]
    %v4986 = vld [vmem:[#allocation6 + $0x16e0] sm:$0xff]
    %v4987 = vld [vmem:[#allocation6 + $0x16e8] sm:$0xff]
    %v4988 = vld [vmem:[#allocation6 + $0x16f0] sm:$0xff]
    %v4989 = vld [vmem:[#allocation6 + $0x16f8] sm:$0xff]
    %v4990 = vld [vmem:[#allocation6 + $0x1700] sm:$0xff]
    %v4991 = vld [vmem:[#allocation6 + $0x1708] sm:$0xff]
    %v4992 = vld [vmem:[#allocation6 + $0x1710] sm:$0xff]
    %v4993 = vld [vmem:[#allocation6 + $0x1718] sm:$0xff]
    %v4994 = vld [vmem:[#allocation6 + $0x1720] sm:$0xff]
    %v4995 = vld [vmem:[#allocation6 + $0x1728] sm:$0xff]
    %v4996 = vld [vmem:[#allocation6 + $0x1730] sm:$0xff]
    %v4997 = vld [vmem:[#allocation6 + $0x1738] sm:$0xff]
    %v4998 = vld [vmem:[#allocation6 + $0x1740] sm:$0xff]
    %v4999 = vld [vmem:[#allocation6 + $0x1748] sm:$0xff]
    %v5000 = vld [vmem:[#allocation6 + $0x1750] sm:$0xff]
    %v5001 = vld [vmem:[#allocation6 + $0x1758] sm:$0xff]
    %v5002 = vld [vmem:[#allocation6 + $0x1760] sm:$0xff]
    %v5003 = vld [vmem:[#allocation6 + $0x1768] sm:$0xff]
    %v5004 = vld [vmem:[#allocation6 + $0x1770] sm:$0xff]
    %v5005 = vld [vmem:[#allocation6 + $0x1778] sm:$0xff]
    %v5006 = vld [vmem:[#allocation6 + $0x1780] sm:$0xff]
    %v5007 = vld [vmem:[#allocation6 + $0x1788] sm:$0xff]
    %v5008 = vld [vmem:[#allocation6 + $0x1790] sm:$0xff]
    %v5009 = vld [vmem:[#allocation6 + $0x1798] sm:$0xff]
    %v5010 = vld [vmem:[#allocation6 + $0x17a0] sm:$0xff]
    %v5011 = vld [vmem:[#allocation6 + $0x17a8] sm:$0xff]
    %v5012 = vld [vmem:[#allocation6 + $0x17b0] sm:$0xff]
    %v5013 = vld [vmem:[#allocation6 + $0x17b8] sm:$0xff]
    %v5014 = vld [vmem:[#allocation6 + $0x17c0] sm:$0xff]
    %v5015 = vld [vmem:[#allocation6 + $0x17c8] sm:$0xff]
    %v5016 = vld [vmem:[#allocation6 + $0x17d0] sm:$0xff]
    %v5017 = vld [vmem:[#allocation6 + $0x17d8] sm:$0xff]
    %v5018 = vld [vmem:[#allocation6 + $0x17e0] sm:$0xff]
    %v5019 = vld [vmem:[#allocation6 + $0x17e8] sm:$0xff]
    %v5020 = vld [vmem:[#allocation6 + $0x17f0] sm:$0xff]
    %v5021 = vld [vmem:[#allocation6 + $0x17f8] sm:$0xff]
    %v5022 = vld [vmem:[#allocation6 + $0x1800] sm:$0xff]
    %v5023 = vld [vmem:[#allocation6 + $0x1808] sm:$0xff]
    %v5024 = vld [vmem:[#allocation6 + $0x1810] sm:$0xff]
    %v5025 = vld [vmem:[#allocation6 + $0x1818] sm:$0xff]
    %v5026 = vld [vmem:[#allocation6 + $0x1820] sm:$0xff]
    %v5027 = vld [vmem:[#allocation6 + $0x1828] sm:$0xff]
    %v5028 = vld [vmem:[#allocation6 + $0x1830] sm:$0xff]
    %v5029 = vld [vmem:[#allocation6 + $0x1838] sm:$0xff]
    %v5030 = vld [vmem:[#allocation6 + $0x1840] sm:$0xff]
    %v5031 = vld [vmem:[#allocation6 + $0x1848] sm:$0xff]
    %v5032 = vld [vmem:[#allocation6 + $0x1850] sm:$0xff]
    %v5033 = vld [vmem:[#allocation6 + $0x1858] sm:$0xff]
    %v5034 = vld [vmem:[#allocation6 + $0x1860] sm:$0xff]
    %v5035 = vld [vmem:[#allocation6 + $0x1868] sm:$0xff]
    %v5036 = vld [vmem:[#allocation6 + $0x1870] sm:$0xff]
    %v5037 = vld [vmem:[#allocation6 + $0x1878] sm:$0xff]
    %v5038 = vld [vmem:[#allocation6 + $0x1880] sm:$0xff]
    %v5039 = vld [vmem:[#allocation6 + $0x1888] sm:$0xff]
    %v5040 = vld [vmem:[#allocation6 + $0x1890] sm:$0xff]
    %v5041 = vld [vmem:[#allocation6 + $0x1898] sm:$0xff]
    %v5042 = vld [vmem:[#allocation6 + $0x18a0] sm:$0xff]
    %v5043 = vld [vmem:[#allocation6 + $0x18a8] sm:$0xff]
    %v5044 = vld [vmem:[#allocation6 + $0x18b0] sm:$0xff]
    %v5045 = vld [vmem:[#allocation6 + $0x18b8] sm:$0xff]
    %v5046 = vld [vmem:[#allocation6 + $0x18c0] sm:$0xff]
    %v5047 = vld [vmem:[#allocation6 + $0x18c8] sm:$0xff]
    %v5048 = vld [vmem:[#allocation6 + $0x18d0] sm:$0xff]
    %v5049 = vld [vmem:[#allocation6 + $0x18d8] sm:$0xff]
    %v5050 = vld [vmem:[#allocation6 + $0x18e0] sm:$0xff]
    %v5051 = vld [vmem:[#allocation6 + $0x18e8] sm:$0xff]
    %v5052 = vld [vmem:[#allocation6 + $0x18f0] sm:$0xff]
    %v5053 = vld [vmem:[#allocation6 + $0x18f8] sm:$0xff]
    %v5054 = vld [vmem:[#allocation6 + $0x1900] sm:$0xff]
    %v5055 = vld [vmem:[#allocation6 + $0x1908] sm:$0xff]
    %v5056 = vld [vmem:[#allocation6 + $0x1910] sm:$0xff]
    %v5057 = vld [vmem:[#allocation6 + $0x1918] sm:$0xff]
    %v5058 = vld [vmem:[#allocation6 + $0x1920] sm:$0xff]
    %v5059 = vld [vmem:[#allocation6 + $0x1928] sm:$0xff]
    %v5060 = vld [vmem:[#allocation6 + $0x1930] sm:$0xff]
    %v5061 = vld [vmem:[#allocation6 + $0x1938] sm:$0xff]
    %v5062 = vld [vmem:[#allocation6 + $0x1940] sm:$0xff]
    %v5063 = vld [vmem:[#allocation6 + $0x1948] sm:$0xff]
    %v5064 = vld [vmem:[#allocation6 + $0x1950] sm:$0xff]
    %v5065 = vld [vmem:[#allocation6 + $0x1958] sm:$0xff]
    %v5066 = vld [vmem:[#allocation6 + $0x1960] sm:$0xff]
    %v5067 = vld [vmem:[#allocation6 + $0x1968] sm:$0xff]
    %v5068 = vld [vmem:[#allocation6 + $0x1970] sm:$0xff]
    %v5069 = vld [vmem:[#allocation6 + $0x1978] sm:$0xff]
    %v5070 = vld [vmem:[#allocation6 + $0x1980] sm:$0xff]
    %v5071 = vld [vmem:[#allocation6 + $0x1988] sm:$0xff]
    %v5072 = vld [vmem:[#allocation6 + $0x1990] sm:$0xff]
    %v5073 = vld [vmem:[#allocation6 + $0x1998] sm:$0xff]
    %v5074 = vld [vmem:[#allocation6 + $0x19a0] sm:$0xff]
    %v5075 = vld [vmem:[#allocation6 + $0x19a8] sm:$0xff]
    %v5076 = vld [vmem:[#allocation6 + $0x19b0] sm:$0xff]
    %v5077 = vld [vmem:[#allocation6 + $0x19b8] sm:$0xff]
    %v5078 = vld [vmem:[#allocation6 + $0x19c0] sm:$0xff]
    %v5079 = vld [vmem:[#allocation6 + $0x19c8] sm:$0xff]
    %v5080 = vld [vmem:[#allocation6 + $0x19d0] sm:$0xff]
    %v5081 = vld [vmem:[#allocation6 + $0x19d8] sm:$0xff]
    %v5082 = vld [vmem:[#allocation6 + $0x19e0] sm:$0xff]
    %v5083 = vld [vmem:[#allocation6 + $0x19e8] sm:$0xff]
    %v5084 = vld [vmem:[#allocation6 + $0x19f0] sm:$0xff]
    %v5085 = vld [vmem:[#allocation6 + $0x19f8] sm:$0xff]
    %v5086 = vld [vmem:[#allocation6 + $0x1a00] sm:$0xff]
    %v5087 = vld [vmem:[#allocation6 + $0x1a08] sm:$0xff]
    %v5088 = vld [vmem:[#allocation6 + $0x1a10] sm:$0xff]
    %v5089 = vld [vmem:[#allocation6 + $0x1a18] sm:$0xff]
    %v5090 = vld [vmem:[#allocation6 + $0x1a20] sm:$0xff]
    %v5091 = vld [vmem:[#allocation6 + $0x1a28] sm:$0xff]
    %v5092 = vld [vmem:[#allocation6 + $0x1a30] sm:$0xff]
    %v5093 = vld [vmem:[#allocation6 + $0x1a38] sm:$0xff]
    %v5094 = vld [vmem:[#allocation6 + $0x1a40] sm:$0xff]
    %v5095 = vld [vmem:[#allocation6 + $0x1a48] sm:$0xff]
    %v5096 = vld [vmem:[#allocation6 + $0x1a50] sm:$0xff]
    %v5097 = vld [vmem:[#allocation6 + $0x1a58] sm:$0xff]
    %v5098 = vld [vmem:[#allocation6 + $0x1a60] sm:$0xff]
    %v5099 = vld [vmem:[#allocation6 + $0x1a68] sm:$0xff]
    %v5100 = vld [vmem:[#allocation6 + $0x1a70] sm:$0xff]
    %v5101 = vld [vmem:[#allocation6 + $0x1a78] sm:$0xff]
    %v5102 = vld [vmem:[#allocation6 + $0x1a80] sm:$0xff]
    %v5103 = vld [vmem:[#allocation6 + $0x1a88] sm:$0xff]
    %v5104 = vld [vmem:[#allocation6 + $0x1a90] sm:$0xff]
    %v5105 = vld [vmem:[#allocation6 + $0x1a98] sm:$0xff]
    %v5106 = vld [vmem:[#allocation6 + $0x1aa0] sm:$0xff]
    %v5107 = vld [vmem:[#allocation6 + $0x1aa8] sm:$0xff]
    %v5108 = vld [vmem:[#allocation6 + $0x1ab0] sm:$0xff]
    %v5109 = vld [vmem:[#allocation6 + $0x1ab8] sm:$0xff]
    %v5110 = vld [vmem:[#allocation6 + $0x1ac0] sm:$0xff]
    %v5111 = vld [vmem:[#allocation6 + $0x1ac8] sm:$0xff]
    %v5112 = vld [vmem:[#allocation6 + $0x1ad0] sm:$0xff]
    %v5113 = vld [vmem:[#allocation6 + $0x1ad8] sm:$0xff]
    %v5114 = vld [vmem:[#allocation6 + $0x1ae0] sm:$0xff]
    %v5115 = vld [vmem:[#allocation6 + $0x1ae8] sm:$0xff]
    %v5116 = vld [vmem:[#allocation6 + $0x1af0] sm:$0xff]
    %v5117 = vld [vmem:[#allocation6 + $0x1af8] sm:$0xff]
    %v5118 = vld [vmem:[#allocation6 + $0x1b00] sm:$0xff]
    %v5119 = vld [vmem:[#allocation6 + $0x1b08] sm:$0xff]
    %v5120 = vld [vmem:[#allocation6 + $0x1b10] sm:$0xff]
    %v5121 = vld [vmem:[#allocation6 + $0x1b18] sm:$0xff]
    %v5122 = vld [vmem:[#allocation6 + $0x1b20] sm:$0xff]
    %v5123 = vld [vmem:[#allocation6 + $0x1b28] sm:$0xff]
    %v5124 = vld [vmem:[#allocation6 + $0x1b30] sm:$0xff]
    %v5125 = vld [vmem:[#allocation6 + $0x1b38] sm:$0xff]
    %v5126 = vld [vmem:[#allocation6 + $0x1b40] sm:$0xff]
    %v5127 = vld [vmem:[#allocation6 + $0x1b48] sm:$0xff]
    %v5128 = vld [vmem:[#allocation6 + $0x1b50] sm:$0xff]
    %v5129 = vld [vmem:[#allocation6 + $0x1b58] sm:$0xff]
    %v5130 = vld [vmem:[#allocation6 + $0x1b60] sm:$0xff]
    %v5131 = vld [vmem:[#allocation6 + $0x1b68] sm:$0xff]
    %v5132 = vld [vmem:[#allocation6 + $0x1b70] sm:$0xff]
    %v5133 = vld [vmem:[#allocation6 + $0x1b78] sm:$0xff]
    %v5134 = vld [vmem:[#allocation6 + $0x1b80] sm:$0xff]
    %v5135 = vld [vmem:[#allocation6 + $0x1b88] sm:$0xff]
    %v5136 = vld [vmem:[#allocation6 + $0x1b90] sm:$0xff]
    %v5137 = vld [vmem:[#allocation6 + $0x1b98] sm:$0xff]
    %v5138 = vld [vmem:[#allocation6 + $0x1ba0] sm:$0xff]
    %v5139 = vld [vmem:[#allocation6 + $0x1ba8] sm:$0xff]
    %v5140 = vld [vmem:[#allocation6 + $0x1bb0] sm:$0xff]
    %v5141 = vld [vmem:[#allocation6 + $0x1bb8] sm:$0xff]
    %v5142 = vld [vmem:[#allocation6 + $0x1bc0] sm:$0xff]
    %v5143 = vld [vmem:[#allocation6 + $0x1bc8] sm:$0xff]
    %v5144 = vld [vmem:[#allocation6 + $0x1bd0] sm:$0xff]
    %v5145 = vld [vmem:[#allocation6 + $0x1bd8] sm:$0xff]
    %v5146 = vld [vmem:[#allocation6 + $0x1be0] sm:$0xff]
    %v5147 = vld [vmem:[#allocation6 + $0x1be8] sm:$0xff]
    %v5148 = vld [vmem:[#allocation6 + $0x1bf0] sm:$0xff]
    %v5149 = vld [vmem:[#allocation6 + $0x1bf8] sm:$0xff]
    %v5150 = vld [vmem:[#allocation6 + $0x1c00] sm:$0xff]
    %v5151 = vld [vmem:[#allocation6 + $0x1c08] sm:$0xff]
    %v5152 = vld [vmem:[#allocation6 + $0x1c10] sm:$0xff]
    %v5153 = vld [vmem:[#allocation6 + $0x1c18] sm:$0xff]
    %v5154 = vld [vmem:[#allocation6 + $0x1c20] sm:$0xff]
    %v5155 = vld [vmem:[#allocation6 + $0x1c28] sm:$0xff]
    %v5156 = vld [vmem:[#allocation6 + $0x1c30] sm:$0xff]
    %v5157 = vld [vmem:[#allocation6 + $0x1c38] sm:$0xff]
    %v5158 = vld [vmem:[#allocation6 + $0x1c40] sm:$0xff]
    %v5159 = vld [vmem:[#allocation6 + $0x1c48] sm:$0xff]
    %v5160 = vld [vmem:[#allocation6 + $0x1c50] sm:$0xff]
    %v5161 = vld [vmem:[#allocation6 + $0x1c58] sm:$0xff]
    %v5162 = vld [vmem:[#allocation6 + $0x1c60] sm:$0xff]
    %v5163 = vld [vmem:[#allocation6 + $0x1c68] sm:$0xff]
    %v5164 = vld [vmem:[#allocation6 + $0x1c70] sm:$0xff]
    %v5165 = vld [vmem:[#allocation6 + $0x1c78] sm:$0xff]
    %v5166 = vld [vmem:[#allocation6 + $0x1c80] sm:$0xff]
    %v5167 = vld [vmem:[#allocation6 + $0x1c88] sm:$0xff]
    %v5168 = vld [vmem:[#allocation6 + $0x1c90] sm:$0xff]
    %v5169 = vld [vmem:[#allocation6 + $0x1c98] sm:$0xff]
    %v5170 = vld [vmem:[#allocation6 + $0x1ca0] sm:$0xff]
    %v5171 = vld [vmem:[#allocation6 + $0x1ca8] sm:$0xff]
    %v5172 = vld [vmem:[#allocation6 + $0x1cb0] sm:$0xff]
    %v5173 = vld [vmem:[#allocation6 + $0x1cb8] sm:$0xff]
    %v5174 = vld [vmem:[#allocation6 + $0x1cc0] sm:$0xff]
    %v5175 = vld [vmem:[#allocation6 + $0x1cc8] sm:$0xff]
    %v5176 = vld [vmem:[#allocation6 + $0x1cd0] sm:$0xff]
    %v5177 = vld [vmem:[#allocation6 + $0x1cd8] sm:$0xff]
    %v5178 = vld [vmem:[#allocation6 + $0x1ce0] sm:$0xff]
    %v5179 = vld [vmem:[#allocation6 + $0x1ce8] sm:$0xff]
    %v5180 = vld [vmem:[#allocation6 + $0x1cf0] sm:$0xff]
    %v5181 = vld [vmem:[#allocation6 + $0x1cf8] sm:$0xff]
    %v5182 = vld [vmem:[#allocation6 + $0x1d00] sm:$0xff]
    %v5183 = vld [vmem:[#allocation6 + $0x1d08] sm:$0xff]
    %v5184 = vld [vmem:[#allocation6 + $0x1d10] sm:$0xff]
    %v5185 = vld [vmem:[#allocation6 + $0x1d18] sm:$0xff]
    %v5186 = vld [vmem:[#allocation6 + $0x1d20] sm:$0xff]
    %v5187 = vld [vmem:[#allocation6 + $0x1d28] sm:$0xff]
    %v5188 = vld [vmem:[#allocation6 + $0x1d30] sm:$0xff]
    %v5189 = vld [vmem:[#allocation6 + $0x1d38] sm:$0xff]
    %v5190 = vld [vmem:[#allocation6 + $0x1d40] sm:$0xff]
    %v5191 = vld [vmem:[#allocation6 + $0x1d48] sm:$0xff]
    %v5192 = vld [vmem:[#allocation6 + $0x1d50] sm:$0xff]
    %v5193 = vld [vmem:[#allocation6 + $0x1d58] sm:$0xff]
    %v5194 = vld [vmem:[#allocation6 + $0x1d60] sm:$0xff]
    %v5195 = vld [vmem:[#allocation6 + $0x1d68] sm:$0xff]
    %v5196 = vld [vmem:[#allocation6 + $0x1d70] sm:$0xff]
    %v5197 = vld [vmem:[#allocation6 + $0x1d78] sm:$0xff]
    %v5198 = vld [vmem:[#allocation6 + $0x1d80] sm:$0xff]
    %v5199 = vld [vmem:[#allocation6 + $0x1d88] sm:$0xff]
    %v5200 = vld [vmem:[#allocation6 + $0x1d90] sm:$0xff]
    %v5201 = vld [vmem:[#allocation6 + $0x1d98] sm:$0xff]
    %v5202 = vld [vmem:[#allocation6 + $0x1da0] sm:$0xff]
    %v5203 = vld [vmem:[#allocation6 + $0x1da8] sm:$0xff]
    %v5204 = vld [vmem:[#allocation6 + $0x1db0] sm:$0xff]
    %v5205 = vld [vmem:[#allocation6 + $0x1db8] sm:$0xff]
    %v5206 = vld [vmem:[#allocation6 + $0x1dc0] sm:$0xff]
    %v5207 = vld [vmem:[#allocation6 + $0x1dc8] sm:$0xff]
    %v5208 = vld [vmem:[#allocation6 + $0x1dd0] sm:$0xff]
    %v5209 = vld [vmem:[#allocation6 + $0x1dd8] sm:$0xff]
    %v5210 = vld [vmem:[#allocation6 + $0x1de0] sm:$0xff]
    %v5211 = vld [vmem:[#allocation6 + $0x1de8] sm:$0xff]
    %v5212 = vld [vmem:[#allocation6 + $0x1df0] sm:$0xff]
    %v5213 = vld [vmem:[#allocation6 + $0x1df8] sm:$0xff]
    %v5214 = vld [vmem:[#allocation6 + $0x1e00] sm:$0xff]
    %v5215 = vld [vmem:[#allocation6 + $0x1e08] sm:$0xff]
    %v5216 = vld [vmem:[#allocation6 + $0x1e10] sm:$0xff]
    %v5217 = vld [vmem:[#allocation6 + $0x1e18] sm:$0xff]
    %v5218 = vld [vmem:[#allocation6 + $0x1e20] sm:$0xff]
    %v5219 = vld [vmem:[#allocation6 + $0x1e28] sm:$0xff]
    %v5220 = vld [vmem:[#allocation6 + $0x1e30] sm:$0xff]
    %v5221 = vld [vmem:[#allocation6 + $0x1e38] sm:$0xff]
    %v5222 = vld [vmem:[#allocation6 + $0x1e40] sm:$0xff]
    %v5223 = vld [vmem:[#allocation6 + $0x1e48] sm:$0xff]
    %v5224 = vld [vmem:[#allocation6 + $0x1e50] sm:$0xff]
    %v5225 = vld [vmem:[#allocation6 + $0x1e58] sm:$0xff]
    %v5226 = vld [vmem:[#allocation6 + $0x1e60] sm:$0xff]
    %v5227 = vld [vmem:[#allocation6 + $0x1e68] sm:$0xff]
    %v5228 = vld [vmem:[#allocation6 + $0x1e70] sm:$0xff]
    %v5229 = vld [vmem:[#allocation6 + $0x1e78] sm:$0xff]
    %v5230 = vld [vmem:[#allocation6 + $0x1e80] sm:$0xff]
    %v5231 = vld [vmem:[#allocation6 + $0x1e88] sm:$0xff]
    %v5232 = vld [vmem:[#allocation6 + $0x1e90] sm:$0xff]
    %v5233 = vld [vmem:[#allocation6 + $0x1e98] sm:$0xff]
    %v5234 = vld [vmem:[#allocation6 + $0x1ea0] sm:$0xff]
    %v5235 = vld [vmem:[#allocation6 + $0x1ea8] sm:$0xff]
    %v5236 = vld [vmem:[#allocation6 + $0x1eb0] sm:$0xff]
    %v5237 = vld [vmem:[#allocation6 + $0x1eb8] sm:$0xff]
    %v5238 = vld [vmem:[#allocation6 + $0x1ec0] sm:$0xff]
    %v5239 = vld [vmem:[#allocation6 + $0x1ec8] sm:$0xff]
    %v5240 = vld [vmem:[#allocation6 + $0x1ed0] sm:$0xff]
    %v5241 = vld [vmem:[#allocation6 + $0x1ed8] sm:$0xff]
    %v5242 = vld [vmem:[#allocation6 + $0x1ee0] sm:$0xff]
    %v5243 = vld [vmem:[#allocation6 + $0x1ee8] sm:$0xff]
    %v5244 = vld [vmem:[#allocation6 + $0x1ef0] sm:$0xff]
    %v5245 = vld [vmem:[#allocation6 + $0x1ef8] sm:$0xff]
    %v5246 = vld [vmem:[#allocation6 + $0x1f00] sm:$0xff]
    %v5247 = vld [vmem:[#allocation6 + $0x1f08] sm:$0xff]
    %v5248 = vld [vmem:[#allocation6 + $0x1f10] sm:$0xff]
    %v5249 = vld [vmem:[#allocation6 + $0x1f18] sm:$0xff]
    %v5250 = vld [vmem:[#allocation6 + $0x1f20] sm:$0xff]
    %v5251 = vld [vmem:[#allocation6 + $0x1f28] sm:$0xff]
    %v5252 = vld [vmem:[#allocation6 + $0x1f30] sm:$0xff]
    %v5253 = vld [vmem:[#allocation6 + $0x1f38] sm:$0xff]
    %v5254 = vld [vmem:[#allocation6 + $0x1f40] sm:$0xff]
    %v5255 = vld [vmem:[#allocation6 + $0x1f48] sm:$0xff]
    %v5256 = vld [vmem:[#allocation6 + $0x1f50] sm:$0xff]
    %v5257 = vld [vmem:[#allocation6 + $0x1f58] sm:$0xff]
    %v5258 = vld [vmem:[#allocation6 + $0x1f60] sm:$0xff]
    %v5259 = vld [vmem:[#allocation6 + $0x1f68] sm:$0xff]
    %v5260 = vld [vmem:[#allocation6 + $0x1f70] sm:$0xff]
    %v5261 = vld [vmem:[#allocation6 + $0x1f78] sm:$0xff]
    %v5262 = vld [vmem:[#allocation6 + $0x1f80] sm:$0xff]
    %v5263 = vld [vmem:[#allocation6 + $0x1f88] sm:$0xff]
    %v5264 = vld [vmem:[#allocation6 + $0x1f90] sm:$0xff]
    %v5265 = vld [vmem:[#allocation6 + $0x1f98] sm:$0xff]
    %v5266 = vld [vmem:[#allocation6 + $0x1fa0] sm:$0xff]
    %v5267 = vld [vmem:[#allocation6 + $0x1fa8] sm:$0xff]
    %v5268 = vld [vmem:[#allocation6 + $0x1fb0] sm:$0xff]
    %v5269 = vld [vmem:[#allocation6 + $0x1fb8] sm:$0xff]
    %v5270 = vld [vmem:[#allocation6 + $0x1fc0] sm:$0xff]
    %v5271 = vld [vmem:[#allocation6 + $0x1fc8] sm:$0xff]
    %v5272 = vld [vmem:[#allocation6 + $0x1fd0] sm:$0xff]
    %v5273 = vld [vmem:[#allocation6 + $0x1fd8] sm:$0xff]
    %v5274 = vld [vmem:[#allocation6 + $0x1fe0] sm:$0xff]
    %v5275 = vld [vmem:[#allocation6 + $0x1fe8] sm:$0xff]
    %v5276 = vld [vmem:[#allocation6 + $0x1ff0] sm:$0xff]
    %v5277 = vld [vmem:[#allocation6 + $0x1ff8] sm:$0xff]
    %v5278 = vld [vmem:[#allocation7] sm:$0xff]
    %v5279 = vld [vmem:[#allocation7 + $0x8] sm:$0xff]
    %v5282 = vperm.slane %v5278, 0
    %v5283 = vperm.slane %v5278, 1
    %v5284 = vperm.slane %v5278, 2
    %v5285 = vperm.slane %v5278, 3
    %v5286 = vperm.slane %v5278, 4
    %v5287 = vperm.slane %v5278, 5
    %v5288 = vperm.slane %v5278, 6
    %v5289 = vperm.slane %v5278, 7
    %v5290 = vperm.slane %v5279, 0
    %v5291 = vperm.slane %v5279, 1
    %v5292 = vperm.slane %v5279, 2
    %v5293 = vperm.slane %v5279, 3
    %v5294 = vperm.slane %v5279, 4
    %v5295 = vperm.slane %v5279, 5
    %v5296 = vperm.slane %v5279, 6
    %v5297 = vperm.slane %v5279, 7
    %v6338 = vunpack.c.l.b16 %v4254
    %v6339 = vunpack.c.h.b16 %v4254
    %v6340 = vunpack.c.l.b16 %v4255
    %v6341 = vunpack.c.h.b16 %v4255
    %v6342 = vunpack.c.l.b16 %v4256
    %v6343 = vunpack.c.h.b16 %v4256
    %v6344 = vunpack.c.l.b16 %v4257
    %v6345 = vunpack.c.h.b16 %v4257
    %v6346 = vunpack.c.l.b16 %v4258
    %v6347 = vunpack.c.h.b16 %v4258
    %v6348 = vunpack.c.l.b16 %v4259
    %v6349 = vunpack.c.h.b16 %v4259
    %v6350 = vunpack.c.l.b16 %v4260
    %v6351 = vunpack.c.h.b16 %v4260
    %v6352 = vunpack.c.l.b16 %v4261
    %v6353 = vunpack.c.h.b16 %v4261
    %v6354 = vunpack.c.l.b16 %v4262
    %v6355 = vunpack.c.h.b16 %v4262
    %v6356 = vunpack.c.l.b16 %v4263
    %v6357 = vunpack.c.h.b16 %v4263
    %v6358 = vunpack.c.l.b16 %v4264
    %v6359 = vunpack.c.h.b16 %v4264
    %v6360 = vunpack.c.l.b16 %v4265
    %v6361 = vunpack.c.h.b16 %v4265
    %v6362 = vunpack.c.l.b16 %v4266
    %v6363 = vunpack.c.h.b16 %v4266
    %v6364 = vunpack.c.l.b16 %v4267
    %v6365 = vunpack.c.h.b16 %v4267
    %v6366 = vunpack.c.l.b16 %v4268
    %v6367 = vunpack.c.h.b16 %v4268
    %v6368 = vunpack.c.l.b16 %v4269
    %v6369 = vunpack.c.h.b16 %v4269
    %v6370 = vunpack.c.l.b16 %v4270
    %v6371 = vunpack.c.h.b16 %v4270
    %v6372 = vunpack.c.l.b16 %v4271
    %v6373 = vunpack.c.h.b16 %v4271
    %v6374 = vunpack.c.l.b16 %v4272
    %v6375 = vunpack.c.h.b16 %v4272
    %v6376 = vunpack.c.l.b16 %v4273
    %v6377 = vunpack.c.h.b16 %v4273
    %v6378 = vunpack.c.l.b16 %v4274
    %v6379 = vunpack.c.h.b16 %v4274
    %v6380 = vunpack.c.l.b16 %v4275
    %v6381 = vunpack.c.h.b16 %v4275
    %v6382 = vunpack.c.l.b16 %v4276
    %v6383 = vunpack.c.h.b16 %v4276
    %v6384 = vunpack.c.l.b16 %v4277
    %v6385 = vunpack.c.h.b16 %v4277
    %v6386 = vunpack.c.l.b16 %v4278
    %v6387 = vunpack.c.h.b16 %v4278
    %v6388 = vunpack.c.l.b16 %v4279
    %v6389 = vunpack.c.h.b16 %v4279
    %v6390 = vunpack.c.l.b16 %v4280
    %v6391 = vunpack.c.h.b16 %v4280
    %v6392 = vunpack.c.l.b16 %v4281
    %v6393 = vunpack.c.h.b16 %v4281
    %v6394 = vunpack.c.l.b16 %v4282
    %v6395 = vunpack.c.h.b16 %v4282
    %v6396 = vunpack.c.l.b16 %v4283
    %v6397 = vunpack.c.h.b16 %v4283
    %v6398 = vunpack.c.l.b16 %v4284
    %v6399 = vunpack.c.h.b16 %v4284
    %v6400 = vunpack.c.l.b16 %v4285
    %v6401 = vunpack.c.h.b16 %v4285
    %v6402 = vunpack.c.l.b16 %v4286
    %v6403 = vunpack.c.h.b16 %v4286
    %v6404 = vunpack.c.l.b16 %v4287
    %v6405 = vunpack.c.h.b16 %v4287
    %v6406 = vunpack.c.l.b16 %v4288
    %v6407 = vunpack.c.h.b16 %v4288
    %v6408 = vunpack.c.l.b16 %v4289
    %v6409 = vunpack.c.h.b16 %v4289
    %v6410 = vunpack.c.l.b16 %v4290
    %v6411 = vunpack.c.h.b16 %v4290
    %v6412 = vunpack.c.l.b16 %v4291
    %v6413 = vunpack.c.h.b16 %v4291
    %v6414 = vunpack.c.l.b16 %v4292
    %v6415 = vunpack.c.h.b16 %v4292
    %v6416 = vunpack.c.l.b16 %v4293
    %v6417 = vunpack.c.h.b16 %v4293
    %v6418 = vunpack.c.l.b16 %v4294
    %v6419 = vunpack.c.h.b16 %v4294
    %v6420 = vunpack.c.l.b16 %v4295
    %v6421 = vunpack.c.h.b16 %v4295
    %v6422 = vunpack.c.l.b16 %v4296
    %v6423 = vunpack.c.h.b16 %v4296
    %v6424 = vunpack.c.l.b16 %v4297
    %v6425 = vunpack.c.h.b16 %v4297
    %v6426 = vunpack.c.l.b16 %v4298
    %v6427 = vunpack.c.h.b16 %v4298
    %v6428 = vunpack.c.l.b16 %v4299
    %v6429 = vunpack.c.h.b16 %v4299
    %v6430 = vunpack.c.l.b16 %v4300
    %v6431 = vunpack.c.h.b16 %v4300
    %v6432 = vunpack.c.l.b16 %v4301
    %v6433 = vunpack.c.h.b16 %v4301
    %v6434 = vunpack.c.l.b16 %v4302
    %v6435 = vunpack.c.h.b16 %v4302
    %v6436 = vunpack.c.l.b16 %v4303
    %v6437 = vunpack.c.h.b16 %v4303
    %v6438 = vunpack.c.l.b16 %v4304
    %v6439 = vunpack.c.h.b16 %v4304
    %v6440 = vunpack.c.l.b16 %v4305
    %v6441 = vunpack.c.h.b16 %v4305
    %v6442 = vunpack.c.l.b16 %v4306
    %v6443 = vunpack.c.h.b16 %v4306
    %v6444 = vunpack.c.l.b16 %v4307
    %v6445 = vunpack.c.h.b16 %v4307
    %v6446 = vunpack.c.l.b16 %v4308
    %v6447 = vunpack.c.h.b16 %v4308
    %v6448 = vunpack.c.l.b16 %v4309
    %v6449 = vunpack.c.h.b16 %v4309
    %v6450 = vunpack.c.l.b16 %v4310
    %v6451 = vunpack.c.h.b16 %v4310
    %v6452 = vunpack.c.l.b16 %v4311
    %v6453 = vunpack.c.h.b16 %v4311
    %v6454 = vunpack.c.l.b16 %v4312
    %v6455 = vunpack.c.h.b16 %v4312
    %v6456 = vunpack.c.l.b16 %v4313
    %v6457 = vunpack.c.h.b16 %v4313
    %v6458 = vunpack.c.l.b16 %v4314
    %v6459 = vunpack.c.h.b16 %v4314
    %v6460 = vunpack.c.l.b16 %v4315
    %v6461 = vunpack.c.h.b16 %v4315
    %v6462 = vunpack.c.l.b16 %v4316
    %v6463 = vunpack.c.h.b16 %v4316
    %v6464 = vunpack.c.l.b16 %v4317
    %v6465 = vunpack.c.h.b16 %v4317
    %v6466 = vunpack.c.l.b16 %v4318
    %v6467 = vunpack.c.h.b16 %v4318
    %v6468 = vunpack.c.l.b16 %v4319
    %v6469 = vunpack.c.h.b16 %v4319
    %v6470 = vunpack.c.l.b16 %v4320
    %v6471 = vunpack.c.h.b16 %v4320
    %v6472 = vunpack.c.l.b16 %v4321
    %v6473 = vunpack.c.h.b16 %v4321
    %v6474 = vunpack.c.l.b16 %v4322
    %v6475 = vunpack.c.h.b16 %v4322
    %v6476 = vunpack.c.l.b16 %v4323
    %v6477 = vunpack.c.h.b16 %v4323
    %v6478 = vunpack.c.l.b16 %v4324
    %v6479 = vunpack.c.h.b16 %v4324
    %v6480 = vunpack.c.l.b16 %v4325
    %v6481 = vunpack.c.h.b16 %v4325
    %v6482 = vunpack.c.l.b16 %v4326
    %v6483 = vunpack.c.h.b16 %v4326
    %v6484 = vunpack.c.l.b16 %v4327
    %v6485 = vunpack.c.h.b16 %v4327
    %v6486 = vunpack.c.l.b16 %v4328
    %v6487 = vunpack.c.h.b16 %v4328
    %v6488 = vunpack.c.l.b16 %v4329
    %v6489 = vunpack.c.h.b16 %v4329
    %v6490 = vunpack.c.l.b16 %v4330
    %v6491 = vunpack.c.h.b16 %v4330
    %v6492 = vunpack.c.l.b16 %v4331
    %v6493 = vunpack.c.h.b16 %v4331
    %v6494 = vunpack.c.l.b16 %v4332
    %v6495 = vunpack.c.h.b16 %v4332
    %v6496 = vunpack.c.l.b16 %v4333
    %v6497 = vunpack.c.h.b16 %v4333
    %v6498 = vunpack.c.l.b16 %v4334
    %v6499 = vunpack.c.h.b16 %v4334
    %v6500 = vunpack.c.l.b16 %v4335
    %v6501 = vunpack.c.h.b16 %v4335
    %v6502 = vunpack.c.l.b16 %v4336
    %v6503 = vunpack.c.h.b16 %v4336
    %v6504 = vunpack.c.l.b16 %v4337
    %v6505 = vunpack.c.h.b16 %v4337
    %v6506 = vunpack.c.l.b16 %v4338
    %v6507 = vunpack.c.h.b16 %v4338
    %v6508 = vunpack.c.l.b16 %v4339
    %v6509 = vunpack.c.h.b16 %v4339
    %v6510 = vunpack.c.l.b16 %v4340
    %v6511 = vunpack.c.h.b16 %v4340
    %v6512 = vunpack.c.l.b16 %v4341
    %v6513 = vunpack.c.h.b16 %v4341
    %v6514 = vunpack.c.l.b16 %v4342
    %v6515 = vunpack.c.h.b16 %v4342
    %v6516 = vunpack.c.l.b16 %v4343
    %v6517 = vunpack.c.h.b16 %v4343
    %v6518 = vunpack.c.l.b16 %v4344
    %v6519 = vunpack.c.h.b16 %v4344
    %v6520 = vunpack.c.l.b16 %v4345
    %v6521 = vunpack.c.h.b16 %v4345
    %v6522 = vunpack.c.l.b16 %v4346
    %v6523 = vunpack.c.h.b16 %v4346
    %v6524 = vunpack.c.l.b16 %v4347
    %v6525 = vunpack.c.h.b16 %v4347
    %v6526 = vunpack.c.l.b16 %v4348
    %v6527 = vunpack.c.h.b16 %v4348
    %v6528 = vunpack.c.l.b16 %v4349
    %v6529 = vunpack.c.h.b16 %v4349
    %v6530 = vunpack.c.l.b16 %v4350
    %v6531 = vunpack.c.h.b16 %v4350
    %v6532 = vunpack.c.l.b16 %v4351
    %v6533 = vunpack.c.h.b16 %v4351
    %v6534 = vunpack.c.l.b16 %v4352
    %v6535 = vunpack.c.h.b16 %v4352
    %v6536 = vunpack.c.l.b16 %v4353
    %v6537 = vunpack.c.h.b16 %v4353
    %v6538 = vunpack.c.l.b16 %v4354
    %v6539 = vunpack.c.h.b16 %v4354
    %v6540 = vunpack.c.l.b16 %v4355
    %v6541 = vunpack.c.h.b16 %v4355
    %v6542 = vunpack.c.l.b16 %v4356
    %v6543 = vunpack.c.h.b16 %v4356
    %v6544 = vunpack.c.l.b16 %v4357
    %v6545 = vunpack.c.h.b16 %v4357
    %v6546 = vunpack.c.l.b16 %v4358
    %v6547 = vunpack.c.h.b16 %v4358
    %v6548 = vunpack.c.l.b16 %v4359
    %v6549 = vunpack.c.h.b16 %v4359
    %v6550 = vunpack.c.l.b16 %v4360
    %v6551 = vunpack.c.h.b16 %v4360
    %v6552 = vunpack.c.l.b16 %v4361
    %v6553 = vunpack.c.h.b16 %v4361
    %v6554 = vunpack.c.l.b16 %v4362
    %v6555 = vunpack.c.h.b16 %v4362
    %v6556 = vunpack.c.l.b16 %v4363
    %v6557 = vunpack.c.h.b16 %v4363
    %v6558 = vunpack.c.l.b16 %v4364
    %v6559 = vunpack.c.h.b16 %v4364
    %v6560 = vunpack.c.l.b16 %v4365
    %v6561 = vunpack.c.h.b16 %v4365
    %v6562 = vunpack.c.l.b16 %v4366
    %v6563 = vunpack.c.h.b16 %v4366
    %v6564 = vunpack.c.l.b16 %v4367
    %v6565 = vunpack.c.h.b16 %v4367
    %v6566 = vunpack.c.l.b16 %v4368
    %v6567 = vunpack.c.h.b16 %v4368
    %v6568 = vunpack.c.l.b16 %v4369
    %v6569 = vunpack.c.h.b16 %v4369
    %v6570 = vunpack.c.l.b16 %v4370
    %v6571 = vunpack.c.h.b16 %v4370
    %v6572 = vunpack.c.l.b16 %v4371
    %v6573 = vunpack.c.h.b16 %v4371
    %v6574 = vunpack.c.l.b16 %v4372
    %v6575 = vunpack.c.h.b16 %v4372
    %v6576 = vunpack.c.l.b16 %v4373
    %v6577 = vunpack.c.h.b16 %v4373
    %v6578 = vunpack.c.l.b16 %v4374
    %v6579 = vunpack.c.h.b16 %v4374
    %v6580 = vunpack.c.l.b16 %v4375
    %v6581 = vunpack.c.h.b16 %v4375
    %v6582 = vunpack.c.l.b16 %v4376
    %v6583 = vunpack.c.h.b16 %v4376
    %v6584 = vunpack.c.l.b16 %v4377
    %v6585 = vunpack.c.h.b16 %v4377
    %v6586 = vunpack.c.l.b16 %v4378
    %v6587 = vunpack.c.h.b16 %v4378
    %v6588 = vunpack.c.l.b16 %v4379
    %v6589 = vunpack.c.h.b16 %v4379
    %v6590 = vunpack.c.l.b16 %v4380
    %v6591 = vunpack.c.h.b16 %v4380
    %v6592 = vunpack.c.l.b16 %v4381
    %v6593 = vunpack.c.h.b16 %v4381
    %v6594 = vunpack.c.l.b16 %v4382
    %v6595 = vunpack.c.h.b16 %v4382
    %v6596 = vunpack.c.l.b16 %v4383
    %v6597 = vunpack.c.h.b16 %v4383
    %v6598 = vunpack.c.l.b16 %v4384
    %v6599 = vunpack.c.h.b16 %v4384
    %v6600 = vunpack.c.l.b16 %v4385
    %v6601 = vunpack.c.h.b16 %v4385
    %v6602 = vunpack.c.l.b16 %v4386
    %v6603 = vunpack.c.h.b16 %v4386
    %v6604 = vunpack.c.l.b16 %v4387
    %v6605 = vunpack.c.h.b16 %v4387
    %v6606 = vunpack.c.l.b16 %v4388
    %v6607 = vunpack.c.h.b16 %v4388
    %v6608 = vunpack.c.l.b16 %v4389
    %v6609 = vunpack.c.h.b16 %v4389
    %v6610 = vunpack.c.l.b16 %v4390
    %v6611 = vunpack.c.h.b16 %v4390
    %v6612 = vunpack.c.l.b16 %v4391
    %v6613 = vunpack.c.h.b16 %v4391
    %v6614 = vunpack.c.l.b16 %v4392
    %v6615 = vunpack.c.h.b16 %v4392
    %v6616 = vunpack.c.l.b16 %v4393
    %v6617 = vunpack.c.h.b16 %v4393
    %v6618 = vunpack.c.l.b16 %v4394
    %v6619 = vunpack.c.h.b16 %v4394
    %v6620 = vunpack.c.l.b16 %v4395
    %v6621 = vunpack.c.h.b16 %v4395
    %v6622 = vunpack.c.l.b16 %v4396
    %v6623 = vunpack.c.h.b16 %v4396
    %v6624 = vunpack.c.l.b16 %v4397
    %v6625 = vunpack.c.h.b16 %v4397
    %v6626 = vunpack.c.l.b16 %v4398
    %v6627 = vunpack.c.h.b16 %v4398
    %v6628 = vunpack.c.l.b16 %v4399
    %v6629 = vunpack.c.h.b16 %v4399
    %v6630 = vunpack.c.l.b16 %v4400
    %v6631 = vunpack.c.h.b16 %v4400
    %v6632 = vunpack.c.l.b16 %v4401
    %v6633 = vunpack.c.h.b16 %v4401
    %v6634 = vunpack.c.l.b16 %v4402
    %v6635 = vunpack.c.h.b16 %v4402
    %v6636 = vunpack.c.l.b16 %v4403
    %v6637 = vunpack.c.h.b16 %v4403
    %v6638 = vunpack.c.l.b16 %v4404
    %v6639 = vunpack.c.h.b16 %v4404
    %v6640 = vunpack.c.l.b16 %v4405
    %v6641 = vunpack.c.h.b16 %v4405
    %v6642 = vunpack.c.l.b16 %v4406
    %v6643 = vunpack.c.h.b16 %v4406
    %v6644 = vunpack.c.l.b16 %v4407
    %v6645 = vunpack.c.h.b16 %v4407
    %v6646 = vunpack.c.l.b16 %v4408
    %v6647 = vunpack.c.h.b16 %v4408
    %v6648 = vunpack.c.l.b16 %v4409
    %v6649 = vunpack.c.h.b16 %v4409
    %v6650 = vunpack.c.l.b16 %v4410
    %v6651 = vunpack.c.h.b16 %v4410
    %v6652 = vunpack.c.l.b16 %v4411
    %v6653 = vunpack.c.h.b16 %v4411
    %v6654 = vunpack.c.l.b16 %v4412
    %v6655 = vunpack.c.h.b16 %v4412
    %v6656 = vunpack.c.l.b16 %v4413
    %v6657 = vunpack.c.h.b16 %v4413
    %v6658 = vunpack.c.l.b16 %v4414
    %v6659 = vunpack.c.h.b16 %v4414
    %v6660 = vunpack.c.l.b16 %v4415
    %v6661 = vunpack.c.h.b16 %v4415
    %v6662 = vunpack.c.l.b16 %v4416
    %v6663 = vunpack.c.h.b16 %v4416
    %v6664 = vunpack.c.l.b16 %v4417
    %v6665 = vunpack.c.h.b16 %v4417
    %v6666 = vunpack.c.l.b16 %v4418
    %v6667 = vunpack.c.h.b16 %v4418
    %v6668 = vunpack.c.l.b16 %v4419
    %v6669 = vunpack.c.h.b16 %v4419
    %v6670 = vunpack.c.l.b16 %v4420
    %v6671 = vunpack.c.h.b16 %v4420
    %v6672 = vunpack.c.l.b16 %v4421
    %v6673 = vunpack.c.h.b16 %v4421
    %v6674 = vunpack.c.l.b16 %v4422
    %v6675 = vunpack.c.h.b16 %v4422
    %v6676 = vunpack.c.l.b16 %v4423
    %v6677 = vunpack.c.h.b16 %v4423
    %v6678 = vunpack.c.l.b16 %v4424
    %v6679 = vunpack.c.h.b16 %v4424
    %v6680 = vunpack.c.l.b16 %v4425
    %v6681 = vunpack.c.h.b16 %v4425
    %v6682 = vunpack.c.l.b16 %v4426
    %v6683 = vunpack.c.h.b16 %v4426
    %v6684 = vunpack.c.l.b16 %v4427
    %v6685 = vunpack.c.h.b16 %v4427
    %v6686 = vunpack.c.l.b16 %v4428
    %v6687 = vunpack.c.h.b16 %v4428
    %v6688 = vunpack.c.l.b16 %v4429
    %v6689 = vunpack.c.h.b16 %v4429
    %v6690 = vunpack.c.l.b16 %v4430
    %v6691 = vunpack.c.h.b16 %v4430
    %v6692 = vunpack.c.l.b16 %v4431
    %v6693 = vunpack.c.h.b16 %v4431
    %v6694 = vunpack.c.l.b16 %v4432
    %v6695 = vunpack.c.h.b16 %v4432
    %v6696 = vunpack.c.l.b16 %v4433
    %v6697 = vunpack.c.h.b16 %v4433
    %v6698 = vunpack.c.l.b16 %v4434
    %v6699 = vunpack.c.h.b16 %v4434
    %v6700 = vunpack.c.l.b16 %v4435
    %v6701 = vunpack.c.h.b16 %v4435
    %v6702 = vunpack.c.l.b16 %v4436
    %v6703 = vunpack.c.h.b16 %v4436
    %v6704 = vunpack.c.l.b16 %v4437
    %v6705 = vunpack.c.h.b16 %v4437
    %v6706 = vunpack.c.l.b16 %v4438
    %v6707 = vunpack.c.h.b16 %v4438
    %v6708 = vunpack.c.l.b16 %v4439
    %v6709 = vunpack.c.h.b16 %v4439
    %v6710 = vunpack.c.l.b16 %v4440
    %v6711 = vunpack.c.h.b16 %v4440
    %v6712 = vunpack.c.l.b16 %v4441
    %v6713 = vunpack.c.h.b16 %v4441
    %v6714 = vunpack.c.l.b16 %v4442
    %v6715 = vunpack.c.h.b16 %v4442
    %v6716 = vunpack.c.l.b16 %v4443
    %v6717 = vunpack.c.h.b16 %v4443
    %v6718 = vunpack.c.l.b16 %v4444
    %v6719 = vunpack.c.h.b16 %v4444
    %v6720 = vunpack.c.l.b16 %v4445
    %v6721 = vunpack.c.h.b16 %v4445
    %v6722 = vunpack.c.l.b16 %v4446
    %v6723 = vunpack.c.h.b16 %v4446
    %v6724 = vunpack.c.l.b16 %v4447
    %v6725 = vunpack.c.h.b16 %v4447
    %v6726 = vunpack.c.l.b16 %v4448
    %v6727 = vunpack.c.h.b16 %v4448
    %v6728 = vunpack.c.l.b16 %v4449
    %v6729 = vunpack.c.h.b16 %v4449
    %v6730 = vunpack.c.l.b16 %v4450
    %v6731 = vunpack.c.h.b16 %v4450
    %v6732 = vunpack.c.l.b16 %v4451
    %v6733 = vunpack.c.h.b16 %v4451
    %v6734 = vunpack.c.l.b16 %v4452
    %v6735 = vunpack.c.h.b16 %v4452
    %v6736 = vunpack.c.l.b16 %v4453
    %v6737 = vunpack.c.h.b16 %v4453
    %v6738 = vunpack.c.l.b16 %v4454
    %v6739 = vunpack.c.h.b16 %v4454
    %v6740 = vunpack.c.l.b16 %v4455
    %v6741 = vunpack.c.h.b16 %v4455
    %v6742 = vunpack.c.l.b16 %v4456
    %v6743 = vunpack.c.h.b16 %v4456
    %v6744 = vunpack.c.l.b16 %v4457
    %v6745 = vunpack.c.h.b16 %v4457
    %v6746 = vunpack.c.l.b16 %v4458
    %v6747 = vunpack.c.h.b16 %v4458
    %v6748 = vunpack.c.l.b16 %v4459
    %v6749 = vunpack.c.h.b16 %v4459
    %v6750 = vunpack.c.l.b16 %v4460
    %v6751 = vunpack.c.h.b16 %v4460
    %v6752 = vunpack.c.l.b16 %v4461
    %v6753 = vunpack.c.h.b16 %v4461
    %v6754 = vunpack.c.l.b16 %v4462
    %v6755 = vunpack.c.h.b16 %v4462
    %v6756 = vunpack.c.l.b16 %v4463
    %v6757 = vunpack.c.h.b16 %v4463
    %v6758 = vunpack.c.l.b16 %v4464
    %v6759 = vunpack.c.h.b16 %v4464
    %v6760 = vunpack.c.l.b16 %v4465
    %v6761 = vunpack.c.h.b16 %v4465
    %v6762 = vunpack.c.l.b16 %v4466
    %v6763 = vunpack.c.h.b16 %v4466
    %v6764 = vunpack.c.l.b16 %v4467
    %v6765 = vunpack.c.h.b16 %v4467
    %v6766 = vunpack.c.l.b16 %v4468
    %v6767 = vunpack.c.h.b16 %v4468
    %v6768 = vunpack.c.l.b16 %v4469
    %v6769 = vunpack.c.h.b16 %v4469
    %v6770 = vunpack.c.l.b16 %v4470
    %v6771 = vunpack.c.h.b16 %v4470
    %v6772 = vunpack.c.l.b16 %v4471
    %v6773 = vunpack.c.h.b16 %v4471
    %v6774 = vunpack.c.l.b16 %v4472
    %v6775 = vunpack.c.h.b16 %v4472
    %v6776 = vunpack.c.l.b16 %v4473
    %v6777 = vunpack.c.h.b16 %v4473
    %v6778 = vunpack.c.l.b16 %v4474
    %v6779 = vunpack.c.h.b16 %v4474
    %v6780 = vunpack.c.l.b16 %v4475
    %v6781 = vunpack.c.h.b16 %v4475
    %v6782 = vunpack.c.l.b16 %v4476
    %v6783 = vunpack.c.h.b16 %v4476
    %v6784 = vunpack.c.l.b16 %v4477
    %v6785 = vunpack.c.h.b16 %v4477
    %v6786 = vunpack.c.l.b16 %v4478
    %v6787 = vunpack.c.h.b16 %v4478
    %v6788 = vunpack.c.l.b16 %v4479
    %v6789 = vunpack.c.h.b16 %v4479
    %v6790 = vunpack.c.l.b16 %v4480
    %v6791 = vunpack.c.h.b16 %v4480
    %v6792 = vunpack.c.l.b16 %v4481
    %v6793 = vunpack.c.h.b16 %v4481
    %v6794 = vunpack.c.l.b16 %v4482
    %v6795 = vunpack.c.h.b16 %v4482
    %v6796 = vunpack.c.l.b16 %v4483
    %v6797 = vunpack.c.h.b16 %v4483
    %v6798 = vunpack.c.l.b16 %v4484
    %v6799 = vunpack.c.h.b16 %v4484
    %v6800 = vunpack.c.l.b16 %v4485
    %v6801 = vunpack.c.h.b16 %v4485
    %v6802 = vunpack.c.l.b16 %v4486
    %v6803 = vunpack.c.h.b16 %v4486
    %v6804 = vunpack.c.l.b16 %v4487
    %v6805 = vunpack.c.h.b16 %v4487
    %v6806 = vunpack.c.l.b16 %v4488
    %v6807 = vunpack.c.h.b16 %v4488
    %v6808 = vunpack.c.l.b16 %v4489
    %v6809 = vunpack.c.h.b16 %v4489
    %v6810 = vunpack.c.l.b16 %v4490
    %v6811 = vunpack.c.h.b16 %v4490
    %v6812 = vunpack.c.l.b16 %v4491
    %v6813 = vunpack.c.h.b16 %v4491
    %v6814 = vunpack.c.l.b16 %v4492
    %v6815 = vunpack.c.h.b16 %v4492
    %v6816 = vunpack.c.l.b16 %v4493
    %v6817 = vunpack.c.h.b16 %v4493
    %v6818 = vunpack.c.l.b16 %v4494
    %v6819 = vunpack.c.h.b16 %v4494
    %v6820 = vunpack.c.l.b16 %v4495
    %v6821 = vunpack.c.h.b16 %v4495
    %v6822 = vunpack.c.l.b16 %v4496
    %v6823 = vunpack.c.h.b16 %v4496
    %v6824 = vunpack.c.l.b16 %v4497
    %v6825 = vunpack.c.h.b16 %v4497
    %v6826 = vunpack.c.l.b16 %v4498
    %v6827 = vunpack.c.h.b16 %v4498
    %v6828 = vunpack.c.l.b16 %v4499
    %v6829 = vunpack.c.h.b16 %v4499
    %v6830 = vunpack.c.l.b16 %v4500
    %v6831 = vunpack.c.h.b16 %v4500
    %v6832 = vunpack.c.l.b16 %v4501
    %v6833 = vunpack.c.h.b16 %v4501
    %v6834 = vunpack.c.l.b16 %v4502
    %v6835 = vunpack.c.h.b16 %v4502
    %v6836 = vunpack.c.l.b16 %v4503
    %v6837 = vunpack.c.h.b16 %v4503
    %v6838 = vunpack.c.l.b16 %v4504
    %v6839 = vunpack.c.h.b16 %v4504
    %v6840 = vunpack.c.l.b16 %v4505
    %v6841 = vunpack.c.h.b16 %v4505
    %v6842 = vunpack.c.l.b16 %v4506
    %v6843 = vunpack.c.h.b16 %v4506
    %v6844 = vunpack.c.l.b16 %v4507
    %v6845 = vunpack.c.h.b16 %v4507
    %v6846 = vunpack.c.l.b16 %v4508
    %v6847 = vunpack.c.h.b16 %v4508
    %v6848 = vunpack.c.l.b16 %v4509
    %v6849 = vunpack.c.h.b16 %v4509
    %v6850 = vunpack.c.l.b16 %v4510
    %v6851 = vunpack.c.h.b16 %v4510
    %v6852 = vunpack.c.l.b16 %v4511
    %v6853 = vunpack.c.h.b16 %v4511
    %v6854 = vunpack.c.l.b16 %v4512
    %v6855 = vunpack.c.h.b16 %v4512
    %v6856 = vunpack.c.l.b16 %v4513
    %v6857 = vunpack.c.h.b16 %v4513
    %v6858 = vunpack.c.l.b16 %v4514
    %v6859 = vunpack.c.h.b16 %v4514
    %v6860 = vunpack.c.l.b16 %v4515
    %v6861 = vunpack.c.h.b16 %v4515
    %v6862 = vunpack.c.l.b16 %v4516
    %v6863 = vunpack.c.h.b16 %v4516
    %v6864 = vunpack.c.l.b16 %v4517
    %v6865 = vunpack.c.h.b16 %v4517
    %v6866 = vunpack.c.l.b16 %v4518
    %v6867 = vunpack.c.h.b16 %v4518
    %v6868 = vunpack.c.l.b16 %v4519
    %v6869 = vunpack.c.h.b16 %v4519
    %v6870 = vunpack.c.l.b16 %v4520
    %v6871 = vunpack.c.h.b16 %v4520
    %v6872 = vunpack.c.l.b16 %v4521
    %v6873 = vunpack.c.h.b16 %v4521
    %v6874 = vunpack.c.l.b16 %v4522
    %v6875 = vunpack.c.h.b16 %v4522
    %v6876 = vunpack.c.l.b16 %v4523
    %v6877 = vunpack.c.h.b16 %v4523
    %v6878 = vunpack.c.l.b16 %v4524
    %v6879 = vunpack.c.h.b16 %v4524
    %v6880 = vunpack.c.l.b16 %v4525
    %v6881 = vunpack.c.h.b16 %v4525
    %v6882 = vunpack.c.l.b16 %v4526
    %v6883 = vunpack.c.h.b16 %v4526
    %v6884 = vunpack.c.l.b16 %v4527
    %v6885 = vunpack.c.h.b16 %v4527
    %v6886 = vunpack.c.l.b16 %v4528
    %v6887 = vunpack.c.h.b16 %v4528
    %v6888 = vunpack.c.l.b16 %v4529
    %v6889 = vunpack.c.h.b16 %v4529
    %v6890 = vunpack.c.l.b16 %v4530
    %v6891 = vunpack.c.h.b16 %v4530
    %v6892 = vunpack.c.l.b16 %v4531
    %v6893 = vunpack.c.h.b16 %v4531
    %v6894 = vunpack.c.l.b16 %v4532
    %v6895 = vunpack.c.h.b16 %v4532
    %v6896 = vunpack.c.l.b16 %v4533
    %v6897 = vunpack.c.h.b16 %v4533
    %v6898 = vunpack.c.l.b16 %v4534
    %v6899 = vunpack.c.h.b16 %v4534
    %v6900 = vunpack.c.l.b16 %v4535
    %v6901 = vunpack.c.h.b16 %v4535
    %v6902 = vunpack.c.l.b16 %v4536
    %v6903 = vunpack.c.h.b16 %v4536
    %v6904 = vunpack.c.l.b16 %v4537
    %v6905 = vunpack.c.h.b16 %v4537
    %v6906 = vunpack.c.l.b16 %v4538
    %v6907 = vunpack.c.h.b16 %v4538
    %v6908 = vunpack.c.l.b16 %v4539
    %v6909 = vunpack.c.h.b16 %v4539
    %v6910 = vunpack.c.l.b16 %v4540
    %v6911 = vunpack.c.h.b16 %v4540
    %v6912 = vunpack.c.l.b16 %v4541
    %v6913 = vunpack.c.h.b16 %v4541
    %v6914 = vunpack.c.l.b16 %v4542
    %v6915 = vunpack.c.h.b16 %v4542
    %v6916 = vunpack.c.l.b16 %v4543
    %v6917 = vunpack.c.h.b16 %v4543
    %v6918 = vunpack.c.l.b16 %v4544
    %v6919 = vunpack.c.h.b16 %v4544
    %v6920 = vunpack.c.l.b16 %v4545
    %v6921 = vunpack.c.h.b16 %v4545
    %v6922 = vunpack.c.l.b16 %v4546
    %v6923 = vunpack.c.h.b16 %v4546
    %v6924 = vunpack.c.l.b16 %v4547
    %v6925 = vunpack.c.h.b16 %v4547
    %v6926 = vunpack.c.l.b16 %v4548
    %v6927 = vunpack.c.h.b16 %v4548
    %v6928 = vunpack.c.l.b16 %v4549
    %v6929 = vunpack.c.h.b16 %v4549
    %v6930 = vunpack.c.l.b16 %v4550
    %v6931 = vunpack.c.h.b16 %v4550
    %v6932 = vunpack.c.l.b16 %v4551
    %v6933 = vunpack.c.h.b16 %v4551
    %v6934 = vunpack.c.l.b16 %v4552
    %v6935 = vunpack.c.h.b16 %v4552
    %v6936 = vunpack.c.l.b16 %v4553
    %v6937 = vunpack.c.h.b16 %v4553
    %v6938 = vunpack.c.l.b16 %v4554
    %v6939 = vunpack.c.h.b16 %v4554
    %v6940 = vunpack.c.l.b16 %v4555
    %v6941 = vunpack.c.h.b16 %v4555
    %v6942 = vunpack.c.l.b16 %v4556
    %v6943 = vunpack.c.h.b16 %v4556
    %v6944 = vunpack.c.l.b16 %v4557
    %v6945 = vunpack.c.h.b16 %v4557
    %v6946 = vunpack.c.l.b16 %v4558
    %v6947 = vunpack.c.h.b16 %v4558
    %v6948 = vunpack.c.l.b16 %v4559
    %v6949 = vunpack.c.h.b16 %v4559
    %v6950 = vunpack.c.l.b16 %v4560
    %v6951 = vunpack.c.h.b16 %v4560
    %v6952 = vunpack.c.l.b16 %v4561
    %v6953 = vunpack.c.h.b16 %v4561
    %v6954 = vunpack.c.l.b16 %v4562
    %v6955 = vunpack.c.h.b16 %v4562
    %v6956 = vunpack.c.l.b16 %v4563
    %v6957 = vunpack.c.h.b16 %v4563
    %v6958 = vunpack.c.l.b16 %v4564
    %v6959 = vunpack.c.h.b16 %v4564
    %v6960 = vunpack.c.l.b16 %v4565
    %v6961 = vunpack.c.h.b16 %v4565
    %v6962 = vunpack.c.l.b16 %v4566
    %v6963 = vunpack.c.h.b16 %v4566
    %v6964 = vunpack.c.l.b16 %v4567
    %v6965 = vunpack.c.h.b16 %v4567
    %v6966 = vunpack.c.l.b16 %v4568
    %v6967 = vunpack.c.h.b16 %v4568
    %v6968 = vunpack.c.l.b16 %v4569
    %v6969 = vunpack.c.h.b16 %v4569
    %v6970 = vunpack.c.l.b16 %v4570
    %v6971 = vunpack.c.h.b16 %v4570
    %v6972 = vunpack.c.l.b16 %v4571
    %v6973 = vunpack.c.h.b16 %v4571
    %v6974 = vunpack.c.l.b16 %v4572
    %v6975 = vunpack.c.h.b16 %v4572
    %v6976 = vunpack.c.l.b16 %v4573
    %v6977 = vunpack.c.h.b16 %v4573
    %v6978 = vunpack.c.l.b16 %v4574
    %v6979 = vunpack.c.h.b16 %v4574
    %v6980 = vunpack.c.l.b16 %v4575
    %v6981 = vunpack.c.h.b16 %v4575
    %v6982 = vunpack.c.l.b16 %v4576
    %v6983 = vunpack.c.h.b16 %v4576
    %v6984 = vunpack.c.l.b16 %v4577
    %v6985 = vunpack.c.h.b16 %v4577
    %v6986 = vunpack.c.l.b16 %v4578
    %v6987 = vunpack.c.h.b16 %v4578
    %v6988 = vunpack.c.l.b16 %v4579
    %v6989 = vunpack.c.h.b16 %v4579
    %v6990 = vunpack.c.l.b16 %v4580
    %v6991 = vunpack.c.h.b16 %v4580
    %v6992 = vunpack.c.l.b16 %v4581
    %v6993 = vunpack.c.h.b16 %v4581
    %v6994 = vunpack.c.l.b16 %v4582
    %v6995 = vunpack.c.h.b16 %v4582
    %v6996 = vunpack.c.l.b16 %v4583
    %v6997 = vunpack.c.h.b16 %v4583
    %v6998 = vunpack.c.l.b16 %v4584
    %v6999 = vunpack.c.h.b16 %v4584
    %v7000 = vunpack.c.l.b16 %v4585
    %v7001 = vunpack.c.h.b16 %v4585
    %v7002 = vunpack.c.l.b16 %v4586
    %v7003 = vunpack.c.h.b16 %v4586
    %v7004 = vunpack.c.l.b16 %v4587
    %v7005 = vunpack.c.h.b16 %v4587
    %v7006 = vunpack.c.l.b16 %v4588
    %v7007 = vunpack.c.h.b16 %v4588
    %v7008 = vunpack.c.l.b16 %v4589
    %v7009 = vunpack.c.h.b16 %v4589
    %v7010 = vunpack.c.l.b16 %v4590
    %v7011 = vunpack.c.h.b16 %v4590
    %v7012 = vunpack.c.l.b16 %v4591
    %v7013 = vunpack.c.h.b16 %v4591
    %v7014 = vunpack.c.l.b16 %v4592
    %v7015 = vunpack.c.h.b16 %v4592
    %v7016 = vunpack.c.l.b16 %v4593
    %v7017 = vunpack.c.h.b16 %v4593
    %v7018 = vunpack.c.l.b16 %v4594
    %v7019 = vunpack.c.h.b16 %v4594
    %v7020 = vunpack.c.l.b16 %v4595
    %v7021 = vunpack.c.h.b16 %v4595
    %v7022 = vunpack.c.l.b16 %v4596
    %v7023 = vunpack.c.h.b16 %v4596
    %v7024 = vunpack.c.l.b16 %v4597
    %v7025 = vunpack.c.h.b16 %v4597
    %v7026 = vunpack.c.l.b16 %v4598
    %v7027 = vunpack.c.h.b16 %v4598
    %v7028 = vunpack.c.l.b16 %v4599
    %v7029 = vunpack.c.h.b16 %v4599
    %v7030 = vunpack.c.l.b16 %v4600
    %v7031 = vunpack.c.h.b16 %v4600
    %v7032 = vunpack.c.l.b16 %v4601
    %v7033 = vunpack.c.h.b16 %v4601
    %v7034 = vunpack.c.l.b16 %v4602
    %v7035 = vunpack.c.h.b16 %v4602
    %v7036 = vunpack.c.l.b16 %v4603
    %v7037 = vunpack.c.h.b16 %v4603
    %v7038 = vunpack.c.l.b16 %v4604
    %v7039 = vunpack.c.h.b16 %v4604
    %v7040 = vunpack.c.l.b16 %v4605
    %v7041 = vunpack.c.h.b16 %v4605
    %v7042 = vunpack.c.l.b16 %v4606
    %v7043 = vunpack.c.h.b16 %v4606
    %v7044 = vunpack.c.l.b16 %v4607
    %v7045 = vunpack.c.h.b16 %v4607
    %v7046 = vunpack.c.l.b16 %v4608
    %v7047 = vunpack.c.h.b16 %v4608
    %v7048 = vunpack.c.l.b16 %v4609
    %v7049 = vunpack.c.h.b16 %v4609
    %v7050 = vunpack.c.l.b16 %v4610
    %v7051 = vunpack.c.h.b16 %v4610
    %v7052 = vunpack.c.l.b16 %v4611
    %v7053 = vunpack.c.h.b16 %v4611
    %v7054 = vunpack.c.l.b16 %v4612
    %v7055 = vunpack.c.h.b16 %v4612
    %v7056 = vunpack.c.l.b16 %v4613
    %v7057 = vunpack.c.h.b16 %v4613
    %v7058 = vunpack.c.l.b16 %v4614
    %v7059 = vunpack.c.h.b16 %v4614
    %v7060 = vunpack.c.l.b16 %v4615
    %v7061 = vunpack.c.h.b16 %v4615
    %v7062 = vunpack.c.l.b16 %v4616
    %v7063 = vunpack.c.h.b16 %v4616
    %v7064 = vunpack.c.l.b16 %v4617
    %v7065 = vunpack.c.h.b16 %v4617
    %v7066 = vunpack.c.l.b16 %v4618
    %v7067 = vunpack.c.h.b16 %v4618
    %v7068 = vunpack.c.l.b16 %v4619
    %v7069 = vunpack.c.h.b16 %v4619
    %v7070 = vunpack.c.l.b16 %v4620
    %v7071 = vunpack.c.h.b16 %v4620
    %v7072 = vunpack.c.l.b16 %v4621
    %v7073 = vunpack.c.h.b16 %v4621
    %v7074 = vunpack.c.l.b16 %v4622
    %v7075 = vunpack.c.h.b16 %v4622
    %v7076 = vunpack.c.l.b16 %v4623
    %v7077 = vunpack.c.h.b16 %v4623
    %v7078 = vunpack.c.l.b16 %v4624
    %v7079 = vunpack.c.h.b16 %v4624
    %v7080 = vunpack.c.l.b16 %v4625
    %v7081 = vunpack.c.h.b16 %v4625
    %v7082 = vunpack.c.l.b16 %v4626
    %v7083 = vunpack.c.h.b16 %v4626
    %v7084 = vunpack.c.l.b16 %v4627
    %v7085 = vunpack.c.h.b16 %v4627
    %v7086 = vunpack.c.l.b16 %v4628
    %v7087 = vunpack.c.h.b16 %v4628
    %v7088 = vunpack.c.l.b16 %v4629
    %v7089 = vunpack.c.h.b16 %v4629
    %v7090 = vunpack.c.l.b16 %v4630
    %v7091 = vunpack.c.h.b16 %v4630
    %v7092 = vunpack.c.l.b16 %v4631
    %v7093 = vunpack.c.h.b16 %v4631
    %v7094 = vunpack.c.l.b16 %v4632
    %v7095 = vunpack.c.h.b16 %v4632
    %v7096 = vunpack.c.l.b16 %v4633
    %v7097 = vunpack.c.h.b16 %v4633
    %v7098 = vunpack.c.l.b16 %v4634
    %v7099 = vunpack.c.h.b16 %v4634
    %v7100 = vunpack.c.l.b16 %v4635
    %v7101 = vunpack.c.h.b16 %v4635
    %v7102 = vunpack.c.l.b16 %v4636
    %v7103 = vunpack.c.h.b16 %v4636
    %v7104 = vunpack.c.l.b16 %v4637
    %v7105 = vunpack.c.h.b16 %v4637
    %v7106 = vunpack.c.l.b16 %v4638
    %v7107 = vunpack.c.h.b16 %v4638
    %v7108 = vunpack.c.l.b16 %v4639
    %v7109 = vunpack.c.h.b16 %v4639
    %v7110 = vunpack.c.l.b16 %v4640
    %v7111 = vunpack.c.h.b16 %v4640
    %v7112 = vunpack.c.l.b16 %v4641
    %v7113 = vunpack.c.h.b16 %v4641
    %v7114 = vunpack.c.l.b16 %v4642
    %v7115 = vunpack.c.h.b16 %v4642
    %v7116 = vunpack.c.l.b16 %v4643
    %v7117 = vunpack.c.h.b16 %v4643
    %v7118 = vunpack.c.l.b16 %v4644
    %v7119 = vunpack.c.h.b16 %v4644
    %v7120 = vunpack.c.l.b16 %v4645
    %v7121 = vunpack.c.h.b16 %v4645
    %v7122 = vunpack.c.l.b16 %v4646
    %v7123 = vunpack.c.h.b16 %v4646
    %v7124 = vunpack.c.l.b16 %v4647
    %v7125 = vunpack.c.h.b16 %v4647
    %v7126 = vunpack.c.l.b16 %v4648
    %v7127 = vunpack.c.h.b16 %v4648
    %v7128 = vunpack.c.l.b16 %v4649
    %v7129 = vunpack.c.h.b16 %v4649
    %v7130 = vunpack.c.l.b16 %v4650
    %v7131 = vunpack.c.h.b16 %v4650
    %v7132 = vunpack.c.l.b16 %v4651
    %v7133 = vunpack.c.h.b16 %v4651
    %v7134 = vunpack.c.l.b16 %v4652
    %v7135 = vunpack.c.h.b16 %v4652
    %v7136 = vunpack.c.l.b16 %v4653
    %v7137 = vunpack.c.h.b16 %v4653
    %v7138 = vunpack.c.l.b16 %v4654
    %v7139 = vunpack.c.h.b16 %v4654
    %v7140 = vunpack.c.l.b16 %v4655
    %v7141 = vunpack.c.h.b16 %v4655
    %v7142 = vunpack.c.l.b16 %v4656
    %v7143 = vunpack.c.h.b16 %v4656
    %v7144 = vunpack.c.l.b16 %v4657
    %v7145 = vunpack.c.h.b16 %v4657
    %v7146 = vunpack.c.l.b16 %v4658
    %v7147 = vunpack.c.h.b16 %v4658
    %v7148 = vunpack.c.l.b16 %v4659
    %v7149 = vunpack.c.h.b16 %v4659
    %v7150 = vunpack.c.l.b16 %v4660
    %v7151 = vunpack.c.h.b16 %v4660
    %v7152 = vunpack.c.l.b16 %v4661
    %v7153 = vunpack.c.h.b16 %v4661
    %v7154 = vunpack.c.l.b16 %v4662
    %v7155 = vunpack.c.h.b16 %v4662
    %v7156 = vunpack.c.l.b16 %v4663
    %v7157 = vunpack.c.h.b16 %v4663
    %v7158 = vunpack.c.l.b16 %v4664
    %v7159 = vunpack.c.h.b16 %v4664
    %v7160 = vunpack.c.l.b16 %v4665
    %v7161 = vunpack.c.h.b16 %v4665
    %v7162 = vunpack.c.l.b16 %v4666
    %v7163 = vunpack.c.h.b16 %v4666
    %v7164 = vunpack.c.l.b16 %v4667
    %v7165 = vunpack.c.h.b16 %v4667
    %v7166 = vunpack.c.l.b16 %v4668
    %v7167 = vunpack.c.h.b16 %v4668
    %v7168 = vunpack.c.l.b16 %v4669
    %v7169 = vunpack.c.h.b16 %v4669
    %v7170 = vunpack.c.l.b16 %v4670
    %v7171 = vunpack.c.h.b16 %v4670
    %v7172 = vunpack.c.l.b16 %v4671
    %v7173 = vunpack.c.h.b16 %v4671
    %v7174 = vunpack.c.l.b16 %v4672
    %v7175 = vunpack.c.h.b16 %v4672
    %v7176 = vunpack.c.l.b16 %v4673
    %v7177 = vunpack.c.h.b16 %v4673
    %v7178 = vunpack.c.l.b16 %v4674
    %v7179 = vunpack.c.h.b16 %v4674
    %v7180 = vunpack.c.l.b16 %v4675
    %v7181 = vunpack.c.h.b16 %v4675
    %v7182 = vunpack.c.l.b16 %v4676
    %v7183 = vunpack.c.h.b16 %v4676
    %v7184 = vunpack.c.l.b16 %v4677
    %v7185 = vunpack.c.h.b16 %v4677
    %v7186 = vunpack.c.l.b16 %v4678
    %v7187 = vunpack.c.h.b16 %v4678
    %v7188 = vunpack.c.l.b16 %v4679
    %v7189 = vunpack.c.h.b16 %v4679
    %v7190 = vunpack.c.l.b16 %v4680
    %v7191 = vunpack.c.h.b16 %v4680
    %v7192 = vunpack.c.l.b16 %v4681
    %v7193 = vunpack.c.h.b16 %v4681
    %v7194 = vunpack.c.l.b16 %v4682
    %v7195 = vunpack.c.h.b16 %v4682
    %v7196 = vunpack.c.l.b16 %v4683
    %v7197 = vunpack.c.h.b16 %v4683
    %v7198 = vunpack.c.l.b16 %v4684
    %v7199 = vunpack.c.h.b16 %v4684
    %v7200 = vunpack.c.l.b16 %v4685
    %v7201 = vunpack.c.h.b16 %v4685
    %v7202 = vunpack.c.l.b16 %v4686
    %v7203 = vunpack.c.h.b16 %v4686
    %v7204 = vunpack.c.l.b16 %v4687
    %v7205 = vunpack.c.h.b16 %v4687
    %v7206 = vunpack.c.l.b16 %v4688
    %v7207 = vunpack.c.h.b16 %v4688
    %v7208 = vunpack.c.l.b16 %v4689
    %v7209 = vunpack.c.h.b16 %v4689
    %v7210 = vunpack.c.l.b16 %v4690
    %v7211 = vunpack.c.h.b16 %v4690
    %v7212 = vunpack.c.l.b16 %v4691
    %v7213 = vunpack.c.h.b16 %v4691
    %v7214 = vunpack.c.l.b16 %v4692
    %v7215 = vunpack.c.h.b16 %v4692
    %v7216 = vunpack.c.l.b16 %v4693
    %v7217 = vunpack.c.h.b16 %v4693
    %v7218 = vunpack.c.l.b16 %v4694
    %v7219 = vunpack.c.h.b16 %v4694
    %v7220 = vunpack.c.l.b16 %v4695
    %v7221 = vunpack.c.h.b16 %v4695
    %v7222 = vunpack.c.l.b16 %v4696
    %v7223 = vunpack.c.h.b16 %v4696
    %v7224 = vunpack.c.l.b16 %v4697
    %v7225 = vunpack.c.h.b16 %v4697
    %v7226 = vunpack.c.l.b16 %v4698
    %v7227 = vunpack.c.h.b16 %v4698
    %v7228 = vunpack.c.l.b16 %v4699
    %v7229 = vunpack.c.h.b16 %v4699
    %v7230 = vunpack.c.l.b16 %v4700
    %v7231 = vunpack.c.h.b16 %v4700
    %v7232 = vunpack.c.l.b16 %v4701
    %v7233 = vunpack.c.h.b16 %v4701
    %v7234 = vunpack.c.l.b16 %v4702
    %v7235 = vunpack.c.h.b16 %v4702
    %v7236 = vunpack.c.l.b16 %v4703
    %v7237 = vunpack.c.h.b16 %v4703
    %v7238 = vunpack.c.l.b16 %v4704
    %v7239 = vunpack.c.h.b16 %v4704
    %v7240 = vunpack.c.l.b16 %v4705
    %v7241 = vunpack.c.h.b16 %v4705
    %v7242 = vunpack.c.l.b16 %v4706
    %v7243 = vunpack.c.h.b16 %v4706
    %v7244 = vunpack.c.l.b16 %v4707
    %v7245 = vunpack.c.h.b16 %v4707
    %v7246 = vunpack.c.l.b16 %v4708
    %v7247 = vunpack.c.h.b16 %v4708
    %v7248 = vunpack.c.l.b16 %v4709
    %v7249 = vunpack.c.h.b16 %v4709
    %v7250 = vunpack.c.l.b16 %v4710
    %v7251 = vunpack.c.h.b16 %v4710
    %v7252 = vunpack.c.l.b16 %v4711
    %v7253 = vunpack.c.h.b16 %v4711
    %v7254 = vunpack.c.l.b16 %v4712
    %v7255 = vunpack.c.h.b16 %v4712
    %v7256 = vunpack.c.l.b16 %v4713
    %v7257 = vunpack.c.h.b16 %v4713
    %v7258 = vunpack.c.l.b16 %v4714
    %v7259 = vunpack.c.h.b16 %v4714
    %v7260 = vunpack.c.l.b16 %v4715
    %v7261 = vunpack.c.h.b16 %v4715
    %v7262 = vunpack.c.l.b16 %v4716
    %v7263 = vunpack.c.h.b16 %v4716
    %v7264 = vunpack.c.l.b16 %v4717
    %v7265 = vunpack.c.h.b16 %v4717
    %v7266 = vunpack.c.l.b16 %v4718
    %v7267 = vunpack.c.h.b16 %v4718
    %v7268 = vunpack.c.l.b16 %v4719
    %v7269 = vunpack.c.h.b16 %v4719
    %v7270 = vunpack.c.l.b16 %v4720
    %v7271 = vunpack.c.h.b16 %v4720
    %v7272 = vunpack.c.l.b16 %v4721
    %v7273 = vunpack.c.h.b16 %v4721
    %v7274 = vunpack.c.l.b16 %v4722
    %v7275 = vunpack.c.h.b16 %v4722
    %v7276 = vunpack.c.l.b16 %v4723
    %v7277 = vunpack.c.h.b16 %v4723
    %v7278 = vunpack.c.l.b16 %v4724
    %v7279 = vunpack.c.h.b16 %v4724
    %v7280 = vunpack.c.l.b16 %v4725
    %v7281 = vunpack.c.h.b16 %v4725
    %v7282 = vunpack.c.l.b16 %v4726
    %v7283 = vunpack.c.h.b16 %v4726
    %v7284 = vunpack.c.l.b16 %v4727
    %v7285 = vunpack.c.h.b16 %v4727
    %v7286 = vunpack.c.l.b16 %v4728
    %v7287 = vunpack.c.h.b16 %v4728
    %v7288 = vunpack.c.l.b16 %v4729
    %v7289 = vunpack.c.h.b16 %v4729
    %v7290 = vunpack.c.l.b16 %v4730
    %v7291 = vunpack.c.h.b16 %v4730
    %v7292 = vunpack.c.l.b16 %v4731
    %v7293 = vunpack.c.h.b16 %v4731
    %v7294 = vunpack.c.l.b16 %v4732
    %v7295 = vunpack.c.h.b16 %v4732
    %v7296 = vunpack.c.l.b16 %v4733
    %v7297 = vunpack.c.h.b16 %v4733
    %v7298 = vunpack.c.l.b16 %v4734
    %v7299 = vunpack.c.h.b16 %v4734
    %v7300 = vunpack.c.l.b16 %v4735
    %v7301 = vunpack.c.h.b16 %v4735
    %v7302 = vunpack.c.l.b16 %v4736
    %v7303 = vunpack.c.h.b16 %v4736
    %v7304 = vunpack.c.l.b16 %v4737
    %v7305 = vunpack.c.h.b16 %v4737
    %v7306 = vunpack.c.l.b16 %v4738
    %v7307 = vunpack.c.h.b16 %v4738
    %v7308 = vunpack.c.l.b16 %v4739
    %v7309 = vunpack.c.h.b16 %v4739
    %v7310 = vunpack.c.l.b16 %v4740
    %v7311 = vunpack.c.h.b16 %v4740
    %v7312 = vunpack.c.l.b16 %v4741
    %v7313 = vunpack.c.h.b16 %v4741
    %v7314 = vunpack.c.l.b16 %v4742
    %v7315 = vunpack.c.h.b16 %v4742
    %v7316 = vunpack.c.l.b16 %v4743
    %v7317 = vunpack.c.h.b16 %v4743
    %v7318 = vunpack.c.l.b16 %v4744
    %v7319 = vunpack.c.h.b16 %v4744
    %v7320 = vunpack.c.l.b16 %v4745
    %v7321 = vunpack.c.h.b16 %v4745
    %v7322 = vunpack.c.l.b16 %v4746
    %v7323 = vunpack.c.h.b16 %v4746
    %v7324 = vunpack.c.l.b16 %v4747
    %v7325 = vunpack.c.h.b16 %v4747
    %v7326 = vunpack.c.l.b16 %v4748
    %v7327 = vunpack.c.h.b16 %v4748
    %v7328 = vunpack.c.l.b16 %v4749
    %v7329 = vunpack.c.h.b16 %v4749
    %v7330 = vunpack.c.l.b16 %v4750
    %v7331 = vunpack.c.h.b16 %v4750
    %v7332 = vunpack.c.l.b16 %v4751
    %v7333 = vunpack.c.h.b16 %v4751
    %v7334 = vunpack.c.l.b16 %v4752
    %v7335 = vunpack.c.h.b16 %v4752
    %v7336 = vunpack.c.l.b16 %v4753
    %v7337 = vunpack.c.h.b16 %v4753
    %v7338 = vunpack.c.l.b16 %v4754
    %v7339 = vunpack.c.h.b16 %v4754
    %v7340 = vunpack.c.l.b16 %v4755
    %v7341 = vunpack.c.h.b16 %v4755
    %v7342 = vunpack.c.l.b16 %v4756
    %v7343 = vunpack.c.h.b16 %v4756
    %v7344 = vunpack.c.l.b16 %v4757
    %v7345 = vunpack.c.h.b16 %v4757
    %v7346 = vunpack.c.l.b16 %v4758
    %v7347 = vunpack.c.h.b16 %v4758
    %v7348 = vunpack.c.l.b16 %v4759
    %v7349 = vunpack.c.h.b16 %v4759
    %v7350 = vunpack.c.l.b16 %v4760
    %v7351 = vunpack.c.h.b16 %v4760
    %v7352 = vunpack.c.l.b16 %v4761
    %v7353 = vunpack.c.h.b16 %v4761
    %v7354 = vunpack.c.l.b16 %v4762
    %v7355 = vunpack.c.h.b16 %v4762
    %v7356 = vunpack.c.l.b16 %v4763
    %v7357 = vunpack.c.h.b16 %v4763
    %v7358 = vunpack.c.l.b16 %v4764
    %v7359 = vunpack.c.h.b16 %v4764
    %v7360 = vunpack.c.l.b16 %v4765
    %v7361 = vunpack.c.h.b16 %v4765
    %v7362 = vunpack.c.l.b16 %v4766
    %v7363 = vunpack.c.h.b16 %v4766
    %v7364 = vunpack.c.l.b16 %v4767
    %v7365 = vunpack.c.h.b16 %v4767
    %v7366 = vunpack.c.l.b16 %v4768
    %v7367 = vunpack.c.h.b16 %v4768
    %v7368 = vunpack.c.l.b16 %v4769
    %v7369 = vunpack.c.h.b16 %v4769
    %v7370 = vunpack.c.l.b16 %v4770
    %v7371 = vunpack.c.h.b16 %v4770
    %v7372 = vunpack.c.l.b16 %v4771
    %v7373 = vunpack.c.h.b16 %v4771
    %v7374 = vunpack.c.l.b16 %v4772
    %v7375 = vunpack.c.h.b16 %v4772
    %v7376 = vunpack.c.l.b16 %v4773
    %v7377 = vunpack.c.h.b16 %v4773
    %v7378 = vunpack.c.l.b16 %v4774
    %v7379 = vunpack.c.h.b16 %v4774
    %v7380 = vunpack.c.l.b16 %v4775
    %v7381 = vunpack.c.h.b16 %v4775
    %v7382 = vunpack.c.l.b16 %v4776
    %v7383 = vunpack.c.h.b16 %v4776
    %v7384 = vunpack.c.l.b16 %v4777
    %v7385 = vunpack.c.h.b16 %v4777
    %v7386 = vunpack.c.l.b16 %v4778
    %v7387 = vunpack.c.h.b16 %v4778
    %v7388 = vunpack.c.l.b16 %v4779
    %v7389 = vunpack.c.h.b16 %v4779
    %v7390 = vunpack.c.l.b16 %v4780
    %v7391 = vunpack.c.h.b16 %v4780
    %v7392 = vunpack.c.l.b16 %v4781
    %v7393 = vunpack.c.h.b16 %v4781
    %v7394 = vunpack.c.l.b16 %v4782
    %v7395 = vunpack.c.h.b16 %v4782
    %v7396 = vunpack.c.l.b16 %v4783
    %v7397 = vunpack.c.h.b16 %v4783
    %v7398 = vunpack.c.l.b16 %v4784
    %v7399 = vunpack.c.h.b16 %v4784
    %v7400 = vunpack.c.l.b16 %v4785
    %v7401 = vunpack.c.h.b16 %v4785
    %v7402 = vunpack.c.l.b16 %v4786
    %v7403 = vunpack.c.h.b16 %v4786
    %v7404 = vunpack.c.l.b16 %v4787
    %v7405 = vunpack.c.h.b16 %v4787
    %v7406 = vunpack.c.l.b16 %v4788
    %v7407 = vunpack.c.h.b16 %v4788
    %v7408 = vunpack.c.l.b16 %v4789
    %v7409 = vunpack.c.h.b16 %v4789
    %v7410 = vunpack.c.l.b16 %v4790
    %v7411 = vunpack.c.h.b16 %v4790
    %v7412 = vunpack.c.l.b16 %v4791
    %v7413 = vunpack.c.h.b16 %v4791
    %v7414 = vunpack.c.l.b16 %v4792
    %v7415 = vunpack.c.h.b16 %v4792
    %v7416 = vunpack.c.l.b16 %v4793
    %v7417 = vunpack.c.h.b16 %v4793
    %v7418 = vunpack.c.l.b16 %v4794
    %v7419 = vunpack.c.h.b16 %v4794
    %v7420 = vunpack.c.l.b16 %v4795
    %v7421 = vunpack.c.h.b16 %v4795
    %v7422 = vunpack.c.l.b16 %v4796
    %v7423 = vunpack.c.h.b16 %v4796
    %v7424 = vunpack.c.l.b16 %v4797
    %v7425 = vunpack.c.h.b16 %v4797
    %v7426 = vunpack.c.l.b16 %v4798
    %v7427 = vunpack.c.h.b16 %v4798
    %v7428 = vunpack.c.l.b16 %v4799
    %v7429 = vunpack.c.h.b16 %v4799
    %v7430 = vunpack.c.l.b16 %v4800
    %v7431 = vunpack.c.h.b16 %v4800
    %v7432 = vunpack.c.l.b16 %v4801
    %v7433 = vunpack.c.h.b16 %v4801
    %v7434 = vunpack.c.l.b16 %v4802
    %v7435 = vunpack.c.h.b16 %v4802
    %v7436 = vunpack.c.l.b16 %v4803
    %v7437 = vunpack.c.h.b16 %v4803
    %v7438 = vunpack.c.l.b16 %v4804
    %v7439 = vunpack.c.h.b16 %v4804
    %v7440 = vunpack.c.l.b16 %v4805
    %v7441 = vunpack.c.h.b16 %v4805
    %v7442 = vunpack.c.l.b16 %v4806
    %v7443 = vunpack.c.h.b16 %v4806
    %v7444 = vunpack.c.l.b16 %v4807
    %v7445 = vunpack.c.h.b16 %v4807
    %v7446 = vunpack.c.l.b16 %v4808
    %v7447 = vunpack.c.h.b16 %v4808
    %v7448 = vunpack.c.l.b16 %v4809
    %v7449 = vunpack.c.h.b16 %v4809
    %v7450 = vunpack.c.l.b16 %v4810
    %v7451 = vunpack.c.h.b16 %v4810
    %v7452 = vunpack.c.l.b16 %v4811
    %v7453 = vunpack.c.h.b16 %v4811
    %v7454 = vunpack.c.l.b16 %v4812
    %v7455 = vunpack.c.h.b16 %v4812
    %v7456 = vunpack.c.l.b16 %v4813
    %v7457 = vunpack.c.h.b16 %v4813
    %v7458 = vunpack.c.l.b16 %v4814
    %v7459 = vunpack.c.h.b16 %v4814
    %v7460 = vunpack.c.l.b16 %v4815
    %v7461 = vunpack.c.h.b16 %v4815
    %v7462 = vunpack.c.l.b16 %v4816
    %v7463 = vunpack.c.h.b16 %v4816
    %v7464 = vunpack.c.l.b16 %v4817
    %v7465 = vunpack.c.h.b16 %v4817
    %v7466 = vunpack.c.l.b16 %v4818
    %v7467 = vunpack.c.h.b16 %v4818
    %v7468 = vunpack.c.l.b16 %v4819
    %v7469 = vunpack.c.h.b16 %v4819
    %v7470 = vunpack.c.l.b16 %v4820
    %v7471 = vunpack.c.h.b16 %v4820
    %v7472 = vunpack.c.l.b16 %v4821
    %v7473 = vunpack.c.h.b16 %v4821
    %v7474 = vunpack.c.l.b16 %v4822
    %v7475 = vunpack.c.h.b16 %v4822
    %v7476 = vunpack.c.l.b16 %v4823
    %v7477 = vunpack.c.h.b16 %v4823
    %v7478 = vunpack.c.l.b16 %v4824
    %v7479 = vunpack.c.h.b16 %v4824
    %v7480 = vunpack.c.l.b16 %v4825
    %v7481 = vunpack.c.h.b16 %v4825
    %v7482 = vunpack.c.l.b16 %v4826
    %v7483 = vunpack.c.h.b16 %v4826
    %v7484 = vunpack.c.l.b16 %v4827
    %v7485 = vunpack.c.h.b16 %v4827
    %v7486 = vunpack.c.l.b16 %v4828
    %v7487 = vunpack.c.h.b16 %v4828
    %v7488 = vunpack.c.l.b16 %v4829
    %v7489 = vunpack.c.h.b16 %v4829
    %v7490 = vunpack.c.l.b16 %v4830
    %v7491 = vunpack.c.h.b16 %v4830
    %v7492 = vunpack.c.l.b16 %v4831
    %v7493 = vunpack.c.h.b16 %v4831
    %v7494 = vunpack.c.l.b16 %v4832
    %v7495 = vunpack.c.h.b16 %v4832
    %v7496 = vunpack.c.l.b16 %v4833
    %v7497 = vunpack.c.h.b16 %v4833
    %v7498 = vunpack.c.l.b16 %v4834
    %v7499 = vunpack.c.h.b16 %v4834
    %v7500 = vunpack.c.l.b16 %v4835
    %v7501 = vunpack.c.h.b16 %v4835
    %v7502 = vunpack.c.l.b16 %v4836
    %v7503 = vunpack.c.h.b16 %v4836
    %v7504 = vunpack.c.l.b16 %v4837
    %v7505 = vunpack.c.h.b16 %v4837
    %v7506 = vunpack.c.l.b16 %v4838
    %v7507 = vunpack.c.h.b16 %v4838
    %v7508 = vunpack.c.l.b16 %v4839
    %v7509 = vunpack.c.h.b16 %v4839
    %v7510 = vunpack.c.l.b16 %v4840
    %v7511 = vunpack.c.h.b16 %v4840
    %v7512 = vunpack.c.l.b16 %v4841
    %v7513 = vunpack.c.h.b16 %v4841
    %v7514 = vunpack.c.l.b16 %v4842
    %v7515 = vunpack.c.h.b16 %v4842
    %v7516 = vunpack.c.l.b16 %v4843
    %v7517 = vunpack.c.h.b16 %v4843
    %v7518 = vunpack.c.l.b16 %v4844
    %v7519 = vunpack.c.h.b16 %v4844
    %v7520 = vunpack.c.l.b16 %v4845
    %v7521 = vunpack.c.h.b16 %v4845
    %v7522 = vunpack.c.l.b16 %v4846
    %v7523 = vunpack.c.h.b16 %v4846
    %v7524 = vunpack.c.l.b16 %v4847
    %v7525 = vunpack.c.h.b16 %v4847
    %v7526 = vunpack.c.l.b16 %v4848
    %v7527 = vunpack.c.h.b16 %v4848
    %v7528 = vunpack.c.l.b16 %v4849
    %v7529 = vunpack.c.h.b16 %v4849
    %v7530 = vunpack.c.l.b16 %v4850
    %v7531 = vunpack.c.h.b16 %v4850
    %v7532 = vunpack.c.l.b16 %v4851
    %v7533 = vunpack.c.h.b16 %v4851
    %v7534 = vunpack.c.l.b16 %v4852
    %v7535 = vunpack.c.h.b16 %v4852
    %v7536 = vunpack.c.l.b16 %v4853
    %v7537 = vunpack.c.h.b16 %v4853
    %v7538 = vunpack.c.l.b16 %v4854
    %v7539 = vunpack.c.h.b16 %v4854
    %v7540 = vunpack.c.l.b16 %v4855
    %v7541 = vunpack.c.h.b16 %v4855
    %v7542 = vunpack.c.l.b16 %v4856
    %v7543 = vunpack.c.h.b16 %v4856
    %v7544 = vunpack.c.l.b16 %v4857
    %v7545 = vunpack.c.h.b16 %v4857
    %v7546 = vunpack.c.l.b16 %v4858
    %v7547 = vunpack.c.h.b16 %v4858
    %v7548 = vunpack.c.l.b16 %v4859
    %v7549 = vunpack.c.h.b16 %v4859
    %v7550 = vunpack.c.l.b16 %v4860
    %v7551 = vunpack.c.h.b16 %v4860
    %v7552 = vunpack.c.l.b16 %v4861
    %v7553 = vunpack.c.h.b16 %v4861
    %v7554 = vunpack.c.l.b16 %v4862
    %v7555 = vunpack.c.h.b16 %v4862
    %v7556 = vunpack.c.l.b16 %v4863
    %v7557 = vunpack.c.h.b16 %v4863
    %v7558 = vunpack.c.l.b16 %v4864
    %v7559 = vunpack.c.h.b16 %v4864
    %v7560 = vunpack.c.l.b16 %v4865
    %v7561 = vunpack.c.h.b16 %v4865
    %v7562 = vunpack.c.l.b16 %v4866
    %v7563 = vunpack.c.h.b16 %v4866
    %v7564 = vunpack.c.l.b16 %v4867
    %v7565 = vunpack.c.h.b16 %v4867
    %v7566 = vunpack.c.l.b16 %v4868
    %v7567 = vunpack.c.h.b16 %v4868
    %v7568 = vunpack.c.l.b16 %v4869
    %v7569 = vunpack.c.h.b16 %v4869
    %v7570 = vunpack.c.l.b16 %v4870
    %v7571 = vunpack.c.h.b16 %v4870
    %v7572 = vunpack.c.l.b16 %v4871
    %v7573 = vunpack.c.h.b16 %v4871
    %v7574 = vunpack.c.l.b16 %v4872
    %v7575 = vunpack.c.h.b16 %v4872
    %v7576 = vunpack.c.l.b16 %v4873
    %v7577 = vunpack.c.h.b16 %v4873
    %v7578 = vunpack.c.l.b16 %v4874
    %v7579 = vunpack.c.h.b16 %v4874
    %v7580 = vunpack.c.l.b16 %v4875
    %v7581 = vunpack.c.h.b16 %v4875
    %v7582 = vunpack.c.l.b16 %v4876
    %v7583 = vunpack.c.h.b16 %v4876
    %v7584 = vunpack.c.l.b16 %v4877
    %v7585 = vunpack.c.h.b16 %v4877
    %v7586 = vunpack.c.l.b16 %v4878
    %v7587 = vunpack.c.h.b16 %v4878
    %v7588 = vunpack.c.l.b16 %v4879
    %v7589 = vunpack.c.h.b16 %v4879
    %v7590 = vunpack.c.l.b16 %v4880
    %v7591 = vunpack.c.h.b16 %v4880
    %v7592 = vunpack.c.l.b16 %v4881
    %v7593 = vunpack.c.h.b16 %v4881
    %v7594 = vunpack.c.l.b16 %v4882
    %v7595 = vunpack.c.h.b16 %v4882
    %v7596 = vunpack.c.l.b16 %v4883
    %v7597 = vunpack.c.h.b16 %v4883
    %v7598 = vunpack.c.l.b16 %v4884
    %v7599 = vunpack.c.h.b16 %v4884
    %v7600 = vunpack.c.l.b16 %v4885
    %v7601 = vunpack.c.h.b16 %v4885
    %v7602 = vunpack.c.l.b16 %v4886
    %v7603 = vunpack.c.h.b16 %v4886
    %v7604 = vunpack.c.l.b16 %v4887
    %v7605 = vunpack.c.h.b16 %v4887
    %v7606 = vunpack.c.l.b16 %v4888
    %v7607 = vunpack.c.h.b16 %v4888
    %v7608 = vunpack.c.l.b16 %v4889
    %v7609 = vunpack.c.h.b16 %v4889
    %v7610 = vunpack.c.l.b16 %v4890
    %v7611 = vunpack.c.h.b16 %v4890
    %v7612 = vunpack.c.l.b16 %v4891
    %v7613 = vunpack.c.h.b16 %v4891
    %v7614 = vunpack.c.l.b16 %v4892
    %v7615 = vunpack.c.h.b16 %v4892
    %v7616 = vunpack.c.l.b16 %v4893
    %v7617 = vunpack.c.h.b16 %v4893
    %v7618 = vunpack.c.l.b16 %v4894
    %v7619 = vunpack.c.h.b16 %v4894
    %v7620 = vunpack.c.l.b16 %v4895
    %v7621 = vunpack.c.h.b16 %v4895
    %v7622 = vunpack.c.l.b16 %v4896
    %v7623 = vunpack.c.h.b16 %v4896
    %v7624 = vunpack.c.l.b16 %v4897
    %v7625 = vunpack.c.h.b16 %v4897
    %v7626 = vunpack.c.l.b16 %v4898
    %v7627 = vunpack.c.h.b16 %v4898
    %v7628 = vunpack.c.l.b16 %v4899
    %v7629 = vunpack.c.h.b16 %v4899
    %v7630 = vunpack.c.l.b16 %v4900
    %v7631 = vunpack.c.h.b16 %v4900
    %v7632 = vunpack.c.l.b16 %v4901
    %v7633 = vunpack.c.h.b16 %v4901
    %v7634 = vunpack.c.l.b16 %v4902
    %v7635 = vunpack.c.h.b16 %v4902
    %v7636 = vunpack.c.l.b16 %v4903
    %v7637 = vunpack.c.h.b16 %v4903
    %v7638 = vunpack.c.l.b16 %v4904
    %v7639 = vunpack.c.h.b16 %v4904
    %v7640 = vunpack.c.l.b16 %v4905
    %v7641 = vunpack.c.h.b16 %v4905
    %v7642 = vunpack.c.l.b16 %v4906
    %v7643 = vunpack.c.h.b16 %v4906
    %v7644 = vunpack.c.l.b16 %v4907
    %v7645 = vunpack.c.h.b16 %v4907
    %v7646 = vunpack.c.l.b16 %v4908
    %v7647 = vunpack.c.h.b16 %v4908
    %v7648 = vunpack.c.l.b16 %v4909
    %v7649 = vunpack.c.h.b16 %v4909
    %v7650 = vunpack.c.l.b16 %v4910
    %v7651 = vunpack.c.h.b16 %v4910
    %v7652 = vunpack.c.l.b16 %v4911
    %v7653 = vunpack.c.h.b16 %v4911
    %v7654 = vunpack.c.l.b16 %v4912
    %v7655 = vunpack.c.h.b16 %v4912
    %v7656 = vunpack.c.l.b16 %v4913
    %v7657 = vunpack.c.h.b16 %v4913
    %v7658 = vunpack.c.l.b16 %v4914
    %v7659 = vunpack.c.h.b16 %v4914
    %v7660 = vunpack.c.l.b16 %v4915
    %v7661 = vunpack.c.h.b16 %v4915
    %v7662 = vunpack.c.l.b16 %v4916
    %v7663 = vunpack.c.h.b16 %v4916
    %v7664 = vunpack.c.l.b16 %v4917
    %v7665 = vunpack.c.h.b16 %v4917
    %v7666 = vunpack.c.l.b16 %v4918
    %v7667 = vunpack.c.h.b16 %v4918
    %v7668 = vunpack.c.l.b16 %v4919
    %v7669 = vunpack.c.h.b16 %v4919
    %v7670 = vunpack.c.l.b16 %v4920
    %v7671 = vunpack.c.h.b16 %v4920
    %v7672 = vunpack.c.l.b16 %v4921
    %v7673 = vunpack.c.h.b16 %v4921
    %v7674 = vunpack.c.l.b16 %v4922
    %v7675 = vunpack.c.h.b16 %v4922
    %v7676 = vunpack.c.l.b16 %v4923
    %v7677 = vunpack.c.h.b16 %v4923
    %v7678 = vunpack.c.l.b16 %v4924
    %v7679 = vunpack.c.h.b16 %v4924
    %v7680 = vunpack.c.l.b16 %v4925
    %v7681 = vunpack.c.h.b16 %v4925
    %v7682 = vunpack.c.l.b16 %v4926
    %v7683 = vunpack.c.h.b16 %v4926
    %v7684 = vunpack.c.l.b16 %v4927
    %v7685 = vunpack.c.h.b16 %v4927
    %v7686 = vunpack.c.l.b16 %v4928
    %v7687 = vunpack.c.h.b16 %v4928
    %v7688 = vunpack.c.l.b16 %v4929
    %v7689 = vunpack.c.h.b16 %v4929
    %v7690 = vunpack.c.l.b16 %v4930
    %v7691 = vunpack.c.h.b16 %v4930
    %v7692 = vunpack.c.l.b16 %v4931
    %v7693 = vunpack.c.h.b16 %v4931
    %v7694 = vunpack.c.l.b16 %v4932
    %v7695 = vunpack.c.h.b16 %v4932
    %v7696 = vunpack.c.l.b16 %v4933
    %v7697 = vunpack.c.h.b16 %v4933
    %v7698 = vunpack.c.l.b16 %v4934
    %v7699 = vunpack.c.h.b16 %v4934
    %v7700 = vunpack.c.l.b16 %v4935
    %v7701 = vunpack.c.h.b16 %v4935
    %v7702 = vunpack.c.l.b16 %v4936
    %v7703 = vunpack.c.h.b16 %v4936
    %v7704 = vunpack.c.l.b16 %v4937
    %v7705 = vunpack.c.h.b16 %v4937
    %v7706 = vunpack.c.l.b16 %v4938
    %v7707 = vunpack.c.h.b16 %v4938
    %v7708 = vunpack.c.l.b16 %v4939
    %v7709 = vunpack.c.h.b16 %v4939
    %v7710 = vunpack.c.l.b16 %v4940
    %v7711 = vunpack.c.h.b16 %v4940
    %v7712 = vunpack.c.l.b16 %v4941
    %v7713 = vunpack.c.h.b16 %v4941
    %v7714 = vunpack.c.l.b16 %v4942
    %v7715 = vunpack.c.h.b16 %v4942
    %v7716 = vunpack.c.l.b16 %v4943
    %v7717 = vunpack.c.h.b16 %v4943
    %v7718 = vunpack.c.l.b16 %v4944
    %v7719 = vunpack.c.h.b16 %v4944
    %v7720 = vunpack.c.l.b16 %v4945
    %v7721 = vunpack.c.h.b16 %v4945
    %v7722 = vunpack.c.l.b16 %v4946
    %v7723 = vunpack.c.h.b16 %v4946
    %v7724 = vunpack.c.l.b16 %v4947
    %v7725 = vunpack.c.h.b16 %v4947
    %v7726 = vunpack.c.l.b16 %v4948
    %v7727 = vunpack.c.h.b16 %v4948
    %v7728 = vunpack.c.l.b16 %v4949
    %v7729 = vunpack.c.h.b16 %v4949
    %v7730 = vunpack.c.l.b16 %v4950
    %v7731 = vunpack.c.h.b16 %v4950
    %v7732 = vunpack.c.l.b16 %v4951
    %v7733 = vunpack.c.h.b16 %v4951
    %v7734 = vunpack.c.l.b16 %v4952
    %v7735 = vunpack.c.h.b16 %v4952
    %v7736 = vunpack.c.l.b16 %v4953
    %v7737 = vunpack.c.h.b16 %v4953
    %v7738 = vunpack.c.l.b16 %v4954
    %v7739 = vunpack.c.h.b16 %v4954
    %v7740 = vunpack.c.l.b16 %v4955
    %v7741 = vunpack.c.h.b16 %v4955
    %v7742 = vunpack.c.l.b16 %v4956
    %v7743 = vunpack.c.h.b16 %v4956
    %v7744 = vunpack.c.l.b16 %v4957
    %v7745 = vunpack.c.h.b16 %v4957
    %v7746 = vunpack.c.l.b16 %v4958
    %v7747 = vunpack.c.h.b16 %v4958
    %v7748 = vunpack.c.l.b16 %v4959
    %v7749 = vunpack.c.h.b16 %v4959
    %v7750 = vunpack.c.l.b16 %v4960
    %v7751 = vunpack.c.h.b16 %v4960
    %v7752 = vunpack.c.l.b16 %v4961
    %v7753 = vunpack.c.h.b16 %v4961
    %v7754 = vunpack.c.l.b16 %v4962
    %v7755 = vunpack.c.h.b16 %v4962
    %v7756 = vunpack.c.l.b16 %v4963
    %v7757 = vunpack.c.h.b16 %v4963
    %v7758 = vunpack.c.l.b16 %v4964
    %v7759 = vunpack.c.h.b16 %v4964
    %v7760 = vunpack.c.l.b16 %v4965
    %v7761 = vunpack.c.h.b16 %v4965
    %v7762 = vunpack.c.l.b16 %v4966
    %v7763 = vunpack.c.h.b16 %v4966
    %v7764 = vunpack.c.l.b16 %v4967
    %v7765 = vunpack.c.h.b16 %v4967
    %v7766 = vunpack.c.l.b16 %v4968
    %v7767 = vunpack.c.h.b16 %v4968
    %v7768 = vunpack.c.l.b16 %v4969
    %v7769 = vunpack.c.h.b16 %v4969
    %v7770 = vunpack.c.l.b16 %v4970
    %v7771 = vunpack.c.h.b16 %v4970
    %v7772 = vunpack.c.l.b16 %v4971
    %v7773 = vunpack.c.h.b16 %v4971
    %v7774 = vunpack.c.l.b16 %v4972
    %v7775 = vunpack.c.h.b16 %v4972
    %v7776 = vunpack.c.l.b16 %v4973
    %v7777 = vunpack.c.h.b16 %v4973
    %v7778 = vunpack.c.l.b16 %v4974
    %v7779 = vunpack.c.h.b16 %v4974
    %v7780 = vunpack.c.l.b16 %v4975
    %v7781 = vunpack.c.h.b16 %v4975
    %v7782 = vunpack.c.l.b16 %v4976
    %v7783 = vunpack.c.h.b16 %v4976
    %v7784 = vunpack.c.l.b16 %v4977
    %v7785 = vunpack.c.h.b16 %v4977
    %v7786 = vunpack.c.l.b16 %v4978
    %v7787 = vunpack.c.h.b16 %v4978
    %v7788 = vunpack.c.l.b16 %v4979
    %v7789 = vunpack.c.h.b16 %v4979
    %v7790 = vunpack.c.l.b16 %v4980
    %v7791 = vunpack.c.h.b16 %v4980
    %v7792 = vunpack.c.l.b16 %v4981
    %v7793 = vunpack.c.h.b16 %v4981
    %v7794 = vunpack.c.l.b16 %v4982
    %v7795 = vunpack.c.h.b16 %v4982
    %v7796 = vunpack.c.l.b16 %v4983
    %v7797 = vunpack.c.h.b16 %v4983
    %v7798 = vunpack.c.l.b16 %v4984
    %v7799 = vunpack.c.h.b16 %v4984
    %v7800 = vunpack.c.l.b16 %v4985
    %v7801 = vunpack.c.h.b16 %v4985
    %v7802 = vunpack.c.l.b16 %v4986
    %v7803 = vunpack.c.h.b16 %v4986
    %v7804 = vunpack.c.l.b16 %v4987
    %v7805 = vunpack.c.h.b16 %v4987
    %v7806 = vunpack.c.l.b16 %v4988
    %v7807 = vunpack.c.h.b16 %v4988
    %v7808 = vunpack.c.l.b16 %v4989
    %v7809 = vunpack.c.h.b16 %v4989
    %v7810 = vunpack.c.l.b16 %v4990
    %v7811 = vunpack.c.h.b16 %v4990
    %v7812 = vunpack.c.l.b16 %v4991
    %v7813 = vunpack.c.h.b16 %v4991
    %v7814 = vunpack.c.l.b16 %v4992
    %v7815 = vunpack.c.h.b16 %v4992
    %v7816 = vunpack.c.l.b16 %v4993
    %v7817 = vunpack.c.h.b16 %v4993
    %v7818 = vunpack.c.l.b16 %v4994
    %v7819 = vunpack.c.h.b16 %v4994
    %v7820 = vunpack.c.l.b16 %v4995
    %v7821 = vunpack.c.h.b16 %v4995
    %v7822 = vunpack.c.l.b16 %v4996
    %v7823 = vunpack.c.h.b16 %v4996
    %v7824 = vunpack.c.l.b16 %v4997
    %v7825 = vunpack.c.h.b16 %v4997
    %v7826 = vunpack.c.l.b16 %v4998
    %v7827 = vunpack.c.h.b16 %v4998
    %v7828 = vunpack.c.l.b16 %v4999
    %v7829 = vunpack.c.h.b16 %v4999
    %v7830 = vunpack.c.l.b16 %v5000
    %v7831 = vunpack.c.h.b16 %v5000
    %v7832 = vunpack.c.l.b16 %v5001
    %v7833 = vunpack.c.h.b16 %v5001
    %v7834 = vunpack.c.l.b16 %v5002
    %v7835 = vunpack.c.h.b16 %v5002
    %v7836 = vunpack.c.l.b16 %v5003
    %v7837 = vunpack.c.h.b16 %v5003
    %v7838 = vunpack.c.l.b16 %v5004
    %v7839 = vunpack.c.h.b16 %v5004
    %v7840 = vunpack.c.l.b16 %v5005
    %v7841 = vunpack.c.h.b16 %v5005
    %v7842 = vunpack.c.l.b16 %v5006
    %v7843 = vunpack.c.h.b16 %v5006
    %v7844 = vunpack.c.l.b16 %v5007
    %v7845 = vunpack.c.h.b16 %v5007
    %v7846 = vunpack.c.l.b16 %v5008
    %v7847 = vunpack.c.h.b16 %v5008
    %v7848 = vunpack.c.l.b16 %v5009
    %v7849 = vunpack.c.h.b16 %v5009
    %v7850 = vunpack.c.l.b16 %v5010
    %v7851 = vunpack.c.h.b16 %v5010
    %v7852 = vunpack.c.l.b16 %v5011
    %v7853 = vunpack.c.h.b16 %v5011
    %v7854 = vunpack.c.l.b16 %v5012
    %v7855 = vunpack.c.h.b16 %v5012
    %v7856 = vunpack.c.l.b16 %v5013
    %v7857 = vunpack.c.h.b16 %v5013
    %v7858 = vunpack.c.l.b16 %v5014
    %v7859 = vunpack.c.h.b16 %v5014
    %v7860 = vunpack.c.l.b16 %v5015
    %v7861 = vunpack.c.h.b16 %v5015
    %v7862 = vunpack.c.l.b16 %v5016
    %v7863 = vunpack.c.h.b16 %v5016
    %v7864 = vunpack.c.l.b16 %v5017
    %v7865 = vunpack.c.h.b16 %v5017
    %v7866 = vunpack.c.l.b16 %v5018
    %v7867 = vunpack.c.h.b16 %v5018
    %v7868 = vunpack.c.l.b16 %v5019
    %v7869 = vunpack.c.h.b16 %v5019
    %v7870 = vunpack.c.l.b16 %v5020
    %v7871 = vunpack.c.h.b16 %v5020
    %v7872 = vunpack.c.l.b16 %v5021
    %v7873 = vunpack.c.h.b16 %v5021
    %v7874 = vunpack.c.l.b16 %v5022
    %v7875 = vunpack.c.h.b16 %v5022
    %v7876 = vunpack.c.l.b16 %v5023
    %v7877 = vunpack.c.h.b16 %v5023
    %v7878 = vunpack.c.l.b16 %v5024
    %v7879 = vunpack.c.h.b16 %v5024
    %v7880 = vunpack.c.l.b16 %v5025
    %v7881 = vunpack.c.h.b16 %v5025
    %v7882 = vunpack.c.l.b16 %v5026
    %v7883 = vunpack.c.h.b16 %v5026
    %v7884 = vunpack.c.l.b16 %v5027
    %v7885 = vunpack.c.h.b16 %v5027
    %v7886 = vunpack.c.l.b16 %v5028
    %v7887 = vunpack.c.h.b16 %v5028
    %v7888 = vunpack.c.l.b16 %v5029
    %v7889 = vunpack.c.h.b16 %v5029
    %v7890 = vunpack.c.l.b16 %v5030
    %v7891 = vunpack.c.h.b16 %v5030
    %v7892 = vunpack.c.l.b16 %v5031
    %v7893 = vunpack.c.h.b16 %v5031
    %v7894 = vunpack.c.l.b16 %v5032
    %v7895 = vunpack.c.h.b16 %v5032
    %v7896 = vunpack.c.l.b16 %v5033
    %v7897 = vunpack.c.h.b16 %v5033
    %v7898 = vunpack.c.l.b16 %v5034
    %v7899 = vunpack.c.h.b16 %v5034
    %v7900 = vunpack.c.l.b16 %v5035
    %v7901 = vunpack.c.h.b16 %v5035
    %v7902 = vunpack.c.l.b16 %v5036
    %v7903 = vunpack.c.h.b16 %v5036
    %v7904 = vunpack.c.l.b16 %v5037
    %v7905 = vunpack.c.h.b16 %v5037
    %v7906 = vunpack.c.l.b16 %v5038
    %v7907 = vunpack.c.h.b16 %v5038
    %v7908 = vunpack.c.l.b16 %v5039
    %v7909 = vunpack.c.h.b16 %v5039
    %v7910 = vunpack.c.l.b16 %v5040
    %v7911 = vunpack.c.h.b16 %v5040
    %v7912 = vunpack.c.l.b16 %v5041
    %v7913 = vunpack.c.h.b16 %v5041
    %v7914 = vunpack.c.l.b16 %v5042
    %v7915 = vunpack.c.h.b16 %v5042
    %v7916 = vunpack.c.l.b16 %v5043
    %v7917 = vunpack.c.h.b16 %v5043
    %v7918 = vunpack.c.l.b16 %v5044
    %v7919 = vunpack.c.h.b16 %v5044
    %v7920 = vunpack.c.l.b16 %v5045
    %v7921 = vunpack.c.h.b16 %v5045
    %v7922 = vunpack.c.l.b16 %v5046
    %v7923 = vunpack.c.h.b16 %v5046
    %v7924 = vunpack.c.l.b16 %v5047
    %v7925 = vunpack.c.h.b16 %v5047
    %v7926 = vunpack.c.l.b16 %v5048
    %v7927 = vunpack.c.h.b16 %v5048
    %v7928 = vunpack.c.l.b16 %v5049
    %v7929 = vunpack.c.h.b16 %v5049
    %v7930 = vunpack.c.l.b16 %v5050
    %v7931 = vunpack.c.h.b16 %v5050
    %v7932 = vunpack.c.l.b16 %v5051
    %v7933 = vunpack.c.h.b16 %v5051
    %v7934 = vunpack.c.l.b16 %v5052
    %v7935 = vunpack.c.h.b16 %v5052
    %v7936 = vunpack.c.l.b16 %v5053
    %v7937 = vunpack.c.h.b16 %v5053
    %v7938 = vunpack.c.l.b16 %v5054
    %v7939 = vunpack.c.h.b16 %v5054
    %v7940 = vunpack.c.l.b16 %v5055
    %v7941 = vunpack.c.h.b16 %v5055
    %v7942 = vunpack.c.l.b16 %v5056
    %v7943 = vunpack.c.h.b16 %v5056
    %v7944 = vunpack.c.l.b16 %v5057
    %v7945 = vunpack.c.h.b16 %v5057
    %v7946 = vunpack.c.l.b16 %v5058
    %v7947 = vunpack.c.h.b16 %v5058
    %v7948 = vunpack.c.l.b16 %v5059
    %v7949 = vunpack.c.h.b16 %v5059
    %v7950 = vunpack.c.l.b16 %v5060
    %v7951 = vunpack.c.h.b16 %v5060
    %v7952 = vunpack.c.l.b16 %v5061
    %v7953 = vunpack.c.h.b16 %v5061
    %v7954 = vunpack.c.l.b16 %v5062
    %v7955 = vunpack.c.h.b16 %v5062
    %v7956 = vunpack.c.l.b16 %v5063
    %v7957 = vunpack.c.h.b16 %v5063
    %v7958 = vunpack.c.l.b16 %v5064
    %v7959 = vunpack.c.h.b16 %v5064
    %v7960 = vunpack.c.l.b16 %v5065
    %v7961 = vunpack.c.h.b16 %v5065
    %v7962 = vunpack.c.l.b16 %v5066
    %v7963 = vunpack.c.h.b16 %v5066
    %v7964 = vunpack.c.l.b16 %v5067
    %v7965 = vunpack.c.h.b16 %v5067
    %v7966 = vunpack.c.l.b16 %v5068
    %v7967 = vunpack.c.h.b16 %v5068
    %v7968 = vunpack.c.l.b16 %v5069
    %v7969 = vunpack.c.h.b16 %v5069
    %v7970 = vunpack.c.l.b16 %v5070
    %v7971 = vunpack.c.h.b16 %v5070
    %v7972 = vunpack.c.l.b16 %v5071
    %v7973 = vunpack.c.h.b16 %v5071
    %v7974 = vunpack.c.l.b16 %v5072
    %v7975 = vunpack.c.h.b16 %v5072
    %v7976 = vunpack.c.l.b16 %v5073
    %v7977 = vunpack.c.h.b16 %v5073
    %v7978 = vunpack.c.l.b16 %v5074
    %v7979 = vunpack.c.h.b16 %v5074
    %v7980 = vunpack.c.l.b16 %v5075
    %v7981 = vunpack.c.h.b16 %v5075
    %v7982 = vunpack.c.l.b16 %v5076
    %v7983 = vunpack.c.h.b16 %v5076
    %v7984 = vunpack.c.l.b16 %v5077
    %v7985 = vunpack.c.h.b16 %v5077
    %v7986 = vunpack.c.l.b16 %v5078
    %v7987 = vunpack.c.h.b16 %v5078
    %v7988 = vunpack.c.l.b16 %v5079
    %v7989 = vunpack.c.h.b16 %v5079
    %v7990 = vunpack.c.l.b16 %v5080
    %v7991 = vunpack.c.h.b16 %v5080
    %v7992 = vunpack.c.l.b16 %v5081
    %v7993 = vunpack.c.h.b16 %v5081
    %v7994 = vunpack.c.l.b16 %v5082
    %v7995 = vunpack.c.h.b16 %v5082
    %v7996 = vunpack.c.l.b16 %v5083
    %v7997 = vunpack.c.h.b16 %v5083
    %v7998 = vunpack.c.l.b16 %v5084
    %v7999 = vunpack.c.h.b16 %v5084
    %v8000 = vunpack.c.l.b16 %v5085
    %v8001 = vunpack.c.h.b16 %v5085
    %v8002 = vunpack.c.l.b16 %v5086
    %v8003 = vunpack.c.h.b16 %v5086
    %v8004 = vunpack.c.l.b16 %v5087
    %v8005 = vunpack.c.h.b16 %v5087
    %v8006 = vunpack.c.l.b16 %v5088
    %v8007 = vunpack.c.h.b16 %v5088
    %v8008 = vunpack.c.l.b16 %v5089
    %v8009 = vunpack.c.h.b16 %v5089
    %v8010 = vunpack.c.l.b16 %v5090
    %v8011 = vunpack.c.h.b16 %v5090
    %v8012 = vunpack.c.l.b16 %v5091
    %v8013 = vunpack.c.h.b16 %v5091
    %v8014 = vunpack.c.l.b16 %v5092
    %v8015 = vunpack.c.h.b16 %v5092
    %v8016 = vunpack.c.l.b16 %v5093
    %v8017 = vunpack.c.h.b16 %v5093
    %v8018 = vunpack.c.l.b16 %v5094
    %v8019 = vunpack.c.h.b16 %v5094
    %v8020 = vunpack.c.l.b16 %v5095
    %v8021 = vunpack.c.h.b16 %v5095
    %v8022 = vunpack.c.l.b16 %v5096
    %v8023 = vunpack.c.h.b16 %v5096
    %v8024 = vunpack.c.l.b16 %v5097
    %v8025 = vunpack.c.h.b16 %v5097
    %v8026 = vunpack.c.l.b16 %v5098
    %v8027 = vunpack.c.h.b16 %v5098
    %v8028 = vunpack.c.l.b16 %v5099
    %v8029 = vunpack.c.h.b16 %v5099
    %v8030 = vunpack.c.l.b16 %v5100
    %v8031 = vunpack.c.h.b16 %v5100
    %v8032 = vunpack.c.l.b16 %v5101
    %v8033 = vunpack.c.h.b16 %v5101
    %v8034 = vunpack.c.l.b16 %v5102
    %v8035 = vunpack.c.h.b16 %v5102
    %v8036 = vunpack.c.l.b16 %v5103
    %v8037 = vunpack.c.h.b16 %v5103
    %v8038 = vunpack.c.l.b16 %v5104
    %v8039 = vunpack.c.h.b16 %v5104
    %v8040 = vunpack.c.l.b16 %v5105
    %v8041 = vunpack.c.h.b16 %v5105
    %v8042 = vunpack.c.l.b16 %v5106
    %v8043 = vunpack.c.h.b16 %v5106
    %v8044 = vunpack.c.l.b16 %v5107
    %v8045 = vunpack.c.h.b16 %v5107
    %v8046 = vunpack.c.l.b16 %v5108
    %v8047 = vunpack.c.h.b16 %v5108
    %v8048 = vunpack.c.l.b16 %v5109
    %v8049 = vunpack.c.h.b16 %v5109
    %v8050 = vunpack.c.l.b16 %v5110
    %v8051 = vunpack.c.h.b16 %v5110
    %v8052 = vunpack.c.l.b16 %v5111
    %v8053 = vunpack.c.h.b16 %v5111
    %v8054 = vunpack.c.l.b16 %v5112
    %v8055 = vunpack.c.h.b16 %v5112
    %v8056 = vunpack.c.l.b16 %v5113
    %v8057 = vunpack.c.h.b16 %v5113
    %v8058 = vunpack.c.l.b16 %v5114
    %v8059 = vunpack.c.h.b16 %v5114
    %v8060 = vunpack.c.l.b16 %v5115
    %v8061 = vunpack.c.h.b16 %v5115
    %v8062 = vunpack.c.l.b16 %v5116
    %v8063 = vunpack.c.h.b16 %v5116
    %v8064 = vunpack.c.l.b16 %v5117
    %v8065 = vunpack.c.h.b16 %v5117
    %v8066 = vunpack.c.l.b16 %v5118
    %v8067 = vunpack.c.h.b16 %v5118
    %v8068 = vunpack.c.l.b16 %v5119
    %v8069 = vunpack.c.h.b16 %v5119
    %v8070 = vunpack.c.l.b16 %v5120
    %v8071 = vunpack.c.h.b16 %v5120
    %v8072 = vunpack.c.l.b16 %v5121
    %v8073 = vunpack.c.h.b16 %v5121
    %v8074 = vunpack.c.l.b16 %v5122
    %v8075 = vunpack.c.h.b16 %v5122
    %v8076 = vunpack.c.l.b16 %v5123
    %v8077 = vunpack.c.h.b16 %v5123
    %v8078 = vunpack.c.l.b16 %v5124
    %v8079 = vunpack.c.h.b16 %v5124
    %v8080 = vunpack.c.l.b16 %v5125
    %v8081 = vunpack.c.h.b16 %v5125
    %v8082 = vunpack.c.l.b16 %v5126
    %v8083 = vunpack.c.h.b16 %v5126
    %v8084 = vunpack.c.l.b16 %v5127
    %v8085 = vunpack.c.h.b16 %v5127
    %v8086 = vunpack.c.l.b16 %v5128
    %v8087 = vunpack.c.h.b16 %v5128
    %v8088 = vunpack.c.l.b16 %v5129
    %v8089 = vunpack.c.h.b16 %v5129
    %v8090 = vunpack.c.l.b16 %v5130
    %v8091 = vunpack.c.h.b16 %v5130
    %v8092 = vunpack.c.l.b16 %v5131
    %v8093 = vunpack.c.h.b16 %v5131
    %v8094 = vunpack.c.l.b16 %v5132
    %v8095 = vunpack.c.h.b16 %v5132
    %v8096 = vunpack.c.l.b16 %v5133
    %v8097 = vunpack.c.h.b16 %v5133
    %v8098 = vunpack.c.l.b16 %v5134
    %v8099 = vunpack.c.h.b16 %v5134
    %v8100 = vunpack.c.l.b16 %v5135
    %v8101 = vunpack.c.h.b16 %v5135
    %v8102 = vunpack.c.l.b16 %v5136
    %v8103 = vunpack.c.h.b16 %v5136
    %v8104 = vunpack.c.l.b16 %v5137
    %v8105 = vunpack.c.h.b16 %v5137
    %v8106 = vunpack.c.l.b16 %v5138
    %v8107 = vunpack.c.h.b16 %v5138
    %v8108 = vunpack.c.l.b16 %v5139
    %v8109 = vunpack.c.h.b16 %v5139
    %v8110 = vunpack.c.l.b16 %v5140
    %v8111 = vunpack.c.h.b16 %v5140
    %v8112 = vunpack.c.l.b16 %v5141
    %v8113 = vunpack.c.h.b16 %v5141
    %v8114 = vunpack.c.l.b16 %v5142
    %v8115 = vunpack.c.h.b16 %v5142
    %v8116 = vunpack.c.l.b16 %v5143
    %v8117 = vunpack.c.h.b16 %v5143
    %v8118 = vunpack.c.l.b16 %v5144
    %v8119 = vunpack.c.h.b16 %v5144
    %v8120 = vunpack.c.l.b16 %v5145
    %v8121 = vunpack.c.h.b16 %v5145
    %v8122 = vunpack.c.l.b16 %v5146
    %v8123 = vunpack.c.h.b16 %v5146
    %v8124 = vunpack.c.l.b16 %v5147
    %v8125 = vunpack.c.h.b16 %v5147
    %v8126 = vunpack.c.l.b16 %v5148
    %v8127 = vunpack.c.h.b16 %v5148
    %v8128 = vunpack.c.l.b16 %v5149
    %v8129 = vunpack.c.h.b16 %v5149
    %v8130 = vunpack.c.l.b16 %v5150
    %v8131 = vunpack.c.h.b16 %v5150
    %v8132 = vunpack.c.l.b16 %v5151
    %v8133 = vunpack.c.h.b16 %v5151
    %v8134 = vunpack.c.l.b16 %v5152
    %v8135 = vunpack.c.h.b16 %v5152
    %v8136 = vunpack.c.l.b16 %v5153
    %v8137 = vunpack.c.h.b16 %v5153
    %v8138 = vunpack.c.l.b16 %v5154
    %v8139 = vunpack.c.h.b16 %v5154
    %v8140 = vunpack.c.l.b16 %v5155
    %v8141 = vunpack.c.h.b16 %v5155
    %v8142 = vunpack.c.l.b16 %v5156
    %v8143 = vunpack.c.h.b16 %v5156
    %v8144 = vunpack.c.l.b16 %v5157
    %v8145 = vunpack.c.h.b16 %v5157
    %v8146 = vunpack.c.l.b16 %v5158
    %v8147 = vunpack.c.h.b16 %v5158
    %v8148 = vunpack.c.l.b16 %v5159
    %v8149 = vunpack.c.h.b16 %v5159
    %v8150 = vunpack.c.l.b16 %v5160
    %v8151 = vunpack.c.h.b16 %v5160
    %v8152 = vunpack.c.l.b16 %v5161
    %v8153 = vunpack.c.h.b16 %v5161
    %v8154 = vunpack.c.l.b16 %v5162
    %v8155 = vunpack.c.h.b16 %v5162
    %v8156 = vunpack.c.l.b16 %v5163
    %v8157 = vunpack.c.h.b16 %v5163
    %v8158 = vunpack.c.l.b16 %v5164
    %v8159 = vunpack.c.h.b16 %v5164
    %v8160 = vunpack.c.l.b16 %v5165
    %v8161 = vunpack.c.h.b16 %v5165
    %v8162 = vunpack.c.l.b16 %v5166
    %v8163 = vunpack.c.h.b16 %v5166
    %v8164 = vunpack.c.l.b16 %v5167
    %v8165 = vunpack.c.h.b16 %v5167
    %v8166 = vunpack.c.l.b16 %v5168
    %v8167 = vunpack.c.h.b16 %v5168
    %v8168 = vunpack.c.l.b16 %v5169
    %v8169 = vunpack.c.h.b16 %v5169
    %v8170 = vunpack.c.l.b16 %v5170
    %v8171 = vunpack.c.h.b16 %v5170
    %v8172 = vunpack.c.l.b16 %v5171
    %v8173 = vunpack.c.h.b16 %v5171
    %v8174 = vunpack.c.l.b16 %v5172
    %v8175 = vunpack.c.h.b16 %v5172
    %v8176 = vunpack.c.l.b16 %v5173
    %v8177 = vunpack.c.h.b16 %v5173
    %v8178 = vunpack.c.l.b16 %v5174
    %v8179 = vunpack.c.h.b16 %v5174
    %v8180 = vunpack.c.l.b16 %v5175
    %v8181 = vunpack.c.h.b16 %v5175
    %v8182 = vunpack.c.l.b16 %v5176
    %v8183 = vunpack.c.h.b16 %v5176
    %v8184 = vunpack.c.l.b16 %v5177
    %v8185 = vunpack.c.h.b16 %v5177
    %v8186 = vunpack.c.l.b16 %v5178
    %v8187 = vunpack.c.h.b16 %v5178
    %v8188 = vunpack.c.l.b16 %v5179
    %v8189 = vunpack.c.h.b16 %v5179
    %v8190 = vunpack.c.l.b16 %v5180
    %v8191 = vunpack.c.h.b16 %v5180
    %v8192 = vunpack.c.l.b16 %v5181
    %v8193 = vunpack.c.h.b16 %v5181
    %v8194 = vunpack.c.l.b16 %v5182
    %v8195 = vunpack.c.h.b16 %v5182
    %v8196 = vunpack.c.l.b16 %v5183
    %v8197 = vunpack.c.h.b16 %v5183
    %v8198 = vunpack.c.l.b16 %v5184
    %v8199 = vunpack.c.h.b16 %v5184
    %v8200 = vunpack.c.l.b16 %v5185
    %v8201 = vunpack.c.h.b16 %v5185
    %v8202 = vunpack.c.l.b16 %v5186
    %v8203 = vunpack.c.h.b16 %v5186
    %v8204 = vunpack.c.l.b16 %v5187
    %v8205 = vunpack.c.h.b16 %v5187
    %v8206 = vunpack.c.l.b16 %v5188
    %v8207 = vunpack.c.h.b16 %v5188
    %v8208 = vunpack.c.l.b16 %v5189
    %v8209 = vunpack.c.h.b16 %v5189
    %v8210 = vunpack.c.l.b16 %v5190
    %v8211 = vunpack.c.h.b16 %v5190
    %v8212 = vunpack.c.l.b16 %v5191
    %v8213 = vunpack.c.h.b16 %v5191
    %v8214 = vunpack.c.l.b16 %v5192
    %v8215 = vunpack.c.h.b16 %v5192
    %v8216 = vunpack.c.l.b16 %v5193
    %v8217 = vunpack.c.h.b16 %v5193
    %v8218 = vunpack.c.l.b16 %v5194
    %v8219 = vunpack.c.h.b16 %v5194
    %v8220 = vunpack.c.l.b16 %v5195
    %v8221 = vunpack.c.h.b16 %v5195
    %v8222 = vunpack.c.l.b16 %v5196
    %v8223 = vunpack.c.h.b16 %v5196
    %v8224 = vunpack.c.l.b16 %v5197
    %v8225 = vunpack.c.h.b16 %v5197
    %v8226 = vunpack.c.l.b16 %v5198
    %v8227 = vunpack.c.h.b16 %v5198
    %v8228 = vunpack.c.l.b16 %v5199
    %v8229 = vunpack.c.h.b16 %v5199
    %v8230 = vunpack.c.l.b16 %v5200
    %v8231 = vunpack.c.h.b16 %v5200
    %v8232 = vunpack.c.l.b16 %v5201
    %v8233 = vunpack.c.h.b16 %v5201
    %v8234 = vunpack.c.l.b16 %v5202
    %v8235 = vunpack.c.h.b16 %v5202
    %v8236 = vunpack.c.l.b16 %v5203
    %v8237 = vunpack.c.h.b16 %v5203
    %v8238 = vunpack.c.l.b16 %v5204
    %v8239 = vunpack.c.h.b16 %v5204
    %v8240 = vunpack.c.l.b16 %v5205
    %v8241 = vunpack.c.h.b16 %v5205
    %v8242 = vunpack.c.l.b16 %v5206
    %v8243 = vunpack.c.h.b16 %v5206
    %v8244 = vunpack.c.l.b16 %v5207
    %v8245 = vunpack.c.h.b16 %v5207
    %v8246 = vunpack.c.l.b16 %v5208
    %v8247 = vunpack.c.h.b16 %v5208
    %v8248 = vunpack.c.l.b16 %v5209
    %v8249 = vunpack.c.h.b16 %v5209
    %v8250 = vunpack.c.l.b16 %v5210
    %v8251 = vunpack.c.h.b16 %v5210
    %v8252 = vunpack.c.l.b16 %v5211
    %v8253 = vunpack.c.h.b16 %v5211
    %v8254 = vunpack.c.l.b16 %v5212
    %v8255 = vunpack.c.h.b16 %v5212
    %v8256 = vunpack.c.l.b16 %v5213
    %v8257 = vunpack.c.h.b16 %v5213
    %v8258 = vunpack.c.l.b16 %v5214
    %v8259 = vunpack.c.h.b16 %v5214
    %v8260 = vunpack.c.l.b16 %v5215
    %v8261 = vunpack.c.h.b16 %v5215
    %v8262 = vunpack.c.l.b16 %v5216
    %v8263 = vunpack.c.h.b16 %v5216
    %v8264 = vunpack.c.l.b16 %v5217
    %v8265 = vunpack.c.h.b16 %v5217
    %v8266 = vunpack.c.l.b16 %v5218
    %v8267 = vunpack.c.h.b16 %v5218
    %v8268 = vunpack.c.l.b16 %v5219
    %v8269 = vunpack.c.h.b16 %v5219
    %v8270 = vunpack.c.l.b16 %v5220
    %v8271 = vunpack.c.h.b16 %v5220
    %v8272 = vunpack.c.l.b16 %v5221
    %v8273 = vunpack.c.h.b16 %v5221
    %v8274 = vunpack.c.l.b16 %v5222
    %v8275 = vunpack.c.h.b16 %v5222
    %v8276 = vunpack.c.l.b16 %v5223
    %v8277 = vunpack.c.h.b16 %v5223
    %v8278 = vunpack.c.l.b16 %v5224
    %v8279 = vunpack.c.h.b16 %v5224
    %v8280 = vunpack.c.l.b16 %v5225
    %v8281 = vunpack.c.h.b16 %v5225
    %v8282 = vunpack.c.l.b16 %v5226
    %v8283 = vunpack.c.h.b16 %v5226
    %v8284 = vunpack.c.l.b16 %v5227
    %v8285 = vunpack.c.h.b16 %v5227
    %v8286 = vunpack.c.l.b16 %v5228
    %v8287 = vunpack.c.h.b16 %v5228
    %v8288 = vunpack.c.l.b16 %v5229
    %v8289 = vunpack.c.h.b16 %v5229
    %v8290 = vunpack.c.l.b16 %v5230
    %v8291 = vunpack.c.h.b16 %v5230
    %v8292 = vunpack.c.l.b16 %v5231
    %v8293 = vunpack.c.h.b16 %v5231
    %v8294 = vunpack.c.l.b16 %v5232
    %v8295 = vunpack.c.h.b16 %v5232
    %v8296 = vunpack.c.l.b16 %v5233
    %v8297 = vunpack.c.h.b16 %v5233
    %v8298 = vunpack.c.l.b16 %v5234
    %v8299 = vunpack.c.h.b16 %v5234
    %v8300 = vunpack.c.l.b16 %v5235
    %v8301 = vunpack.c.h.b16 %v5235
    %v8302 = vunpack.c.l.b16 %v5236
    %v8303 = vunpack.c.h.b16 %v5236
    %v8304 = vunpack.c.l.b16 %v5237
    %v8305 = vunpack.c.h.b16 %v5237
    %v8306 = vunpack.c.l.b16 %v5238
    %v8307 = vunpack.c.h.b16 %v5238
    %v8308 = vunpack.c.l.b16 %v5239
    %v8309 = vunpack.c.h.b16 %v5239
    %v8310 = vunpack.c.l.b16 %v5240
    %v8311 = vunpack.c.h.b16 %v5240
    %v8312 = vunpack.c.l.b16 %v5241
    %v8313 = vunpack.c.h.b16 %v5241
    %v8314 = vunpack.c.l.b16 %v5242
    %v8315 = vunpack.c.h.b16 %v5242
    %v8316 = vunpack.c.l.b16 %v5243
    %v8317 = vunpack.c.h.b16 %v5243
    %v8318 = vunpack.c.l.b16 %v5244
    %v8319 = vunpack.c.h.b16 %v5244
    %v8320 = vunpack.c.l.b16 %v5245
    %v8321 = vunpack.c.h.b16 %v5245
    %v8322 = vunpack.c.l.b16 %v5246
    %v8323 = vunpack.c.h.b16 %v5246
    %v8324 = vunpack.c.l.b16 %v5247
    %v8325 = vunpack.c.h.b16 %v5247
    %v8326 = vunpack.c.l.b16 %v5248
    %v8327 = vunpack.c.h.b16 %v5248
    %v8328 = vunpack.c.l.b16 %v5249
    %v8329 = vunpack.c.h.b16 %v5249
    %v8330 = vunpack.c.l.b16 %v5250
    %v8331 = vunpack.c.h.b16 %v5250
    %v8332 = vunpack.c.l.b16 %v5251
    %v8333 = vunpack.c.h.b16 %v5251
    %v8334 = vunpack.c.l.b16 %v5252
    %v8335 = vunpack.c.h.b16 %v5252
    %v8336 = vunpack.c.l.b16 %v5253
    %v8337 = vunpack.c.h.b16 %v5253
    %v8338 = vunpack.c.l.b16 %v5254
    %v8339 = vunpack.c.h.b16 %v5254
    %v8340 = vunpack.c.l.b16 %v5255
    %v8341 = vunpack.c.h.b16 %v5255
    %v8342 = vunpack.c.l.b16 %v5256
    %v8343 = vunpack.c.h.b16 %v5256
    %v8344 = vunpack.c.l.b16 %v5257
    %v8345 = vunpack.c.h.b16 %v5257
    %v8346 = vunpack.c.l.b16 %v5258
    %v8347 = vunpack.c.h.b16 %v5258
    %v8348 = vunpack.c.l.b16 %v5259
    %v8349 = vunpack.c.h.b16 %v5259
    %v8350 = vunpack.c.l.b16 %v5260
    %v8351 = vunpack.c.h.b16 %v5260
    %v8352 = vunpack.c.l.b16 %v5261
    %v8353 = vunpack.c.h.b16 %v5261
    %v8354 = vunpack.c.l.b16 %v5262
    %v8355 = vunpack.c.h.b16 %v5262
    %v8356 = vunpack.c.l.b16 %v5263
    %v8357 = vunpack.c.h.b16 %v5263
    %v8358 = vunpack.c.l.b16 %v5264
    %v8359 = vunpack.c.h.b16 %v5264
    %v8360 = vunpack.c.l.b16 %v5265
    %v8361 = vunpack.c.h.b16 %v5265
    %v8362 = vunpack.c.l.b16 %v5266
    %v8363 = vunpack.c.h.b16 %v5266
    %v8364 = vunpack.c.l.b16 %v5267
    %v8365 = vunpack.c.h.b16 %v5267
    %v8366 = vunpack.c.l.b16 %v5268
    %v8367 = vunpack.c.h.b16 %v5268
    %v8368 = vunpack.c.l.b16 %v5269
    %v8369 = vunpack.c.h.b16 %v5269
    %v8370 = vunpack.c.l.b16 %v5270
    %v8371 = vunpack.c.h.b16 %v5270
    %v8372 = vunpack.c.l.b16 %v5271
    %v8373 = vunpack.c.h.b16 %v5271
    %v8374 = vunpack.c.l.b16 %v5272
    %v8375 = vunpack.c.h.b16 %v5272
    %v8376 = vunpack.c.l.b16 %v5273
    %v8377 = vunpack.c.h.b16 %v5273
    %v8378 = vunpack.c.l.b16 %v5274
    %v8379 = vunpack.c.h.b16 %v5274
    %v8380 = vunpack.c.l.b16 %v5275
    %v8381 = vunpack.c.h.b16 %v5275
    %v8382 = vunpack.c.l.b16 %v5276
    %v8383 = vunpack.c.h.b16 %v5276
    %v8384 = vunpack.c.l.b16 %v5277
    %v8385 = vunpack.c.h.b16 %v5277
    %v8386 = vpack.c.b16 %v6354, %v6338
    %v8387 = vpack.c.b16 %v6355, %v6339
    %v8388 = vpack.c.b16 %v6356, %v6340
    %v8389 = vpack.c.b16 %v6357, %v6341
    %v8390 = vpack.c.b16 %v6358, %v6342
    %v8391 = vpack.c.b16 %v6359, %v6343
    %v8392 = vpack.c.b16 %v6360, %v6344
    %v8393 = vpack.c.b16 %v6361, %v6345
    %v8394 = vpack.c.b16 %v6362, %v6346
    %v8395 = vpack.c.b16 %v6363, %v6347
    %v8396 = vpack.c.b16 %v6364, %v6348
    %v8397 = vpack.c.b16 %v6365, %v6349
    %v8398 = vpack.c.b16 %v6366, %v6350
    %v8399 = vpack.c.b16 %v6367, %v6351
    %v8400 = vpack.c.b16 %v6368, %v6352
    %v8401 = vpack.c.b16 %v6369, %v6353
    %v8402 = vpack.c.b16 %v6386, %v6370
    %v8403 = vpack.c.b16 %v6387, %v6371
    %v8404 = vpack.c.b16 %v6388, %v6372
    %v8405 = vpack.c.b16 %v6389, %v6373
    %v8406 = vpack.c.b16 %v6390, %v6374
    %v8407 = vpack.c.b16 %v6391, %v6375
    %v8408 = vpack.c.b16 %v6392, %v6376
    %v8409 = vpack.c.b16 %v6393, %v6377
    %v8410 = vpack.c.b16 %v6394, %v6378
    %v8411 = vpack.c.b16 %v6395, %v6379
    %v8412 = vpack.c.b16 %v6396, %v6380
    %v8413 = vpack.c.b16 %v6397, %v6381
    %v8414 = vpack.c.b16 %v6398, %v6382
    %v8415 = vpack.c.b16 %v6399, %v6383
    %v8416 = vpack.c.b16 %v6400, %v6384
    %v8417 = vpack.c.b16 %v6401, %v6385
    %v8418 = vpack.c.b16 %v6418, %v6402
    %v8419 = vpack.c.b16 %v6419, %v6403
    %v8420 = vpack.c.b16 %v6420, %v6404
    %v8421 = vpack.c.b16 %v6421, %v6405
    %v8422 = vpack.c.b16 %v6422, %v6406
    %v8423 = vpack.c.b16 %v6423, %v6407
    %v8424 = vpack.c.b16 %v6424, %v6408
    %v8425 = vpack.c.b16 %v6425, %v6409
    %v8426 = vpack.c.b16 %v6426, %v6410
    %v8427 = vpack.c.b16 %v6427, %v6411
    %v8428 = vpack.c.b16 %v6428, %v6412
    %v8429 = vpack.c.b16 %v6429, %v6413
    %v8430 = vpack.c.b16 %v6430, %v6414
    %v8431 = vpack.c.b16 %v6431, %v6415
    %v8432 = vpack.c.b16 %v6432, %v6416
    %v8433 = vpack.c.b16 %v6433, %v6417
    %v8434 = vpack.c.b16 %v6450, %v6434
    %v8435 = vpack.c.b16 %v6451, %v6435
    %v8436 = vpack.c.b16 %v6452, %v6436
    %v8437 = vpack.c.b16 %v6453, %v6437
    %v8438 = vpack.c.b16 %v6454, %v6438
    %v8439 = vpack.c.b16 %v6455, %v6439
    %v8440 = vpack.c.b16 %v6456, %v6440
    %v8441 = vpack.c.b16 %v6457, %v6441
    %v8442 = vpack.c.b16 %v6458, %v6442
    %v8443 = vpack.c.b16 %v6459, %v6443
    %v8444 = vpack.c.b16 %v6460, %v6444
    %v8445 = vpack.c.b16 %v6461, %v6445
    %v8446 = vpack.c.b16 %v6462, %v6446
    %v8447 = vpack.c.b16 %v6463, %v6447
    %v8448 = vpack.c.b16 %v6464, %v6448
    %v8449 = vpack.c.b16 %v6465, %v6449
    %v8450 = vpack.c.b16 %v6482, %v6466
    %v8451 = vpack.c.b16 %v6483, %v6467
    %v8452 = vpack.c.b16 %v6484, %v6468
    %v8453 = vpack.c.b16 %v6485, %v6469
    %v8454 = vpack.c.b16 %v6486, %v6470
    %v8455 = vpack.c.b16 %v6487, %v6471
    %v8456 = vpack.c.b16 %v6488, %v6472
    %v8457 = vpack.c.b16 %v6489, %v6473
    %v8458 = vpack.c.b16 %v6490, %v6474
    %v8459 = vpack.c.b16 %v6491, %v6475
    %v8460 = vpack.c.b16 %v6492, %v6476
    %v8461 = vpack.c.b16 %v6493, %v6477
    %v8462 = vpack.c.b16 %v6494, %v6478
    %v8463 = vpack.c.b16 %v6495, %v6479
    %v8464 = vpack.c.b16 %v6496, %v6480
    %v8465 = vpack.c.b16 %v6497, %v6481
    %v8466 = vpack.c.b16 %v6514, %v6498
    %v8467 = vpack.c.b16 %v6515, %v6499
    %v8468 = vpack.c.b16 %v6516, %v6500
    %v8469 = vpack.c.b16 %v6517, %v6501
    %v8470 = vpack.c.b16 %v6518, %v6502
    %v8471 = vpack.c.b16 %v6519, %v6503
    %v8472 = vpack.c.b16 %v6520, %v6504
    %v8473 = vpack.c.b16 %v6521, %v6505
    %v8474 = vpack.c.b16 %v6522, %v6506
    %v8475 = vpack.c.b16 %v6523, %v6507
    %v8476 = vpack.c.b16 %v6524, %v6508
    %v8477 = vpack.c.b16 %v6525, %v6509
    %v8478 = vpack.c.b16 %v6526, %v6510
    %v8479 = vpack.c.b16 %v6527, %v6511
    %v8480 = vpack.c.b16 %v6528, %v6512
    %v8481 = vpack.c.b16 %v6529, %v6513
    %v8482 = vpack.c.b16 %v6546, %v6530
    %v8483 = vpack.c.b16 %v6547, %v6531
    %v8484 = vpack.c.b16 %v6548, %v6532
    %v8485 = vpack.c.b16 %v6549, %v6533
    %v8486 = vpack.c.b16 %v6550, %v6534
    %v8487 = vpack.c.b16 %v6551, %v6535
    %v8488 = vpack.c.b16 %v6552, %v6536
    %v8489 = vpack.c.b16 %v6553, %v6537
    %v8490 = vpack.c.b16 %v6554, %v6538
    %v8491 = vpack.c.b16 %v6555, %v6539
    %v8492 = vpack.c.b16 %v6556, %v6540
    %v8493 = vpack.c.b16 %v6557, %v6541
    %v8494 = vpack.c.b16 %v6558, %v6542
    %v8495 = vpack.c.b16 %v6559, %v6543
    %v8496 = vpack.c.b16 %v6560, %v6544
    %v8497 = vpack.c.b16 %v6561, %v6545
    %v8498 = vpack.c.b16 %v6578, %v6562
    %v8499 = vpack.c.b16 %v6579, %v6563
    %v8500 = vpack.c.b16 %v6580, %v6564
    %v8501 = vpack.c.b16 %v6581, %v6565
    %v8502 = vpack.c.b16 %v6582, %v6566
    %v8503 = vpack.c.b16 %v6583, %v6567
    %v8504 = vpack.c.b16 %v6584, %v6568
    %v8505 = vpack.c.b16 %v6585, %v6569
    %v8506 = vpack.c.b16 %v6586, %v6570
    %v8507 = vpack.c.b16 %v6587, %v6571
    %v8508 = vpack.c.b16 %v6588, %v6572
    %v8509 = vpack.c.b16 %v6589, %v6573
    %v8510 = vpack.c.b16 %v6590, %v6574
    %v8511 = vpack.c.b16 %v6591, %v6575
    %v8512 = vpack.c.b16 %v6592, %v6576
    %v8513 = vpack.c.b16 %v6593, %v6577
    %v8514 = vpack.c.b16 %v6610, %v6594
    %v8515 = vpack.c.b16 %v6611, %v6595
    %v8516 = vpack.c.b16 %v6612, %v6596
    %v8517 = vpack.c.b16 %v6613, %v6597
    %v8518 = vpack.c.b16 %v6614, %v6598
    %v8519 = vpack.c.b16 %v6615, %v6599
    %v8520 = vpack.c.b16 %v6616, %v6600
    %v8521 = vpack.c.b16 %v6617, %v6601
    %v8522 = vpack.c.b16 %v6618, %v6602
    %v8523 = vpack.c.b16 %v6619, %v6603
    %v8524 = vpack.c.b16 %v6620, %v6604
    %v8525 = vpack.c.b16 %v6621, %v6605
    %v8526 = vpack.c.b16 %v6622, %v6606
    %v8527 = vpack.c.b16 %v6623, %v6607
    %v8528 = vpack.c.b16 %v6624, %v6608
    %v8529 = vpack.c.b16 %v6625, %v6609
    %v8530 = vpack.c.b16 %v6642, %v6626
    %v8531 = vpack.c.b16 %v6643, %v6627
    %v8532 = vpack.c.b16 %v6644, %v6628
    %v8533 = vpack.c.b16 %v6645, %v6629
    %v8534 = vpack.c.b16 %v6646, %v6630
    %v8535 = vpack.c.b16 %v6647, %v6631
    %v8536 = vpack.c.b16 %v6648, %v6632
    %v8537 = vpack.c.b16 %v6649, %v6633
    %v8538 = vpack.c.b16 %v6650, %v6634
    %v8539 = vpack.c.b16 %v6651, %v6635
    %v8540 = vpack.c.b16 %v6652, %v6636
    %v8541 = vpack.c.b16 %v6653, %v6637
    %v8542 = vpack.c.b16 %v6654, %v6638
    %v8543 = vpack.c.b16 %v6655, %v6639
    %v8544 = vpack.c.b16 %v6656, %v6640
    %v8545 = vpack.c.b16 %v6657, %v6641
    %v8546 = vpack.c.b16 %v6674, %v6658
    %v8547 = vpack.c.b16 %v6675, %v6659
    %v8548 = vpack.c.b16 %v6676, %v6660
    %v8549 = vpack.c.b16 %v6677, %v6661
    %v8550 = vpack.c.b16 %v6678, %v6662
    %v8551 = vpack.c.b16 %v6679, %v6663
    %v8552 = vpack.c.b16 %v6680, %v6664
    %v8553 = vpack.c.b16 %v6681, %v6665
    %v8554 = vpack.c.b16 %v6682, %v6666
    %v8555 = vpack.c.b16 %v6683, %v6667
    %v8556 = vpack.c.b16 %v6684, %v6668
    %v8557 = vpack.c.b16 %v6685, %v6669
    %v8558 = vpack.c.b16 %v6686, %v6670
    %v8559 = vpack.c.b16 %v6687, %v6671
    %v8560 = vpack.c.b16 %v6688, %v6672
    %v8561 = vpack.c.b16 %v6689, %v6673
    %v8562 = vpack.c.b16 %v6706, %v6690
    %v8563 = vpack.c.b16 %v6707, %v6691
    %v8564 = vpack.c.b16 %v6708, %v6692
    %v8565 = vpack.c.b16 %v6709, %v6693
    %v8566 = vpack.c.b16 %v6710, %v6694
    %v8567 = vpack.c.b16 %v6711, %v6695
    %v8568 = vpack.c.b16 %v6712, %v6696
    %v8569 = vpack.c.b16 %v6713, %v6697
    %v8570 = vpack.c.b16 %v6714, %v6698
    %v8571 = vpack.c.b16 %v6715, %v6699
    %v8572 = vpack.c.b16 %v6716, %v6700
    %v8573 = vpack.c.b16 %v6717, %v6701
    %v8574 = vpack.c.b16 %v6718, %v6702
    %v8575 = vpack.c.b16 %v6719, %v6703
    %v8576 = vpack.c.b16 %v6720, %v6704
    %v8577 = vpack.c.b16 %v6721, %v6705
    %v8578 = vpack.c.b16 %v6738, %v6722
    %v8579 = vpack.c.b16 %v6739, %v6723
    %v8580 = vpack.c.b16 %v6740, %v6724
    %v8581 = vpack.c.b16 %v6741, %v6725
    %v8582 = vpack.c.b16 %v6742, %v6726
    %v8583 = vpack.c.b16 %v6743, %v6727
    %v8584 = vpack.c.b16 %v6744, %v6728
    %v8585 = vpack.c.b16 %v6745, %v6729
    %v8586 = vpack.c.b16 %v6746, %v6730
    %v8587 = vpack.c.b16 %v6747, %v6731
    %v8588 = vpack.c.b16 %v6748, %v6732
    %v8589 = vpack.c.b16 %v6749, %v6733
    %v8590 = vpack.c.b16 %v6750, %v6734
    %v8591 = vpack.c.b16 %v6751, %v6735
    %v8592 = vpack.c.b16 %v6752, %v6736
    %v8593 = vpack.c.b16 %v6753, %v6737
    %v8594 = vpack.c.b16 %v6770, %v6754
    %v8595 = vpack.c.b16 %v6771, %v6755
    %v8596 = vpack.c.b16 %v6772, %v6756
    %v8597 = vpack.c.b16 %v6773, %v6757
    %v8598 = vpack.c.b16 %v6774, %v6758
    %v8599 = vpack.c.b16 %v6775, %v6759
    %v8600 = vpack.c.b16 %v6776, %v6760
    %v8601 = vpack.c.b16 %v6777, %v6761
    %v8602 = vpack.c.b16 %v6778, %v6762
    %v8603 = vpack.c.b16 %v6779, %v6763
    %v8604 = vpack.c.b16 %v6780, %v6764
    %v8605 = vpack.c.b16 %v6781, %v6765
    %v8606 = vpack.c.b16 %v6782, %v6766
    %v8607 = vpack.c.b16 %v6783, %v6767
    %v8608 = vpack.c.b16 %v6784, %v6768
    %v8609 = vpack.c.b16 %v6785, %v6769
    %v8610 = vpack.c.b16 %v6802, %v6786
    %v8611 = vpack.c.b16 %v6803, %v6787
    %v8612 = vpack.c.b16 %v6804, %v6788
    %v8613 = vpack.c.b16 %v6805, %v6789
    %v8614 = vpack.c.b16 %v6806, %v6790
    %v8615 = vpack.c.b16 %v6807, %v6791
    %v8616 = vpack.c.b16 %v6808, %v6792
    %v8617 = vpack.c.b16 %v6809, %v6793
    %v8618 = vpack.c.b16 %v6810, %v6794
    %v8619 = vpack.c.b16 %v6811, %v6795
    %v8620 = vpack.c.b16 %v6812, %v6796
    %v8621 = vpack.c.b16 %v6813, %v6797
    %v8622 = vpack.c.b16 %v6814, %v6798
    %v8623 = vpack.c.b16 %v6815, %v6799
    %v8624 = vpack.c.b16 %v6816, %v6800
    %v8625 = vpack.c.b16 %v6817, %v6801
    %v8626 = vpack.c.b16 %v6834, %v6818
    %v8627 = vpack.c.b16 %v6835, %v6819
    %v8628 = vpack.c.b16 %v6836, %v6820
    %v8629 = vpack.c.b16 %v6837, %v6821
    %v8630 = vpack.c.b16 %v6838, %v6822
    %v8631 = vpack.c.b16 %v6839, %v6823
    %v8632 = vpack.c.b16 %v6840, %v6824
    %v8633 = vpack.c.b16 %v6841, %v6825
    %v8634 = vpack.c.b16 %v6842, %v6826
    %v8635 = vpack.c.b16 %v6843, %v6827
    %v8636 = vpack.c.b16 %v6844, %v6828
    %v8637 = vpack.c.b16 %v6845, %v6829
    %v8638 = vpack.c.b16 %v6846, %v6830
    %v8639 = vpack.c.b16 %v6847, %v6831
    %v8640 = vpack.c.b16 %v6848, %v6832
    %v8641 = vpack.c.b16 %v6849, %v6833
    %v8642 = vpack.c.b16 %v6866, %v6850
    %v8643 = vpack.c.b16 %v6867, %v6851
    %v8644 = vpack.c.b16 %v6868, %v6852
    %v8645 = vpack.c.b16 %v6869, %v6853
    %v8646 = vpack.c.b16 %v6870, %v6854
    %v8647 = vpack.c.b16 %v6871, %v6855
    %v8648 = vpack.c.b16 %v6872, %v6856
    %v8649 = vpack.c.b16 %v6873, %v6857
    %v8650 = vpack.c.b16 %v6874, %v6858
    %v8651 = vpack.c.b16 %v6875, %v6859
    %v8652 = vpack.c.b16 %v6876, %v6860
    %v8653 = vpack.c.b16 %v6877, %v6861
    %v8654 = vpack.c.b16 %v6878, %v6862
    %v8655 = vpack.c.b16 %v6879, %v6863
    %v8656 = vpack.c.b16 %v6880, %v6864
    %v8657 = vpack.c.b16 %v6881, %v6865
    %v8658 = vpack.c.b16 %v6898, %v6882
    %v8659 = vpack.c.b16 %v6899, %v6883
    %v8660 = vpack.c.b16 %v6900, %v6884
    %v8661 = vpack.c.b16 %v6901, %v6885
    %v8662 = vpack.c.b16 %v6902, %v6886
    %v8663 = vpack.c.b16 %v6903, %v6887
    %v8664 = vpack.c.b16 %v6904, %v6888
    %v8665 = vpack.c.b16 %v6905, %v6889
    %v8666 = vpack.c.b16 %v6906, %v6890
    %v8667 = vpack.c.b16 %v6907, %v6891
    %v8668 = vpack.c.b16 %v6908, %v6892
    %v8669 = vpack.c.b16 %v6909, %v6893
    %v8670 = vpack.c.b16 %v6910, %v6894
    %v8671 = vpack.c.b16 %v6911, %v6895
    %v8672 = vpack.c.b16 %v6912, %v6896
    %v8673 = vpack.c.b16 %v6913, %v6897
    %v8674 = vpack.c.b16 %v6930, %v6914
    %v8675 = vpack.c.b16 %v6931, %v6915
    %v8676 = vpack.c.b16 %v6932, %v6916
    %v8677 = vpack.c.b16 %v6933, %v6917
    %v8678 = vpack.c.b16 %v6934, %v6918
    %v8679 = vpack.c.b16 %v6935, %v6919
    %v8680 = vpack.c.b16 %v6936, %v6920
    %v8681 = vpack.c.b16 %v6937, %v6921
    %v8682 = vpack.c.b16 %v6938, %v6922
    %v8683 = vpack.c.b16 %v6939, %v6923
    %v8684 = vpack.c.b16 %v6940, %v6924
    %v8685 = vpack.c.b16 %v6941, %v6925
    %v8686 = vpack.c.b16 %v6942, %v6926
    %v8687 = vpack.c.b16 %v6943, %v6927
    %v8688 = vpack.c.b16 %v6944, %v6928
    %v8689 = vpack.c.b16 %v6945, %v6929
    %v8690 = vpack.c.b16 %v6962, %v6946
    %v8691 = vpack.c.b16 %v6963, %v6947
    %v8692 = vpack.c.b16 %v6964, %v6948
    %v8693 = vpack.c.b16 %v6965, %v6949
    %v8694 = vpack.c.b16 %v6966, %v6950
    %v8695 = vpack.c.b16 %v6967, %v6951
    %v8696 = vpack.c.b16 %v6968, %v6952
    %v8697 = vpack.c.b16 %v6969, %v6953
    %v8698 = vpack.c.b16 %v6970, %v6954
    %v8699 = vpack.c.b16 %v6971, %v6955
    %v8700 = vpack.c.b16 %v6972, %v6956
    %v8701 = vpack.c.b16 %v6973, %v6957
    %v8702 = vpack.c.b16 %v6974, %v6958
    %v8703 = vpack.c.b16 %v6975, %v6959
    %v8704 = vpack.c.b16 %v6976, %v6960
    %v8705 = vpack.c.b16 %v6977, %v6961
    %v8706 = vpack.c.b16 %v6994, %v6978
    %v8707 = vpack.c.b16 %v6995, %v6979
    %v8708 = vpack.c.b16 %v6996, %v6980
    %v8709 = vpack.c.b16 %v6997, %v6981
    %v8710 = vpack.c.b16 %v6998, %v6982
    %v8711 = vpack.c.b16 %v6999, %v6983
    %v8712 = vpack.c.b16 %v7000, %v6984
    %v8713 = vpack.c.b16 %v7001, %v6985
    %v8714 = vpack.c.b16 %v7002, %v6986
    %v8715 = vpack.c.b16 %v7003, %v6987
    %v8716 = vpack.c.b16 %v7004, %v6988
    %v8717 = vpack.c.b16 %v7005, %v6989
    %v8718 = vpack.c.b16 %v7006, %v6990
    %v8719 = vpack.c.b16 %v7007, %v6991
    %v8720 = vpack.c.b16 %v7008, %v6992
    %v8721 = vpack.c.b16 %v7009, %v6993
    %v8722 = vpack.c.b16 %v7026, %v7010
    %v8723 = vpack.c.b16 %v7027, %v7011
    %v8724 = vpack.c.b16 %v7028, %v7012
    %v8725 = vpack.c.b16 %v7029, %v7013
    %v8726 = vpack.c.b16 %v7030, %v7014
    %v8727 = vpack.c.b16 %v7031, %v7015
    %v8728 = vpack.c.b16 %v7032, %v7016
    %v8729 = vpack.c.b16 %v7033, %v7017
    %v8730 = vpack.c.b16 %v7034, %v7018
    %v8731 = vpack.c.b16 %v7035, %v7019
    %v8732 = vpack.c.b16 %v7036, %v7020
    %v8733 = vpack.c.b16 %v7037, %v7021
    %v8734 = vpack.c.b16 %v7038, %v7022
    %v8735 = vpack.c.b16 %v7039, %v7023
    %v8736 = vpack.c.b16 %v7040, %v7024
    %v8737 = vpack.c.b16 %v7041, %v7025
    %v8738 = vpack.c.b16 %v7058, %v7042
    %v8739 = vpack.c.b16 %v7059, %v7043
    %v8740 = vpack.c.b16 %v7060, %v7044
    %v8741 = vpack.c.b16 %v7061, %v7045
    %v8742 = vpack.c.b16 %v7062, %v7046
    %v8743 = vpack.c.b16 %v7063, %v7047
    %v8744 = vpack.c.b16 %v7064, %v7048
    %v8745 = vpack.c.b16 %v7065, %v7049
    %v8746 = vpack.c.b16 %v7066, %v7050
    %v8747 = vpack.c.b16 %v7067, %v7051
    %v8748 = vpack.c.b16 %v7068, %v7052
    %v8749 = vpack.c.b16 %v7069, %v7053
    %v8750 = vpack.c.b16 %v7070, %v7054
    %v8751 = vpack.c.b16 %v7071, %v7055
    %v8752 = vpack.c.b16 %v7072, %v7056
    %v8753 = vpack.c.b16 %v7073, %v7057
    %v8754 = vpack.c.b16 %v7090, %v7074
    %v8755 = vpack.c.b16 %v7091, %v7075
    %v8756 = vpack.c.b16 %v7092, %v7076
    %v8757 = vpack.c.b16 %v7093, %v7077
    %v8758 = vpack.c.b16 %v7094, %v7078
    %v8759 = vpack.c.b16 %v7095, %v7079
    %v8760 = vpack.c.b16 %v7096, %v7080
    %v8761 = vpack.c.b16 %v7097, %v7081
    %v8762 = vpack.c.b16 %v7098, %v7082
    %v8763 = vpack.c.b16 %v7099, %v7083
    %v8764 = vpack.c.b16 %v7100, %v7084
    %v8765 = vpack.c.b16 %v7101, %v7085
    %v8766 = vpack.c.b16 %v7102, %v7086
    %v8767 = vpack.c.b16 %v7103, %v7087
    %v8768 = vpack.c.b16 %v7104, %v7088
    %v8769 = vpack.c.b16 %v7105, %v7089
    %v8770 = vpack.c.b16 %v7122, %v7106
    %v8771 = vpack.c.b16 %v7123, %v7107
    %v8772 = vpack.c.b16 %v7124, %v7108
    %v8773 = vpack.c.b16 %v7125, %v7109
    %v8774 = vpack.c.b16 %v7126, %v7110
    %v8775 = vpack.c.b16 %v7127, %v7111
    %v8776 = vpack.c.b16 %v7128, %v7112
    %v8777 = vpack.c.b16 %v7129, %v7113
    %v8778 = vpack.c.b16 %v7130, %v7114
    %v8779 = vpack.c.b16 %v7131, %v7115
    %v8780 = vpack.c.b16 %v7132, %v7116
    %v8781 = vpack.c.b16 %v7133, %v7117
    %v8782 = vpack.c.b16 %v7134, %v7118
    %v8783 = vpack.c.b16 %v7135, %v7119
    %v8784 = vpack.c.b16 %v7136, %v7120
    %v8785 = vpack.c.b16 %v7137, %v7121
    %v8786 = vpack.c.b16 %v7154, %v7138
    %v8787 = vpack.c.b16 %v7155, %v7139
    %v8788 = vpack.c.b16 %v7156, %v7140
    %v8789 = vpack.c.b16 %v7157, %v7141
    %v8790 = vpack.c.b16 %v7158, %v7142
    %v8791 = vpack.c.b16 %v7159, %v7143
    %v8792 = vpack.c.b16 %v7160, %v7144
    %v8793 = vpack.c.b16 %v7161, %v7145
    %v8794 = vpack.c.b16 %v7162, %v7146
    %v8795 = vpack.c.b16 %v7163, %v7147
    %v8796 = vpack.c.b16 %v7164, %v7148
    %v8797 = vpack.c.b16 %v7165, %v7149
    %v8798 = vpack.c.b16 %v7166, %v7150
    %v8799 = vpack.c.b16 %v7167, %v7151
    %v8800 = vpack.c.b16 %v7168, %v7152
    %v8801 = vpack.c.b16 %v7169, %v7153
    %v8802 = vpack.c.b16 %v7186, %v7170
    %v8803 = vpack.c.b16 %v7187, %v7171
    %v8804 = vpack.c.b16 %v7188, %v7172
    %v8805 = vpack.c.b16 %v7189, %v7173
    %v8806 = vpack.c.b16 %v7190, %v7174
    %v8807 = vpack.c.b16 %v7191, %v7175
    %v8808 = vpack.c.b16 %v7192, %v7176
    %v8809 = vpack.c.b16 %v7193, %v7177
    %v8810 = vpack.c.b16 %v7194, %v7178
    %v8811 = vpack.c.b16 %v7195, %v7179
    %v8812 = vpack.c.b16 %v7196, %v7180
    %v8813 = vpack.c.b16 %v7197, %v7181
    %v8814 = vpack.c.b16 %v7198, %v7182
    %v8815 = vpack.c.b16 %v7199, %v7183
    %v8816 = vpack.c.b16 %v7200, %v7184
    %v8817 = vpack.c.b16 %v7201, %v7185
    %v8818 = vpack.c.b16 %v7218, %v7202
    %v8819 = vpack.c.b16 %v7219, %v7203
    %v8820 = vpack.c.b16 %v7220, %v7204
    %v8821 = vpack.c.b16 %v7221, %v7205
    %v8822 = vpack.c.b16 %v7222, %v7206
    %v8823 = vpack.c.b16 %v7223, %v7207
    %v8824 = vpack.c.b16 %v7224, %v7208
    %v8825 = vpack.c.b16 %v7225, %v7209
    %v8826 = vpack.c.b16 %v7226, %v7210
    %v8827 = vpack.c.b16 %v7227, %v7211
    %v8828 = vpack.c.b16 %v7228, %v7212
    %v8829 = vpack.c.b16 %v7229, %v7213
    %v8830 = vpack.c.b16 %v7230, %v7214
    %v8831 = vpack.c.b16 %v7231, %v7215
    %v8832 = vpack.c.b16 %v7232, %v7216
    %v8833 = vpack.c.b16 %v7233, %v7217
    %v8834 = vpack.c.b16 %v7250, %v7234
    %v8835 = vpack.c.b16 %v7251, %v7235
    %v8836 = vpack.c.b16 %v7252, %v7236
    %v8837 = vpack.c.b16 %v7253, %v7237
    %v8838 = vpack.c.b16 %v7254, %v7238
    %v8839 = vpack.c.b16 %v7255, %v7239
    %v8840 = vpack.c.b16 %v7256, %v7240
    %v8841 = vpack.c.b16 %v7257, %v7241
    %v8842 = vpack.c.b16 %v7258, %v7242
    %v8843 = vpack.c.b16 %v7259, %v7243
    %v8844 = vpack.c.b16 %v7260, %v7244
    %v8845 = vpack.c.b16 %v7261, %v7245
    %v8846 = vpack.c.b16 %v7262, %v7246
    %v8847 = vpack.c.b16 %v7263, %v7247
    %v8848 = vpack.c.b16 %v7264, %v7248
    %v8849 = vpack.c.b16 %v7265, %v7249
    %v8850 = vpack.c.b16 %v7282, %v7266
    %v8851 = vpack.c.b16 %v7283, %v7267
    %v8852 = vpack.c.b16 %v7284, %v7268
    %v8853 = vpack.c.b16 %v7285, %v7269
    %v8854 = vpack.c.b16 %v7286, %v7270
    %v8855 = vpack.c.b16 %v7287, %v7271
    %v8856 = vpack.c.b16 %v7288, %v7272
    %v8857 = vpack.c.b16 %v7289, %v7273
    %v8858 = vpack.c.b16 %v7290, %v7274
    %v8859 = vpack.c.b16 %v7291, %v7275
    %v8860 = vpack.c.b16 %v7292, %v7276
    %v8861 = vpack.c.b16 %v7293, %v7277
    %v8862 = vpack.c.b16 %v7294, %v7278
    %v8863 = vpack.c.b16 %v7295, %v7279
    %v8864 = vpack.c.b16 %v7296, %v7280
    %v8865 = vpack.c.b16 %v7297, %v7281
    %v8866 = vpack.c.b16 %v7314, %v7298
    %v8867 = vpack.c.b16 %v7315, %v7299
    %v8868 = vpack.c.b16 %v7316, %v7300
    %v8869 = vpack.c.b16 %v7317, %v7301
    %v8870 = vpack.c.b16 %v7318, %v7302
    %v8871 = vpack.c.b16 %v7319, %v7303
    %v8872 = vpack.c.b16 %v7320, %v7304
    %v8873 = vpack.c.b16 %v7321, %v7305
    %v8874 = vpack.c.b16 %v7322, %v7306
    %v8875 = vpack.c.b16 %v7323, %v7307
    %v8876 = vpack.c.b16 %v7324, %v7308
    %v8877 = vpack.c.b16 %v7325, %v7309
    %v8878 = vpack.c.b16 %v7326, %v7310
    %v8879 = vpack.c.b16 %v7327, %v7311
    %v8880 = vpack.c.b16 %v7328, %v7312
    %v8881 = vpack.c.b16 %v7329, %v7313
    %v8882 = vpack.c.b16 %v7346, %v7330
    %v8883 = vpack.c.b16 %v7347, %v7331
    %v8884 = vpack.c.b16 %v7348, %v7332
    %v8885 = vpack.c.b16 %v7349, %v7333
    %v8886 = vpack.c.b16 %v7350, %v7334
    %v8887 = vpack.c.b16 %v7351, %v7335
    %v8888 = vpack.c.b16 %v7352, %v7336
    %v8889 = vpack.c.b16 %v7353, %v7337
    %v8890 = vpack.c.b16 %v7354, %v7338
    %v8891 = vpack.c.b16 %v7355, %v7339
    %v8892 = vpack.c.b16 %v7356, %v7340
    %v8893 = vpack.c.b16 %v7357, %v7341
    %v8894 = vpack.c.b16 %v7358, %v7342
    %v8895 = vpack.c.b16 %v7359, %v7343
    %v8896 = vpack.c.b16 %v7360, %v7344
    %v8897 = vpack.c.b16 %v7361, %v7345
    %v8898 = vpack.c.b16 %v7378, %v7362
    %v8899 = vpack.c.b16 %v7379, %v7363
    %v8900 = vpack.c.b16 %v7380, %v7364
    %v8901 = vpack.c.b16 %v7381, %v7365
    %v8902 = vpack.c.b16 %v7382, %v7366
    %v8903 = vpack.c.b16 %v7383, %v7367
    %v8904 = vpack.c.b16 %v7384, %v7368
    %v8905 = vpack.c.b16 %v7385, %v7369
    %v8906 = vpack.c.b16 %v7386, %v7370
    %v8907 = vpack.c.b16 %v7387, %v7371
    %v8908 = vpack.c.b16 %v7388, %v7372
    %v8909 = vpack.c.b16 %v7389, %v7373
    %v8910 = vpack.c.b16 %v7390, %v7374
    %v8911 = vpack.c.b16 %v7391, %v7375
    %v8912 = vpack.c.b16 %v7392, %v7376
    %v8913 = vpack.c.b16 %v7393, %v7377
    %v8914 = vpack.c.b16 %v7410, %v7394
    %v8915 = vpack.c.b16 %v7411, %v7395
    %v8916 = vpack.c.b16 %v7412, %v7396
    %v8917 = vpack.c.b16 %v7413, %v7397
    %v8918 = vpack.c.b16 %v7414, %v7398
    %v8919 = vpack.c.b16 %v7415, %v7399
    %v8920 = vpack.c.b16 %v7416, %v7400
    %v8921 = vpack.c.b16 %v7417, %v7401
    %v8922 = vpack.c.b16 %v7418, %v7402
    %v8923 = vpack.c.b16 %v7419, %v7403
    %v8924 = vpack.c.b16 %v7420, %v7404
    %v8925 = vpack.c.b16 %v7421, %v7405
    %v8926 = vpack.c.b16 %v7422, %v7406
    %v8927 = vpack.c.b16 %v7423, %v7407
    %v8928 = vpack.c.b16 %v7424, %v7408
    %v8929 = vpack.c.b16 %v7425, %v7409
    %v8930 = vpack.c.b16 %v7442, %v7426
    %v8931 = vpack.c.b16 %v7443, %v7427
    %v8932 = vpack.c.b16 %v7444, %v7428
    %v8933 = vpack.c.b16 %v7445, %v7429
    %v8934 = vpack.c.b16 %v7446, %v7430
    %v8935 = vpack.c.b16 %v7447, %v7431
    %v8936 = vpack.c.b16 %v7448, %v7432
    %v8937 = vpack.c.b16 %v7449, %v7433
    %v8938 = vpack.c.b16 %v7450, %v7434
    %v8939 = vpack.c.b16 %v7451, %v7435
    %v8940 = vpack.c.b16 %v7452, %v7436
    %v8941 = vpack.c.b16 %v7453, %v7437
    %v8942 = vpack.c.b16 %v7454, %v7438
    %v8943 = vpack.c.b16 %v7455, %v7439
    %v8944 = vpack.c.b16 %v7456, %v7440
    %v8945 = vpack.c.b16 %v7457, %v7441
    %v8946 = vpack.c.b16 %v7474, %v7458
    %v8947 = vpack.c.b16 %v7475, %v7459
    %v8948 = vpack.c.b16 %v7476, %v7460
    %v8949 = vpack.c.b16 %v7477, %v7461
    %v8950 = vpack.c.b16 %v7478, %v7462
    %v8951 = vpack.c.b16 %v7479, %v7463
    %v8952 = vpack.c.b16 %v7480, %v7464
    %v8953 = vpack.c.b16 %v7481, %v7465
    %v8954 = vpack.c.b16 %v7482, %v7466
    %v8955 = vpack.c.b16 %v7483, %v7467
    %v8956 = vpack.c.b16 %v7484, %v7468
    %v8957 = vpack.c.b16 %v7485, %v7469
    %v8958 = vpack.c.b16 %v7486, %v7470
    %v8959 = vpack.c.b16 %v7487, %v7471
    %v8960 = vpack.c.b16 %v7488, %v7472
    %v8961 = vpack.c.b16 %v7489, %v7473
    %v8962 = vpack.c.b16 %v7506, %v7490
    %v8963 = vpack.c.b16 %v7507, %v7491
    %v8964 = vpack.c.b16 %v7508, %v7492
    %v8965 = vpack.c.b16 %v7509, %v7493
    %v8966 = vpack.c.b16 %v7510, %v7494
    %v8967 = vpack.c.b16 %v7511, %v7495
    %v8968 = vpack.c.b16 %v7512, %v7496
    %v8969 = vpack.c.b16 %v7513, %v7497
    %v8970 = vpack.c.b16 %v7514, %v7498
    %v8971 = vpack.c.b16 %v7515, %v7499
    %v8972 = vpack.c.b16 %v7516, %v7500
    %v8973 = vpack.c.b16 %v7517, %v7501
    %v8974 = vpack.c.b16 %v7518, %v7502
    %v8975 = vpack.c.b16 %v7519, %v7503
    %v8976 = vpack.c.b16 %v7520, %v7504
    %v8977 = vpack.c.b16 %v7521, %v7505
    %v8978 = vpack.c.b16 %v7538, %v7522
    %v8979 = vpack.c.b16 %v7539, %v7523
    %v8980 = vpack.c.b16 %v7540, %v7524
    %v8981 = vpack.c.b16 %v7541, %v7525
    %v8982 = vpack.c.b16 %v7542, %v7526
    %v8983 = vpack.c.b16 %v7543, %v7527
    %v8984 = vpack.c.b16 %v7544, %v7528
    %v8985 = vpack.c.b16 %v7545, %v7529
    %v8986 = vpack.c.b16 %v7546, %v7530
    %v8987 = vpack.c.b16 %v7547, %v7531
    %v8988 = vpack.c.b16 %v7548, %v7532
    %v8989 = vpack.c.b16 %v7549, %v7533
    %v8990 = vpack.c.b16 %v7550, %v7534
    %v8991 = vpack.c.b16 %v7551, %v7535
    %v8992 = vpack.c.b16 %v7552, %v7536
    %v8993 = vpack.c.b16 %v7553, %v7537
    %v8994 = vpack.c.b16 %v7570, %v7554
    %v8995 = vpack.c.b16 %v7571, %v7555
    %v8996 = vpack.c.b16 %v7572, %v7556
    %v8997 = vpack.c.b16 %v7573, %v7557
    %v8998 = vpack.c.b16 %v7574, %v7558
    %v8999 = vpack.c.b16 %v7575, %v7559
    %v9000 = vpack.c.b16 %v7576, %v7560
    %v9001 = vpack.c.b16 %v7577, %v7561
    %v9002 = vpack.c.b16 %v7578, %v7562
    %v9003 = vpack.c.b16 %v7579, %v7563
    %v9004 = vpack.c.b16 %v7580, %v7564
    %v9005 = vpack.c.b16 %v7581, %v7565
    %v9006 = vpack.c.b16 %v7582, %v7566
    %v9007 = vpack.c.b16 %v7583, %v7567
    %v9008 = vpack.c.b16 %v7584, %v7568
    %v9009 = vpack.c.b16 %v7585, %v7569
    %v9010 = vpack.c.b16 %v7602, %v7586
    %v9011 = vpack.c.b16 %v7603, %v7587
    %v9012 = vpack.c.b16 %v7604, %v7588
    %v9013 = vpack.c.b16 %v7605, %v7589
    %v9014 = vpack.c.b16 %v7606, %v7590
    %v9015 = vpack.c.b16 %v7607, %v7591
    %v9016 = vpack.c.b16 %v7608, %v7592
    %v9017 = vpack.c.b16 %v7609, %v7593
    %v9018 = vpack.c.b16 %v7610, %v7594
    %v9019 = vpack.c.b16 %v7611, %v7595
    %v9020 = vpack.c.b16 %v7612, %v7596
    %v9021 = vpack.c.b16 %v7613, %v7597
    %v9022 = vpack.c.b16 %v7614, %v7598
    %v9023 = vpack.c.b16 %v7615, %v7599
    %v9024 = vpack.c.b16 %v7616, %v7600
    %v9025 = vpack.c.b16 %v7617, %v7601
    %v9026 = vpack.c.b16 %v7634, %v7618
    %v9027 = vpack.c.b16 %v7635, %v7619
    %v9028 = vpack.c.b16 %v7636, %v7620
    %v9029 = vpack.c.b16 %v7637, %v7621
    %v9030 = vpack.c.b16 %v7638, %v7622
    %v9031 = vpack.c.b16 %v7639, %v7623
    %v9032 = vpack.c.b16 %v7640, %v7624
    %v9033 = vpack.c.b16 %v7641, %v7625
    %v9034 = vpack.c.b16 %v7642, %v7626
    %v9035 = vpack.c.b16 %v7643, %v7627
    %v9036 = vpack.c.b16 %v7644, %v7628
    %v9037 = vpack.c.b16 %v7645, %v7629
    %v9038 = vpack.c.b16 %v7646, %v7630
    %v9039 = vpack.c.b16 %v7647, %v7631
    %v9040 = vpack.c.b16 %v7648, %v7632
    %v9041 = vpack.c.b16 %v7649, %v7633
    %v9042 = vpack.c.b16 %v7666, %v7650
    %v9043 = vpack.c.b16 %v7667, %v7651
    %v9044 = vpack.c.b16 %v7668, %v7652
    %v9045 = vpack.c.b16 %v7669, %v7653
    %v9046 = vpack.c.b16 %v7670, %v7654
    %v9047 = vpack.c.b16 %v7671, %v7655
    %v9048 = vpack.c.b16 %v7672, %v7656
    %v9049 = vpack.c.b16 %v7673, %v7657
    %v9050 = vpack.c.b16 %v7674, %v7658
    %v9051 = vpack.c.b16 %v7675, %v7659
    %v9052 = vpack.c.b16 %v7676, %v7660
    %v9053 = vpack.c.b16 %v7677, %v7661
    %v9054 = vpack.c.b16 %v7678, %v7662
    %v9055 = vpack.c.b16 %v7679, %v7663
    %v9056 = vpack.c.b16 %v7680, %v7664
    %v9057 = vpack.c.b16 %v7681, %v7665
    %v9058 = vpack.c.b16 %v7698, %v7682
    %v9059 = vpack.c.b16 %v7699, %v7683
    %v9060 = vpack.c.b16 %v7700, %v7684
    %v9061 = vpack.c.b16 %v7701, %v7685
    %v9062 = vpack.c.b16 %v7702, %v7686
    %v9063 = vpack.c.b16 %v7703, %v7687
    %v9064 = vpack.c.b16 %v7704, %v7688
    %v9065 = vpack.c.b16 %v7705, %v7689
    %v9066 = vpack.c.b16 %v7706, %v7690
    %v9067 = vpack.c.b16 %v7707, %v7691
    %v9068 = vpack.c.b16 %v7708, %v7692
    %v9069 = vpack.c.b16 %v7709, %v7693
    %v9070 = vpack.c.b16 %v7710, %v7694
    %v9071 = vpack.c.b16 %v7711, %v7695
    %v9072 = vpack.c.b16 %v7712, %v7696
    %v9073 = vpack.c.b16 %v7713, %v7697
    %v9074 = vpack.c.b16 %v7730, %v7714
    %v9075 = vpack.c.b16 %v7731, %v7715
    %v9076 = vpack.c.b16 %v7732, %v7716
    %v9077 = vpack.c.b16 %v7733, %v7717
    %v9078 = vpack.c.b16 %v7734, %v7718
    %v9079 = vpack.c.b16 %v7735, %v7719
    %v9080 = vpack.c.b16 %v7736, %v7720
    %v9081 = vpack.c.b16 %v7737, %v7721
    %v9082 = vpack.c.b16 %v7738, %v7722
    %v9083 = vpack.c.b16 %v7739, %v7723
    %v9084 = vpack.c.b16 %v7740, %v7724
    %v9085 = vpack.c.b16 %v7741, %v7725
    %v9086 = vpack.c.b16 %v7742, %v7726
    %v9087 = vpack.c.b16 %v7743, %v7727
    %v9088 = vpack.c.b16 %v7744, %v7728
    %v9089 = vpack.c.b16 %v7745, %v7729
    %v9090 = vpack.c.b16 %v7762, %v7746
    %v9091 = vpack.c.b16 %v7763, %v7747
    %v9092 = vpack.c.b16 %v7764, %v7748
    %v9093 = vpack.c.b16 %v7765, %v7749
    %v9094 = vpack.c.b16 %v7766, %v7750
    %v9095 = vpack.c.b16 %v7767, %v7751
    %v9096 = vpack.c.b16 %v7768, %v7752
    %v9097 = vpack.c.b16 %v7769, %v7753
    %v9098 = vpack.c.b16 %v7770, %v7754
    %v9099 = vpack.c.b16 %v7771, %v7755
    %v9100 = vpack.c.b16 %v7772, %v7756
    %v9101 = vpack.c.b16 %v7773, %v7757
    %v9102 = vpack.c.b16 %v7774, %v7758
    %v9103 = vpack.c.b16 %v7775, %v7759
    %v9104 = vpack.c.b16 %v7776, %v7760
    %v9105 = vpack.c.b16 %v7777, %v7761
    %v9106 = vpack.c.b16 %v7794, %v7778
    %v9107 = vpack.c.b16 %v7795, %v7779
    %v9108 = vpack.c.b16 %v7796, %v7780
    %v9109 = vpack.c.b16 %v7797, %v7781
    %v9110 = vpack.c.b16 %v7798, %v7782
    %v9111 = vpack.c.b16 %v7799, %v7783
    %v9112 = vpack.c.b16 %v7800, %v7784
    %v9113 = vpack.c.b16 %v7801, %v7785
    %v9114 = vpack.c.b16 %v7802, %v7786
    %v9115 = vpack.c.b16 %v7803, %v7787
    %v9116 = vpack.c.b16 %v7804, %v7788
    %v9117 = vpack.c.b16 %v7805, %v7789
    %v9118 = vpack.c.b16 %v7806, %v7790
    %v9119 = vpack.c.b16 %v7807, %v7791
    %v9120 = vpack.c.b16 %v7808, %v7792
    %v9121 = vpack.c.b16 %v7809, %v7793
    %v9122 = vpack.c.b16 %v7826, %v7810
    %v9123 = vpack.c.b16 %v7827, %v7811
    %v9124 = vpack.c.b16 %v7828, %v7812
    %v9125 = vpack.c.b16 %v7829, %v7813
    %v9126 = vpack.c.b16 %v7830, %v7814
    %v9127 = vpack.c.b16 %v7831, %v7815
    %v9128 = vpack.c.b16 %v7832, %v7816
    %v9129 = vpack.c.b16 %v7833, %v7817
    %v9130 = vpack.c.b16 %v7834, %v7818
    %v9131 = vpack.c.b16 %v7835, %v7819
    %v9132 = vpack.c.b16 %v7836, %v7820
    %v9133 = vpack.c.b16 %v7837, %v7821
    %v9134 = vpack.c.b16 %v7838, %v7822
    %v9135 = vpack.c.b16 %v7839, %v7823
    %v9136 = vpack.c.b16 %v7840, %v7824
    %v9137 = vpack.c.b16 %v7841, %v7825
    %v9138 = vpack.c.b16 %v7858, %v7842
    %v9139 = vpack.c.b16 %v7859, %v7843
    %v9140 = vpack.c.b16 %v7860, %v7844
    %v9141 = vpack.c.b16 %v7861, %v7845
    %v9142 = vpack.c.b16 %v7862, %v7846
    %v9143 = vpack.c.b16 %v7863, %v7847
    %v9144 = vpack.c.b16 %v7864, %v7848
    %v9145 = vpack.c.b16 %v7865, %v7849
    %v9146 = vpack.c.b16 %v7866, %v7850
    %v9147 = vpack.c.b16 %v7867, %v7851
    %v9148 = vpack.c.b16 %v7868, %v7852
    %v9149 = vpack.c.b16 %v7869, %v7853
    %v9150 = vpack.c.b16 %v7870, %v7854
    %v9151 = vpack.c.b16 %v7871, %v7855
    %v9152 = vpack.c.b16 %v7872, %v7856
    %v9153 = vpack.c.b16 %v7873, %v7857
    %v9154 = vpack.c.b16 %v7890, %v7874
    %v9155 = vpack.c.b16 %v7891, %v7875
    %v9156 = vpack.c.b16 %v7892, %v7876
    %v9157 = vpack.c.b16 %v7893, %v7877
    %v9158 = vpack.c.b16 %v7894, %v7878
    %v9159 = vpack.c.b16 %v7895, %v7879
    %v9160 = vpack.c.b16 %v7896, %v7880
    %v9161 = vpack.c.b16 %v7897, %v7881
    %v9162 = vpack.c.b16 %v7898, %v7882
    %v9163 = vpack.c.b16 %v7899, %v7883
    %v9164 = vpack.c.b16 %v7900, %v7884
    %v9165 = vpack.c.b16 %v7901, %v7885
    %v9166 = vpack.c.b16 %v7902, %v7886
    %v9167 = vpack.c.b16 %v7903, %v7887
    %v9168 = vpack.c.b16 %v7904, %v7888
    %v9169 = vpack.c.b16 %v7905, %v7889
    %v9170 = vpack.c.b16 %v7922, %v7906
    %v9171 = vpack.c.b16 %v7923, %v7907
    %v9172 = vpack.c.b16 %v7924, %v7908
    %v9173 = vpack.c.b16 %v7925, %v7909
    %v9174 = vpack.c.b16 %v7926, %v7910
    %v9175 = vpack.c.b16 %v7927, %v7911
    %v9176 = vpack.c.b16 %v7928, %v7912
    %v9177 = vpack.c.b16 %v7929, %v7913
    %v9178 = vpack.c.b16 %v7930, %v7914
    %v9179 = vpack.c.b16 %v7931, %v7915
    %v9180 = vpack.c.b16 %v7932, %v7916
    %v9181 = vpack.c.b16 %v7933, %v7917
    %v9182 = vpack.c.b16 %v7934, %v7918
    %v9183 = vpack.c.b16 %v7935, %v7919
    %v9184 = vpack.c.b16 %v7936, %v7920
    %v9185 = vpack.c.b16 %v7937, %v7921
    %v9186 = vpack.c.b16 %v7954, %v7938
    %v9187 = vpack.c.b16 %v7955, %v7939
    %v9188 = vpack.c.b16 %v7956, %v7940
    %v9189 = vpack.c.b16 %v7957, %v7941
    %v9190 = vpack.c.b16 %v7958, %v7942
    %v9191 = vpack.c.b16 %v7959, %v7943
    %v9192 = vpack.c.b16 %v7960, %v7944
    %v9193 = vpack.c.b16 %v7961, %v7945
    %v9194 = vpack.c.b16 %v7962, %v7946
    %v9195 = vpack.c.b16 %v7963, %v7947
    %v9196 = vpack.c.b16 %v7964, %v7948
    %v9197 = vpack.c.b16 %v7965, %v7949
    %v9198 = vpack.c.b16 %v7966, %v7950
    %v9199 = vpack.c.b16 %v7967, %v7951
    %v9200 = vpack.c.b16 %v7968, %v7952
    %v9201 = vpack.c.b16 %v7969, %v7953
    %v9202 = vpack.c.b16 %v7986, %v7970
    %v9203 = vpack.c.b16 %v7987, %v7971
    %v9204 = vpack.c.b16 %v7988, %v7972
    %v9205 = vpack.c.b16 %v7989, %v7973
    %v9206 = vpack.c.b16 %v7990, %v7974
    %v9207 = vpack.c.b16 %v7991, %v7975
    %v9208 = vpack.c.b16 %v7992, %v7976
    %v9209 = vpack.c.b16 %v7993, %v7977
    %v9210 = vpack.c.b16 %v7994, %v7978
    %v9211 = vpack.c.b16 %v7995, %v7979
    %v9212 = vpack.c.b16 %v7996, %v7980
    %v9213 = vpack.c.b16 %v7997, %v7981
    %v9214 = vpack.c.b16 %v7998, %v7982
    %v9215 = vpack.c.b16 %v7999, %v7983
    %v9216 = vpack.c.b16 %v8000, %v7984
    %v9217 = vpack.c.b16 %v8001, %v7985
    %v9218 = vpack.c.b16 %v8018, %v8002
    %v9219 = vpack.c.b16 %v8019, %v8003
    %v9220 = vpack.c.b16 %v8020, %v8004
    %v9221 = vpack.c.b16 %v8021, %v8005
    %v9222 = vpack.c.b16 %v8022, %v8006
    %v9223 = vpack.c.b16 %v8023, %v8007
    %v9224 = vpack.c.b16 %v8024, %v8008
    %v9225 = vpack.c.b16 %v8025, %v8009
    %v9226 = vpack.c.b16 %v8026, %v8010
    %v9227 = vpack.c.b16 %v8027, %v8011
    %v9228 = vpack.c.b16 %v8028, %v8012
    %v9229 = vpack.c.b16 %v8029, %v8013
    %v9230 = vpack.c.b16 %v8030, %v8014
    %v9231 = vpack.c.b16 %v8031, %v8015
    %v9232 = vpack.c.b16 %v8032, %v8016
    %v9233 = vpack.c.b16 %v8033, %v8017
    %v9234 = vpack.c.b16 %v8050, %v8034
    %v9235 = vpack.c.b16 %v8051, %v8035
    %v9236 = vpack.c.b16 %v8052, %v8036
    %v9237 = vpack.c.b16 %v8053, %v8037
    %v9238 = vpack.c.b16 %v8054, %v8038
    %v9239 = vpack.c.b16 %v8055, %v8039
    %v9240 = vpack.c.b16 %v8056, %v8040
    %v9241 = vpack.c.b16 %v8057, %v8041
    %v9242 = vpack.c.b16 %v8058, %v8042
    %v9243 = vpack.c.b16 %v8059, %v8043
    %v9244 = vpack.c.b16 %v8060, %v8044
    %v9245 = vpack.c.b16 %v8061, %v8045
    %v9246 = vpack.c.b16 %v8062, %v8046
    %v9247 = vpack.c.b16 %v8063, %v8047
    %v9248 = vpack.c.b16 %v8064, %v8048
    %v9249 = vpack.c.b16 %v8065, %v8049
    %v9250 = vpack.c.b16 %v8082, %v8066
    %v9251 = vpack.c.b16 %v8083, %v8067
    %v9252 = vpack.c.b16 %v8084, %v8068
    %v9253 = vpack.c.b16 %v8085, %v8069
    %v9254 = vpack.c.b16 %v8086, %v8070
    %v9255 = vpack.c.b16 %v8087, %v8071
    %v9256 = vpack.c.b16 %v8088, %v8072
    %v9257 = vpack.c.b16 %v8089, %v8073
    %v9258 = vpack.c.b16 %v8090, %v8074
    %v9259 = vpack.c.b16 %v8091, %v8075
    %v9260 = vpack.c.b16 %v8092, %v8076
    %v9261 = vpack.c.b16 %v8093, %v8077
    %v9262 = vpack.c.b16 %v8094, %v8078
    %v9263 = vpack.c.b16 %v8095, %v8079
    %v9264 = vpack.c.b16 %v8096, %v8080
    %v9265 = vpack.c.b16 %v8097, %v8081
    %v9266 = vpack.c.b16 %v8114, %v8098
    %v9267 = vpack.c.b16 %v8115, %v8099
    %v9268 = vpack.c.b16 %v8116, %v8100
    %v9269 = vpack.c.b16 %v8117, %v8101
    %v9270 = vpack.c.b16 %v8118, %v8102
    %v9271 = vpack.c.b16 %v8119, %v8103
    %v9272 = vpack.c.b16 %v8120, %v8104
    %v9273 = vpack.c.b16 %v8121, %v8105
    %v9274 = vpack.c.b16 %v8122, %v8106
    %v9275 = vpack.c.b16 %v8123, %v8107
    %v9276 = vpack.c.b16 %v8124, %v8108
    %v9277 = vpack.c.b16 %v8125, %v8109
    %v9278 = vpack.c.b16 %v8126, %v8110
    %v9279 = vpack.c.b16 %v8127, %v8111
    %v9280 = vpack.c.b16 %v8128, %v8112
    %v9281 = vpack.c.b16 %v8129, %v8113
    %v9282 = vpack.c.b16 %v8146, %v8130
    %v9283 = vpack.c.b16 %v8147, %v8131
    %v9284 = vpack.c.b16 %v8148, %v8132
    %v9285 = vpack.c.b16 %v8149, %v8133
    %v9286 = vpack.c.b16 %v8150, %v8134
    %v9287 = vpack.c.b16 %v8151, %v8135
    %v9288 = vpack.c.b16 %v8152, %v8136
    %v9289 = vpack.c.b16 %v8153, %v8137
    %v9290 = vpack.c.b16 %v8154, %v8138
    %v9291 = vpack.c.b16 %v8155, %v8139
    %v9292 = vpack.c.b16 %v8156, %v8140
    %v9293 = vpack.c.b16 %v8157, %v8141
    %v9294 = vpack.c.b16 %v8158, %v8142
    %v9295 = vpack.c.b16 %v8159, %v8143
    %v9296 = vpack.c.b16 %v8160, %v8144
    %v9297 = vpack.c.b16 %v8161, %v8145
    %v9298 = vpack.c.b16 %v8178, %v8162
    %v9299 = vpack.c.b16 %v8179, %v8163
    %v9300 = vpack.c.b16 %v8180, %v8164
    %v9301 = vpack.c.b16 %v8181, %v8165
    %v9302 = vpack.c.b16 %v8182, %v8166
    %v9303 = vpack.c.b16 %v8183, %v8167
    %v9304 = vpack.c.b16 %v8184, %v8168
    %v9305 = vpack.c.b16 %v8185, %v8169
    %v9306 = vpack.c.b16 %v8186, %v8170
    %v9307 = vpack.c.b16 %v8187, %v8171
    %v9308 = vpack.c.b16 %v8188, %v8172
    %v9309 = vpack.c.b16 %v8189, %v8173
    %v9310 = vpack.c.b16 %v8190, %v8174
    %v9311 = vpack.c.b16 %v8191, %v8175
    %v9312 = vpack.c.b16 %v8192, %v8176
    %v9313 = vpack.c.b16 %v8193, %v8177
    %v9314 = vpack.c.b16 %v8210, %v8194
    %v9315 = vpack.c.b16 %v8211, %v8195
    %v9316 = vpack.c.b16 %v8212, %v8196
    %v9317 = vpack.c.b16 %v8213, %v8197
    %v9318 = vpack.c.b16 %v8214, %v8198
    %v9319 = vpack.c.b16 %v8215, %v8199
    %v9320 = vpack.c.b16 %v8216, %v8200
    %v9321 = vpack.c.b16 %v8217, %v8201
    %v9322 = vpack.c.b16 %v8218, %v8202
    %v9323 = vpack.c.b16 %v8219, %v8203
    %v9324 = vpack.c.b16 %v8220, %v8204
    %v9325 = vpack.c.b16 %v8221, %v8205
    %v9326 = vpack.c.b16 %v8222, %v8206
    %v9327 = vpack.c.b16 %v8223, %v8207
    %v9328 = vpack.c.b16 %v8224, %v8208
    %v9329 = vpack.c.b16 %v8225, %v8209
    %v9330 = vpack.c.b16 %v8242, %v8226
    %v9331 = vpack.c.b16 %v8243, %v8227
    %v9332 = vpack.c.b16 %v8244, %v8228
    %v9333 = vpack.c.b16 %v8245, %v8229
    %v9334 = vpack.c.b16 %v8246, %v8230
    %v9335 = vpack.c.b16 %v8247, %v8231
    %v9336 = vpack.c.b16 %v8248, %v8232
    %v9337 = vpack.c.b16 %v8249, %v8233
    %v9338 = vpack.c.b16 %v8250, %v8234
    %v9339 = vpack.c.b16 %v8251, %v8235
    %v9340 = vpack.c.b16 %v8252, %v8236
    %v9341 = vpack.c.b16 %v8253, %v8237
    %v9342 = vpack.c.b16 %v8254, %v8238
    %v9343 = vpack.c.b16 %v8255, %v8239
    %v9344 = vpack.c.b16 %v8256, %v8240
    %v9345 = vpack.c.b16 %v8257, %v8241
    %v9346 = vpack.c.b16 %v8274, %v8258
    %v9347 = vpack.c.b16 %v8275, %v8259
    %v9348 = vpack.c.b16 %v8276, %v8260
    %v9349 = vpack.c.b16 %v8277, %v8261
    %v9350 = vpack.c.b16 %v8278, %v8262
    %v9351 = vpack.c.b16 %v8279, %v8263
    %v9352 = vpack.c.b16 %v8280, %v8264
    %v9353 = vpack.c.b16 %v8281, %v8265
    %v9354 = vpack.c.b16 %v8282, %v8266
    %v9355 = vpack.c.b16 %v8283, %v8267
    %v9356 = vpack.c.b16 %v8284, %v8268
    %v9357 = vpack.c.b16 %v8285, %v8269
    %v9358 = vpack.c.b16 %v8286, %v8270
    %v9359 = vpack.c.b16 %v8287, %v8271
    %v9360 = vpack.c.b16 %v8288, %v8272
    %v9361 = vpack.c.b16 %v8289, %v8273
    %v9362 = vpack.c.b16 %v8306, %v8290
    %v9363 = vpack.c.b16 %v8307, %v8291
    %v9364 = vpack.c.b16 %v8308, %v8292
    %v9365 = vpack.c.b16 %v8309, %v8293
    %v9366 = vpack.c.b16 %v8310, %v8294
    %v9367 = vpack.c.b16 %v8311, %v8295
    %v9368 = vpack.c.b16 %v8312, %v8296
    %v9369 = vpack.c.b16 %v8313, %v8297
    %v9370 = vpack.c.b16 %v8314, %v8298
    %v9371 = vpack.c.b16 %v8315, %v8299
    %v9372 = vpack.c.b16 %v8316, %v8300
    %v9373 = vpack.c.b16 %v8317, %v8301
    %v9374 = vpack.c.b16 %v8318, %v8302
    %v9375 = vpack.c.b16 %v8319, %v8303
    %v9376 = vpack.c.b16 %v8320, %v8304
    %v9377 = vpack.c.b16 %v8321, %v8305
    %v9378 = vpack.c.b16 %v8338, %v8322
    %v9379 = vpack.c.b16 %v8339, %v8323
    %v9380 = vpack.c.b16 %v8340, %v8324
    %v9381 = vpack.c.b16 %v8341, %v8325
    %v9382 = vpack.c.b16 %v8342, %v8326
    %v9383 = vpack.c.b16 %v8343, %v8327
    %v9384 = vpack.c.b16 %v8344, %v8328
    %v9385 = vpack.c.b16 %v8345, %v8329
    %v9386 = vpack.c.b16 %v8346, %v8330
    %v9387 = vpack.c.b16 %v8347, %v8331
    %v9388 = vpack.c.b16 %v8348, %v8332
    %v9389 = vpack.c.b16 %v8349, %v8333
    %v9390 = vpack.c.b16 %v8350, %v8334
    %v9391 = vpack.c.b16 %v8351, %v8335
    %v9392 = vpack.c.b16 %v8352, %v8336
    %v9393 = vpack.c.b16 %v8353, %v8337
    %v9394 = vpack.c.b16 %v8370, %v8354
    %v9395 = vpack.c.b16 %v8371, %v8355
    %v9396 = vpack.c.b16 %v8372, %v8356
    %v9397 = vpack.c.b16 %v8373, %v8357
    %v9398 = vpack.c.b16 %v8374, %v8358
    %v9399 = vpack.c.b16 %v8375, %v8359
    %v9400 = vpack.c.b16 %v8376, %v8360
    %v9401 = vpack.c.b16 %v8377, %v8361
    %v9402 = vpack.c.b16 %v8378, %v8362
    %v9403 = vpack.c.b16 %v8379, %v8363
    %v9404 = vpack.c.b16 %v8380, %v8364
    %v9405 = vpack.c.b16 %v8381, %v8365
    %v9406 = vpack.c.b16 %v8382, %v8366
    %v9407 = vpack.c.b16 %v8383, %v8367
    %v9408 = vpack.c.b16 %v8384, %v8368
    %v9409 = vpack.c.b16 %v8385, %v8369
    %10434 = vmatpush.bf16.msra.mxu0 %v8498
    %10435 = vmatpush.bf16.msra.mxu0 %v8482
    %10436 = vmatpush.bf16.msra.mxu0 %v8466
    %10437 = vmatpush.bf16.msra.mxu0 %v8450
    %10438 = vmatpush.bf16.msra.mxu0 %v8434
    %10439 = vmatpush.bf16.msra.mxu0 %v8418
    %10440 = vmatpush.bf16.msra.mxu0 %v8402
    %10441 = vmatpush.bf16.msra.mxu0 %v8386
    %10442 = vmatmul.bf16.gmra.mxu0 %v4246
    %v10443 = vpop.f32.mrf.mxu0
    %v10444 = vadd.f32 %v5282, %v10443
    %v10445 = vpop.f32.mrf.mxu0
    %10446 = vdwg.mxu0
    %10447 = vmatpush.bf16.msra.mxu0 %v8626
    %10448 = vmatpush.bf16.msra.mxu0 %v8610
    %10449 = vmatpush.bf16.msra.mxu0 %v8594
    %10450 = vmatpush.bf16.msra.mxu0 %v8578
    %10451 = vmatpush.bf16.msra.mxu0 %v8562
    %10452 = vmatpush.bf16.msra.mxu0 %v8546
    %10453 = vmatpush.bf16.msra.mxu0 %v8530
    %10454 = vmatpush.bf16.msra.mxu0 %v8514
    %10455 = vmatmul.bf16.gmra.mxu0 %v4247
    %v10456 = vpop.f32.mrf.mxu0
    %v10457 = vadd.f32 %v10444, %v10456
    %v10458 = vpop.f32.mrf.mxu0
    %10459 = vdwg.mxu0
    %10460 = vmatpush.bf16.msra.mxu0 %v8754
    %10461 = vmatpush.bf16.msra.mxu0 %v8738
    %10462 = vmatpush.bf16.msra.mxu0 %v8722
    %10463 = vmatpush.bf16.msra.mxu0 %v8706
    %10464 = vmatpush.bf16.msra.mxu0 %v8690
    %10465 = vmatpush.bf16.msra.mxu0 %v8674
    %10466 = vmatpush.bf16.msra.mxu0 %v8658
    %10467 = vmatpush.bf16.msra.mxu0 %v8642
    %10468 = vmatmul.bf16.gmra.mxu0 %v4248
    %v10469 = vpop.f32.mrf.mxu0
    %v10470 = vadd.f32 %v10457, %v10469
    %v10471 = vpop.f32.mrf.mxu0
    %10472 = vdwg.mxu0
    %10473 = vmatpush.bf16.msra.mxu0 %v8882
    %10474 = vmatpush.bf16.msra.mxu0 %v8866
    %10475 = vmatpush.bf16.msra.mxu0 %v8850
    %10476 = vmatpush.bf16.msra.mxu0 %v8834
    %10477 = vmatpush.bf16.msra.mxu0 %v8818
    %10478 = vmatpush.bf16.msra.mxu0 %v8802
    %10479 = vmatpush.bf16.msra.mxu0 %v8786
    %10480 = vmatpush.bf16.msra.mxu0 %v8770
    %10481 = vmatmul.bf16.gmra.mxu0 %v4249
    %v10482 = vpop.f32.mrf.mxu0
    %v10483 = vadd.f32 %v10470, %v10482
    %v10484 = vpop.f32.mrf.mxu0
    %10485 = vdwg.mxu0
    %10486 = vmatpush.bf16.msra.mxu0 %v9010
    %10487 = vmatpush.bf16.msra.mxu0 %v8994
    %10488 = vmatpush.bf16.msra.mxu0 %v8978
    %10489 = vmatpush.bf16.msra.mxu0 %v8962
    %10490 = vmatpush.bf16.msra.mxu0 %v8946
    %10491 = vmatpush.bf16.msra.mxu0 %v8930
    %10492 = vmatpush.bf16.msra.mxu0 %v8914
    %10493 = vmatpush.bf16.msra.mxu0 %v8898
    %10494 = vmatmul.bf16.gmra.mxu0 %v4250
    %v10495 = vpop.f32.mrf.mxu0
    %v10496 = vadd.f32 %v10483, %v10495
    %v10497 = vpop.f32.mrf.mxu0
    %10498 = vdwg.mxu0
    %10499 = vmatpush.bf16.msra.mxu0 %v9138
    %10500 = vmatpush.bf16.msra.mxu0 %v9122
    %10501 = vmatpush.bf16.msra.mxu0 %v9106
    %10502 = vmatpush.bf16.msra.mxu0 %v9090
    %10503 = vmatpush.bf16.msra.mxu0 %v9074
    %10504 = vmatpush.bf16.msra.mxu0 %v9058
    %10505 = vmatpush.bf16.msra.mxu0 %v9042
    %10506 = vmatpush.bf16.msra.mxu0 %v9026
    %10507 = vmatmul.bf16.gmra.mxu0 %v4251
    %v10508 = vpop.f32.mrf.mxu0
    %v10509 = vadd.f32 %v10496, %v10508
    %v10510 = vpop.f32.mrf.mxu0
    %10511 = vdwg.mxu0
    %10512 = vmatpush.bf16.msra.mxu0 %v9266
    %10513 = vmatpush.bf16.msra.mxu0 %v9250
    %10514 = vmatpush.bf16.msra.mxu0 %v9234
    %10515 = vmatpush.bf16.msra.mxu0 %v9218
    %10516 = vmatpush.bf16.msra.mxu0 %v9202
    %10517 = vmatpush.bf16.msra.mxu0 %v9186
    %10518 = vmatpush.bf16.msra.mxu0 %v9170
    %10519 = vmatpush.bf16.msra.mxu0 %v9154
    %10520 = vmatmul.bf16.gmra.mxu0 %v4252
    %v10521 = vpop.f32.mrf.mxu0
    %v10522 = vadd.f32 %v10509, %v10521
    %v10523 = vpop.f32.mrf.mxu0
    %10524 = vdwg.mxu0
    %10525 = vmatpush.bf16.msra.mxu0 %v9394
    %10526 = vmatpush.bf16.msra.mxu0 %v9378
    %10527 = vmatpush.bf16.msra.mxu0 %v9362
    %10528 = vmatpush.bf16.msra.mxu0 %v9346
    %10529 = vmatpush.bf16.msra.mxu0 %v9330
    %10530 = vmatpush.bf16.msra.mxu0 %v9314
    %10531 = vmatpush.bf16.msra.mxu0 %v9298
    %10532 = vmatpush.bf16.msra.mxu0 %v9282
    %10533 = vmatmul.bf16.gmra.mxu0 %v4253
    %v10534 = vpop.f32.mrf.mxu0
    %v10535 = vadd.f32 %v10522, %v10534
    %v10536 = vpop.f32.mrf.mxu0
    %10537 = vdwg.mxu0
    %10538 = vmatpush.bf16.msra.mxu0 %v8499
    %10539 = vmatpush.bf16.msra.mxu0 %v8483
    %10540 = vmatpush.bf16.msra.mxu0 %v8467
    %10541 = vmatpush.bf16.msra.mxu0 %v8451
    %10542 = vmatpush.bf16.msra.mxu0 %v8435
    %10543 = vmatpush.bf16.msra.mxu0 %v8419
    %10544 = vmatpush.bf16.msra.mxu0 %v8403
    %10545 = vmatpush.bf16.msra.mxu0 %v8387
    %10546 = vmatmul.bf16.gmra.mxu0 %v4246
    %v10547 = vpop.f32.mrf.mxu0
    %v10548 = vadd.f32 %v5283, %v10547
    %v10549 = vpop.f32.mrf.mxu0
    %10550 = vdwg.mxu0
    %10551 = vmatpush.bf16.msra.mxu0 %v8627
    %10552 = vmatpush.bf16.msra.mxu0 %v8611
    %10553 = vmatpush.bf16.msra.mxu0 %v8595
    %10554 = vmatpush.bf16.msra.mxu0 %v8579
    %10555 = vmatpush.bf16.msra.mxu0 %v8563
    %10556 = vmatpush.bf16.msra.mxu0 %v8547
    %10557 = vmatpush.bf16.msra.mxu0 %v8531
    %10558 = vmatpush.bf16.msra.mxu0 %v8515
    %10559 = vmatmul.bf16.gmra.mxu0 %v4247
    %v10560 = vpop.f32.mrf.mxu0
    %v10561 = vadd.f32 %v10548, %v10560
    %v10562 = vpop.f32.mrf.mxu0
    %10563 = vdwg.mxu0
    %10564 = vmatpush.bf16.msra.mxu0 %v8755
    %10565 = vmatpush.bf16.msra.mxu0 %v8739
    %10566 = vmatpush.bf16.msra.mxu0 %v8723
    %10567 = vmatpush.bf16.msra.mxu0 %v8707
    %10568 = vmatpush.bf16.msra.mxu0 %v8691
    %10569 = vmatpush.bf16.msra.mxu0 %v8675
    %10570 = vmatpush.bf16.msra.mxu0 %v8659
    %10571 = vmatpush.bf16.msra.mxu0 %v8643
    %10572 = vmatmul.bf16.gmra.mxu0 %v4248
    %v10573 = vpop.f32.mrf.mxu0
    %v10574 = vadd.f32 %v10561, %v10573
    %v10575 = vpop.f32.mrf.mxu0
    %10576 = vdwg.mxu0
    %10577 = vmatpush.bf16.msra.mxu0 %v8883
    %10578 = vmatpush.bf16.msra.mxu0 %v8867
    %10579 = vmatpush.bf16.msra.mxu0 %v8851
    %10580 = vmatpush.bf16.msra.mxu0 %v8835
    %10581 = vmatpush.bf16.msra.mxu0 %v8819
    %10582 = vmatpush.bf16.msra.mxu0 %v8803
    %10583 = vmatpush.bf16.msra.mxu0 %v8787
    %10584 = vmatpush.bf16.msra.mxu0 %v8771
    %10585 = vmatmul.bf16.gmra.mxu0 %v4249
    %v10586 = vpop.f32.mrf.mxu0
    %v10587 = vadd.f32 %v10574, %v10586
    %v10588 = vpop.f32.mrf.mxu0
    %10589 = vdwg.mxu0
    %10590 = vmatpush.bf16.msra.mxu0 %v9011
    %10591 = vmatpush.bf16.msra.mxu0 %v8995
    %10592 = vmatpush.bf16.msra.mxu0 %v8979
    %10593 = vmatpush.bf16.msra.mxu0 %v8963
    %10594 = vmatpush.bf16.msra.mxu0 %v8947
    %10595 = vmatpush.bf16.msra.mxu0 %v8931
    %10596 = vmatpush.bf16.msra.mxu0 %v8915
    %10597 = vmatpush.bf16.msra.mxu0 %v8899
    %10598 = vmatmul.bf16.gmra.mxu0 %v4250
    %v10599 = vpop.f32.mrf.mxu0
    %v10600 = vadd.f32 %v10587, %v10599
    %v10601 = vpop.f32.mrf.mxu0
    %10602 = vdwg.mxu0
    %10603 = vmatpush.bf16.msra.mxu0 %v9139
    %10604 = vmatpush.bf16.msra.mxu0 %v9123
    %10605 = vmatpush.bf16.msra.mxu0 %v9107
    %10606 = vmatpush.bf16.msra.mxu0 %v9091
    %10607 = vmatpush.bf16.msra.mxu0 %v9075
    %10608 = vmatpush.bf16.msra.mxu0 %v9059
    %10609 = vmatpush.bf16.msra.mxu0 %v9043
    %10610 = vmatpush.bf16.msra.mxu0 %v9027
    %10611 = vmatmul.bf16.gmra.mxu0 %v4251
    %v10612 = vpop.f32.mrf.mxu0
    %v10613 = vadd.f32 %v10600, %v10612
    %v10614 = vpop.f32.mrf.mxu0
    %10615 = vdwg.mxu0
    %10616 = vmatpush.bf16.msra.mxu0 %v9267
    %10617 = vmatpush.bf16.msra.mxu0 %v9251
    %10618 = vmatpush.bf16.msra.mxu0 %v9235
    %10619 = vmatpush.bf16.msra.mxu0 %v9219
    %10620 = vmatpush.bf16.msra.mxu0 %v9203
    %10621 = vmatpush.bf16.msra.mxu0 %v9187
    %10622 = vmatpush.bf16.msra.mxu0 %v9171
    %10623 = vmatpush.bf16.msra.mxu0 %v9155
    %10624 = vmatmul.bf16.gmra.mxu0 %v4252
    %v10625 = vpop.f32.mrf.mxu0
    %v10626 = vadd.f32 %v10613, %v10625
    %v10627 = vpop.f32.mrf.mxu0
    %10628 = vdwg.mxu0
    %10629 = vmatpush.bf16.msra.mxu0 %v9395
    %10630 = vmatpush.bf16.msra.mxu0 %v9379
    %10631 = vmatpush.bf16.msra.mxu0 %v9363
    %10632 = vmatpush.bf16.msra.mxu0 %v9347
    %10633 = vmatpush.bf16.msra.mxu0 %v9331
    %10634 = vmatpush.bf16.msra.mxu0 %v9315
    %10635 = vmatpush.bf16.msra.mxu0 %v9299
    %10636 = vmatpush.bf16.msra.mxu0 %v9283
    %10637 = vmatmul.bf16.gmra.mxu0 %v4253
    %v10638 = vpop.f32.mrf.mxu0
    %v10639 = vadd.f32 %v10626, %v10638
    %v10640 = vpop.f32.mrf.mxu0
    %10641 = vdwg.mxu0
    %10642 = vmatpush.bf16.msra.mxu0 %v8500
    %10643 = vmatpush.bf16.msra.mxu0 %v8484
    %10644 = vmatpush.bf16.msra.mxu0 %v8468
    %10645 = vmatpush.bf16.msra.mxu0 %v8452
    %10646 = vmatpush.bf16.msra.mxu0 %v8436
    %10647 = vmatpush.bf16.msra.mxu0 %v8420
    %10648 = vmatpush.bf16.msra.mxu0 %v8404
    %10649 = vmatpush.bf16.msra.mxu0 %v8388
    %10650 = vmatmul.bf16.gmra.mxu0 %v4246
    %v10651 = vpop.f32.mrf.mxu0
    %v10652 = vadd.f32 %v5284, %v10651
    %v10653 = vpop.f32.mrf.mxu0
    %10654 = vdwg.mxu0
    %10655 = vmatpush.bf16.msra.mxu0 %v8628
    %10656 = vmatpush.bf16.msra.mxu0 %v8612
    %10657 = vmatpush.bf16.msra.mxu0 %v8596
    %10658 = vmatpush.bf16.msra.mxu0 %v8580
    %10659 = vmatpush.bf16.msra.mxu0 %v8564
    %10660 = vmatpush.bf16.msra.mxu0 %v8548
    %10661 = vmatpush.bf16.msra.mxu0 %v8532
    %10662 = vmatpush.bf16.msra.mxu0 %v8516
    %10663 = vmatmul.bf16.gmra.mxu0 %v4247
    %v10664 = vpop.f32.mrf.mxu0
    %v10665 = vadd.f32 %v10652, %v10664
    %v10666 = vpop.f32.mrf.mxu0
    %10667 = vdwg.mxu0
    %10668 = vmatpush.bf16.msra.mxu0 %v8756
    %10669 = vmatpush.bf16.msra.mxu0 %v8740
    %10670 = vmatpush.bf16.msra.mxu0 %v8724
    %10671 = vmatpush.bf16.msra.mxu0 %v8708
    %10672 = vmatpush.bf16.msra.mxu0 %v8692
    %10673 = vmatpush.bf16.msra.mxu0 %v8676
    %10674 = vmatpush.bf16.msra.mxu0 %v8660
    %10675 = vmatpush.bf16.msra.mxu0 %v8644
    %10676 = vmatmul.bf16.gmra.mxu0 %v4248
    %v10677 = vpop.f32.mrf.mxu0
    %v10678 = vadd.f32 %v10665, %v10677
    %v10679 = vpop.f32.mrf.mxu0
    %10680 = vdwg.mxu0
    %10681 = vmatpush.bf16.msra.mxu0 %v8884
    %10682 = vmatpush.bf16.msra.mxu0 %v8868
    %10683 = vmatpush.bf16.msra.mxu0 %v8852
    %10684 = vmatpush.bf16.msra.mxu0 %v8836
    %10685 = vmatpush.bf16.msra.mxu0 %v8820
    %10686 = vmatpush.bf16.msra.mxu0 %v8804
    %10687 = vmatpush.bf16.msra.mxu0 %v8788
    %10688 = vmatpush.bf16.msra.mxu0 %v8772
    %10689 = vmatmul.bf16.gmra.mxu0 %v4249
    %v10690 = vpop.f32.mrf.mxu0
    %v10691 = vadd.f32 %v10678, %v10690
    %v10692 = vpop.f32.mrf.mxu0
    %10693 = vdwg.mxu0
    %10694 = vmatpush.bf16.msra.mxu0 %v9012
    %10695 = vmatpush.bf16.msra.mxu0 %v8996
    %10696 = vmatpush.bf16.msra.mxu0 %v8980
    %10697 = vmatpush.bf16.msra.mxu0 %v8964
    %10698 = vmatpush.bf16.msra.mxu0 %v8948
    %10699 = vmatpush.bf16.msra.mxu0 %v8932
    %10700 = vmatpush.bf16.msra.mxu0 %v8916
    %10701 = vmatpush.bf16.msra.mxu0 %v8900
    %10702 = vmatmul.bf16.gmra.mxu0 %v4250
    %v10703 = vpop.f32.mrf.mxu0
    %v10704 = vadd.f32 %v10691, %v10703
    %v10705 = vpop.f32.mrf.mxu0
    %10706 = vdwg.mxu0
    %10707 = vmatpush.bf16.msra.mxu0 %v9140
    %10708 = vmatpush.bf16.msra.mxu0 %v9124
    %10709 = vmatpush.bf16.msra.mxu0 %v9108
    %10710 = vmatpush.bf16.msra.mxu0 %v9092
    %10711 = vmatpush.bf16.msra.mxu0 %v9076
    %10712 = vmatpush.bf16.msra.mxu0 %v9060
    %10713 = vmatpush.bf16.msra.mxu0 %v9044
    %10714 = vmatpush.bf16.msra.mxu0 %v9028
    %10715 = vmatmul.bf16.gmra.mxu0 %v4251
    %v10716 = vpop.f32.mrf.mxu0
    %v10717 = vadd.f32 %v10704, %v10716
    %v10718 = vpop.f32.mrf.mxu0
    %10719 = vdwg.mxu0
    %10720 = vmatpush.bf16.msra.mxu0 %v9268
    %10721 = vmatpush.bf16.msra.mxu0 %v9252
    %10722 = vmatpush.bf16.msra.mxu0 %v9236
    %10723 = vmatpush.bf16.msra.mxu0 %v9220
    %10724 = vmatpush.bf16.msra.mxu0 %v9204
    %10725 = vmatpush.bf16.msra.mxu0 %v9188
    %10726 = vmatpush.bf16.msra.mxu0 %v9172
    %10727 = vmatpush.bf16.msra.mxu0 %v9156
    %10728 = vmatmul.bf16.gmra.mxu0 %v4252
    %v10729 = vpop.f32.mrf.mxu0
    %v10730 = vadd.f32 %v10717, %v10729
    %v10731 = vpop.f32.mrf.mxu0
    %10732 = vdwg.mxu0
    %10733 = vmatpush.bf16.msra.mxu0 %v9396
    %10734 = vmatpush.bf16.msra.mxu0 %v9380
    %10735 = vmatpush.bf16.msra.mxu0 %v9364
    %10736 = vmatpush.bf16.msra.mxu0 %v9348
    %10737 = vmatpush.bf16.msra.mxu0 %v9332
    %10738 = vmatpush.bf16.msra.mxu0 %v9316
    %10739 = vmatpush.bf16.msra.mxu0 %v9300
    %10740 = vmatpush.bf16.msra.mxu0 %v9284
    %10741 = vmatmul.bf16.gmra.mxu0 %v4253
    %v10742 = vpop.f32.mrf.mxu0
    %v10743 = vadd.f32 %v10730, %v10742
    %v10744 = vpop.f32.mrf.mxu0
    %10745 = vdwg.mxu0
    %10746 = vmatpush.bf16.msra.mxu0 %v8501
    %10747 = vmatpush.bf16.msra.mxu0 %v8485
    %10748 = vmatpush.bf16.msra.mxu0 %v8469
    %10749 = vmatpush.bf16.msra.mxu0 %v8453
    %10750 = vmatpush.bf16.msra.mxu0 %v8437
    %10751 = vmatpush.bf16.msra.mxu0 %v8421
    %10752 = vmatpush.bf16.msra.mxu0 %v8405
    %10753 = vmatpush.bf16.msra.mxu0 %v8389
    %10754 = vmatmul.bf16.gmra.mxu0 %v4246
    %v10755 = vpop.f32.mrf.mxu0
    %v10756 = vadd.f32 %v5285, %v10755
    %v10757 = vpop.f32.mrf.mxu0
    %10758 = vdwg.mxu0
    %10759 = vmatpush.bf16.msra.mxu0 %v8629
    %10760 = vmatpush.bf16.msra.mxu0 %v8613
    %10761 = vmatpush.bf16.msra.mxu0 %v8597
    %10762 = vmatpush.bf16.msra.mxu0 %v8581
    %10763 = vmatpush.bf16.msra.mxu0 %v8565
    %10764 = vmatpush.bf16.msra.mxu0 %v8549
    %10765 = vmatpush.bf16.msra.mxu0 %v8533
    %10766 = vmatpush.bf16.msra.mxu0 %v8517
    %10767 = vmatmul.bf16.gmra.mxu0 %v4247
    %v10768 = vpop.f32.mrf.mxu0
    %v10769 = vadd.f32 %v10756, %v10768
    %v10770 = vpop.f32.mrf.mxu0
    %10771 = vdwg.mxu0
    %10772 = vmatpush.bf16.msra.mxu0 %v8757
    %10773 = vmatpush.bf16.msra.mxu0 %v8741
    %10774 = vmatpush.bf16.msra.mxu0 %v8725
    %10775 = vmatpush.bf16.msra.mxu0 %v8709
    %10776 = vmatpush.bf16.msra.mxu0 %v8693
    %10777 = vmatpush.bf16.msra.mxu0 %v8677
    %10778 = vmatpush.bf16.msra.mxu0 %v8661
    %10779 = vmatpush.bf16.msra.mxu0 %v8645
    %10780 = vmatmul.bf16.gmra.mxu0 %v4248
    %v10781 = vpop.f32.mrf.mxu0
    %v10782 = vadd.f32 %v10769, %v10781
    %v10783 = vpop.f32.mrf.mxu0
    %10784 = vdwg.mxu0
    %10785 = vmatpush.bf16.msra.mxu0 %v8885
    %10786 = vmatpush.bf16.msra.mxu0 %v8869
    %10787 = vmatpush.bf16.msra.mxu0 %v8853
    %10788 = vmatpush.bf16.msra.mxu0 %v8837
    %10789 = vmatpush.bf16.msra.mxu0 %v8821
    %10790 = vmatpush.bf16.msra.mxu0 %v8805
    %10791 = vmatpush.bf16.msra.mxu0 %v8789
    %10792 = vmatpush.bf16.msra.mxu0 %v8773
    %10793 = vmatmul.bf16.gmra.mxu0 %v4249
    %v10794 = vpop.f32.mrf.mxu0
    %v10795 = vadd.f32 %v10782, %v10794
    %v10796 = vpop.f32.mrf.mxu0
    %10797 = vdwg.mxu0
    %10798 = vmatpush.bf16.msra.mxu0 %v9013
    %10799 = vmatpush.bf16.msra.mxu0 %v8997
    %10800 = vmatpush.bf16.msra.mxu0 %v8981
    %10801 = vmatpush.bf16.msra.mxu0 %v8965
    %10802 = vmatpush.bf16.msra.mxu0 %v8949
    %10803 = vmatpush.bf16.msra.mxu0 %v8933
    %10804 = vmatpush.bf16.msra.mxu0 %v8917
    %10805 = vmatpush.bf16.msra.mxu0 %v8901
    %10806 = vmatmul.bf16.gmra.mxu0 %v4250
    %v10807 = vpop.f32.mrf.mxu0
    %v10808 = vadd.f32 %v10795, %v10807
    %v10809 = vpop.f32.mrf.mxu0
    %10810 = vdwg.mxu0
    %10811 = vmatpush.bf16.msra.mxu0 %v9141
    %10812 = vmatpush.bf16.msra.mxu0 %v9125
    %10813 = vmatpush.bf16.msra.mxu0 %v9109
    %10814 = vmatpush.bf16.msra.mxu0 %v9093
    %10815 = vmatpush.bf16.msra.mxu0 %v9077
    %10816 = vmatpush.bf16.msra.mxu0 %v9061
    %10817 = vmatpush.bf16.msra.mxu0 %v9045
    %10818 = vmatpush.bf16.msra.mxu0 %v9029
    %10819 = vmatmul.bf16.gmra.mxu0 %v4251
    %v10820 = vpop.f32.mrf.mxu0
    %v10821 = vadd.f32 %v10808, %v10820
    %v10822 = vpop.f32.mrf.mxu0
    %10823 = vdwg.mxu0
    %10824 = vmatpush.bf16.msra.mxu0 %v9269
    %10825 = vmatpush.bf16.msra.mxu0 %v9253
    %10826 = vmatpush.bf16.msra.mxu0 %v9237
    %10827 = vmatpush.bf16.msra.mxu0 %v9221
    %10828 = vmatpush.bf16.msra.mxu0 %v9205
    %10829 = vmatpush.bf16.msra.mxu0 %v9189
    %10830 = vmatpush.bf16.msra.mxu0 %v9173
    %10831 = vmatpush.bf16.msra.mxu0 %v9157
    %10832 = vmatmul.bf16.gmra.mxu0 %v4252
    %v10833 = vpop.f32.mrf.mxu0
    %v10834 = vadd.f32 %v10821, %v10833
    %v10835 = vpop.f32.mrf.mxu0
    %10836 = vdwg.mxu0
    %10837 = vmatpush.bf16.msra.mxu0 %v9397
    %10838 = vmatpush.bf16.msra.mxu0 %v9381
    %10839 = vmatpush.bf16.msra.mxu0 %v9365
    %10840 = vmatpush.bf16.msra.mxu0 %v9349
    %10841 = vmatpush.bf16.msra.mxu0 %v9333
    %10842 = vmatpush.bf16.msra.mxu0 %v9317
    %10843 = vmatpush.bf16.msra.mxu0 %v9301
    %10844 = vmatpush.bf16.msra.mxu0 %v9285
    %10845 = vmatmul.bf16.gmra.mxu0 %v4253
    %v10846 = vpop.f32.mrf.mxu0
    %v10847 = vadd.f32 %v10834, %v10846
    %v10848 = vpop.f32.mrf.mxu0
    %10849 = vdwg.mxu0
    %10850 = vmatpush.bf16.msra.mxu0 %v8502
    %10851 = vmatpush.bf16.msra.mxu0 %v8486
    %10852 = vmatpush.bf16.msra.mxu0 %v8470
    %10853 = vmatpush.bf16.msra.mxu0 %v8454
    %10854 = vmatpush.bf16.msra.mxu0 %v8438
    %10855 = vmatpush.bf16.msra.mxu0 %v8422
    %10856 = vmatpush.bf16.msra.mxu0 %v8406
    %10857 = vmatpush.bf16.msra.mxu0 %v8390
    %10858 = vmatmul.bf16.gmra.mxu0 %v4246
    %v10859 = vpop.f32.mrf.mxu0
    %v10860 = vadd.f32 %v5286, %v10859
    %v10861 = vpop.f32.mrf.mxu0
    %10862 = vdwg.mxu0
    %10863 = vmatpush.bf16.msra.mxu0 %v8630
    %10864 = vmatpush.bf16.msra.mxu0 %v8614
    %10865 = vmatpush.bf16.msra.mxu0 %v8598
    %10866 = vmatpush.bf16.msra.mxu0 %v8582
    %10867 = vmatpush.bf16.msra.mxu0 %v8566
    %10868 = vmatpush.bf16.msra.mxu0 %v8550
    %10869 = vmatpush.bf16.msra.mxu0 %v8534
    %10870 = vmatpush.bf16.msra.mxu0 %v8518
    %10871 = vmatmul.bf16.gmra.mxu0 %v4247
    %v10872 = vpop.f32.mrf.mxu0
    %v10873 = vadd.f32 %v10860, %v10872
    %v10874 = vpop.f32.mrf.mxu0
    %10875 = vdwg.mxu0
    %10876 = vmatpush.bf16.msra.mxu0 %v8758
    %10877 = vmatpush.bf16.msra.mxu0 %v8742
    %10878 = vmatpush.bf16.msra.mxu0 %v8726
    %10879 = vmatpush.bf16.msra.mxu0 %v8710
    %10880 = vmatpush.bf16.msra.mxu0 %v8694
    %10881 = vmatpush.bf16.msra.mxu0 %v8678
    %10882 = vmatpush.bf16.msra.mxu0 %v8662
    %10883 = vmatpush.bf16.msra.mxu0 %v8646
    %10884 = vmatmul.bf16.gmra.mxu0 %v4248
    %v10885 = vpop.f32.mrf.mxu0
    %v10886 = vadd.f32 %v10873, %v10885
    %v10887 = vpop.f32.mrf.mxu0
    %10888 = vdwg.mxu0
    %10889 = vmatpush.bf16.msra.mxu0 %v8886
    %10890 = vmatpush.bf16.msra.mxu0 %v8870
    %10891 = vmatpush.bf16.msra.mxu0 %v8854
    %10892 = vmatpush.bf16.msra.mxu0 %v8838
    %10893 = vmatpush.bf16.msra.mxu0 %v8822
    %10894 = vmatpush.bf16.msra.mxu0 %v8806
    %10895 = vmatpush.bf16.msra.mxu0 %v8790
    %10896 = vmatpush.bf16.msra.mxu0 %v8774
    %10897 = vmatmul.bf16.gmra.mxu0 %v4249
    %v10898 = vpop.f32.mrf.mxu0
    %v10899 = vadd.f32 %v10886, %v10898
    %v10900 = vpop.f32.mrf.mxu0
    %10901 = vdwg.mxu0
    %10902 = vmatpush.bf16.msra.mxu0 %v9014
    %10903 = vmatpush.bf16.msra.mxu0 %v8998
    %10904 = vmatpush.bf16.msra.mxu0 %v8982
    %10905 = vmatpush.bf16.msra.mxu0 %v8966
    %10906 = vmatpush.bf16.msra.mxu0 %v8950
    %10907 = vmatpush.bf16.msra.mxu0 %v8934
    %10908 = vmatpush.bf16.msra.mxu0 %v8918
    %10909 = vmatpush.bf16.msra.mxu0 %v8902
    %10910 = vmatmul.bf16.gmra.mxu0 %v4250
    %v10911 = vpop.f32.mrf.mxu0
    %v10912 = vadd.f32 %v10899, %v10911
    %v10913 = vpop.f32.mrf.mxu0
    %10914 = vdwg.mxu0
    %10915 = vmatpush.bf16.msra.mxu0 %v9142
    %10916 = vmatpush.bf16.msra.mxu0 %v9126
    %10917 = vmatpush.bf16.msra.mxu0 %v9110
    %10918 = vmatpush.bf16.msra.mxu0 %v9094
    %10919 = vmatpush.bf16.msra.mxu0 %v9078
    %10920 = vmatpush.bf16.msra.mxu0 %v9062
    %10921 = vmatpush.bf16.msra.mxu0 %v9046
    %10922 = vmatpush.bf16.msra.mxu0 %v9030
    %10923 = vmatmul.bf16.gmra.mxu0 %v4251
    %v10924 = vpop.f32.mrf.mxu0
    %v10925 = vadd.f32 %v10912, %v10924
    %v10926 = vpop.f32.mrf.mxu0
    %10927 = vdwg.mxu0
    %10928 = vmatpush.bf16.msra.mxu0 %v9270
    %10929 = vmatpush.bf16.msra.mxu0 %v9254
    %10930 = vmatpush.bf16.msra.mxu0 %v9238
    %10931 = vmatpush.bf16.msra.mxu0 %v9222
    %10932 = vmatpush.bf16.msra.mxu0 %v9206
    %10933 = vmatpush.bf16.msra.mxu0 %v9190
    %10934 = vmatpush.bf16.msra.mxu0 %v9174
    %10935 = vmatpush.bf16.msra.mxu0 %v9158
    %10936 = vmatmul.bf16.gmra.mxu0 %v4252
    %v10937 = vpop.f32.mrf.mxu0
    %v10938 = vadd.f32 %v10925, %v10937
    %v10939 = vpop.f32.mrf.mxu0
    %10940 = vdwg.mxu0
    %10941 = vmatpush.bf16.msra.mxu0 %v9398
    %10942 = vmatpush.bf16.msra.mxu0 %v9382
    %10943 = vmatpush.bf16.msra.mxu0 %v9366
    %10944 = vmatpush.bf16.msra.mxu0 %v9350
    %10945 = vmatpush.bf16.msra.mxu0 %v9334
    %10946 = vmatpush.bf16.msra.mxu0 %v9318
    %10947 = vmatpush.bf16.msra.mxu0 %v9302
    %10948 = vmatpush.bf16.msra.mxu0 %v9286
    %10949 = vmatmul.bf16.gmra.mxu0 %v4253
    %v10950 = vpop.f32.mrf.mxu0
    %v10951 = vadd.f32 %v10938, %v10950
    %v10952 = vpop.f32.mrf.mxu0
    %10953 = vdwg.mxu0
    %10954 = vmatpush.bf16.msra.mxu0 %v8503
    %10955 = vmatpush.bf16.msra.mxu0 %v8487
    %10956 = vmatpush.bf16.msra.mxu0 %v8471
    %10957 = vmatpush.bf16.msra.mxu0 %v8455
    %10958 = vmatpush.bf16.msra.mxu0 %v8439
    %10959 = vmatpush.bf16.msra.mxu0 %v8423
    %10960 = vmatpush.bf16.msra.mxu0 %v8407
    %10961 = vmatpush.bf16.msra.mxu0 %v8391
    %10962 = vmatmul.bf16.gmra.mxu0 %v4246
    %v10963 = vpop.f32.mrf.mxu0
    %v10964 = vadd.f32 %v5287, %v10963
    %v10965 = vpop.f32.mrf.mxu0
    %10966 = vdwg.mxu0
    %10967 = vmatpush.bf16.msra.mxu0 %v8631
    %10968 = vmatpush.bf16.msra.mxu0 %v8615
    %10969 = vmatpush.bf16.msra.mxu0 %v8599
    %10970 = vmatpush.bf16.msra.mxu0 %v8583
    %10971 = vmatpush.bf16.msra.mxu0 %v8567
    %10972 = vmatpush.bf16.msra.mxu0 %v8551
    %10973 = vmatpush.bf16.msra.mxu0 %v8535
    %10974 = vmatpush.bf16.msra.mxu0 %v8519
    %10975 = vmatmul.bf16.gmra.mxu0 %v4247
    %v10976 = vpop.f32.mrf.mxu0
    %v10977 = vadd.f32 %v10964, %v10976
    %v10978 = vpop.f32.mrf.mxu0
    %10979 = vdwg.mxu0
    %10980 = vmatpush.bf16.msra.mxu0 %v8759
    %10981 = vmatpush.bf16.msra.mxu0 %v8743
    %10982 = vmatpush.bf16.msra.mxu0 %v8727
    %10983 = vmatpush.bf16.msra.mxu0 %v8711
    %10984 = vmatpush.bf16.msra.mxu0 %v8695
    %10985 = vmatpush.bf16.msra.mxu0 %v8679
    %10986 = vmatpush.bf16.msra.mxu0 %v8663
    %10987 = vmatpush.bf16.msra.mxu0 %v8647
    %10988 = vmatmul.bf16.gmra.mxu0 %v4248
    %v10989 = vpop.f32.mrf.mxu0
    %v10990 = vadd.f32 %v10977, %v10989
    %v10991 = vpop.f32.mrf.mxu0
    %10992 = vdwg.mxu0
    %10993 = vmatpush.bf16.msra.mxu0 %v8887
    %10994 = vmatpush.bf16.msra.mxu0 %v8871
    %10995 = vmatpush.bf16.msra.mxu0 %v8855
    %10996 = vmatpush.bf16.msra.mxu0 %v8839
    %10997 = vmatpush.bf16.msra.mxu0 %v8823
    %10998 = vmatpush.bf16.msra.mxu0 %v8807
    %10999 = vmatpush.bf16.msra.mxu0 %v8791
    %11000 = vmatpush.bf16.msra.mxu0 %v8775
    %11001 = vmatmul.bf16.gmra.mxu0 %v4249
    %v11002 = vpop.f32.mrf.mxu0
    %v11003 = vadd.f32 %v10990, %v11002
    %v11004 = vpop.f32.mrf.mxu0
    %11005 = vdwg.mxu0
    %11006 = vmatpush.bf16.msra.mxu0 %v9015
    %11007 = vmatpush.bf16.msra.mxu0 %v8999
    %11008 = vmatpush.bf16.msra.mxu0 %v8983
    %11009 = vmatpush.bf16.msra.mxu0 %v8967
    %11010 = vmatpush.bf16.msra.mxu0 %v8951
    %11011 = vmatpush.bf16.msra.mxu0 %v8935
    %11012 = vmatpush.bf16.msra.mxu0 %v8919
    %11013 = vmatpush.bf16.msra.mxu0 %v8903
    %11014 = vmatmul.bf16.gmra.mxu0 %v4250
    %v11015 = vpop.f32.mrf.mxu0
    %v11016 = vadd.f32 %v11003, %v11015
    %v11017 = vpop.f32.mrf.mxu0
    %11018 = vdwg.mxu0
    %11019 = vmatpush.bf16.msra.mxu0 %v9143
    %11020 = vmatpush.bf16.msra.mxu0 %v9127
    %11021 = vmatpush.bf16.msra.mxu0 %v9111
    %11022 = vmatpush.bf16.msra.mxu0 %v9095
    %11023 = vmatpush.bf16.msra.mxu0 %v9079
    %11024 = vmatpush.bf16.msra.mxu0 %v9063
    %11025 = vmatpush.bf16.msra.mxu0 %v9047
    %11026 = vmatpush.bf16.msra.mxu0 %v9031
    %11027 = vmatmul.bf16.gmra.mxu0 %v4251
    %v11028 = vpop.f32.mrf.mxu0
    %v11029 = vadd.f32 %v11016, %v11028
    %v11030 = vpop.f32.mrf.mxu0
    %11031 = vdwg.mxu0
    %11032 = vmatpush.bf16.msra.mxu0 %v9271
    %11033 = vmatpush.bf16.msra.mxu0 %v9255
    %11034 = vmatpush.bf16.msra.mxu0 %v9239
    %11035 = vmatpush.bf16.msra.mxu0 %v9223
    %11036 = vmatpush.bf16.msra.mxu0 %v9207
    %11037 = vmatpush.bf16.msra.mxu0 %v9191
    %11038 = vmatpush.bf16.msra.mxu0 %v9175
    %11039 = vmatpush.bf16.msra.mxu0 %v9159
    %11040 = vmatmul.bf16.gmra.mxu0 %v4252
    %v11041 = vpop.f32.mrf.mxu0
    %v11042 = vadd.f32 %v11029, %v11041
    %v11043 = vpop.f32.mrf.mxu0
    %11044 = vdwg.mxu0
    %11045 = vmatpush.bf16.msra.mxu0 %v9399
    %11046 = vmatpush.bf16.msra.mxu0 %v9383
    %11047 = vmatpush.bf16.msra.mxu0 %v9367
    %11048 = vmatpush.bf16.msra.mxu0 %v9351
    %11049 = vmatpush.bf16.msra.mxu0 %v9335
    %11050 = vmatpush.bf16.msra.mxu0 %v9319
    %11051 = vmatpush.bf16.msra.mxu0 %v9303
    %11052 = vmatpush.bf16.msra.mxu0 %v9287
    %11053 = vmatmul.bf16.gmra.mxu0 %v4253
    %v11054 = vpop.f32.mrf.mxu0
    %v11055 = vadd.f32 %v11042, %v11054
    %v11056 = vpop.f32.mrf.mxu0
    %11057 = vdwg.mxu0
    %11058 = vmatpush.bf16.msra.mxu0 %v8504
    %11059 = vmatpush.bf16.msra.mxu0 %v8488
    %11060 = vmatpush.bf16.msra.mxu0 %v8472
    %11061 = vmatpush.bf16.msra.mxu0 %v8456
    %11062 = vmatpush.bf16.msra.mxu0 %v8440
    %11063 = vmatpush.bf16.msra.mxu0 %v8424
    %11064 = vmatpush.bf16.msra.mxu0 %v8408
    %11065 = vmatpush.bf16.msra.mxu0 %v8392
    %11066 = vmatmul.bf16.gmra.mxu0 %v4246
    %v11067 = vpop.f32.mrf.mxu0
    %v11068 = vadd.f32 %v5288, %v11067
    %v11069 = vpop.f32.mrf.mxu0
    %11070 = vdwg.mxu0
    %11071 = vmatpush.bf16.msra.mxu0 %v8632
    %11072 = vmatpush.bf16.msra.mxu0 %v8616
    %11073 = vmatpush.bf16.msra.mxu0 %v8600
    %11074 = vmatpush.bf16.msra.mxu0 %v8584
    %11075 = vmatpush.bf16.msra.mxu0 %v8568
    %11076 = vmatpush.bf16.msra.mxu0 %v8552
    %11077 = vmatpush.bf16.msra.mxu0 %v8536
    %11078 = vmatpush.bf16.msra.mxu0 %v8520
    %11079 = vmatmul.bf16.gmra.mxu0 %v4247
    %v11080 = vpop.f32.mrf.mxu0
    %v11081 = vadd.f32 %v11068, %v11080
    %v11082 = vpop.f32.mrf.mxu0
    %11083 = vdwg.mxu0
    %11084 = vmatpush.bf16.msra.mxu0 %v8760
    %11085 = vmatpush.bf16.msra.mxu0 %v8744
    %11086 = vmatpush.bf16.msra.mxu0 %v8728
    %11087 = vmatpush.bf16.msra.mxu0 %v8712
    %11088 = vmatpush.bf16.msra.mxu0 %v8696
    %11089 = vmatpush.bf16.msra.mxu0 %v8680
    %11090 = vmatpush.bf16.msra.mxu0 %v8664
    %11091 = vmatpush.bf16.msra.mxu0 %v8648
    %11092 = vmatmul.bf16.gmra.mxu0 %v4248
    %v11093 = vpop.f32.mrf.mxu0
    %v11094 = vadd.f32 %v11081, %v11093
    %v11095 = vpop.f32.mrf.mxu0
    %11096 = vdwg.mxu0
    %11097 = vmatpush.bf16.msra.mxu0 %v8888
    %11098 = vmatpush.bf16.msra.mxu0 %v8872
    %11099 = vmatpush.bf16.msra.mxu0 %v8856
    %11100 = vmatpush.bf16.msra.mxu0 %v8840
    %11101 = vmatpush.bf16.msra.mxu0 %v8824
    %11102 = vmatpush.bf16.msra.mxu0 %v8808
    %11103 = vmatpush.bf16.msra.mxu0 %v8792
    %11104 = vmatpush.bf16.msra.mxu0 %v8776
    %11105 = vmatmul.bf16.gmra.mxu0 %v4249
    %v11106 = vpop.f32.mrf.mxu0
    %v11107 = vadd.f32 %v11094, %v11106
    %v11108 = vpop.f32.mrf.mxu0
    %11109 = vdwg.mxu0
    %11110 = vmatpush.bf16.msra.mxu0 %v9016
    %11111 = vmatpush.bf16.msra.mxu0 %v9000
    %11112 = vmatpush.bf16.msra.mxu0 %v8984
    %11113 = vmatpush.bf16.msra.mxu0 %v8968
    %11114 = vmatpush.bf16.msra.mxu0 %v8952
    %11115 = vmatpush.bf16.msra.mxu0 %v8936
    %11116 = vmatpush.bf16.msra.mxu0 %v8920
    %11117 = vmatpush.bf16.msra.mxu0 %v8904
    %11118 = vmatmul.bf16.gmra.mxu0 %v4250
    %v11119 = vpop.f32.mrf.mxu0
    %v11120 = vadd.f32 %v11107, %v11119
    %v11121 = vpop.f32.mrf.mxu0
    %11122 = vdwg.mxu0
    %11123 = vmatpush.bf16.msra.mxu0 %v9144
    %11124 = vmatpush.bf16.msra.mxu0 %v9128
    %11125 = vmatpush.bf16.msra.mxu0 %v9112
    %11126 = vmatpush.bf16.msra.mxu0 %v9096
    %11127 = vmatpush.bf16.msra.mxu0 %v9080
    %11128 = vmatpush.bf16.msra.mxu0 %v9064
    %11129 = vmatpush.bf16.msra.mxu0 %v9048
    %11130 = vmatpush.bf16.msra.mxu0 %v9032
    %11131 = vmatmul.bf16.gmra.mxu0 %v4251
    %v11132 = vpop.f32.mrf.mxu0
    %v11133 = vadd.f32 %v11120, %v11132
    %v11134 = vpop.f32.mrf.mxu0
    %11135 = vdwg.mxu0
    %11136 = vmatpush.bf16.msra.mxu0 %v9272
    %11137 = vmatpush.bf16.msra.mxu0 %v9256
    %11138 = vmatpush.bf16.msra.mxu0 %v9240
    %11139 = vmatpush.bf16.msra.mxu0 %v9224
    %11140 = vmatpush.bf16.msra.mxu0 %v9208
    %11141 = vmatpush.bf16.msra.mxu0 %v9192
    %11142 = vmatpush.bf16.msra.mxu0 %v9176
    %11143 = vmatpush.bf16.msra.mxu0 %v9160
    %11144 = vmatmul.bf16.gmra.mxu0 %v4252
    %v11145 = vpop.f32.mrf.mxu0
    %v11146 = vadd.f32 %v11133, %v11145
    %v11147 = vpop.f32.mrf.mxu0
    %11148 = vdwg.mxu0
    %11149 = vmatpush.bf16.msra.mxu0 %v9400
    %11150 = vmatpush.bf16.msra.mxu0 %v9384
    %11151 = vmatpush.bf16.msra.mxu0 %v9368
    %11152 = vmatpush.bf16.msra.mxu0 %v9352
    %11153 = vmatpush.bf16.msra.mxu0 %v9336
    %11154 = vmatpush.bf16.msra.mxu0 %v9320
    %11155 = vmatpush.bf16.msra.mxu0 %v9304
    %11156 = vmatpush.bf16.msra.mxu0 %v9288
    %11157 = vmatmul.bf16.gmra.mxu0 %v4253
    %v11158 = vpop.f32.mrf.mxu0
    %v11159 = vadd.f32 %v11146, %v11158
    %v11160 = vpop.f32.mrf.mxu0
    %11161 = vdwg.mxu0
    %11162 = vmatpush.bf16.msra.mxu0 %v8505
    %11163 = vmatpush.bf16.msra.mxu0 %v8489
    %11164 = vmatpush.bf16.msra.mxu0 %v8473
    %11165 = vmatpush.bf16.msra.mxu0 %v8457
    %11166 = vmatpush.bf16.msra.mxu0 %v8441
    %11167 = vmatpush.bf16.msra.mxu0 %v8425
    %11168 = vmatpush.bf16.msra.mxu0 %v8409
    %11169 = vmatpush.bf16.msra.mxu0 %v8393
    %11170 = vmatmul.bf16.gmra.mxu0 %v4246
    %v11171 = vpop.f32.mrf.mxu0
    %v11172 = vadd.f32 %v5289, %v11171
    %v11173 = vpop.f32.mrf.mxu0
    %11174 = vdwg.mxu0
    %11175 = vmatpush.bf16.msra.mxu0 %v8633
    %11176 = vmatpush.bf16.msra.mxu0 %v8617
    %11177 = vmatpush.bf16.msra.mxu0 %v8601
    %11178 = vmatpush.bf16.msra.mxu0 %v8585
    %11179 = vmatpush.bf16.msra.mxu0 %v8569
    %11180 = vmatpush.bf16.msra.mxu0 %v8553
    %11181 = vmatpush.bf16.msra.mxu0 %v8537
    %11182 = vmatpush.bf16.msra.mxu0 %v8521
    %11183 = vmatmul.bf16.gmra.mxu0 %v4247
    %v11184 = vpop.f32.mrf.mxu0
    %v11185 = vadd.f32 %v11172, %v11184
    %v11186 = vpop.f32.mrf.mxu0
    %11187 = vdwg.mxu0
    %11188 = vmatpush.bf16.msra.mxu0 %v8761
    %11189 = vmatpush.bf16.msra.mxu0 %v8745
    %11190 = vmatpush.bf16.msra.mxu0 %v8729
    %11191 = vmatpush.bf16.msra.mxu0 %v8713
    %11192 = vmatpush.bf16.msra.mxu0 %v8697
    %11193 = vmatpush.bf16.msra.mxu0 %v8681
    %11194 = vmatpush.bf16.msra.mxu0 %v8665
    %11195 = vmatpush.bf16.msra.mxu0 %v8649
    %11196 = vmatmul.bf16.gmra.mxu0 %v4248
    %v11197 = vpop.f32.mrf.mxu0
    %v11198 = vadd.f32 %v11185, %v11197
    %v11199 = vpop.f32.mrf.mxu0
    %11200 = vdwg.mxu0
    %11201 = vmatpush.bf16.msra.mxu0 %v8889
    %11202 = vmatpush.bf16.msra.mxu0 %v8873
    %11203 = vmatpush.bf16.msra.mxu0 %v8857
    %11204 = vmatpush.bf16.msra.mxu0 %v8841
    %11205 = vmatpush.bf16.msra.mxu0 %v8825
    %11206 = vmatpush.bf16.msra.mxu0 %v8809
    %11207 = vmatpush.bf16.msra.mxu0 %v8793
    %11208 = vmatpush.bf16.msra.mxu0 %v8777
    %11209 = vmatmul.bf16.gmra.mxu0 %v4249
    %v11210 = vpop.f32.mrf.mxu0
    %v11211 = vadd.f32 %v11198, %v11210
    %v11212 = vpop.f32.mrf.mxu0
    %11213 = vdwg.mxu0
    %11214 = vmatpush.bf16.msra.mxu0 %v9017
    %11215 = vmatpush.bf16.msra.mxu0 %v9001
    %11216 = vmatpush.bf16.msra.mxu0 %v8985
    %11217 = vmatpush.bf16.msra.mxu0 %v8969
    %11218 = vmatpush.bf16.msra.mxu0 %v8953
    %11219 = vmatpush.bf16.msra.mxu0 %v8937
    %11220 = vmatpush.bf16.msra.mxu0 %v8921
    %11221 = vmatpush.bf16.msra.mxu0 %v8905
    %11222 = vmatmul.bf16.gmra.mxu0 %v4250
    %v11223 = vpop.f32.mrf.mxu0
    %v11224 = vadd.f32 %v11211, %v11223
    %v11225 = vpop.f32.mrf.mxu0
    %11226 = vdwg.mxu0
    %11227 = vmatpush.bf16.msra.mxu0 %v9145
    %11228 = vmatpush.bf16.msra.mxu0 %v9129
    %11229 = vmatpush.bf16.msra.mxu0 %v9113
    %11230 = vmatpush.bf16.msra.mxu0 %v9097
    %11231 = vmatpush.bf16.msra.mxu0 %v9081
    %11232 = vmatpush.bf16.msra.mxu0 %v9065
    %11233 = vmatpush.bf16.msra.mxu0 %v9049
    %11234 = vmatpush.bf16.msra.mxu0 %v9033
    %11235 = vmatmul.bf16.gmra.mxu0 %v4251
    %v11236 = vpop.f32.mrf.mxu0
    %v11237 = vadd.f32 %v11224, %v11236
    %v11238 = vpop.f32.mrf.mxu0
    %11239 = vdwg.mxu0
    %11240 = vmatpush.bf16.msra.mxu0 %v9273
    %11241 = vmatpush.bf16.msra.mxu0 %v9257
    %11242 = vmatpush.bf16.msra.mxu0 %v9241
    %11243 = vmatpush.bf16.msra.mxu0 %v9225
    %11244 = vmatpush.bf16.msra.mxu0 %v9209
    %11245 = vmatpush.bf16.msra.mxu0 %v9193
    %11246 = vmatpush.bf16.msra.mxu0 %v9177
    %11247 = vmatpush.bf16.msra.mxu0 %v9161
    %11248 = vmatmul.bf16.gmra.mxu0 %v4252
    %v11249 = vpop.f32.mrf.mxu0
    %v11250 = vadd.f32 %v11237, %v11249
    %v11251 = vpop.f32.mrf.mxu0
    %11252 = vdwg.mxu0
    %11253 = vmatpush.bf16.msra.mxu0 %v9401
    %11254 = vmatpush.bf16.msra.mxu0 %v9385
    %11255 = vmatpush.bf16.msra.mxu0 %v9369
    %11256 = vmatpush.bf16.msra.mxu0 %v9353
    %11257 = vmatpush.bf16.msra.mxu0 %v9337
    %11258 = vmatpush.bf16.msra.mxu0 %v9321
    %11259 = vmatpush.bf16.msra.mxu0 %v9305
    %11260 = vmatpush.bf16.msra.mxu0 %v9289
    %11261 = vmatmul.bf16.gmra.mxu0 %v4253
    %v11262 = vpop.f32.mrf.mxu0
    %v11263 = vadd.f32 %v11250, %v11262
    %v11264 = vpop.f32.mrf.mxu0
    %11265 = vdwg.mxu0
    %11266 = vmatpush.bf16.msra.mxu0 %v8506
    %11267 = vmatpush.bf16.msra.mxu0 %v8490
    %11268 = vmatpush.bf16.msra.mxu0 %v8474
    %11269 = vmatpush.bf16.msra.mxu0 %v8458
    %11270 = vmatpush.bf16.msra.mxu0 %v8442
    %11271 = vmatpush.bf16.msra.mxu0 %v8426
    %11272 = vmatpush.bf16.msra.mxu0 %v8410
    %11273 = vmatpush.bf16.msra.mxu0 %v8394
    %11274 = vmatmul.bf16.gmra.mxu0 %v4246
    %v11275 = vpop.f32.mrf.mxu0
    %v11276 = vadd.f32 %v5290, %v11275
    %v11277 = vpop.f32.mrf.mxu0
    %11278 = vdwg.mxu0
    %11279 = vmatpush.bf16.msra.mxu0 %v8634
    %11280 = vmatpush.bf16.msra.mxu0 %v8618
    %11281 = vmatpush.bf16.msra.mxu0 %v8602
    %11282 = vmatpush.bf16.msra.mxu0 %v8586
    %11283 = vmatpush.bf16.msra.mxu0 %v8570
    %11284 = vmatpush.bf16.msra.mxu0 %v8554
    %11285 = vmatpush.bf16.msra.mxu0 %v8538
    %11286 = vmatpush.bf16.msra.mxu0 %v8522
    %11287 = vmatmul.bf16.gmra.mxu0 %v4247
    %v11288 = vpop.f32.mrf.mxu0
    %v11289 = vadd.f32 %v11276, %v11288
    %v11290 = vpop.f32.mrf.mxu0
    %11291 = vdwg.mxu0
    %11292 = vmatpush.bf16.msra.mxu0 %v8762
    %11293 = vmatpush.bf16.msra.mxu0 %v8746
    %11294 = vmatpush.bf16.msra.mxu0 %v8730
    %11295 = vmatpush.bf16.msra.mxu0 %v8714
    %11296 = vmatpush.bf16.msra.mxu0 %v8698
    %11297 = vmatpush.bf16.msra.mxu0 %v8682
    %11298 = vmatpush.bf16.msra.mxu0 %v8666
    %11299 = vmatpush.bf16.msra.mxu0 %v8650
    %11300 = vmatmul.bf16.gmra.mxu0 %v4248
    %v11301 = vpop.f32.mrf.mxu0
    %v11302 = vadd.f32 %v11289, %v11301
    %v11303 = vpop.f32.mrf.mxu0
    %11304 = vdwg.mxu0
    %11305 = vmatpush.bf16.msra.mxu0 %v8890
    %11306 = vmatpush.bf16.msra.mxu0 %v8874
    %11307 = vmatpush.bf16.msra.mxu0 %v8858
    %11308 = vmatpush.bf16.msra.mxu0 %v8842
    %11309 = vmatpush.bf16.msra.mxu0 %v8826
    %11310 = vmatpush.bf16.msra.mxu0 %v8810
    %11311 = vmatpush.bf16.msra.mxu0 %v8794
    %11312 = vmatpush.bf16.msra.mxu0 %v8778
    %11313 = vmatmul.bf16.gmra.mxu0 %v4249
    %v11314 = vpop.f32.mrf.mxu0
    %v11315 = vadd.f32 %v11302, %v11314
    %v11316 = vpop.f32.mrf.mxu0
    %11317 = vdwg.mxu0
    %11318 = vmatpush.bf16.msra.mxu0 %v9018
    %11319 = vmatpush.bf16.msra.mxu0 %v9002
    %11320 = vmatpush.bf16.msra.mxu0 %v8986
    %11321 = vmatpush.bf16.msra.mxu0 %v8970
    %11322 = vmatpush.bf16.msra.mxu0 %v8954
    %11323 = vmatpush.bf16.msra.mxu0 %v8938
    %11324 = vmatpush.bf16.msra.mxu0 %v8922
    %11325 = vmatpush.bf16.msra.mxu0 %v8906
    %11326 = vmatmul.bf16.gmra.mxu0 %v4250
    %v11327 = vpop.f32.mrf.mxu0
    %v11328 = vadd.f32 %v11315, %v11327
    %v11329 = vpop.f32.mrf.mxu0
    %11330 = vdwg.mxu0
    %11331 = vmatpush.bf16.msra.mxu0 %v9146
    %11332 = vmatpush.bf16.msra.mxu0 %v9130
    %11333 = vmatpush.bf16.msra.mxu0 %v9114
    %11334 = vmatpush.bf16.msra.mxu0 %v9098
    %11335 = vmatpush.bf16.msra.mxu0 %v9082
    %11336 = vmatpush.bf16.msra.mxu0 %v9066
    %11337 = vmatpush.bf16.msra.mxu0 %v9050
    %11338 = vmatpush.bf16.msra.mxu0 %v9034
    %11339 = vmatmul.bf16.gmra.mxu0 %v4251
    %v11340 = vpop.f32.mrf.mxu0
    %v11341 = vadd.f32 %v11328, %v11340
    %v11342 = vpop.f32.mrf.mxu0
    %11343 = vdwg.mxu0
    %11344 = vmatpush.bf16.msra.mxu0 %v9274
    %11345 = vmatpush.bf16.msra.mxu0 %v9258
    %11346 = vmatpush.bf16.msra.mxu0 %v9242
    %11347 = vmatpush.bf16.msra.mxu0 %v9226
    %11348 = vmatpush.bf16.msra.mxu0 %v9210
    %11349 = vmatpush.bf16.msra.mxu0 %v9194
    %11350 = vmatpush.bf16.msra.mxu0 %v9178
    %11351 = vmatpush.bf16.msra.mxu0 %v9162
    %11352 = vmatmul.bf16.gmra.mxu0 %v4252
    %v11353 = vpop.f32.mrf.mxu0
    %v11354 = vadd.f32 %v11341, %v11353
    %v11355 = vpop.f32.mrf.mxu0
    %11356 = vdwg.mxu0
    %11357 = vmatpush.bf16.msra.mxu0 %v9402
    %11358 = vmatpush.bf16.msra.mxu0 %v9386
    %11359 = vmatpush.bf16.msra.mxu0 %v9370
    %11360 = vmatpush.bf16.msra.mxu0 %v9354
    %11361 = vmatpush.bf16.msra.mxu0 %v9338
    %11362 = vmatpush.bf16.msra.mxu0 %v9322
    %11363 = vmatpush.bf16.msra.mxu0 %v9306
    %11364 = vmatpush.bf16.msra.mxu0 %v9290
    %11365 = vmatmul.bf16.gmra.mxu0 %v4253
    %v11366 = vpop.f32.mrf.mxu0
    %v11367 = vadd.f32 %v11354, %v11366
    %v11368 = vpop.f32.mrf.mxu0
    %11369 = vdwg.mxu0
    %11370 = vmatpush.bf16.msra.mxu0 %v8507
    %11371 = vmatpush.bf16.msra.mxu0 %v8491
    %11372 = vmatpush.bf16.msra.mxu0 %v8475
    %11373 = vmatpush.bf16.msra.mxu0 %v8459
    %11374 = vmatpush.bf16.msra.mxu0 %v8443
    %11375 = vmatpush.bf16.msra.mxu0 %v8427
    %11376 = vmatpush.bf16.msra.mxu0 %v8411
    %11377 = vmatpush.bf16.msra.mxu0 %v8395
    %11378 = vmatmul.bf16.gmra.mxu0 %v4246
    %v11379 = vpop.f32.mrf.mxu0
    %v11380 = vadd.f32 %v5291, %v11379
    %v11381 = vpop.f32.mrf.mxu0
    %11382 = vdwg.mxu0
    %11383 = vmatpush.bf16.msra.mxu0 %v8635
    %11384 = vmatpush.bf16.msra.mxu0 %v8619
    %11385 = vmatpush.bf16.msra.mxu0 %v8603
    %11386 = vmatpush.bf16.msra.mxu0 %v8587
    %11387 = vmatpush.bf16.msra.mxu0 %v8571
    %11388 = vmatpush.bf16.msra.mxu0 %v8555
    %11389 = vmatpush.bf16.msra.mxu0 %v8539
    %11390 = vmatpush.bf16.msra.mxu0 %v8523
    %11391 = vmatmul.bf16.gmra.mxu0 %v4247
    %v11392 = vpop.f32.mrf.mxu0
    %v11393 = vadd.f32 %v11380, %v11392
    %v11394 = vpop.f32.mrf.mxu0
    %11395 = vdwg.mxu0
    %11396 = vmatpush.bf16.msra.mxu0 %v8763
    %11397 = vmatpush.bf16.msra.mxu0 %v8747
    %11398 = vmatpush.bf16.msra.mxu0 %v8731
    %11399 = vmatpush.bf16.msra.mxu0 %v8715
    %11400 = vmatpush.bf16.msra.mxu0 %v8699
    %11401 = vmatpush.bf16.msra.mxu0 %v8683
    %11402 = vmatpush.bf16.msra.mxu0 %v8667
    %11403 = vmatpush.bf16.msra.mxu0 %v8651
    %11404 = vmatmul.bf16.gmra.mxu0 %v4248
    %v11405 = vpop.f32.mrf.mxu0
    %v11406 = vadd.f32 %v11393, %v11405
    %v11407 = vpop.f32.mrf.mxu0
    %11408 = vdwg.mxu0
    %11409 = vmatpush.bf16.msra.mxu0 %v8891
    %11410 = vmatpush.bf16.msra.mxu0 %v8875
    %11411 = vmatpush.bf16.msra.mxu0 %v8859
    %11412 = vmatpush.bf16.msra.mxu0 %v8843
    %11413 = vmatpush.bf16.msra.mxu0 %v8827
    %11414 = vmatpush.bf16.msra.mxu0 %v8811
    %11415 = vmatpush.bf16.msra.mxu0 %v8795
    %11416 = vmatpush.bf16.msra.mxu0 %v8779
    %11417 = vmatmul.bf16.gmra.mxu0 %v4249
    %v11418 = vpop.f32.mrf.mxu0
    %v11419 = vadd.f32 %v11406, %v11418
    %v11420 = vpop.f32.mrf.mxu0
    %11421 = vdwg.mxu0
    %11422 = vmatpush.bf16.msra.mxu0 %v9019
    %11423 = vmatpush.bf16.msra.mxu0 %v9003
    %11424 = vmatpush.bf16.msra.mxu0 %v8987
    %11425 = vmatpush.bf16.msra.mxu0 %v8971
    %11426 = vmatpush.bf16.msra.mxu0 %v8955
    %11427 = vmatpush.bf16.msra.mxu0 %v8939
    %11428 = vmatpush.bf16.msra.mxu0 %v8923
    %11429 = vmatpush.bf16.msra.mxu0 %v8907
    %11430 = vmatmul.bf16.gmra.mxu0 %v4250
    %v11431 = vpop.f32.mrf.mxu0
    %v11432 = vadd.f32 %v11419, %v11431
    %v11433 = vpop.f32.mrf.mxu0
    %11434 = vdwg.mxu0
    %11435 = vmatpush.bf16.msra.mxu0 %v9147
    %11436 = vmatpush.bf16.msra.mxu0 %v9131
    %11437 = vmatpush.bf16.msra.mxu0 %v9115
    %11438 = vmatpush.bf16.msra.mxu0 %v9099
    %11439 = vmatpush.bf16.msra.mxu0 %v9083
    %11440 = vmatpush.bf16.msra.mxu0 %v9067
    %11441 = vmatpush.bf16.msra.mxu0 %v9051
    %11442 = vmatpush.bf16.msra.mxu0 %v9035
    %11443 = vmatmul.bf16.gmra.mxu0 %v4251
    %v11444 = vpop.f32.mrf.mxu0
    %v11445 = vadd.f32 %v11432, %v11444
    %v11446 = vpop.f32.mrf.mxu0
    %11447 = vdwg.mxu0
    %11448 = vmatpush.bf16.msra.mxu0 %v9275
    %11449 = vmatpush.bf16.msra.mxu0 %v9259
    %11450 = vmatpush.bf16.msra.mxu0 %v9243
    %11451 = vmatpush.bf16.msra.mxu0 %v9227
    %11452 = vmatpush.bf16.msra.mxu0 %v9211
    %11453 = vmatpush.bf16.msra.mxu0 %v9195
    %11454 = vmatpush.bf16.msra.mxu0 %v9179
    %11455 = vmatpush.bf16.msra.mxu0 %v9163
    %11456 = vmatmul.bf16.gmra.mxu0 %v4252
    %v11457 = vpop.f32.mrf.mxu0
    %v11458 = vadd.f32 %v11445, %v11457
    %v11459 = vpop.f32.mrf.mxu0
    %11460 = vdwg.mxu0
    %11461 = vmatpush.bf16.msra.mxu0 %v9403
    %11462 = vmatpush.bf16.msra.mxu0 %v9387
    %11463 = vmatpush.bf16.msra.mxu0 %v9371
    %11464 = vmatpush.bf16.msra.mxu0 %v9355
    %11465 = vmatpush.bf16.msra.mxu0 %v9339
    %11466 = vmatpush.bf16.msra.mxu0 %v9323
    %11467 = vmatpush.bf16.msra.mxu0 %v9307
    %11468 = vmatpush.bf16.msra.mxu0 %v9291
    %11469 = vmatmul.bf16.gmra.mxu0 %v4253
    %v11470 = vpop.f32.mrf.mxu0
    %v11471 = vadd.f32 %v11458, %v11470
    %v11472 = vpop.f32.mrf.mxu0
    %11473 = vdwg.mxu0
    %11474 = vmatpush.bf16.msra.mxu0 %v8508
    %11475 = vmatpush.bf16.msra.mxu0 %v8492
    %11476 = vmatpush.bf16.msra.mxu0 %v8476
    %11477 = vmatpush.bf16.msra.mxu0 %v8460
    %11478 = vmatpush.bf16.msra.mxu0 %v8444
    %11479 = vmatpush.bf16.msra.mxu0 %v8428
    %11480 = vmatpush.bf16.msra.mxu0 %v8412
    %11481 = vmatpush.bf16.msra.mxu0 %v8396
    %11482 = vmatmul.bf16.gmra.mxu0 %v4246
    %v11483 = vpop.f32.mrf.mxu0
    %v11484 = vadd.f32 %v5292, %v11483
    %v11485 = vpop.f32.mrf.mxu0
    %11486 = vdwg.mxu0
    %11487 = vmatpush.bf16.msra.mxu0 %v8636
    %11488 = vmatpush.bf16.msra.mxu0 %v8620
    %11489 = vmatpush.bf16.msra.mxu0 %v8604
    %11490 = vmatpush.bf16.msra.mxu0 %v8588
    %11491 = vmatpush.bf16.msra.mxu0 %v8572
    %11492 = vmatpush.bf16.msra.mxu0 %v8556
    %11493 = vmatpush.bf16.msra.mxu0 %v8540
    %11494 = vmatpush.bf16.msra.mxu0 %v8524
    %11495 = vmatmul.bf16.gmra.mxu0 %v4247
    %v11496 = vpop.f32.mrf.mxu0
    %v11497 = vadd.f32 %v11484, %v11496
    %v11498 = vpop.f32.mrf.mxu0
    %11499 = vdwg.mxu0
    %11500 = vmatpush.bf16.msra.mxu0 %v8764
    %11501 = vmatpush.bf16.msra.mxu0 %v8748
    %11502 = vmatpush.bf16.msra.mxu0 %v8732
    %11503 = vmatpush.bf16.msra.mxu0 %v8716
    %11504 = vmatpush.bf16.msra.mxu0 %v8700
    %11505 = vmatpush.bf16.msra.mxu0 %v8684
    %11506 = vmatpush.bf16.msra.mxu0 %v8668
    %11507 = vmatpush.bf16.msra.mxu0 %v8652
    %11508 = vmatmul.bf16.gmra.mxu0 %v4248
    %v11509 = vpop.f32.mrf.mxu0
    %v11510 = vadd.f32 %v11497, %v11509
    %v11511 = vpop.f32.mrf.mxu0
    %11512 = vdwg.mxu0
    %11513 = vmatpush.bf16.msra.mxu0 %v8892
    %11514 = vmatpush.bf16.msra.mxu0 %v8876
    %11515 = vmatpush.bf16.msra.mxu0 %v8860
    %11516 = vmatpush.bf16.msra.mxu0 %v8844
    %11517 = vmatpush.bf16.msra.mxu0 %v8828
    %11518 = vmatpush.bf16.msra.mxu0 %v8812
    %11519 = vmatpush.bf16.msra.mxu0 %v8796
    %11520 = vmatpush.bf16.msra.mxu0 %v8780
    %11521 = vmatmul.bf16.gmra.mxu0 %v4249
    %v11522 = vpop.f32.mrf.mxu0
    %v11523 = vadd.f32 %v11510, %v11522
    %v11524 = vpop.f32.mrf.mxu0
    %11525 = vdwg.mxu0
    %11526 = vmatpush.bf16.msra.mxu0 %v9020
    %11527 = vmatpush.bf16.msra.mxu0 %v9004
    %11528 = vmatpush.bf16.msra.mxu0 %v8988
    %11529 = vmatpush.bf16.msra.mxu0 %v8972
    %11530 = vmatpush.bf16.msra.mxu0 %v8956
    %11531 = vmatpush.bf16.msra.mxu0 %v8940
    %11532 = vmatpush.bf16.msra.mxu0 %v8924
    %11533 = vmatpush.bf16.msra.mxu0 %v8908
    %11534 = vmatmul.bf16.gmra.mxu0 %v4250
    %v11535 = vpop.f32.mrf.mxu0
    %v11536 = vadd.f32 %v11523, %v11535
    %v11537 = vpop.f32.mrf.mxu0
    %11538 = vdwg.mxu0
    %11539 = vmatpush.bf16.msra.mxu0 %v9148
    %11540 = vmatpush.bf16.msra.mxu0 %v9132
    %11541 = vmatpush.bf16.msra.mxu0 %v9116
    %11542 = vmatpush.bf16.msra.mxu0 %v9100
    %11543 = vmatpush.bf16.msra.mxu0 %v9084
    %11544 = vmatpush.bf16.msra.mxu0 %v9068
    %11545 = vmatpush.bf16.msra.mxu0 %v9052
    %11546 = vmatpush.bf16.msra.mxu0 %v9036
    %11547 = vmatmul.bf16.gmra.mxu0 %v4251
    %v11548 = vpop.f32.mrf.mxu0
    %v11549 = vadd.f32 %v11536, %v11548
    %v11550 = vpop.f32.mrf.mxu0
    %11551 = vdwg.mxu0
    %11552 = vmatpush.bf16.msra.mxu0 %v9276
    %11553 = vmatpush.bf16.msra.mxu0 %v9260
    %11554 = vmatpush.bf16.msra.mxu0 %v9244
    %11555 = vmatpush.bf16.msra.mxu0 %v9228
    %11556 = vmatpush.bf16.msra.mxu0 %v9212
    %11557 = vmatpush.bf16.msra.mxu0 %v9196
    %11558 = vmatpush.bf16.msra.mxu0 %v9180
    %11559 = vmatpush.bf16.msra.mxu0 %v9164
    %11560 = vmatmul.bf16.gmra.mxu0 %v4252
    %v11561 = vpop.f32.mrf.mxu0
    %v11562 = vadd.f32 %v11549, %v11561
    %v11563 = vpop.f32.mrf.mxu0
    %11564 = vdwg.mxu0
    %11565 = vmatpush.bf16.msra.mxu0 %v9404
    %11566 = vmatpush.bf16.msra.mxu0 %v9388
    %11567 = vmatpush.bf16.msra.mxu0 %v9372
    %11568 = vmatpush.bf16.msra.mxu0 %v9356
    %11569 = vmatpush.bf16.msra.mxu0 %v9340
    %11570 = vmatpush.bf16.msra.mxu0 %v9324
    %11571 = vmatpush.bf16.msra.mxu0 %v9308
    %11572 = vmatpush.bf16.msra.mxu0 %v9292
    %11573 = vmatmul.bf16.gmra.mxu0 %v4253
    %v11574 = vpop.f32.mrf.mxu0
    %v11575 = vadd.f32 %v11562, %v11574
    %v11576 = vpop.f32.mrf.mxu0
    %11577 = vdwg.mxu0
    %11578 = vmatpush.bf16.msra.mxu0 %v8509
    %11579 = vmatpush.bf16.msra.mxu0 %v8493
    %11580 = vmatpush.bf16.msra.mxu0 %v8477
    %11581 = vmatpush.bf16.msra.mxu0 %v8461
    %11582 = vmatpush.bf16.msra.mxu0 %v8445
    %11583 = vmatpush.bf16.msra.mxu0 %v8429
    %11584 = vmatpush.bf16.msra.mxu0 %v8413
    %11585 = vmatpush.bf16.msra.mxu0 %v8397
    %11586 = vmatmul.bf16.gmra.mxu0 %v4246
    %v11587 = vpop.f32.mrf.mxu0
    %v11588 = vadd.f32 %v5293, %v11587
    %v11589 = vpop.f32.mrf.mxu0
    %11590 = vdwg.mxu0
    %11591 = vmatpush.bf16.msra.mxu0 %v8637
    %11592 = vmatpush.bf16.msra.mxu0 %v8621
    %11593 = vmatpush.bf16.msra.mxu0 %v8605
    %11594 = vmatpush.bf16.msra.mxu0 %v8589
    %11595 = vmatpush.bf16.msra.mxu0 %v8573
    %11596 = vmatpush.bf16.msra.mxu0 %v8557
    %11597 = vmatpush.bf16.msra.mxu0 %v8541
    %11598 = vmatpush.bf16.msra.mxu0 %v8525
    %11599 = vmatmul.bf16.gmra.mxu0 %v4247
    %v11600 = vpop.f32.mrf.mxu0
    %v11601 = vadd.f32 %v11588, %v11600
    %v11602 = vpop.f32.mrf.mxu0
    %11603 = vdwg.mxu0
    %11604 = vmatpush.bf16.msra.mxu0 %v8765
    %11605 = vmatpush.bf16.msra.mxu0 %v8749
    %11606 = vmatpush.bf16.msra.mxu0 %v8733
    %11607 = vmatpush.bf16.msra.mxu0 %v8717
    %11608 = vmatpush.bf16.msra.mxu0 %v8701
    %11609 = vmatpush.bf16.msra.mxu0 %v8685
    %11610 = vmatpush.bf16.msra.mxu0 %v8669
    %11611 = vmatpush.bf16.msra.mxu0 %v8653
    %11612 = vmatmul.bf16.gmra.mxu0 %v4248
    %v11613 = vpop.f32.mrf.mxu0
    %v11614 = vadd.f32 %v11601, %v11613
    %v11615 = vpop.f32.mrf.mxu0
    %11616 = vdwg.mxu0
    %11617 = vmatpush.bf16.msra.mxu0 %v8893
    %11618 = vmatpush.bf16.msra.mxu0 %v8877
    %11619 = vmatpush.bf16.msra.mxu0 %v8861
    %11620 = vmatpush.bf16.msra.mxu0 %v8845
    %11621 = vmatpush.bf16.msra.mxu0 %v8829
    %11622 = vmatpush.bf16.msra.mxu0 %v8813
    %11623 = vmatpush.bf16.msra.mxu0 %v8797
    %11624 = vmatpush.bf16.msra.mxu0 %v8781
    %11625 = vmatmul.bf16.gmra.mxu0 %v4249
    %v11626 = vpop.f32.mrf.mxu0
    %v11627 = vadd.f32 %v11614, %v11626
    %v11628 = vpop.f32.mrf.mxu0
    %11629 = vdwg.mxu0
    %11630 = vmatpush.bf16.msra.mxu0 %v9021
    %11631 = vmatpush.bf16.msra.mxu0 %v9005
    %11632 = vmatpush.bf16.msra.mxu0 %v8989
    %11633 = vmatpush.bf16.msra.mxu0 %v8973
    %11634 = vmatpush.bf16.msra.mxu0 %v8957
    %11635 = vmatpush.bf16.msra.mxu0 %v8941
    %11636 = vmatpush.bf16.msra.mxu0 %v8925
    %11637 = vmatpush.bf16.msra.mxu0 %v8909
    %11638 = vmatmul.bf16.gmra.mxu0 %v4250
    %v11639 = vpop.f32.mrf.mxu0
    %v11640 = vadd.f32 %v11627, %v11639
    %v11641 = vpop.f32.mrf.mxu0
    %11642 = vdwg.mxu0
    %11643 = vmatpush.bf16.msra.mxu0 %v9149
    %11644 = vmatpush.bf16.msra.mxu0 %v9133
    %11645 = vmatpush.bf16.msra.mxu0 %v9117
    %11646 = vmatpush.bf16.msra.mxu0 %v9101
    %11647 = vmatpush.bf16.msra.mxu0 %v9085
    %11648 = vmatpush.bf16.msra.mxu0 %v9069
    %11649 = vmatpush.bf16.msra.mxu0 %v9053
    %11650 = vmatpush.bf16.msra.mxu0 %v9037
    %11651 = vmatmul.bf16.gmra.mxu0 %v4251
    %v11652 = vpop.f32.mrf.mxu0
    %v11653 = vadd.f32 %v11640, %v11652
    %v11654 = vpop.f32.mrf.mxu0
    %11655 = vdwg.mxu0
    %11656 = vmatpush.bf16.msra.mxu0 %v9277
    %11657 = vmatpush.bf16.msra.mxu0 %v9261
    %11658 = vmatpush.bf16.msra.mxu0 %v9245
    %11659 = vmatpush.bf16.msra.mxu0 %v9229
    %11660 = vmatpush.bf16.msra.mxu0 %v9213
    %11661 = vmatpush.bf16.msra.mxu0 %v9197
    %11662 = vmatpush.bf16.msra.mxu0 %v9181
    %11663 = vmatpush.bf16.msra.mxu0 %v9165
    %11664 = vmatmul.bf16.gmra.mxu0 %v4252
    %v11665 = vpop.f32.mrf.mxu0
    %v11666 = vadd.f32 %v11653, %v11665
    %v11667 = vpop.f32.mrf.mxu0
    %11668 = vdwg.mxu0
    %11669 = vmatpush.bf16.msra.mxu0 %v9405
    %11670 = vmatpush.bf16.msra.mxu0 %v9389
    %11671 = vmatpush.bf16.msra.mxu0 %v9373
    %11672 = vmatpush.bf16.msra.mxu0 %v9357
    %11673 = vmatpush.bf16.msra.mxu0 %v9341
    %11674 = vmatpush.bf16.msra.mxu0 %v9325
    %11675 = vmatpush.bf16.msra.mxu0 %v9309
    %11676 = vmatpush.bf16.msra.mxu0 %v9293
    %11677 = vmatmul.bf16.gmra.mxu0 %v4253
    %v11678 = vpop.f32.mrf.mxu0
    %v11679 = vadd.f32 %v11666, %v11678
    %v11680 = vpop.f32.mrf.mxu0
    %11681 = vdwg.mxu0
    %11682 = vmatpush.bf16.msra.mxu0 %v8510
    %11683 = vmatpush.bf16.msra.mxu0 %v8494
    %11684 = vmatpush.bf16.msra.mxu0 %v8478
    %11685 = vmatpush.bf16.msra.mxu0 %v8462
    %11686 = vmatpush.bf16.msra.mxu0 %v8446
    %11687 = vmatpush.bf16.msra.mxu0 %v8430
    %11688 = vmatpush.bf16.msra.mxu0 %v8414
    %11689 = vmatpush.bf16.msra.mxu0 %v8398
    %11690 = vmatmul.bf16.gmra.mxu0 %v4246
    %v11691 = vpop.f32.mrf.mxu0
    %v11692 = vadd.f32 %v5294, %v11691
    %v11693 = vpop.f32.mrf.mxu0
    %11694 = vdwg.mxu0
    %11695 = vmatpush.bf16.msra.mxu0 %v8638
    %11696 = vmatpush.bf16.msra.mxu0 %v8622
    %11697 = vmatpush.bf16.msra.mxu0 %v8606
    %11698 = vmatpush.bf16.msra.mxu0 %v8590
    %11699 = vmatpush.bf16.msra.mxu0 %v8574
    %11700 = vmatpush.bf16.msra.mxu0 %v8558
    %11701 = vmatpush.bf16.msra.mxu0 %v8542
    %11702 = vmatpush.bf16.msra.mxu0 %v8526
    %11703 = vmatmul.bf16.gmra.mxu0 %v4247
    %v11704 = vpop.f32.mrf.mxu0
    %v11705 = vadd.f32 %v11692, %v11704
    %v11706 = vpop.f32.mrf.mxu0
    %11707 = vdwg.mxu0
    %11708 = vmatpush.bf16.msra.mxu0 %v8766
    %11709 = vmatpush.bf16.msra.mxu0 %v8750
    %11710 = vmatpush.bf16.msra.mxu0 %v8734
    %11711 = vmatpush.bf16.msra.mxu0 %v8718
    %11712 = vmatpush.bf16.msra.mxu0 %v8702
    %11713 = vmatpush.bf16.msra.mxu0 %v8686
    %11714 = vmatpush.bf16.msra.mxu0 %v8670
    %11715 = vmatpush.bf16.msra.mxu0 %v8654
    %11716 = vmatmul.bf16.gmra.mxu0 %v4248
    %v11717 = vpop.f32.mrf.mxu0
    %v11718 = vadd.f32 %v11705, %v11717
    %v11719 = vpop.f32.mrf.mxu0
    %11720 = vdwg.mxu0
    %11721 = vmatpush.bf16.msra.mxu0 %v8894
    %11722 = vmatpush.bf16.msra.mxu0 %v8878
    %11723 = vmatpush.bf16.msra.mxu0 %v8862
    %11724 = vmatpush.bf16.msra.mxu0 %v8846
    %11725 = vmatpush.bf16.msra.mxu0 %v8830
    %11726 = vmatpush.bf16.msra.mxu0 %v8814
    %11727 = vmatpush.bf16.msra.mxu0 %v8798
    %11728 = vmatpush.bf16.msra.mxu0 %v8782
    %11729 = vmatmul.bf16.gmra.mxu0 %v4249
    %v11730 = vpop.f32.mrf.mxu0
    %v11731 = vadd.f32 %v11718, %v11730
    %v11732 = vpop.f32.mrf.mxu0
    %11733 = vdwg.mxu0
    %11734 = vmatpush.bf16.msra.mxu0 %v9022
    %11735 = vmatpush.bf16.msra.mxu0 %v9006
    %11736 = vmatpush.bf16.msra.mxu0 %v8990
    %11737 = vmatpush.bf16.msra.mxu0 %v8974
    %11738 = vmatpush.bf16.msra.mxu0 %v8958
    %11739 = vmatpush.bf16.msra.mxu0 %v8942
    %11740 = vmatpush.bf16.msra.mxu0 %v8926
    %11741 = vmatpush.bf16.msra.mxu0 %v8910
    %11742 = vmatmul.bf16.gmra.mxu0 %v4250
    %v11743 = vpop.f32.mrf.mxu0
    %v11744 = vadd.f32 %v11731, %v11743
    %v11745 = vpop.f32.mrf.mxu0
    %11746 = vdwg.mxu0
    %11747 = vmatpush.bf16.msra.mxu0 %v9150
    %11748 = vmatpush.bf16.msra.mxu0 %v9134
    %11749 = vmatpush.bf16.msra.mxu0 %v9118
    %11750 = vmatpush.bf16.msra.mxu0 %v9102
    %11751 = vmatpush.bf16.msra.mxu0 %v9086
    %11752 = vmatpush.bf16.msra.mxu0 %v9070
    %11753 = vmatpush.bf16.msra.mxu0 %v9054
    %11754 = vmatpush.bf16.msra.mxu0 %v9038
    %11755 = vmatmul.bf16.gmra.mxu0 %v4251
    %v11756 = vpop.f32.mrf.mxu0
    %v11757 = vadd.f32 %v11744, %v11756
    %v11758 = vpop.f32.mrf.mxu0
    %11759 = vdwg.mxu0
    %11760 = vmatpush.bf16.msra.mxu0 %v9278
    %11761 = vmatpush.bf16.msra.mxu0 %v9262
    %11762 = vmatpush.bf16.msra.mxu0 %v9246
    %11763 = vmatpush.bf16.msra.mxu0 %v9230
    %11764 = vmatpush.bf16.msra.mxu0 %v9214
    %11765 = vmatpush.bf16.msra.mxu0 %v9198
    %11766 = vmatpush.bf16.msra.mxu0 %v9182
    %11767 = vmatpush.bf16.msra.mxu0 %v9166
    %11768 = vmatmul.bf16.gmra.mxu0 %v4252
    %v11769 = vpop.f32.mrf.mxu0
    %v11770 = vadd.f32 %v11757, %v11769
    %v11771 = vpop.f32.mrf.mxu0
    %11772 = vdwg.mxu0
    %11773 = vmatpush.bf16.msra.mxu0 %v9406
    %11774 = vmatpush.bf16.msra.mxu0 %v9390
    %11775 = vmatpush.bf16.msra.mxu0 %v9374
    %11776 = vmatpush.bf16.msra.mxu0 %v9358
    %11777 = vmatpush.bf16.msra.mxu0 %v9342
    %11778 = vmatpush.bf16.msra.mxu0 %v9326
    %11779 = vmatpush.bf16.msra.mxu0 %v9310
    %11780 = vmatpush.bf16.msra.mxu0 %v9294
    %11781 = vmatmul.bf16.gmra.mxu0 %v4253
    %v11782 = vpop.f32.mrf.mxu0
    %v11783 = vadd.f32 %v11770, %v11782
    %v11784 = vpop.f32.mrf.mxu0
    %11785 = vdwg.mxu0
    %11786 = vmatpush.bf16.msra.mxu0 %v8511
    %11787 = vmatpush.bf16.msra.mxu0 %v8495
    %11788 = vmatpush.bf16.msra.mxu0 %v8479
    %11789 = vmatpush.bf16.msra.mxu0 %v8463
    %11790 = vmatpush.bf16.msra.mxu0 %v8447
    %11791 = vmatpush.bf16.msra.mxu0 %v8431
    %11792 = vmatpush.bf16.msra.mxu0 %v8415
    %11793 = vmatpush.bf16.msra.mxu0 %v8399
    %11794 = vmatmul.bf16.gmra.mxu0 %v4246
    %v11795 = vpop.f32.mrf.mxu0
    %v11796 = vadd.f32 %v5295, %v11795
    %v11797 = vpop.f32.mrf.mxu0
    %11798 = vdwg.mxu0
    %11799 = vmatpush.bf16.msra.mxu0 %v8639
    %11800 = vmatpush.bf16.msra.mxu0 %v8623
    %11801 = vmatpush.bf16.msra.mxu0 %v8607
    %11802 = vmatpush.bf16.msra.mxu0 %v8591
    %11803 = vmatpush.bf16.msra.mxu0 %v8575
    %11804 = vmatpush.bf16.msra.mxu0 %v8559
    %11805 = vmatpush.bf16.msra.mxu0 %v8543
    %11806 = vmatpush.bf16.msra.mxu0 %v8527
    %11807 = vmatmul.bf16.gmra.mxu0 %v4247
    %v11808 = vpop.f32.mrf.mxu0
    %v11809 = vadd.f32 %v11796, %v11808
    %v11810 = vpop.f32.mrf.mxu0
    %11811 = vdwg.mxu0
    %11812 = vmatpush.bf16.msra.mxu0 %v8767
    %11813 = vmatpush.bf16.msra.mxu0 %v8751
    %11814 = vmatpush.bf16.msra.mxu0 %v8735
    %11815 = vmatpush.bf16.msra.mxu0 %v8719
    %11816 = vmatpush.bf16.msra.mxu0 %v8703
    %11817 = vmatpush.bf16.msra.mxu0 %v8687
    %11818 = vmatpush.bf16.msra.mxu0 %v8671
    %11819 = vmatpush.bf16.msra.mxu0 %v8655
    %11820 = vmatmul.bf16.gmra.mxu0 %v4248
    %v11821 = vpop.f32.mrf.mxu0
    %v11822 = vadd.f32 %v11809, %v11821
    %v11823 = vpop.f32.mrf.mxu0
    %11824 = vdwg.mxu0
    %11825 = vmatpush.bf16.msra.mxu0 %v8895
    %11826 = vmatpush.bf16.msra.mxu0 %v8879
    %11827 = vmatpush.bf16.msra.mxu0 %v8863
    %11828 = vmatpush.bf16.msra.mxu0 %v8847
    %11829 = vmatpush.bf16.msra.mxu0 %v8831
    %11830 = vmatpush.bf16.msra.mxu0 %v8815
    %11831 = vmatpush.bf16.msra.mxu0 %v8799
    %11832 = vmatpush.bf16.msra.mxu0 %v8783
    %11833 = vmatmul.bf16.gmra.mxu0 %v4249
    %v11834 = vpop.f32.mrf.mxu0
    %v11835 = vadd.f32 %v11822, %v11834
    %v11836 = vpop.f32.mrf.mxu0
    %11837 = vdwg.mxu0
    %11838 = vmatpush.bf16.msra.mxu0 %v9023
    %11839 = vmatpush.bf16.msra.mxu0 %v9007
    %11840 = vmatpush.bf16.msra.mxu0 %v8991
    %11841 = vmatpush.bf16.msra.mxu0 %v8975
    %11842 = vmatpush.bf16.msra.mxu0 %v8959
    %11843 = vmatpush.bf16.msra.mxu0 %v8943
    %11844 = vmatpush.bf16.msra.mxu0 %v8927
    %11845 = vmatpush.bf16.msra.mxu0 %v8911
    %11846 = vmatmul.bf16.gmra.mxu0 %v4250
    %v11847 = vpop.f32.mrf.mxu0
    %v11848 = vadd.f32 %v11835, %v11847
    %v11849 = vpop.f32.mrf.mxu0
    %11850 = vdwg.mxu0
    %11851 = vmatpush.bf16.msra.mxu0 %v9151
    %11852 = vmatpush.bf16.msra.mxu0 %v9135
    %11853 = vmatpush.bf16.msra.mxu0 %v9119
    %11854 = vmatpush.bf16.msra.mxu0 %v9103
    %11855 = vmatpush.bf16.msra.mxu0 %v9087
    %11856 = vmatpush.bf16.msra.mxu0 %v9071
    %11857 = vmatpush.bf16.msra.mxu0 %v9055
    %11858 = vmatpush.bf16.msra.mxu0 %v9039
    %11859 = vmatmul.bf16.gmra.mxu0 %v4251
    %v11860 = vpop.f32.mrf.mxu0
    %v11861 = vadd.f32 %v11848, %v11860
    %v11862 = vpop.f32.mrf.mxu0
    %11863 = vdwg.mxu0
    %11864 = vmatpush.bf16.msra.mxu0 %v9279
    %11865 = vmatpush.bf16.msra.mxu0 %v9263
    %11866 = vmatpush.bf16.msra.mxu0 %v9247
    %11867 = vmatpush.bf16.msra.mxu0 %v9231
    %11868 = vmatpush.bf16.msra.mxu0 %v9215
    %11869 = vmatpush.bf16.msra.mxu0 %v9199
    %11870 = vmatpush.bf16.msra.mxu0 %v9183
    %11871 = vmatpush.bf16.msra.mxu0 %v9167
    %11872 = vmatmul.bf16.gmra.mxu0 %v4252
    %v11873 = vpop.f32.mrf.mxu0
    %v11874 = vadd.f32 %v11861, %v11873
    %v11875 = vpop.f32.mrf.mxu0
    %11876 = vdwg.mxu0
    %11877 = vmatpush.bf16.msra.mxu0 %v9407
    %11878 = vmatpush.bf16.msra.mxu0 %v9391
    %11879 = vmatpush.bf16.msra.mxu0 %v9375
    %11880 = vmatpush.bf16.msra.mxu0 %v9359
    %11881 = vmatpush.bf16.msra.mxu0 %v9343
    %11882 = vmatpush.bf16.msra.mxu0 %v9327
    %11883 = vmatpush.bf16.msra.mxu0 %v9311
    %11884 = vmatpush.bf16.msra.mxu0 %v9295
    %11885 = vmatmul.bf16.gmra.mxu0 %v4253
    %v11886 = vpop.f32.mrf.mxu0
    %v11887 = vadd.f32 %v11874, %v11886
    %v11888 = vpop.f32.mrf.mxu0
    %11889 = vdwg.mxu0
    %11890 = vmatpush.bf16.msra.mxu0 %v8512
    %11891 = vmatpush.bf16.msra.mxu0 %v8496
    %11892 = vmatpush.bf16.msra.mxu0 %v8480
    %11893 = vmatpush.bf16.msra.mxu0 %v8464
    %11894 = vmatpush.bf16.msra.mxu0 %v8448
    %11895 = vmatpush.bf16.msra.mxu0 %v8432
    %11896 = vmatpush.bf16.msra.mxu0 %v8416
    %11897 = vmatpush.bf16.msra.mxu0 %v8400
    %11898 = vmatmul.bf16.gmra.mxu0 %v4246
    %v11899 = vpop.f32.mrf.mxu0
    %v11900 = vadd.f32 %v5296, %v11899
    %v11901 = vpop.f32.mrf.mxu0
    %11902 = vdwg.mxu0
    %11903 = vmatpush.bf16.msra.mxu0 %v8640
    %11904 = vmatpush.bf16.msra.mxu0 %v8624
    %11905 = vmatpush.bf16.msra.mxu0 %v8608
    %11906 = vmatpush.bf16.msra.mxu0 %v8592
    %11907 = vmatpush.bf16.msra.mxu0 %v8576
    %11908 = vmatpush.bf16.msra.mxu0 %v8560
    %11909 = vmatpush.bf16.msra.mxu0 %v8544
    %11910 = vmatpush.bf16.msra.mxu0 %v8528
    %11911 = vmatmul.bf16.gmra.mxu0 %v4247
    %v11912 = vpop.f32.mrf.mxu0
    %v11913 = vadd.f32 %v11900, %v11912
    %v11914 = vpop.f32.mrf.mxu0
    %11915 = vdwg.mxu0
    %11916 = vmatpush.bf16.msra.mxu0 %v8768
    %11917 = vmatpush.bf16.msra.mxu0 %v8752
    %11918 = vmatpush.bf16.msra.mxu0 %v8736
    %11919 = vmatpush.bf16.msra.mxu0 %v8720
    %11920 = vmatpush.bf16.msra.mxu0 %v8704
    %11921 = vmatpush.bf16.msra.mxu0 %v8688
    %11922 = vmatpush.bf16.msra.mxu0 %v8672
    %11923 = vmatpush.bf16.msra.mxu0 %v8656
    %11924 = vmatmul.bf16.gmra.mxu0 %v4248
    %v11925 = vpop.f32.mrf.mxu0
    %v11926 = vadd.f32 %v11913, %v11925
    %v11927 = vpop.f32.mrf.mxu0
    %11928 = vdwg.mxu0
    %11929 = vmatpush.bf16.msra.mxu0 %v8896
    %11930 = vmatpush.bf16.msra.mxu0 %v8880
    %11931 = vmatpush.bf16.msra.mxu0 %v8864
    %11932 = vmatpush.bf16.msra.mxu0 %v8848
    %11933 = vmatpush.bf16.msra.mxu0 %v8832
    %11934 = vmatpush.bf16.msra.mxu0 %v8816
    %11935 = vmatpush.bf16.msra.mxu0 %v8800
    %11936 = vmatpush.bf16.msra.mxu0 %v8784
    %11937 = vmatmul.bf16.gmra.mxu0 %v4249
    %v11938 = vpop.f32.mrf.mxu0
    %v11939 = vadd.f32 %v11926, %v11938
    %v11940 = vpop.f32.mrf.mxu0
    %11941 = vdwg.mxu0
    %11942 = vmatpush.bf16.msra.mxu0 %v9024
    %11943 = vmatpush.bf16.msra.mxu0 %v9008
    %11944 = vmatpush.bf16.msra.mxu0 %v8992
    %11945 = vmatpush.bf16.msra.mxu0 %v8976
    %11946 = vmatpush.bf16.msra.mxu0 %v8960
    %11947 = vmatpush.bf16.msra.mxu0 %v8944
    %11948 = vmatpush.bf16.msra.mxu0 %v8928
    %11949 = vmatpush.bf16.msra.mxu0 %v8912
    %11950 = vmatmul.bf16.gmra.mxu0 %v4250
    %v11951 = vpop.f32.mrf.mxu0
    %v11952 = vadd.f32 %v11939, %v11951
    %v11953 = vpop.f32.mrf.mxu0
    %11954 = vdwg.mxu0
    %11955 = vmatpush.bf16.msra.mxu0 %v9152
    %11956 = vmatpush.bf16.msra.mxu0 %v9136
    %11957 = vmatpush.bf16.msra.mxu0 %v9120
    %11958 = vmatpush.bf16.msra.mxu0 %v9104
    %11959 = vmatpush.bf16.msra.mxu0 %v9088
    %11960 = vmatpush.bf16.msra.mxu0 %v9072
    %11961 = vmatpush.bf16.msra.mxu0 %v9056
    %11962 = vmatpush.bf16.msra.mxu0 %v9040
    %11963 = vmatmul.bf16.gmra.mxu0 %v4251
    %v11964 = vpop.f32.mrf.mxu0
    %v11965 = vadd.f32 %v11952, %v11964
    %v11966 = vpop.f32.mrf.mxu0
    %11967 = vdwg.mxu0
    %11968 = vmatpush.bf16.msra.mxu0 %v9280
    %11969 = vmatpush.bf16.msra.mxu0 %v9264
    %11970 = vmatpush.bf16.msra.mxu0 %v9248
    %11971 = vmatpush.bf16.msra.mxu0 %v9232
    %11972 = vmatpush.bf16.msra.mxu0 %v9216
    %11973 = vmatpush.bf16.msra.mxu0 %v9200
    %11974 = vmatpush.bf16.msra.mxu0 %v9184
    %11975 = vmatpush.bf16.msra.mxu0 %v9168
    %11976 = vmatmul.bf16.gmra.mxu0 %v4252
    %v11977 = vpop.f32.mrf.mxu0
    %v11978 = vadd.f32 %v11965, %v11977
    %v11979 = vpop.f32.mrf.mxu0
    %11980 = vdwg.mxu0
    %11981 = vmatpush.bf16.msra.mxu0 %v9408
    %11982 = vmatpush.bf16.msra.mxu0 %v9392
    %11983 = vmatpush.bf16.msra.mxu0 %v9376
    %11984 = vmatpush.bf16.msra.mxu0 %v9360
    %11985 = vmatpush.bf16.msra.mxu0 %v9344
    %11986 = vmatpush.bf16.msra.mxu0 %v9328
    %11987 = vmatpush.bf16.msra.mxu0 %v9312
    %11988 = vmatpush.bf16.msra.mxu0 %v9296
    %11989 = vmatmul.bf16.gmra.mxu0 %v4253
    %v11990 = vpop.f32.mrf.mxu0
    %v11991 = vadd.f32 %v11978, %v11990
    %v11992 = vpop.f32.mrf.mxu0
    %11993 = vdwg.mxu0
    %11994 = vmatpush.bf16.msra.mxu0 %v8513
    %11995 = vmatpush.bf16.msra.mxu0 %v8497
    %11996 = vmatpush.bf16.msra.mxu0 %v8481
    %11997 = vmatpush.bf16.msra.mxu0 %v8465
    %11998 = vmatpush.bf16.msra.mxu0 %v8449
    %11999 = vmatpush.bf16.msra.mxu0 %v8433
    %12000 = vmatpush.bf16.msra.mxu0 %v8417
    %12001 = vmatpush.bf16.msra.mxu0 %v8401
    %12002 = vmatmul.bf16.gmra.mxu0 %v4246
    %v12003 = vpop.f32.mrf.mxu0
    %v12004 = vadd.f32 %v5297, %v12003
    %v12005 = vpop.f32.mrf.mxu0
    %12006 = vdwg.mxu0
    %12007 = vmatpush.bf16.msra.mxu0 %v8641
    %12008 = vmatpush.bf16.msra.mxu0 %v8625
    %12009 = vmatpush.bf16.msra.mxu0 %v8609
    %12010 = vmatpush.bf16.msra.mxu0 %v8593
    %12011 = vmatpush.bf16.msra.mxu0 %v8577
    %12012 = vmatpush.bf16.msra.mxu0 %v8561
    %12013 = vmatpush.bf16.msra.mxu0 %v8545
    %12014 = vmatpush.bf16.msra.mxu0 %v8529
    %12015 = vmatmul.bf16.gmra.mxu0 %v4247
    %v12016 = vpop.f32.mrf.mxu0
    %v12017 = vadd.f32 %v12004, %v12016
    %v12018 = vpop.f32.mrf.mxu0
    %12019 = vdwg.mxu0
    %12020 = vmatpush.bf16.msra.mxu0 %v8769
    %12021 = vmatpush.bf16.msra.mxu0 %v8753
    %12022 = vmatpush.bf16.msra.mxu0 %v8737
    %12023 = vmatpush.bf16.msra.mxu0 %v8721
    %12024 = vmatpush.bf16.msra.mxu0 %v8705
    %12025 = vmatpush.bf16.msra.mxu0 %v8689
    %12026 = vmatpush.bf16.msra.mxu0 %v8673
    %12027 = vmatpush.bf16.msra.mxu0 %v8657
    %12028 = vmatmul.bf16.gmra.mxu0 %v4248
    %v12029 = vpop.f32.mrf.mxu0
    %v12030 = vadd.f32 %v12017, %v12029
    %v12031 = vpop.f32.mrf.mxu0
    %12032 = vdwg.mxu0
    %12033 = vmatpush.bf16.msra.mxu0 %v8897
    %12034 = vmatpush.bf16.msra.mxu0 %v8881
    %12035 = vmatpush.bf16.msra.mxu0 %v8865
    %12036 = vmatpush.bf16.msra.mxu0 %v8849
    %12037 = vmatpush.bf16.msra.mxu0 %v8833
    %12038 = vmatpush.bf16.msra.mxu0 %v8817
    %12039 = vmatpush.bf16.msra.mxu0 %v8801
    %12040 = vmatpush.bf16.msra.mxu0 %v8785
    %12041 = vmatmul.bf16.gmra.mxu0 %v4249
    %v12042 = vpop.f32.mrf.mxu0
    %v12043 = vadd.f32 %v12030, %v12042
    %v12044 = vpop.f32.mrf.mxu0
    %12045 = vdwg.mxu0
    %12046 = vmatpush.bf16.msra.mxu0 %v9025
    %12047 = vmatpush.bf16.msra.mxu0 %v9009
    %12048 = vmatpush.bf16.msra.mxu0 %v8993
    %12049 = vmatpush.bf16.msra.mxu0 %v8977
    %12050 = vmatpush.bf16.msra.mxu0 %v8961
    %12051 = vmatpush.bf16.msra.mxu0 %v8945
    %12052 = vmatpush.bf16.msra.mxu0 %v8929
    %12053 = vmatpush.bf16.msra.mxu0 %v8913
    %12054 = vmatmul.bf16.gmra.mxu0 %v4250
    %v12055 = vpop.f32.mrf.mxu0
    %v12056 = vadd.f32 %v12043, %v12055
    %v12057 = vpop.f32.mrf.mxu0
    %12058 = vdwg.mxu0
    %12059 = vmatpush.bf16.msra.mxu0 %v9153
    %12060 = vmatpush.bf16.msra.mxu0 %v9137
    %12061 = vmatpush.bf16.msra.mxu0 %v9121
    %12062 = vmatpush.bf16.msra.mxu0 %v9105
    %12063 = vmatpush.bf16.msra.mxu0 %v9089
    %12064 = vmatpush.bf16.msra.mxu0 %v9073
    %12065 = vmatpush.bf16.msra.mxu0 %v9057
    %12066 = vmatpush.bf16.msra.mxu0 %v9041
    %12067 = vmatmul.bf16.gmra.mxu0 %v4251
    %v12068 = vpop.f32.mrf.mxu0
    %v12069 = vadd.f32 %v12056, %v12068
    %v12070 = vpop.f32.mrf.mxu0
    %12071 = vdwg.mxu0
    %12072 = vmatpush.bf16.msra.mxu0 %v9281
    %12073 = vmatpush.bf16.msra.mxu0 %v9265
    %12074 = vmatpush.bf16.msra.mxu0 %v9249
    %12075 = vmatpush.bf16.msra.mxu0 %v9233
    %12076 = vmatpush.bf16.msra.mxu0 %v9217
    %12077 = vmatpush.bf16.msra.mxu0 %v9201
    %12078 = vmatpush.bf16.msra.mxu0 %v9185
    %12079 = vmatpush.bf16.msra.mxu0 %v9169
    %12080 = vmatmul.bf16.gmra.mxu0 %v4252
    %v12081 = vpop.f32.mrf.mxu0
    %v12082 = vadd.f32 %v12069, %v12081
    %v12083 = vpop.f32.mrf.mxu0
    %12084 = vdwg.mxu0
    %12085 = vmatpush.bf16.msra.mxu0 %v9409
    %12086 = vmatpush.bf16.msra.mxu0 %v9393
    %12087 = vmatpush.bf16.msra.mxu0 %v9377
    %12088 = vmatpush.bf16.msra.mxu0 %v9361
    %12089 = vmatpush.bf16.msra.mxu0 %v9345
    %12090 = vmatpush.bf16.msra.mxu0 %v9329
    %12091 = vmatpush.bf16.msra.mxu0 %v9313
    %12092 = vmatpush.bf16.msra.mxu0 %v9297
    %12093 = vmatmul.bf16.gmra.mxu0 %v4253
    %v12094 = vpop.f32.mrf.mxu0
    %v12095 = vadd.f32 %v12082, %v12094
    %v12096 = vpop.f32.mrf.mxu0
    %12097 = vdwg.mxu0
    %v12098 = vmax.f32 %v10535, 0.0
    %v12099 = vmax.f32 %v10639, 0.0
    %v12100 = vmax.f32 %v10743, 0.0
    %v12101 = vmax.f32 %v10847, 0.0
    %v12102 = vmax.f32 %v10951, 0.0
    %v12103 = vmax.f32 %v11055, 0.0
    %v12104 = vmax.f32 %v11159, 0.0
    %v12105 = vmax.f32 %v11263, 0.0
    %v12106 = vmax.f32 %v11367, 0.0
    %v12107 = vmax.f32 %v11471, 0.0
    %v12108 = vmax.f32 %v11575, 0.0
    %v12109 = vmax.f32 %v11679, 0.0
    %v12110 = vmax.f32 %v11783, 0.0
    %v12111 = vmax.f32 %v11887, 0.0
    %v12112 = vmax.f32 %v11991, 0.0
    %v12113 = vmax.f32 %v12095, 0.0
    %v12114 = vmax.f32 %v12098, %v12106
    %v12115 = vmax.f32 %v12099, %v12107
    %v12116 = vmax.f32 %v12100, %v12108
    %v12117 = vmax.f32 %v12101, %v12109
    %v12118 = vmax.f32 %v12102, %v12110
    %v12119 = vmax.f32 %v12103, %v12111
    %v12120 = vmax.f32 %v12104, %v12112
    %v12121 = vmax.f32 %v12105, %v12113
    %v12122 = vmax.f32 %v12114, %v12118
    %v12123 = vmax.f32 %v12115, %v12119
    %v12124 = vmax.f32 %v12116, %v12120
    %v12125 = vmax.f32 %v12117, %v12121
    %v12126 = vpack.c.bf16 %v12122, %v12122
    %v12127 = vpack.c.bf16 %v12123, %v12123
    %v12128 = vpack.c.bf16 %v12124, %v12124
    %v12129 = vpack.c.bf16 %v12125, %v12125
    %v12130 = vld [vmem:[#allocation9] sm:$0xff]
    %v12131 = vld [vmem:[#allocation9 + $0x8] sm:$0xff]
    %v12132 = vld [vmem:[#allocation9 + $0x10] sm:$0xff]
    %v12133 = vld [vmem:[#allocation9 + $0x18] sm:$0xff]
    %v12134 = vld [vmem:[#allocation9 + $0x20] sm:$0xff]
    %v12135 = vld [vmem:[#allocation9 + $0x28] sm:$0xff]
    %v12136 = vld [vmem:[#allocation9 + $0x30] sm:$0xff]
    %v12137 = vld [vmem:[#allocation9 + $0x38] sm:$0xff]
    %v12138 = vld [vmem:[#allocation9 + $0x40] sm:$0xff]
    %v12139 = vld [vmem:[#allocation9 + $0x48] sm:$0xff]
    %v12140 = vld [vmem:[#allocation9 + $0x50] sm:$0xff]
    %v12141 = vld [vmem:[#allocation9 + $0x58] sm:$0xff]
    %v12142 = vld [vmem:[#allocation9 + $0x60] sm:$0xff]
    %v12143 = vld [vmem:[#allocation9 + $0x68] sm:$0xff]
    %v12144 = vld [vmem:[#allocation9 + $0x70] sm:$0xff]
    %v12145 = vld [vmem:[#allocation9 + $0x78] sm:$0xff]
    %v12146 = vld [vmem:[#allocation9 + $0x80] sm:$0xff]
    %v12147 = vld [vmem:[#allocation9 + $0x88] sm:$0xff]
    %v12148 = vld [vmem:[#allocation9 + $0x90] sm:$0xff]
    %v12149 = vld [vmem:[#allocation9 + $0x98] sm:$0xff]
    %v12150 = vld [vmem:[#allocation9 + $0xa0] sm:$0xff]
    %v12151 = vld [vmem:[#allocation9 + $0xa8] sm:$0xff]
    %v12152 = vld [vmem:[#allocation9 + $0xb0] sm:$0xff]
    %v12153 = vld [vmem:[#allocation9 + $0xb8] sm:$0xff]
    %v12154 = vld [vmem:[#allocation9 + $0xc0] sm:$0xff]
    %v12155 = vld [vmem:[#allocation9 + $0xc8] sm:$0xff]
    %v12156 = vld [vmem:[#allocation9 + $0xd0] sm:$0xff]
    %v12157 = vld [vmem:[#allocation9 + $0xd8] sm:$0xff]
    %v12158 = vld [vmem:[#allocation9 + $0xe0] sm:$0xff]
    %v12159 = vld [vmem:[#allocation9 + $0xe8] sm:$0xff]
    %v12160 = vld [vmem:[#allocation9 + $0xf0] sm:$0xff]
    %v12161 = vld [vmem:[#allocation9 + $0xf8] sm:$0xff]
    %v12162 = vld [vmem:[#allocation9 + $0x100] sm:$0xff]
    %v12163 = vld [vmem:[#allocation9 + $0x108] sm:$0xff]
    %v12164 = vld [vmem:[#allocation9 + $0x110] sm:$0xff]
    %v12165 = vld [vmem:[#allocation9 + $0x118] sm:$0xff]
    %v12166 = vld [vmem:[#allocation9 + $0x120] sm:$0xff]
    %v12167 = vld [vmem:[#allocation9 + $0x128] sm:$0xff]
    %v12168 = vld [vmem:[#allocation9 + $0x130] sm:$0xff]
    %v12169 = vld [vmem:[#allocation9 + $0x138] sm:$0xff]
    %v12170 = vld [vmem:[#allocation9 + $0x140] sm:$0xff]
    %v12171 = vld [vmem:[#allocation9 + $0x148] sm:$0xff]
    %v12172 = vld [vmem:[#allocation9 + $0x150] sm:$0xff]
    %v12173 = vld [vmem:[#allocation9 + $0x158] sm:$0xff]
    %v12174 = vld [vmem:[#allocation9 + $0x160] sm:$0xff]
    %v12175 = vld [vmem:[#allocation9 + $0x168] sm:$0xff]
    %v12176 = vld [vmem:[#allocation9 + $0x170] sm:$0xff]
    %v12177 = vld [vmem:[#allocation9 + $0x178] sm:$0xff]
    %v12178 = vld [vmem:[#allocation9 + $0x180] sm:$0xff]
    %v12179 = vld [vmem:[#allocation9 + $0x188] sm:$0xff]
    %v12180 = vld [vmem:[#allocation9 + $0x190] sm:$0xff]
    %v12181 = vld [vmem:[#allocation9 + $0x198] sm:$0xff]
    %v12182 = vld [vmem:[#allocation9 + $0x1a0] sm:$0xff]
    %v12183 = vld [vmem:[#allocation9 + $0x1a8] sm:$0xff]
    %v12184 = vld [vmem:[#allocation9 + $0x1b0] sm:$0xff]
    %v12185 = vld [vmem:[#allocation9 + $0x1b8] sm:$0xff]
    %v12186 = vld [vmem:[#allocation9 + $0x1c0] sm:$0xff]
    %v12187 = vld [vmem:[#allocation9 + $0x1c8] sm:$0xff]
    %v12188 = vld [vmem:[#allocation9 + $0x1d0] sm:$0xff]
    %v12189 = vld [vmem:[#allocation9 + $0x1d8] sm:$0xff]
    %v12190 = vld [vmem:[#allocation9 + $0x1e0] sm:$0xff]
    %v12191 = vld [vmem:[#allocation9 + $0x1e8] sm:$0xff]
    %v12192 = vld [vmem:[#allocation9 + $0x1f0] sm:$0xff]
    %v12193 = vld [vmem:[#allocation9 + $0x1f8] sm:$0xff]
    %v12194 = vld [vmem:[#allocation9 + $0x200] sm:$0xff]
    %v12195 = vld [vmem:[#allocation9 + $0x208] sm:$0xff]
    %v12196 = vld [vmem:[#allocation9 + $0x210] sm:$0xff]
    %v12197 = vld [vmem:[#allocation9 + $0x218] sm:$0xff]
    %v12198 = vld [vmem:[#allocation9 + $0x220] sm:$0xff]
    %v12199 = vld [vmem:[#allocation9 + $0x228] sm:$0xff]
    %v12200 = vld [vmem:[#allocation9 + $0x230] sm:$0xff]
    %v12201 = vld [vmem:[#allocation9 + $0x238] sm:$0xff]
    %v12202 = vld [vmem:[#allocation9 + $0x240] sm:$0xff]
    %v12203 = vld [vmem:[#allocation9 + $0x248] sm:$0xff]
    %v12204 = vld [vmem:[#allocation9 + $0x250] sm:$0xff]
    %v12205 = vld [vmem:[#allocation9 + $0x258] sm:$0xff]
    %v12206 = vld [vmem:[#allocation9 + $0x260] sm:$0xff]
    %v12207 = vld [vmem:[#allocation9 + $0x268] sm:$0xff]
    %v12208 = vld [vmem:[#allocation9 + $0x270] sm:$0xff]
    %v12209 = vld [vmem:[#allocation9 + $0x278] sm:$0xff]
    %v12210 = vld [vmem:[#allocation9 + $0x280] sm:$0xff]
    %v12211 = vld [vmem:[#allocation9 + $0x288] sm:$0xff]
    %v12212 = vld [vmem:[#allocation9 + $0x290] sm:$0xff]
    %v12213 = vld [vmem:[#allocation9 + $0x298] sm:$0xff]
    %v12214 = vld [vmem:[#allocation9 + $0x2a0] sm:$0xff]
    %v12215 = vld [vmem:[#allocation9 + $0x2a8] sm:$0xff]
    %v12216 = vld [vmem:[#allocation9 + $0x2b0] sm:$0xff]
    %v12217 = vld [vmem:[#allocation9 + $0x2b8] sm:$0xff]
    %v12218 = vld [vmem:[#allocation9 + $0x2c0] sm:$0xff]
    %v12219 = vld [vmem:[#allocation9 + $0x2c8] sm:$0xff]
    %v12220 = vld [vmem:[#allocation9 + $0x2d0] sm:$0xff]
    %v12221 = vld [vmem:[#allocation9 + $0x2d8] sm:$0xff]
    %v12222 = vld [vmem:[#allocation9 + $0x2e0] sm:$0xff]
    %v12223 = vld [vmem:[#allocation9 + $0x2e8] sm:$0xff]
    %v12224 = vld [vmem:[#allocation9 + $0x2f0] sm:$0xff]
    %v12225 = vld [vmem:[#allocation9 + $0x2f8] sm:$0xff]
    %v12226 = vld [vmem:[#allocation9 + $0x300] sm:$0xff]
    %v12227 = vld [vmem:[#allocation9 + $0x308] sm:$0xff]
    %v12228 = vld [vmem:[#allocation9 + $0x310] sm:$0xff]
    %v12229 = vld [vmem:[#allocation9 + $0x318] sm:$0xff]
    %v12230 = vld [vmem:[#allocation9 + $0x320] sm:$0xff]
    %v12231 = vld [vmem:[#allocation9 + $0x328] sm:$0xff]
    %v12232 = vld [vmem:[#allocation9 + $0x330] sm:$0xff]
    %v12233 = vld [vmem:[#allocation9 + $0x338] sm:$0xff]
    %v12234 = vld [vmem:[#allocation9 + $0x340] sm:$0xff]
    %v12235 = vld [vmem:[#allocation9 + $0x348] sm:$0xff]
    %v12236 = vld [vmem:[#allocation9 + $0x350] sm:$0xff]
    %v12237 = vld [vmem:[#allocation9 + $0x358] sm:$0xff]
    %v12238 = vld [vmem:[#allocation9 + $0x360] sm:$0xff]
    %v12239 = vld [vmem:[#allocation9 + $0x368] sm:$0xff]
    %v12240 = vld [vmem:[#allocation9 + $0x370] sm:$0xff]
    %v12241 = vld [vmem:[#allocation9 + $0x378] sm:$0xff]
    %v12242 = vld [vmem:[#allocation9 + $0x380] sm:$0xff]
    %v12243 = vld [vmem:[#allocation9 + $0x388] sm:$0xff]
    %v12244 = vld [vmem:[#allocation9 + $0x390] sm:$0xff]
    %v12245 = vld [vmem:[#allocation9 + $0x398] sm:$0xff]
    %v12246 = vld [vmem:[#allocation9 + $0x3a0] sm:$0xff]
    %v12247 = vld [vmem:[#allocation9 + $0x3a8] sm:$0xff]
    %v12248 = vld [vmem:[#allocation9 + $0x3b0] sm:$0xff]
    %v12249 = vld [vmem:[#allocation9 + $0x3b8] sm:$0xff]
    %v12250 = vld [vmem:[#allocation9 + $0x3c0] sm:$0xff]
    %v12251 = vld [vmem:[#allocation9 + $0x3c8] sm:$0xff]
    %v12252 = vld [vmem:[#allocation9 + $0x3d0] sm:$0xff]
    %v12253 = vld [vmem:[#allocation9 + $0x3d8] sm:$0xff]
    %v12254 = vld [vmem:[#allocation9 + $0x3e0] sm:$0xff]
    %v12255 = vld [vmem:[#allocation9 + $0x3e8] sm:$0xff]
    %v12256 = vld [vmem:[#allocation9 + $0x3f0] sm:$0xff]
    %v12257 = vld [vmem:[#allocation9 + $0x3f8] sm:$0xff]
    %v12258 = vld [vmem:[#allocation10] sm:$0xf]
    %v12260 = vperm.slane %v12258, 0
    %v12261 = vperm.slane %v12258, 1
    %v12262 = vperm.slane %v12258, 2
    %v12263 = vperm.slane %v12258, 3
    %v12396 = vunpack.c.l.b16 %v12130
    %v12397 = vunpack.c.h.b16 %v12130
    %v12398 = vunpack.c.l.b16 %v12131
    %v12399 = vunpack.c.h.b16 %v12131
    %v12400 = vunpack.c.l.b16 %v12132
    %v12401 = vunpack.c.h.b16 %v12132
    %v12402 = vunpack.c.l.b16 %v12133
    %v12403 = vunpack.c.h.b16 %v12133
    %v12404 = vunpack.c.l.b16 %v12134
    %v12405 = vunpack.c.h.b16 %v12134
    %v12406 = vunpack.c.l.b16 %v12135
    %v12407 = vunpack.c.h.b16 %v12135
    %v12408 = vunpack.c.l.b16 %v12136
    %v12409 = vunpack.c.h.b16 %v12136
    %v12410 = vunpack.c.l.b16 %v12137
    %v12411 = vunpack.c.h.b16 %v12137
    %v12412 = vunpack.c.l.b16 %v12138
    %v12413 = vunpack.c.h.b16 %v12138
    %v12414 = vunpack.c.l.b16 %v12139
    %v12415 = vunpack.c.h.b16 %v12139
    %v12416 = vunpack.c.l.b16 %v12140
    %v12417 = vunpack.c.h.b16 %v12140
    %v12418 = vunpack.c.l.b16 %v12141
    %v12419 = vunpack.c.h.b16 %v12141
    %v12420 = vunpack.c.l.b16 %v12142
    %v12421 = vunpack.c.h.b16 %v12142
    %v12422 = vunpack.c.l.b16 %v12143
    %v12423 = vunpack.c.h.b16 %v12143
    %v12424 = vunpack.c.l.b16 %v12144
    %v12425 = vunpack.c.h.b16 %v12144
    %v12426 = vunpack.c.l.b16 %v12145
    %v12427 = vunpack.c.h.b16 %v12145
    %v12428 = vunpack.c.l.b16 %v12146
    %v12429 = vunpack.c.h.b16 %v12146
    %v12430 = vunpack.c.l.b16 %v12147
    %v12431 = vunpack.c.h.b16 %v12147
    %v12432 = vunpack.c.l.b16 %v12148
    %v12433 = vunpack.c.h.b16 %v12148
    %v12434 = vunpack.c.l.b16 %v12149
    %v12435 = vunpack.c.h.b16 %v12149
    %v12436 = vunpack.c.l.b16 %v12150
    %v12437 = vunpack.c.h.b16 %v12150
    %v12438 = vunpack.c.l.b16 %v12151
    %v12439 = vunpack.c.h.b16 %v12151
    %v12440 = vunpack.c.l.b16 %v12152
    %v12441 = vunpack.c.h.b16 %v12152
    %v12442 = vunpack.c.l.b16 %v12153
    %v12443 = vunpack.c.h.b16 %v12153
    %v12444 = vunpack.c.l.b16 %v12154
    %v12445 = vunpack.c.h.b16 %v12154
    %v12446 = vunpack.c.l.b16 %v12155
    %v12447 = vunpack.c.h.b16 %v12155
    %v12448 = vunpack.c.l.b16 %v12156
    %v12449 = vunpack.c.h.b16 %v12156
    %v12450 = vunpack.c.l.b16 %v12157
    %v12451 = vunpack.c.h.b16 %v12157
    %v12452 = vunpack.c.l.b16 %v12158
    %v12453 = vunpack.c.h.b16 %v12158
    %v12454 = vunpack.c.l.b16 %v12159
    %v12455 = vunpack.c.h.b16 %v12159
    %v12456 = vunpack.c.l.b16 %v12160
    %v12457 = vunpack.c.h.b16 %v12160
    %v12458 = vunpack.c.l.b16 %v12161
    %v12459 = vunpack.c.h.b16 %v12161
    %v12460 = vunpack.c.l.b16 %v12162
    %v12461 = vunpack.c.h.b16 %v12162
    %v12462 = vunpack.c.l.b16 %v12163
    %v12463 = vunpack.c.h.b16 %v12163
    %v12464 = vunpack.c.l.b16 %v12164
    %v12465 = vunpack.c.h.b16 %v12164
    %v12466 = vunpack.c.l.b16 %v12165
    %v12467 = vunpack.c.h.b16 %v12165
    %v12468 = vunpack.c.l.b16 %v12166
    %v12469 = vunpack.c.h.b16 %v12166
    %v12470 = vunpack.c.l.b16 %v12167
    %v12471 = vunpack.c.h.b16 %v12167
    %v12472 = vunpack.c.l.b16 %v12168
    %v12473 = vunpack.c.h.b16 %v12168
    %v12474 = vunpack.c.l.b16 %v12169
    %v12475 = vunpack.c.h.b16 %v12169
    %v12476 = vunpack.c.l.b16 %v12170
    %v12477 = vunpack.c.h.b16 %v12170
    %v12478 = vunpack.c.l.b16 %v12171
    %v12479 = vunpack.c.h.b16 %v12171
    %v12480 = vunpack.c.l.b16 %v12172
    %v12481 = vunpack.c.h.b16 %v12172
    %v12482 = vunpack.c.l.b16 %v12173
    %v12483 = vunpack.c.h.b16 %v12173
    %v12484 = vunpack.c.l.b16 %v12174
    %v12485 = vunpack.c.h.b16 %v12174
    %v12486 = vunpack.c.l.b16 %v12175
    %v12487 = vunpack.c.h.b16 %v12175
    %v12488 = vunpack.c.l.b16 %v12176
    %v12489 = vunpack.c.h.b16 %v12176
    %v12490 = vunpack.c.l.b16 %v12177
    %v12491 = vunpack.c.h.b16 %v12177
    %v12492 = vunpack.c.l.b16 %v12178
    %v12493 = vunpack.c.h.b16 %v12178
    %v12494 = vunpack.c.l.b16 %v12179
    %v12495 = vunpack.c.h.b16 %v12179
    %v12496 = vunpack.c.l.b16 %v12180
    %v12497 = vunpack.c.h.b16 %v12180
    %v12498 = vunpack.c.l.b16 %v12181
    %v12499 = vunpack.c.h.b16 %v12181
    %v12500 = vunpack.c.l.b16 %v12182
    %v12501 = vunpack.c.h.b16 %v12182
    %v12502 = vunpack.c.l.b16 %v12183
    %v12503 = vunpack.c.h.b16 %v12183
    %v12504 = vunpack.c.l.b16 %v12184
    %v12505 = vunpack.c.h.b16 %v12184
    %v12506 = vunpack.c.l.b16 %v12185
    %v12507 = vunpack.c.h.b16 %v12185
    %v12508 = vunpack.c.l.b16 %v12186
    %v12509 = vunpack.c.h.b16 %v12186
    %v12510 = vunpack.c.l.b16 %v12187
    %v12511 = vunpack.c.h.b16 %v12187
    %v12512 = vunpack.c.l.b16 %v12188
    %v12513 = vunpack.c.h.b16 %v12188
    %v12514 = vunpack.c.l.b16 %v12189
    %v12515 = vunpack.c.h.b16 %v12189
    %v12516 = vunpack.c.l.b16 %v12190
    %v12517 = vunpack.c.h.b16 %v12190
    %v12518 = vunpack.c.l.b16 %v12191
    %v12519 = vunpack.c.h.b16 %v12191
    %v12520 = vunpack.c.l.b16 %v12192
    %v12521 = vunpack.c.h.b16 %v12192
    %v12522 = vunpack.c.l.b16 %v12193
    %v12523 = vunpack.c.h.b16 %v12193
    %v12524 = vunpack.c.l.b16 %v12194
    %v12525 = vunpack.c.h.b16 %v12194
    %v12526 = vunpack.c.l.b16 %v12195
    %v12527 = vunpack.c.h.b16 %v12195
    %v12528 = vunpack.c.l.b16 %v12196
    %v12529 = vunpack.c.h.b16 %v12196
    %v12530 = vunpack.c.l.b16 %v12197
    %v12531 = vunpack.c.h.b16 %v12197
    %v12532 = vunpack.c.l.b16 %v12198
    %v12533 = vunpack.c.h.b16 %v12198
    %v12534 = vunpack.c.l.b16 %v12199
    %v12535 = vunpack.c.h.b16 %v12199
    %v12536 = vunpack.c.l.b16 %v12200
    %v12537 = vunpack.c.h.b16 %v12200
    %v12538 = vunpack.c.l.b16 %v12201
    %v12539 = vunpack.c.h.b16 %v12201
    %v12540 = vunpack.c.l.b16 %v12202
    %v12541 = vunpack.c.h.b16 %v12202
    %v12542 = vunpack.c.l.b16 %v12203
    %v12543 = vunpack.c.h.b16 %v12203
    %v12544 = vunpack.c.l.b16 %v12204
    %v12545 = vunpack.c.h.b16 %v12204
    %v12546 = vunpack.c.l.b16 %v12205
    %v12547 = vunpack.c.h.b16 %v12205
    %v12548 = vunpack.c.l.b16 %v12206
    %v12549 = vunpack.c.h.b16 %v12206
    %v12550 = vunpack.c.l.b16 %v12207
    %v12551 = vunpack.c.h.b16 %v12207
    %v12552 = vunpack.c.l.b16 %v12208
    %v12553 = vunpack.c.h.b16 %v12208
    %v12554 = vunpack.c.l.b16 %v12209
    %v12555 = vunpack.c.h.b16 %v12209
    %v12556 = vunpack.c.l.b16 %v12210
    %v12557 = vunpack.c.h.b16 %v12210
    %v12558 = vunpack.c.l.b16 %v12211
    %v12559 = vunpack.c.h.b16 %v12211
    %v12560 = vunpack.c.l.b16 %v12212
    %v12561 = vunpack.c.h.b16 %v12212
    %v12562 = vunpack.c.l.b16 %v12213
    %v12563 = vunpack.c.h.b16 %v12213
    %v12564 = vunpack.c.l.b16 %v12214
    %v12565 = vunpack.c.h.b16 %v12214
    %v12566 = vunpack.c.l.b16 %v12215
    %v12567 = vunpack.c.h.b16 %v12215
    %v12568 = vunpack.c.l.b16 %v12216
    %v12569 = vunpack.c.h.b16 %v12216
    %v12570 = vunpack.c.l.b16 %v12217
    %v12571 = vunpack.c.h.b16 %v12217
    %v12572 = vunpack.c.l.b16 %v12218
    %v12573 = vunpack.c.h.b16 %v12218
    %v12574 = vunpack.c.l.b16 %v12219
    %v12575 = vunpack.c.h.b16 %v12219
    %v12576 = vunpack.c.l.b16 %v12220
    %v12577 = vunpack.c.h.b16 %v12220
    %v12578 = vunpack.c.l.b16 %v12221
    %v12579 = vunpack.c.h.b16 %v12221
    %v12580 = vunpack.c.l.b16 %v12222
    %v12581 = vunpack.c.h.b16 %v12222
    %v12582 = vunpack.c.l.b16 %v12223
    %v12583 = vunpack.c.h.b16 %v12223
    %v12584 = vunpack.c.l.b16 %v12224
    %v12585 = vunpack.c.h.b16 %v12224
    %v12586 = vunpack.c.l.b16 %v12225
    %v12587 = vunpack.c.h.b16 %v12225
    %v12588 = vunpack.c.l.b16 %v12226
    %v12589 = vunpack.c.h.b16 %v12226
    %v12590 = vunpack.c.l.b16 %v12227
    %v12591 = vunpack.c.h.b16 %v12227
    %v12592 = vunpack.c.l.b16 %v12228
    %v12593 = vunpack.c.h.b16 %v12228
    %v12594 = vunpack.c.l.b16 %v12229
    %v12595 = vunpack.c.h.b16 %v12229
    %v12596 = vunpack.c.l.b16 %v12230
    %v12597 = vunpack.c.h.b16 %v12230
    %v12598 = vunpack.c.l.b16 %v12231
    %v12599 = vunpack.c.h.b16 %v12231
    %v12600 = vunpack.c.l.b16 %v12232
    %v12601 = vunpack.c.h.b16 %v12232
    %v12602 = vunpack.c.l.b16 %v12233
    %v12603 = vunpack.c.h.b16 %v12233
    %v12604 = vunpack.c.l.b16 %v12234
    %v12605 = vunpack.c.h.b16 %v12234
    %v12606 = vunpack.c.l.b16 %v12235
    %v12607 = vunpack.c.h.b16 %v12235
    %v12608 = vunpack.c.l.b16 %v12236
    %v12609 = vunpack.c.h.b16 %v12236
    %v12610 = vunpack.c.l.b16 %v12237
    %v12611 = vunpack.c.h.b16 %v12237
    %v12612 = vunpack.c.l.b16 %v12238
    %v12613 = vunpack.c.h.b16 %v12238
    %v12614 = vunpack.c.l.b16 %v12239
    %v12615 = vunpack.c.h.b16 %v12239
    %v12616 = vunpack.c.l.b16 %v12240
    %v12617 = vunpack.c.h.b16 %v12240
    %v12618 = vunpack.c.l.b16 %v12241
    %v12619 = vunpack.c.h.b16 %v12241
    %v12620 = vunpack.c.l.b16 %v12242
    %v12621 = vunpack.c.h.b16 %v12242
    %v12622 = vunpack.c.l.b16 %v12243
    %v12623 = vunpack.c.h.b16 %v12243
    %v12624 = vunpack.c.l.b16 %v12244
    %v12625 = vunpack.c.h.b16 %v12244
    %v12626 = vunpack.c.l.b16 %v12245
    %v12627 = vunpack.c.h.b16 %v12245
    %v12628 = vunpack.c.l.b16 %v12246
    %v12629 = vunpack.c.h.b16 %v12246
    %v12630 = vunpack.c.l.b16 %v12247
    %v12631 = vunpack.c.h.b16 %v12247
    %v12632 = vunpack.c.l.b16 %v12248
    %v12633 = vunpack.c.h.b16 %v12248
    %v12634 = vunpack.c.l.b16 %v12249
    %v12635 = vunpack.c.h.b16 %v12249
    %v12636 = vunpack.c.l.b16 %v12250
    %v12637 = vunpack.c.h.b16 %v12250
    %v12638 = vunpack.c.l.b16 %v12251
    %v12639 = vunpack.c.h.b16 %v12251
    %v12640 = vunpack.c.l.b16 %v12252
    %v12641 = vunpack.c.h.b16 %v12252
    %v12642 = vunpack.c.l.b16 %v12253
    %v12643 = vunpack.c.h.b16 %v12253
    %v12644 = vunpack.c.l.b16 %v12254
    %v12645 = vunpack.c.h.b16 %v12254
    %v12646 = vunpack.c.l.b16 %v12255
    %v12647 = vunpack.c.h.b16 %v12255
    %v12648 = vunpack.c.l.b16 %v12256
    %v12649 = vunpack.c.h.b16 %v12256
    %v12650 = vunpack.c.l.b16 %v12257
    %v12651 = vunpack.c.h.b16 %v12257
    %v12652 = vpack.c.b16 %v12400, %v12396
    %v12653 = vpack.c.b16 %v12401, %v12397
    %v12654 = vpack.c.b16 %v12402, %v12398
    %v12655 = vpack.c.b16 %v12403, %v12399
    %v12656 = vpack.c.b16 %v12408, %v12404
    %v12657 = vpack.c.b16 %v12409, %v12405
    %v12658 = vpack.c.b16 %v12410, %v12406
    %v12659 = vpack.c.b16 %v12411, %v12407
    %v12660 = vpack.c.b16 %v12416, %v12412
    %v12661 = vpack.c.b16 %v12417, %v12413
    %v12662 = vpack.c.b16 %v12418, %v12414
    %v12663 = vpack.c.b16 %v12419, %v12415
    %v12664 = vpack.c.b16 %v12424, %v12420
    %v12665 = vpack.c.b16 %v12425, %v12421
    %v12666 = vpack.c.b16 %v12426, %v12422
    %v12667 = vpack.c.b16 %v12427, %v12423
    %v12668 = vpack.c.b16 %v12432, %v12428
    %v12669 = vpack.c.b16 %v12433, %v12429
    %v12670 = vpack.c.b16 %v12434, %v12430
    %v12671 = vpack.c.b16 %v12435, %v12431
    %v12672 = vpack.c.b16 %v12440, %v12436
    %v12673 = vpack.c.b16 %v12441, %v12437
    %v12674 = vpack.c.b16 %v12442, %v12438
    %v12675 = vpack.c.b16 %v12443, %v12439
    %v12676 = vpack.c.b16 %v12448, %v12444
    %v12677 = vpack.c.b16 %v12449, %v12445
    %v12678 = vpack.c.b16 %v12450, %v12446
    %v12679 = vpack.c.b16 %v12451, %v12447
    %v12680 = vpack.c.b16 %v12456, %v12452
    %v12681 = vpack.c.b16 %v12457, %v12453
    %v12682 = vpack.c.b16 %v12458, %v12454
    %v12683 = vpack.c.b16 %v12459, %v12455
    %v12684 = vpack.c.b16 %v12464, %v12460
    %v12685 = vpack.c.b16 %v12465, %v12461
    %v12686 = vpack.c.b16 %v12466, %v12462
    %v12687 = vpack.c.b16 %v12467, %v12463
    %v12688 = vpack.c.b16 %v12472, %v12468
    %v12689 = vpack.c.b16 %v12473, %v12469
    %v12690 = vpack.c.b16 %v12474, %v12470
    %v12691 = vpack.c.b16 %v12475, %v12471
    %v12692 = vpack.c.b16 %v12480, %v12476
    %v12693 = vpack.c.b16 %v12481, %v12477
    %v12694 = vpack.c.b16 %v12482, %v12478
    %v12695 = vpack.c.b16 %v12483, %v12479
    %v12696 = vpack.c.b16 %v12488, %v12484
    %v12697 = vpack.c.b16 %v12489, %v12485
    %v12698 = vpack.c.b16 %v12490, %v12486
    %v12699 = vpack.c.b16 %v12491, %v12487
    %v12700 = vpack.c.b16 %v12496, %v12492
    %v12701 = vpack.c.b16 %v12497, %v12493
    %v12702 = vpack.c.b16 %v12498, %v12494
    %v12703 = vpack.c.b16 %v12499, %v12495
    %v12704 = vpack.c.b16 %v12504, %v12500
    %v12705 = vpack.c.b16 %v12505, %v12501
    %v12706 = vpack.c.b16 %v12506, %v12502
    %v12707 = vpack.c.b16 %v12507, %v12503
    %v12708 = vpack.c.b16 %v12512, %v12508
    %v12709 = vpack.c.b16 %v12513, %v12509
    %v12710 = vpack.c.b16 %v12514, %v12510
    %v12711 = vpack.c.b16 %v12515, %v12511
    %v12712 = vpack.c.b16 %v12520, %v12516
    %v12713 = vpack.c.b16 %v12521, %v12517
    %v12714 = vpack.c.b16 %v12522, %v12518
    %v12715 = vpack.c.b16 %v12523, %v12519
    %v12716 = vpack.c.b16 %v12528, %v12524
    %v12717 = vpack.c.b16 %v12529, %v12525
    %v12718 = vpack.c.b16 %v12530, %v12526
    %v12719 = vpack.c.b16 %v12531, %v12527
    %v12720 = vpack.c.b16 %v12536, %v12532
    %v12721 = vpack.c.b16 %v12537, %v12533
    %v12722 = vpack.c.b16 %v12538, %v12534
    %v12723 = vpack.c.b16 %v12539, %v12535
    %v12724 = vpack.c.b16 %v12544, %v12540
    %v12725 = vpack.c.b16 %v12545, %v12541
    %v12726 = vpack.c.b16 %v12546, %v12542
    %v12727 = vpack.c.b16 %v12547, %v12543
    %v12728 = vpack.c.b16 %v12552, %v12548
    %v12729 = vpack.c.b16 %v12553, %v12549
    %v12730 = vpack.c.b16 %v12554, %v12550
    %v12731 = vpack.c.b16 %v12555, %v12551
    %v12732 = vpack.c.b16 %v12560, %v12556
    %v12733 = vpack.c.b16 %v12561, %v12557
    %v12734 = vpack.c.b16 %v12562, %v12558
    %v12735 = vpack.c.b16 %v12563, %v12559
    %v12736 = vpack.c.b16 %v12568, %v12564
    %v12737 = vpack.c.b16 %v12569, %v12565
    %v12738 = vpack.c.b16 %v12570, %v12566
    %v12739 = vpack.c.b16 %v12571, %v12567
    %v12740 = vpack.c.b16 %v12576, %v12572
    %v12741 = vpack.c.b16 %v12577, %v12573
    %v12742 = vpack.c.b16 %v12578, %v12574
    %v12743 = vpack.c.b16 %v12579, %v12575
    %v12744 = vpack.c.b16 %v12584, %v12580
    %v12745 = vpack.c.b16 %v12585, %v12581
    %v12746 = vpack.c.b16 %v12586, %v12582
    %v12747 = vpack.c.b16 %v12587, %v12583
    %v12748 = vpack.c.b16 %v12592, %v12588
    %v12749 = vpack.c.b16 %v12593, %v12589
    %v12750 = vpack.c.b16 %v12594, %v12590
    %v12751 = vpack.c.b16 %v12595, %v12591
    %v12752 = vpack.c.b16 %v12600, %v12596
    %v12753 = vpack.c.b16 %v12601, %v12597
    %v12754 = vpack.c.b16 %v12602, %v12598
    %v12755 = vpack.c.b16 %v12603, %v12599
    %v12756 = vpack.c.b16 %v12608, %v12604
    %v12757 = vpack.c.b16 %v12609, %v12605
    %v12758 = vpack.c.b16 %v12610, %v12606
    %v12759 = vpack.c.b16 %v12611, %v12607
    %v12760 = vpack.c.b16 %v12616, %v12612
    %v12761 = vpack.c.b16 %v12617, %v12613
    %v12762 = vpack.c.b16 %v12618, %v12614
    %v12763 = vpack.c.b16 %v12619, %v12615
    %v12764 = vpack.c.b16 %v12624, %v12620
    %v12765 = vpack.c.b16 %v12625, %v12621
    %v12766 = vpack.c.b16 %v12626, %v12622
    %v12767 = vpack.c.b16 %v12627, %v12623
    %v12768 = vpack.c.b16 %v12632, %v12628
    %v12769 = vpack.c.b16 %v12633, %v12629
    %v12770 = vpack.c.b16 %v12634, %v12630
    %v12771 = vpack.c.b16 %v12635, %v12631
    %v12772 = vpack.c.b16 %v12640, %v12636
    %v12773 = vpack.c.b16 %v12641, %v12637
    %v12774 = vpack.c.b16 %v12642, %v12638
    %v12775 = vpack.c.b16 %v12643, %v12639
    %v12776 = vpack.c.b16 %v12648, %v12644
    %v12777 = vpack.c.b16 %v12649, %v12645
    %v12778 = vpack.c.b16 %v12650, %v12646
    %v12779 = vpack.c.b16 %v12651, %v12647
    %12908 = vmatpush.bf16.msra.mxu0 %v12680
    %12909 = vmatpush.bf16.msra.mxu0 %v12676
    %12910 = vmatpush.bf16.msra.mxu0 %v12672
    %12911 = vmatpush.bf16.msra.mxu0 %v12668
    %12912 = vmatpush.bf16.msra.mxu0 %v12664
    %12913 = vmatpush.bf16.msra.mxu0 %v12660
    %12914 = vmatpush.bf16.msra.mxu0 %v12656
    %12915 = vmatpush.bf16.msra.mxu0 %v12652
    %12916 = vmatmul.bf16.gmra.mxu0 %v12126
    %v12917 = vpop.f32.mrf.mxu0
    %v12918 = vadd.f32 %v12260, %v12917
    %v12919 = vpop.f32.mrf.mxu0
    %12920 = vdwg.mxu0
    %12921 = vmatpush.bf16.msra.mxu0 %v12712
    %12922 = vmatpush.bf16.msra.mxu0 %v12708
    %12923 = vmatpush.bf16.msra.mxu0 %v12704
    %12924 = vmatpush.bf16.msra.mxu0 %v12700
    %12925 = vmatpush.bf16.msra.mxu0 %v12696
    %12926 = vmatpush.bf16.msra.mxu0 %v12692
    %12927 = vmatpush.bf16.msra.mxu0 %v12688
    %12928 = vmatpush.bf16.msra.mxu0 %v12684
    %12929 = vmatmul.bf16.gmra.mxu0 %v12127
    %v12930 = vpop.f32.mrf.mxu0
    %v12931 = vadd.f32 %v12918, %v12930
    %v12932 = vpop.f32.mrf.mxu0
    %12933 = vdwg.mxu0
    %12934 = vmatpush.bf16.msra.mxu0 %v12744
    %12935 = vmatpush.bf16.msra.mxu0 %v12740
    %12936 = vmatpush.bf16.msra.mxu0 %v12736
    %12937 = vmatpush.bf16.msra.mxu0 %v12732
    %12938 = vmatpush.bf16.msra.mxu0 %v12728
    %12939 = vmatpush.bf16.msra.mxu0 %v12724
    %12940 = vmatpush.bf16.msra.mxu0 %v12720
    %12941 = vmatpush.bf16.msra.mxu0 %v12716
    %12942 = vmatmul.bf16.gmra.mxu0 %v12128
    %v12943 = vpop.f32.mrf.mxu0
    %v12944 = vadd.f32 %v12931, %v12943
    %v12945 = vpop.f32.mrf.mxu0
    %12946 = vdwg.mxu0
    %12947 = vmatpush.bf16.msra.mxu0 %v12776
    %12948 = vmatpush.bf16.msra.mxu0 %v12772
    %12949 = vmatpush.bf16.msra.mxu0 %v12768
    %12950 = vmatpush.bf16.msra.mxu0 %v12764
    %12951 = vmatpush.bf16.msra.mxu0 %v12760
    %12952 = vmatpush.bf16.msra.mxu0 %v12756
    %12953 = vmatpush.bf16.msra.mxu0 %v12752
    %12954 = vmatpush.bf16.msra.mxu0 %v12748
    %12955 = vmatmul.bf16.gmra.mxu0 %v12129
    %v12956 = vpop.f32.mrf.mxu0
    %v12957 = vadd.f32 %v12944, %v12956
    %v12958 = vpop.f32.mrf.mxu0
    %12959 = vdwg.mxu0
    %12960 = vmatpush.bf16.msra.mxu0 %v12681
    %12961 = vmatpush.bf16.msra.mxu0 %v12677
    %12962 = vmatpush.bf16.msra.mxu0 %v12673
    %12963 = vmatpush.bf16.msra.mxu0 %v12669
    %12964 = vmatpush.bf16.msra.mxu0 %v12665
    %12965 = vmatpush.bf16.msra.mxu0 %v12661
    %12966 = vmatpush.bf16.msra.mxu0 %v12657
    %12967 = vmatpush.bf16.msra.mxu0 %v12653
    %12968 = vmatmul.bf16.gmra.mxu0 %v12126
    %v12969 = vpop.f32.mrf.mxu0
    %v12970 = vadd.f32 %v12261, %v12969
    %v12971 = vpop.f32.mrf.mxu0
    %12972 = vdwg.mxu0
    %12973 = vmatpush.bf16.msra.mxu0 %v12713
    %12974 = vmatpush.bf16.msra.mxu0 %v12709
    %12975 = vmatpush.bf16.msra.mxu0 %v12705
    %12976 = vmatpush.bf16.msra.mxu0 %v12701
    %12977 = vmatpush.bf16.msra.mxu0 %v12697
    %12978 = vmatpush.bf16.msra.mxu0 %v12693
    %12979 = vmatpush.bf16.msra.mxu0 %v12689
    %12980 = vmatpush.bf16.msra.mxu0 %v12685
    %12981 = vmatmul.bf16.gmra.mxu0 %v12127
    %v12982 = vpop.f32.mrf.mxu0
    %v12983 = vadd.f32 %v12970, %v12982
    %v12984 = vpop.f32.mrf.mxu0
    %12985 = vdwg.mxu0
    %12986 = vmatpush.bf16.msra.mxu0 %v12745
    %12987 = vmatpush.bf16.msra.mxu0 %v12741
    %12988 = vmatpush.bf16.msra.mxu0 %v12737
    %12989 = vmatpush.bf16.msra.mxu0 %v12733
    %12990 = vmatpush.bf16.msra.mxu0 %v12729
    %12991 = vmatpush.bf16.msra.mxu0 %v12725
    %12992 = vmatpush.bf16.msra.mxu0 %v12721
    %12993 = vmatpush.bf16.msra.mxu0 %v12717
    %12994 = vmatmul.bf16.gmra.mxu0 %v12128
    %v12995 = vpop.f32.mrf.mxu0
    %v12996 = vadd.f32 %v12983, %v12995
    %v12997 = vpop.f32.mrf.mxu0
    %12998 = vdwg.mxu0
    %12999 = vmatpush.bf16.msra.mxu0 %v12777
    %13000 = vmatpush.bf16.msra.mxu0 %v12773
    %13001 = vmatpush.bf16.msra.mxu0 %v12769
    %13002 = vmatpush.bf16.msra.mxu0 %v12765
    %13003 = vmatpush.bf16.msra.mxu0 %v12761
    %13004 = vmatpush.bf16.msra.mxu0 %v12757
    %13005 = vmatpush.bf16.msra.mxu0 %v12753
    %13006 = vmatpush.bf16.msra.mxu0 %v12749
    %13007 = vmatmul.bf16.gmra.mxu0 %v12129
    %v13008 = vpop.f32.mrf.mxu0
    %v13009 = vadd.f32 %v12996, %v13008
    %v13010 = vpop.f32.mrf.mxu0
    %13011 = vdwg.mxu0
    %13012 = vmatpush.bf16.msra.mxu0 %v12682
    %13013 = vmatpush.bf16.msra.mxu0 %v12678
    %13014 = vmatpush.bf16.msra.mxu0 %v12674
    %13015 = vmatpush.bf16.msra.mxu0 %v12670
    %13016 = vmatpush.bf16.msra.mxu0 %v12666
    %13017 = vmatpush.bf16.msra.mxu0 %v12662
    %13018 = vmatpush.bf16.msra.mxu0 %v12658
    %13019 = vmatpush.bf16.msra.mxu0 %v12654
    %13020 = vmatmul.bf16.gmra.mxu0 %v12126
    %v13021 = vpop.f32.mrf.mxu0
    %v13022 = vadd.f32 %v12262, %v13021
    %v13023 = vpop.f32.mrf.mxu0
    %13024 = vdwg.mxu0
    %13025 = vmatpush.bf16.msra.mxu0 %v12714
    %13026 = vmatpush.bf16.msra.mxu0 %v12710
    %13027 = vmatpush.bf16.msra.mxu0 %v12706
    %13028 = vmatpush.bf16.msra.mxu0 %v12702
    %13029 = vmatpush.bf16.msra.mxu0 %v12698
    %13030 = vmatpush.bf16.msra.mxu0 %v12694
    %13031 = vmatpush.bf16.msra.mxu0 %v12690
    %13032 = vmatpush.bf16.msra.mxu0 %v12686
    %13033 = vmatmul.bf16.gmra.mxu0 %v12127
    %v13034 = vpop.f32.mrf.mxu0
    %v13035 = vadd.f32 %v13022, %v13034
    %v13036 = vpop.f32.mrf.mxu0
    %13037 = vdwg.mxu0
    %13038 = vmatpush.bf16.msra.mxu0 %v12746
    %13039 = vmatpush.bf16.msra.mxu0 %v12742
    %13040 = vmatpush.bf16.msra.mxu0 %v12738
    %13041 = vmatpush.bf16.msra.mxu0 %v12734
    %13042 = vmatpush.bf16.msra.mxu0 %v12730
    %13043 = vmatpush.bf16.msra.mxu0 %v12726
    %13044 = vmatpush.bf16.msra.mxu0 %v12722
    %13045 = vmatpush.bf16.msra.mxu0 %v12718
    %13046 = vmatmul.bf16.gmra.mxu0 %v12128
    %v13047 = vpop.f32.mrf.mxu0
    %v13048 = vadd.f32 %v13035, %v13047
    %v13049 = vpop.f32.mrf.mxu0
    %13050 = vdwg.mxu0
    %13051 = vmatpush.bf16.msra.mxu0 %v12778
    %13052 = vmatpush.bf16.msra.mxu0 %v12774
    %13053 = vmatpush.bf16.msra.mxu0 %v12770
    %13054 = vmatpush.bf16.msra.mxu0 %v12766
    %13055 = vmatpush.bf16.msra.mxu0 %v12762
    %13056 = vmatpush.bf16.msra.mxu0 %v12758
    %13057 = vmatpush.bf16.msra.mxu0 %v12754
    %13058 = vmatpush.bf16.msra.mxu0 %v12750
    %13059 = vmatmul.bf16.gmra.mxu0 %v12129
    %v13060 = vpop.f32.mrf.mxu0
    %v13061 = vadd.f32 %v13048, %v13060
    %v13062 = vpop.f32.mrf.mxu0
    %13063 = vdwg.mxu0
    %13064 = vmatpush.bf16.msra.mxu0 %v12683
    %13065 = vmatpush.bf16.msra.mxu0 %v12679
    %13066 = vmatpush.bf16.msra.mxu0 %v12675
    %13067 = vmatpush.bf16.msra.mxu0 %v12671
    %13068 = vmatpush.bf16.msra.mxu0 %v12667
    %13069 = vmatpush.bf16.msra.mxu0 %v12663
    %13070 = vmatpush.bf16.msra.mxu0 %v12659
    %13071 = vmatpush.bf16.msra.mxu0 %v12655
    %13072 = vmatmul.bf16.gmra.mxu0 %v12126
    %v13073 = vpop.f32.mrf.mxu0
    %v13074 = vadd.f32 %v12263, %v13073
    %v13075 = vpop.f32.mrf.mxu0
    %13076 = vdwg.mxu0
    %13077 = vmatpush.bf16.msra.mxu0 %v12715
    %13078 = vmatpush.bf16.msra.mxu0 %v12711
    %13079 = vmatpush.bf16.msra.mxu0 %v12707
    %13080 = vmatpush.bf16.msra.mxu0 %v12703
    %13081 = vmatpush.bf16.msra.mxu0 %v12699
    %13082 = vmatpush.bf16.msra.mxu0 %v12695
    %13083 = vmatpush.bf16.msra.mxu0 %v12691
    %13084 = vmatpush.bf16.msra.mxu0 %v12687
    %13085 = vmatmul.bf16.gmra.mxu0 %v12127
    %v13086 = vpop.f32.mrf.mxu0
    %v13087 = vadd.f32 %v13074, %v13086
    %v13088 = vpop.f32.mrf.mxu0
    %13089 = vdwg.mxu0
    %13090 = vmatpush.bf16.msra.mxu0 %v12747
    %13091 = vmatpush.bf16.msra.mxu0 %v12743
    %13092 = vmatpush.bf16.msra.mxu0 %v12739
    %13093 = vmatpush.bf16.msra.mxu0 %v12735
    %13094 = vmatpush.bf16.msra.mxu0 %v12731
    %13095 = vmatpush.bf16.msra.mxu0 %v12727
    %13096 = vmatpush.bf16.msra.mxu0 %v12723
    %13097 = vmatpush.bf16.msra.mxu0 %v12719
    %13098 = vmatmul.bf16.gmra.mxu0 %v12128
    %v13099 = vpop.f32.mrf.mxu0
    %v13100 = vadd.f32 %v13087, %v13099
    %v13101 = vpop.f32.mrf.mxu0
    %13102 = vdwg.mxu0
    %13103 = vmatpush.bf16.msra.mxu0 %v12779
    %13104 = vmatpush.bf16.msra.mxu0 %v12775
    %13105 = vmatpush.bf16.msra.mxu0 %v12771
    %13106 = vmatpush.bf16.msra.mxu0 %v12767
    %13107 = vmatpush.bf16.msra.mxu0 %v12763
    %13108 = vmatpush.bf16.msra.mxu0 %v12759
    %13109 = vmatpush.bf16.msra.mxu0 %v12755
    %13110 = vmatpush.bf16.msra.mxu0 %v12751
    %13111 = vmatmul.bf16.gmra.mxu0 %v12129
    %v13112 = vpop.f32.mrf.mxu0
    %v13113 = vadd.f32 %v13100, %v13112
    %v13114 = vpop.f32.mrf.mxu0
    %13115 = vdwg.mxu0
    %v13116 = vmax.f32 %v12957, 0.0
    %v13117 = vmax.f32 %v13009, 0.0
    %v13118 = vmax.f32 %v13061, 0.0
    %v13119 = vmax.f32 %v13113, 0.0
    %v13120 = vpack.c.bf16 %v13116, %v13116
    %v13121 = vpack.c.bf16 %v13117, %v13117
    %v13122 = vpack.c.bf16 %v13118, %v13118
    %v13123 = vpack.c.bf16 %v13119, %v13119
    %v13124 = vld [vmem:[%s8] sm:$0xf]
    %v13125 = vld [vmem:[%s8 + $0x4] sm:$0xf]
    %v13126 = vld [vmem:[%s8 + $0x8] sm:$0xf]
    %v13127 = vld [vmem:[%s8 + $0xc] sm:$0xf]
    %v13128 = vld [vmem:[%s8 + $0x10] sm:$0xf]
    %v13129 = vld [vmem:[%s8 + $0x14] sm:$0xf]
    %v13130 = vld [vmem:[%s8 + $0x18] sm:$0xf]
    %v13131 = vld [vmem:[%s8 + $0x1c] sm:$0xf]
    %v13132 = vld [vmem:[%s8 + $0x20] sm:$0xf]
    %v13133 = vld [vmem:[%s8 + $0x24] sm:$0xf]
    %v13134 = vld [vmem:[%s8 + $0x28] sm:$0xf]
    %v13135 = vld [vmem:[%s8 + $0x2c] sm:$0xf]
    %v13136 = vld [vmem:[%s8 + $0x30] sm:$0xf]
    %v13137 = vld [vmem:[%s8 + $0x34] sm:$0xf]
    %v13138 = vld [vmem:[%s8 + $0x38] sm:$0xf]
    %v13139 = vld [vmem:[%s8 + $0x3c] sm:$0xf]
    %v13140 = vld [vmem:[%s8 + $0x40] sm:$0xf]
    %v13141 = vld [vmem:[%s8 + $0x44] sm:$0xf]
    %v13142 = vld [vmem:[%s8 + $0x48] sm:$0xf]
    %v13143 = vld [vmem:[%s8 + $0x4c] sm:$0xf]
    %v13144 = vld [vmem:[%s8 + $0x50] sm:$0xf]
    %v13145 = vld [vmem:[%s8 + $0x54] sm:$0xf]
    %v13146 = vld [vmem:[%s8 + $0x58] sm:$0xf]
    %v13147 = vld [vmem:[%s8 + $0x5c] sm:$0xf]
    %v13148 = vld [vmem:[%s8 + $0x60] sm:$0xf]
    %v13149 = vld [vmem:[%s8 + $0x64] sm:$0xf]
    %v13150 = vld [vmem:[%s8 + $0x68] sm:$0xf]
    %v13151 = vld [vmem:[%s8 + $0x6c] sm:$0xf]
    %v13152 = vld [vmem:[%s8 + $0x70] sm:$0xf]
    %v13153 = vld [vmem:[%s8 + $0x74] sm:$0xf]
    %v13154 = vld [vmem:[%s8 + $0x78] sm:$0xf]
    %v13155 = vld [vmem:[%s8 + $0x7c] sm:$0xf]
    %v13156 = vld [vmem:[%s8 + $0x80] sm:$0xf]
    %v13157 = vld [vmem:[%s8 + $0x84] sm:$0xf]
    %v13158 = vld [vmem:[%s8 + $0x88] sm:$0xf]
    %v13159 = vld [vmem:[%s8 + $0x8c] sm:$0xf]
    %v13160 = vld [vmem:[%s8 + $0x90] sm:$0xf]
    %v13161 = vld [vmem:[%s8 + $0x94] sm:$0xf]
    %v13162 = vld [vmem:[%s8 + $0x98] sm:$0xf]
    %v13163 = vld [vmem:[%s8 + $0x9c] sm:$0xf]
    %v13164 = vld [vmem:[%s8 + $0xa0] sm:$0xf]
    %v13165 = vld [vmem:[%s8 + $0xa4] sm:$0xf]
    %v13166 = vld [vmem:[%s8 + $0xa8] sm:$0xf]
    %v13167 = vld [vmem:[%s8 + $0xac] sm:$0xf]
    %v13168 = vld [vmem:[%s8 + $0xb0] sm:$0xf]
    %v13169 = vld [vmem:[%s8 + $0xb4] sm:$0xf]
    %v13170 = vld [vmem:[%s8 + $0xb8] sm:$0xf]
    %v13171 = vld [vmem:[%s8 + $0xbc] sm:$0xf]
    %v13172 = vld [vmem:[%s8 + $0xc0] sm:$0xf]
    %v13173 = vld [vmem:[%s8 + $0xc4] sm:$0xf]
    %v13174 = vld [vmem:[%s8 + $0xc8] sm:$0xf]
    %v13175 = vld [vmem:[%s8 + $0xcc] sm:$0xf]
    %v13176 = vld [vmem:[%s8 + $0xd0] sm:$0xf]
    %v13177 = vld [vmem:[%s8 + $0xd4] sm:$0xf]
    %v13178 = vld [vmem:[%s8 + $0xd8] sm:$0xf]
    %v13179 = vld [vmem:[%s8 + $0xdc] sm:$0xf]
    %v13180 = vld [vmem:[%s8 + $0xe0] sm:$0xf]
    %v13181 = vld [vmem:[%s8 + $0xe4] sm:$0xf]
    %v13182 = vld [vmem:[%s8 + $0xe8] sm:$0xf]
    %v13183 = vld [vmem:[%s8 + $0xec] sm:$0xf]
    %v13184 = vld [vmem:[%s8 + $0xf0] sm:$0xf]
    %v13185 = vld [vmem:[%s8 + $0xf4] sm:$0xf]
    %v13186 = vld [vmem:[%s8 + $0xf8] sm:$0xf]
    %v13187 = vld [vmem:[%s8 + $0xfc] sm:$0xf]
    %v13188 = vld [vmem:[#allocation12] sm:$0x1]
    %v13190 = vperm.slane %v13188, 0
    %v13256 = vunpack.c.l.b16 %v13124
    %v13257 = vunpack.c.l.b16 %v13125
    %v13258 = vunpack.c.l.b16 %v13126
    %v13259 = vunpack.c.l.b16 %v13127
    %v13260 = vunpack.c.l.b16 %v13128
    %v13261 = vunpack.c.l.b16 %v13129
    %v13262 = vunpack.c.l.b16 %v13130
    %v13263 = vunpack.c.l.b16 %v13131
    %v13264 = vunpack.c.l.b16 %v13132
    %v13265 = vunpack.c.l.b16 %v13133
    %v13266 = vunpack.c.l.b16 %v13134
    %v13267 = vunpack.c.l.b16 %v13135
    %v13268 = vunpack.c.l.b16 %v13136
    %v13269 = vunpack.c.l.b16 %v13137
    %v13270 = vunpack.c.l.b16 %v13138
    %v13271 = vunpack.c.l.b16 %v13139
    %v13272 = vunpack.c.l.b16 %v13140
    %v13273 = vunpack.c.l.b16 %v13141
    %v13274 = vunpack.c.l.b16 %v13142
    %v13275 = vunpack.c.l.b16 %v13143
    %v13276 = vunpack.c.l.b16 %v13144
    %v13277 = vunpack.c.l.b16 %v13145
    %v13278 = vunpack.c.l.b16 %v13146
    %v13279 = vunpack.c.l.b16 %v13147
    %v13280 = vunpack.c.l.b16 %v13148
    %v13281 = vunpack.c.l.b16 %v13149
    %v13282 = vunpack.c.l.b16 %v13150
    %v13283 = vunpack.c.l.b16 %v13151
    %v13284 = vunpack.c.l.b16 %v13152
    %v13285 = vunpack.c.l.b16 %v13153
    %v13286 = vunpack.c.l.b16 %v13154
    %v13287 = vunpack.c.l.b16 %v13155
    %v13288 = vunpack.c.l.b16 %v13156
    %v13289 = vunpack.c.l.b16 %v13157
    %v13290 = vunpack.c.l.b16 %v13158
    %v13291 = vunpack.c.l.b16 %v13159
    %v13292 = vunpack.c.l.b16 %v13160
    %v13293 = vunpack.c.l.b16 %v13161
    %v13294 = vunpack.c.l.b16 %v13162
    %v13295 = vunpack.c.l.b16 %v13163
    %v13296 = vunpack.c.l.b16 %v13164
    %v13297 = vunpack.c.l.b16 %v13165
    %v13298 = vunpack.c.l.b16 %v13166
    %v13299 = vunpack.c.l.b16 %v13167
    %v13300 = vunpack.c.l.b16 %v13168
    %v13301 = vunpack.c.l.b16 %v13169
    %v13302 = vunpack.c.l.b16 %v13170
    %v13303 = vunpack.c.l.b16 %v13171
    %v13304 = vunpack.c.l.b16 %v13172
    %v13305 = vunpack.c.l.b16 %v13173
    %v13306 = vunpack.c.l.b16 %v13174
    %v13307 = vunpack.c.l.b16 %v13175
    %v13308 = vunpack.c.l.b16 %v13176
    %v13309 = vunpack.c.l.b16 %v13177
    %v13310 = vunpack.c.l.b16 %v13178
    %v13311 = vunpack.c.l.b16 %v13179
    %v13312 = vunpack.c.l.b16 %v13180
    %v13313 = vunpack.c.l.b16 %v13181
    %v13314 = vunpack.c.l.b16 %v13182
    %v13315 = vunpack.c.l.b16 %v13183
    %v13316 = vunpack.c.l.b16 %v13184
    %v13317 = vunpack.c.l.b16 %v13185
    %v13318 = vunpack.c.l.b16 %v13186
    %v13319 = vunpack.c.l.b16 %v13187
    %v13320 = vpack.c.b16 %v13257, %v13256
    %v13321 = vpack.c.b16 %v13259, %v13258
    %v13322 = vpack.c.b16 %v13261, %v13260
    %v13323 = vpack.c.b16 %v13263, %v13262
    %v13324 = vpack.c.b16 %v13265, %v13264
    %v13325 = vpack.c.b16 %v13267, %v13266
    %v13326 = vpack.c.b16 %v13269, %v13268
    %v13327 = vpack.c.b16 %v13271, %v13270
    %v13328 = vpack.c.b16 %v13273, %v13272
    %v13329 = vpack.c.b16 %v13275, %v13274
    %v13330 = vpack.c.b16 %v13277, %v13276
    %v13331 = vpack.c.b16 %v13279, %v13278
    %v13332 = vpack.c.b16 %v13281, %v13280
    %v13333 = vpack.c.b16 %v13283, %v13282
    %v13334 = vpack.c.b16 %v13285, %v13284
    %v13335 = vpack.c.b16 %v13287, %v13286
    %v13336 = vpack.c.b16 %v13289, %v13288
    %v13337 = vpack.c.b16 %v13291, %v13290
    %v13338 = vpack.c.b16 %v13293, %v13292
    %v13339 = vpack.c.b16 %v13295, %v13294
    %v13340 = vpack.c.b16 %v13297, %v13296
    %v13341 = vpack.c.b16 %v13299, %v13298
    %v13342 = vpack.c.b16 %v13301, %v13300
    %v13343 = vpack.c.b16 %v13303, %v13302
    %v13344 = vpack.c.b16 %v13305, %v13304
    %v13345 = vpack.c.b16 %v13307, %v13306
    %v13346 = vpack.c.b16 %v13309, %v13308
    %v13347 = vpack.c.b16 %v13311, %v13310
    %v13348 = vpack.c.b16 %v13313, %v13312
    %v13349 = vpack.c.b16 %v13315, %v13314
    %v13350 = vpack.c.b16 %v13317, %v13316
    %v13351 = vpack.c.b16 %v13319, %v13318
    %13384 = vmatpush.bf16.msra.mxu0 %v13327
    %13385 = vmatpush.bf16.msra.mxu0 %v13326
    %13386 = vmatpush.bf16.msra.mxu0 %v13325
    %13387 = vmatpush.bf16.msra.mxu0 %v13324
    %13388 = vmatpush.bf16.msra.mxu0 %v13323
    %13389 = vmatpush.bf16.msra.mxu0 %v13322
    %13390 = vmatpush.bf16.msra.mxu0 %v13321
    %13391 = vmatpush.bf16.msra.mxu0 %v13320
    %13392 = vmatmul.bf16.gmra.mxu0 %v13120
    %v13393 = vpop.f32.mrf.mxu0
    %v13394 = vadd.f32 %v13190, %v13393
    %v13395 = vpop.f32.mrf.mxu0
    %13396 = vdwg.mxu0
    %13397 = vmatpush.bf16.msra.mxu0 %v13335
    %13398 = vmatpush.bf16.msra.mxu0 %v13334
    %13399 = vmatpush.bf16.msra.mxu0 %v13333
    %13400 = vmatpush.bf16.msra.mxu0 %v13332
    %13401 = vmatpush.bf16.msra.mxu0 %v13331
    %13402 = vmatpush.bf16.msra.mxu0 %v13330
    %13403 = vmatpush.bf16.msra.mxu0 %v13329
    %13404 = vmatpush.bf16.msra.mxu0 %v13328
    %13405 = vmatmul.bf16.gmra.mxu0 %v13121
    %v13406 = vpop.f32.mrf.mxu0
    %v13407 = vadd.f32 %v13394, %v13406
    %v13408 = vpop.f32.mrf.mxu0
    %13409 = vdwg.mxu0
    %13410 = vmatpush.bf16.msra.mxu0 %v13343
    %13411 = vmatpush.bf16.msra.mxu0 %v13342
    %13412 = vmatpush.bf16.msra.mxu0 %v13341
    %13413 = vmatpush.bf16.msra.mxu0 %v13340
    %13414 = vmatpush.bf16.msra.mxu0 %v13339
    %13415 = vmatpush.bf16.msra.mxu0 %v13338
    %13416 = vmatpush.bf16.msra.mxu0 %v13337
    %13417 = vmatpush.bf16.msra.mxu0 %v13336
    %13418 = vmatmul.bf16.gmra.mxu0 %v13122
    %v13419 = vpop.f32.mrf.mxu0
    %v13420 = vadd.f32 %v13407, %v13419
    %v13421 = vpop.f32.mrf.mxu0
    %13422 = vdwg.mxu0
    %13423 = vmatpush.bf16.msra.mxu0 %v13351
    %13424 = vmatpush.bf16.msra.mxu0 %v13350
    %13425 = vmatpush.bf16.msra.mxu0 %v13349
    %13426 = vmatpush.bf16.msra.mxu0 %v13348
    %13427 = vmatpush.bf16.msra.mxu0 %v13347
    %13428 = vmatpush.bf16.msra.mxu0 %v13346
    %13429 = vmatpush.bf16.msra.mxu0 %v13345
    %13430 = vmatpush.bf16.msra.mxu0 %v13344
    %13431 = vmatmul.bf16.gmra.mxu0 %v13123
    %v13432 = vpop.f32.mrf.mxu0
    %v13433 = vadd.f32 %v13420, %v13432
    %v13434 = vpop.f32.mrf.mxu0
    %13435 = vdwg.mxu0
    %v13436 = vmax.f32 %v13433, 0.0
    %v13437 = vpack.c.bf16 %v13436, %v13436
    %v13438 = vld [vmem:[#allocation13] sm:$0xff]
    %v13439 = vld [vmem:[#allocation13 + $0x8] sm:$0xff]
    %v13440 = vld [vmem:[#allocation13 + $0x10] sm:$0xff]
    %v13441 = vld [vmem:[#allocation13 + $0x18] sm:$0xff]
    %v13442 = vld [vmem:[#allocation13 + $0x20] sm:$0xff]
    %v13443 = vld [vmem:[#allocation13 + $0x28] sm:$0xff]
    %v13444 = vld [vmem:[#allocation13 + $0x30] sm:$0xff]
    %v13445 = vld [vmem:[#allocation13 + $0x38] sm:$0xff]
    %v13446 = vld [vmem:[%s1] sm:$0xff]
    %v13447 = vpack.c.bf16 %v13446, %v13446
    %v13448 = vld [vmem:[#allocation15] sm:$0xff]
    %v13449 = vld [vmem:[#allocation15 + $0x8] sm:$0x33]
    %v13452 = vunpack.c.l.b16 %v13448
    %v13453 = vunpack.c.h.b16 %v13448
    %v13454 = vunpack.c.l.b16 %v13449
    %v13455 = vunpack.c.h.b16 %v13449
    %v13456 = vpack.c.b16 %v13454, %v13452
    %v13457 = vpack.c.b16 %v13455, %v13453
    %vm13458 = vcmask 89088
    %v13460 = vsel %vm13458, %v13447, 0
    %vm13462 = vcmask 1044480
    %vm13463 = vcmask 1045504
    %v13464 = vsel %vm13462, 4294967295, 65535
    %v13465 = vsel %vm13463, %v13464, 0
    %v13467 = vand.u32 %v13456, %v13465
    %v13470 = vand.u32 %v13457, %v13465
    %13472 = vmatpush.bf16.msra.mxu0 0
    %13473 = vmatpush.bf16.msra.mxu0 0
    %13474 = vmatpush.bf16.msra.mxu0 0
    %13475 = vmatpush.bf16.msra.mxu0 0
    %13476 = vmatpush.bf16.msra.mxu0 0
    %13477 = vmatpush.bf16.msra.mxu0 0
    %13478 = vmatpush.bf16.msra.mxu0 0
    %13479 = vmatpush.bf16.msra.mxu0 %v13467
    %13480 = vmatmul.bf16.gmra.mxu0 %v13460
    %v13481 = vpop.f32.mrf.mxu0
    %v13482 = vadd.f32 0.0, %v13481
    %v13483 = vpop.f32.mrf.mxu0
    %13484 = vdwg.mxu0
    %13485 = vmatpush.bf16.msra.mxu0 0
    %13486 = vmatpush.bf16.msra.mxu0 0
    %13487 = vmatpush.bf16.msra.mxu0 0
    %13488 = vmatpush.bf16.msra.mxu0 0
    %13489 = vmatpush.bf16.msra.mxu0 0
    %13490 = vmatpush.bf16.msra.mxu0 0
    %13491 = vmatpush.bf16.msra.mxu0 0
    %13492 = vmatpush.bf16.msra.mxu0 %v13470
    %13493 = vmatmul.bf16.gmra.mxu0 %v13460
    %v13494 = vpop.f32.mrf.mxu0
    %v13495 = vadd.f32 0.0, %v13494
    %v13496 = vpop.f32.mrf.mxu0
    %13497 = vdwg.mxu0
    %v13506 = vunpack.c.l.b16 %v13438
    %v13507 = vunpack.c.h.b16 %v13438
    %v13508 = vunpack.c.l.b16 %v13439
    %v13509 = vunpack.c.h.b16 %v13439
    %v13510 = vunpack.c.l.b16 %v13440
    %v13511 = vunpack.c.h.b16 %v13440
    %v13512 = vunpack.c.l.b16 %v13441
    %v13513 = vunpack.c.h.b16 %v13441
    %v13514 = vunpack.c.l.b16 %v13442
    %v13515 = vunpack.c.h.b16 %v13442
    %v13516 = vunpack.c.l.b16 %v13443
    %v13517 = vunpack.c.h.b16 %v13443
    %v13518 = vunpack.c.l.b16 %v13444
    %v13519 = vunpack.c.h.b16 %v13444
    %v13520 = vunpack.c.l.b16 %v13445
    %v13521 = vunpack.c.h.b16 %v13445
    %v13522 = vpack.c.b16 %v13508, %v13506
    %v13523 = vpack.c.b16 %v13509, %v13507
    %v13524 = vpack.c.b16 %v13512, %v13510
    %v13525 = vpack.c.b16 %v13513, %v13511
    %v13526 = vpack.c.b16 %v13516, %v13514
    %v13527 = vpack.c.b16 %v13517, %v13515
    %v13528 = vpack.c.b16 %v13520, %v13518
    %v13529 = vpack.c.b16 %v13521, %v13519
    %vm13538 = vcmask 523264
    %v13540 = vsel %vm13538, %v13437, 0
    %13542 = vmatpush.bf16.msra.mxu0 0
    %13543 = vmatpush.bf16.msra.mxu0 0
    %13544 = vmatpush.bf16.msra.mxu0 0
    %13545 = vmatpush.bf16.msra.mxu0 0
    %13546 = vmatpush.bf16.msra.mxu0 %v13528
    %13547 = vmatpush.bf16.msra.mxu0 %v13526
    %13548 = vmatpush.bf16.msra.mxu0 %v13524
    %13549 = vmatpush.bf16.msra.mxu0 %v13522
    %13550 = vmatmul.bf16.gmra.mxu0 %v13540
    %v13551 = vpop.f32.mrf.mxu0
    %v13552 = vadd.f32 %v13482, %v13551
    %v13553 = vpop.f32.mrf.mxu0
    %13554 = vdwg.mxu0
    %13555 = vmatpush.bf16.msra.mxu0 0
    %13556 = vmatpush.bf16.msra.mxu0 0
    %13557 = vmatpush.bf16.msra.mxu0 0
    %13558 = vmatpush.bf16.msra.mxu0 0
    %13559 = vmatpush.bf16.msra.mxu0 %v13529
    %13560 = vmatpush.bf16.msra.mxu0 %v13527
    %13561 = vmatpush.bf16.msra.mxu0 %v13525
    %13562 = vmatpush.bf16.msra.mxu0 %v13523
    %13563 = vmatmul.bf16.gmra.mxu0 %v13540
    %v13564 = vpop.f32.mrf.mxu0
    %v13565 = vadd.f32 %v13495, %v13564
    %v13566 = vpop.f32.mrf.mxu0
    %13567 = vdwg.mxu0
    %v13568 = vld [vmem:[#allocation16] sm:$0x3]
    %v13570 = vperm.slane %v13568, 0
    %v13571 = vperm.slane %v13568, 1
    %v13574 = vadd.f32 %v13552, %v13570
    %v13575 = vadd.f32 %v13565, %v13571
    %v13576 = vmax.f32 %v13574, 0.0
    %v13577 = vmax.f32 %v13575, 0.0
    %v13578 = vpack.c.bf16 %v13576, %v13576
    %v13579 = vpack.c.bf16 %v13577, %v13577
    %v13580 = vld [vmem:[%s13] sm:$0xf]
    %v13581 = vld [vmem:[%s13 + $0x4] sm:$0xf]
    %v13582 = vld [vmem:[%s13 + $0x8] sm:$0xf]
    %v13583 = vld [vmem:[%s13 + $0xc] sm:$0xf]
    %v13584 = vld [vmem:[%s13 + $0x10] sm:$0xf]
    %v13585 = vld [vmem:[%s13 + $0x14] sm:$0xf]
    %v13586 = vld [vmem:[%s13 + $0x18] sm:$0xf]
    %v13587 = vld [vmem:[%s13 + $0x1c] sm:$0xf]
    %v13588 = vld [vmem:[%s13 + $0x20] sm:$0xf]
    %v13589 = vld [vmem:[%s13 + $0x24] sm:$0xf]
    %v13590 = vld [vmem:[%s13 + $0x28] sm:$0xf]
    %v13591 = vld [vmem:[%s13 + $0x2c] sm:$0xf]
    %v13592 = vld [vmem:[%s13 + $0x30] sm:$0xf]
    %v13593 = vld [vmem:[%s13 + $0x34] sm:$0xf]
    %v13594 = vld [vmem:[%s13 + $0x38] sm:$0xf]
    %v13595 = vld [vmem:[%s13 + $0x3c] sm:$0xf]
    %v13596 = vld [vmem:[%s13 + $0x40] sm:$0xf]
    %v13597 = vld [vmem:[%s13 + $0x44] sm:$0xf]
    %v13598 = vld [vmem:[%s13 + $0x48] sm:$0xf]
    %v13599 = vld [vmem:[%s13 + $0x4c] sm:$0xf]
    %v13600 = vld [vmem:[%s13 + $0x50] sm:$0xf]
    %v13601 = vld [vmem:[%s13 + $0x54] sm:$0xf]
    %v13602 = vld [vmem:[%s13 + $0x58] sm:$0xf]
    %v13603 = vld [vmem:[%s13 + $0x5c] sm:$0xf]
    %v13604 = vld [vmem:[%s13 + $0x60] sm:$0xf]
    %v13605 = vld [vmem:[%s13 + $0x64] sm:$0xf]
    %v13606 = vld [vmem:[%s13 + $0x68] sm:$0xf]
    %v13607 = vld [vmem:[%s13 + $0x6c] sm:$0xf]
    %v13608 = vld [vmem:[%s13 + $0x70] sm:$0xf]
    %v13609 = vld [vmem:[%s13 + $0x74] sm:$0xf]
    %v13610 = vld [vmem:[%s13 + $0x78] sm:$0xf]
    %v13611 = vld [vmem:[%s13 + $0x7c] sm:$0xf]
    %v13612 = vld [vmem:[#allocation18] sm:$0x1]
    %v13614 = vperm.slane %v13612, 0
    %v13648 = vunpack.c.l.b16 %v13580
    %v13649 = vunpack.c.l.b16 %v13581
    %v13650 = vunpack.c.l.b16 %v13582
    %v13651 = vunpack.c.l.b16 %v13583
    %v13652 = vunpack.c.l.b16 %v13584
    %v13653 = vunpack.c.l.b16 %v13585
    %v13654 = vunpack.c.l.b16 %v13586
    %v13655 = vunpack.c.l.b16 %v13587
    %v13656 = vunpack.c.l.b16 %v13588
    %v13657 = vunpack.c.l.b16 %v13589
    %v13658 = vunpack.c.l.b16 %v13590
    %v13659 = vunpack.c.l.b16 %v13591
    %v13660 = vunpack.c.l.b16 %v13592
    %v13661 = vunpack.c.l.b16 %v13593
    %v13662 = vunpack.c.l.b16 %v13594
    %v13663 = vunpack.c.l.b16 %v13595
    %v13664 = vunpack.c.l.b16 %v13596
    %v13665 = vunpack.c.l.b16 %v13597
    %v13666 = vunpack.c.l.b16 %v13598
    %v13667 = vunpack.c.l.b16 %v13599
    %v13668 = vunpack.c.l.b16 %v13600
    %v13669 = vunpack.c.l.b16 %v13601
    %v13670 = vunpack.c.l.b16 %v13602
    %v13671 = vunpack.c.l.b16 %v13603
    %v13672 = vunpack.c.l.b16 %v13604
    %v13673 = vunpack.c.l.b16 %v13605
    %v13674 = vunpack.c.l.b16 %v13606
    %v13675 = vunpack.c.l.b16 %v13607
    %v13676 = vunpack.c.l.b16 %v13608
    %v13677 = vunpack.c.l.b16 %v13609
    %v13678 = vunpack.c.l.b16 %v13610
    %v13679 = vunpack.c.l.b16 %v13611
    %v13680 = vpack.c.b16 %v13649, %v13648
    %v13681 = vpack.c.b16 %v13651, %v13650
    %v13682 = vpack.c.b16 %v13653, %v13652
    %v13683 = vpack.c.b16 %v13655, %v13654
    %v13684 = vpack.c.b16 %v13657, %v13656
    %v13685 = vpack.c.b16 %v13659, %v13658
    %v13686 = vpack.c.b16 %v13661, %v13660
    %v13687 = vpack.c.b16 %v13663, %v13662
    %v13688 = vpack.c.b16 %v13665, %v13664
    %v13689 = vpack.c.b16 %v13667, %v13666
    %v13690 = vpack.c.b16 %v13669, %v13668
    %v13691 = vpack.c.b16 %v13671, %v13670
    %v13692 = vpack.c.b16 %v13673, %v13672
    %v13693 = vpack.c.b16 %v13675, %v13674
    %v13694 = vpack.c.b16 %v13677, %v13676
    %v13695 = vpack.c.b16 %v13679, %v13678
    %13712 = vmatpush.bf16.msra.mxu0 %v13687
    %13713 = vmatpush.bf16.msra.mxu0 %v13686
    %13714 = vmatpush.bf16.msra.mxu0 %v13685
    %13715 = vmatpush.bf16.msra.mxu0 %v13684
    %13716 = vmatpush.bf16.msra.mxu0 %v13683
    %13717 = vmatpush.bf16.msra.mxu0 %v13682
    %13718 = vmatpush.bf16.msra.mxu0 %v13681
    %13719 = vmatpush.bf16.msra.mxu0 %v13680
    %13720 = vmatmul.bf16.gmra.mxu0 %v13578
    %v13721 = vpop.f32.mrf.mxu0
    %v13722 = vadd.f32 %v13614, %v13721
    %v13723 = vpop.f32.mrf.mxu0
    %13724 = vdwg.mxu0
    %13725 = vmatpush.bf16.msra.mxu0 %v13695
    %13726 = vmatpush.bf16.msra.mxu0 %v13694
    %13727 = vmatpush.bf16.msra.mxu0 %v13693
    %13728 = vmatpush.bf16.msra.mxu0 %v13692
    %13729 = vmatpush.bf16.msra.mxu0 %v13691
    %13730 = vmatpush.bf16.msra.mxu0 %v13690
    %13731 = vmatpush.bf16.msra.mxu0 %v13689
    %13732 = vmatpush.bf16.msra.mxu0 %v13688
    %13733 = vmatmul.bf16.gmra.mxu0 %v13579
    %v13734 = vpop.f32.mrf.mxu0
    %v13735 = vadd.f32 %v13722, %v13734
    %v13736 = vpop.f32.mrf.mxu0
    %13737 = vdwg.mxu0
    %vm13738 = vcmask 23552
    %13739 = vst.msk [vmem:[%s15] sm:$0xff] %vm13738, %v13735
    // Predicated region
    $region106: #{cnn_qnet_forward.1} parent=1 // pred_check
      _
    $region107: #{cnn_qnet_forward.1} parent=1 // pred_check_branch
      %13741 = sbr.rel (0) target = $region109
    $region108: #{cnn_qnet_forward.1} parent=1 // pred_region
      _
    $region109: #{cnn_qnet_forward.1} parent=1 // pred_fallthru
      _
    // Predicated region
    $region110: #{cnn_qnet_forward.1} parent=1 // pred_check
      _
    $region111: #{cnn_qnet_forward.1} parent=1 // pred_check_branch
      %13743 = sbr.rel (0) target = $region113
    $region112: #{cnn_qnet_forward.1} parent=1 // pred_region
      _
    $region113: #{cnn_qnet_forward.1} parent=1 // pred_fallthru
      _
    %13744 = vsyncpa [#allocation3], 1
    %13745 = vsyncpa [#allocation5], 1
    %13746 = vsyncpa [#allocation8], 1
    %13747 = vsyncpa [#allocation11], 1
    %13748 = vsyncpa [#allocation14], 1
    %13749 = vsyncpa [#allocation17], 1

</llo_original>
